<compile_context>
chip_gen: v6e
topology: v6e:2x2x1
jax: 0.10.0
libtpu: 0.0.40
codegen_flags: <defaults>
</compile_context>

<pallas_src>
import functools

import jax
import jax.numpy as jnp
from jax.experimental import pallas as pl
from jax.experimental.pallas import tpu as pltpu

LANE = 128                       # vreg lane width: channel dims padded to this
_DEF_BLOCK_M = 512               # rows (pixels) per grid step for 1x1 convs
_VMEM_LIMIT = 32 * 1024 * 1024   # safe on v5e/v6e (128 MiB) and v7x (64 MiB)


def _round_up(x, m):
    return ((x + m - 1) // m) * m


def _cpad(c):
    return _round_up(c, LANE)


def _silu_f32(y):
    """SiLU with the sigmoid divide on the EUP slot (exp already lives there)."""
    if hasattr(pl, "reciprocal"):
        return y * pl.reciprocal(1.0 + jnp.exp(-y), approx=True)
    return y * (1.0 / (1.0 + jnp.exp(-y)))   # fallback for very old jax


# ---------------------------------------------------------------------------
# Kernels
# ---------------------------------------------------------------------------
def _pointwise_kernel(*refs, n_in):
    """(sum_i x_i @ w_i) -> folded-BN affine -> SiLU, f32 accumulation."""
    x_refs = refs[:n_in]
    w_refs = refs[n_in:2 * n_in]
    sb_ref = refs[2 * n_in]       # (2, Cout): row 0 = scale, row 1 = bias
    o_ref = refs[2 * n_in + 1]
    acc = jnp.dot(x_refs[0][...], w_refs[0][...],
                  preferred_element_type=jnp.float32)
    for xr, wr in zip(x_refs[1:], w_refs[1:]):        # fused concat: extra dots
        acc = acc + jnp.dot(xr[...], wr[...],
                            preferred_element_type=jnp.float32)
    y = acc * sb_ref[0:1, :] + sb_ref[1:2, :]
    o_ref[...] = _silu_f32(y).astype(o_ref.dtype)


def _conv3x3_kernel(*refs, shortcut):
    """3x3 'same' conv as 9 accumulated (H*W, C) @ (C, Cout) dots (no im2col),
    folded-BN affine, SiLU, optional fused residual add."""
    if shortcut:
        xp_ref, w_ref, sb_ref, res_ref, o_ref = refs
    else:
        xp_ref, w_ref, sb_ref, o_ref = refs
    _, H, W, Cout = o_ref.shape
    C = xp_ref.shape[3]
    acc = jnp.zeros((H * W, Cout), jnp.float32)
    for dh in range(3):
        for dw in range(3):
            xs = xp_ref[0, dh:dh + H, dw:dw + W, :].reshape(H * W, C)
            acc = acc + jnp.dot(xs, w_ref[dh * 3 + dw],
                                preferred_element_type=jnp.float32)
    y = acc * sb_ref[0:1, :] + sb_ref[1:2, :]
    y = _silu_f32(y)
    if shortcut:
        y = y + res_ref[0].reshape(H * W, Cout).astype(jnp.float32)
    o_ref[...] = y.reshape(1, H, W, Cout).astype(o_ref.dtype)


# ---------------------------------------------------------------------------
# pallas_call wrappers
# ---------------------------------------------------------------------------
def fused_pointwise(x_list, w_list, sb, *, block_m=_DEF_BLOCK_M, out_dtype=None):
    """Fused 1x1-conv(+concat) + BN + SiLU over flattened pixels.

    x_list: list of (arr(M, n_blocks*cin), cin, col_block). The kernel reads
            columns [col_block*cin : (col_block+1)*cin] of `arr` -- host-side
            slices / concats are expressed purely in the BlockSpec index_map.
    w_list: matching list of (cin, cout) weights; their dots are accumulated.
    sb:     (2, cout) f32 folded-BN scale / bias (single resident input).
    """
    M = x_list[0][0].shape[0]
    cout = w_list[0].shape[1]
    if out_dtype is None:
        out_dtype = x_list[0][0].dtype
    bm = M if M <= block_m else block_m          # ragged tail handled by cdiv
    grid = (pl.cdiv(M, bm),)

    in_specs, operands = [], []
    for arr, cin, col in x_list:
        in_specs.append(pl.BlockSpec((bm, cin), lambda i, c=col: (i, c)))
        operands.append(arr)
    for w in w_list:
        # Weight / scale-bias blocks return (0, 0) every step -> stay resident.
        in_specs.append(pl.BlockSpec(w.shape, lambda i: (0, 0)))
        operands.append(w)
    in_specs.append(pl.BlockSpec(sb.shape, lambda i: (0, 0)))
    operands.append(sb)

    return pl.pallas_call(
        functools.partial(_pointwise_kernel, n_in=len(x_list)),
        grid=grid,
        in_specs=in_specs,
        out_specs=pl.BlockSpec((bm, cout), lambda i: (i, 0)),
        out_shape=jax.ShapeDtypeStruct((M, cout), out_dtype),
        compiler_params=pltpu.CompilerParams(
            dimension_semantics=("parallel",),       # megacore-shardable
            vmem_limit_bytes=_VMEM_LIMIT),
    )(*operands)


def conv3x3_bn_silu(x_nhwc, w9, sb, residual=None, *, out_dtype=None):
    """3x3 stride-1 'same' Conv+BN+SiLU (+ fused residual), one image per grid
    step; the 9 taps are accumulated in-kernel from a halo-padded block."""
    N, H, W, C = x_nhwc.shape
    Cout = w9.shape[2]
    if out_dtype is None:
        out_dtype = x_nhwc.dtype
    # Single cheap halo pad instead of a 9x im2col blow-up through HBM.
    xp = jnp.pad(x_nhwc, ((0, 0), (1, 1), (1, 1), (0, 0)))

    in_specs = [
        pl.BlockSpec((1, H + 2, W + 2, C), lambda n: (n, 0, 0, 0)),
        pl.BlockSpec(w9.shape, lambda n: (0, 0, 0)),
        pl.BlockSpec(sb.shape, lambda n: (0, 0)),
    ]
    operands = [xp, w9, sb]
    if residual is not None:
        res_arr, res_col = residual        # residual picked by column block
        in_specs.append(pl.BlockSpec((1, H, W, Cout),
                                     lambda n, c=res_col: (n, 0, 0, c)))
        operands.append(res_arr)

    return pl.pallas_call(
        functools.partial(_conv3x3_kernel, shortcut=residual is not None),
        grid=(N,),
        in_specs=in_specs,
        out_specs=pl.BlockSpec((1, H, W, Cout), lambda n: (n, 0, 0, 0)),
        out_shape=jax.ShapeDtypeStruct((N, H, W, Cout), out_dtype),
        compiler_params=pltpu.CompilerParams(
            dimension_semantics=("parallel",),
            vmem_limit_bytes=_VMEM_LIMIT),
    )(*operands)


# ---------------------------------------------------------------------------
# Parameters: Conv2d weight + folded (inference-mode) BatchNorm
# ---------------------------------------------------------------------------
def make_conv_params(key, cin, cout, k):
    kw, kg, kb, km, kv = jax.random.split(key, 5)
    w = jax.random.normal(kw, (cout, cin, k, k), jnp.float32)
    w = w * (1.0 / (cin * k * k) ** 0.5)
    gamma = 1.0 + 0.1 * jax.random.normal(kg, (cout,), jnp.float32)
    beta = 0.1 * jax.random.normal(kb, (cout,), jnp.float32)
    mean = 0.1 * jax.random.normal(km, (cout,), jnp.float32)
    var = jnp.abs(jax.random.normal(kv, (cout,), jnp.float32)) + 1.0
    eps = 1e-5
    scale = gamma / jnp.sqrt(var + eps)
    bias = beta - mean * scale
    return {"w_oihw": w, "scale": scale, "bias": bias,
            "cin": cin, "cout": cout, "k": k}


def _pack_pointwise(p, compute_dtype):
    cin, cout = p["cin"], p["cout"]
    cin_p, cout_p = _cpad(cin), _cpad(cout)
    w2d = jnp.zeros((cin_p, cout_p), jnp.float32)
    w2d = w2d.at[:cin, :cout].set(p["w_oihw"][:, :, 0, 0].T)
    sb = jnp.zeros((2, cout_p), jnp.float32)
    sb = sb.at[0, :cout].set(p["scale"]).at[1, :cout].set(p["bias"])
    return w2d.astype(compute_dtype), sb


def _pack_3x3(p, compute_dtype):
    cin, cout = p["cin"], p["cout"]
    cin_p, cout_p = _cpad(cin), _cpad(cout)
    w = jnp.transpose(p["w_oihw"], (2, 3, 1, 0)).reshape(9, cin, cout)
    w9 = jnp.zeros((9, cin_p, cout_p), jnp.float32).at[:, :cin, :cout].set(w)
    sb = jnp.zeros((2, cout_p), jnp.float32)
    sb = sb.at[0, :cout].set(p["scale"]).at[1, :cout].set(p["bias"])
    return w9.astype(compute_dtype), sb


def pack_c3_params(params, compute_dtype=jnp.bfloat16):
    """Pack C3 params into lane-padded, bf16, kernel-ready arrays only."""
    c_ = params["cv1"]["cout"]
    c2 = params["cv3"]["cout"]
    c_p, c2_p = _cpad(c_), _cpad(c2)

    w1, sb1 = _pack_pointwise(params["cv1"], compute_dtype)
    w2, sb2 = _pack_pointwise(params["cv2"], compute_dtype)
    packed = {
        "w12": jnp.concatenate([w1, w2], axis=1),    # cv1+cv2 fused weight
        "sb12": jnp.concatenate([sb1, sb2], axis=1),
        "m": [],
    }
    for bp in params["m"]:
        bw1, bsb1 = _pack_pointwise(bp["cv1"], compute_dtype)
        bw2, bsb2 = _pack_3x3(bp["cv2"], compute_dtype)
        packed["m"].append({"w1": bw1, "sb1": bsb1, "w2": bw2, "sb2": bsb2})

    # cv3: split its 2*c_ input channels into the m-half and the y2-half so the
    # concat can be fused as two accumulated dots.
    w3 = params["cv3"]["w_oihw"][:, :, 0, 0]                 # (c2, 2*c_)
    w3a = jnp.zeros((c_p, c2_p), jnp.float32).at[:c_, :c2].set(w3[:, :c_].T)
    w3b = jnp.zeros((c_p, c2_p), jnp.float32).at[:c_, :c2].set(w3[:, c_:].T)
    sb3 = jnp.zeros((2, c2_p), jnp.float32)
    sb3 = sb3.at[0, :c2].set(params["cv3"]["scale"])
    sb3 = sb3.at[1, :c2].set(params["cv3"]["bias"])
    packed["w3a"] = w3a.astype(compute_dtype)
    packed["w3b"] = w3b.astype(compute_dtype)
    packed["sb3"] = sb3
    return packed


# ---------------------------------------------------------------------------
# C3 forward
# ---------------------------------------------------------------------------
def c3_forward_nhwc(x_nhwc, packed, *, out_channels, shortcut=True,
                    block_m=_DEF_BLOCK_M, compute_dtype=jnp.bfloat16):
    N, H, W, C1 = x_nhwc.shape
    M = N * H * W
    c1_p = packed["w12"].shape[0]
    c_p = packed["w12"].shape[1] // 2
    c2_p = packed["w3a"].shape[1]

    # Pad channels to the lane width and cast to bf16 once at the kernel
    # boundary (halves HBM traffic; dots still accumulate in f32).
    x2d = jnp.pad(x_nhwc, ((0, 0), (0, 0), (0, 0), (0, c1_p - C1)))
    x2d = x2d.astype(compute_dtype).reshape(M, c1_p)

    # cv1 + cv2 fused into one matmul: x read once, lane-dense (M, 2*c_p) slab.
    y12 = fused_pointwise([(x2d, c1_p, 0)], [packed["w12"]], packed["sb12"],
                          block_m=block_m, out_dtype=compute_dtype)

    m2d, m_col = y12, 0                         # m starts as cv1's column block
    for bp in packed["m"]:
        t2d = fused_pointwise([(m2d, c_p, m_col)], [bp["w1"]], bp["sb1"],
                              block_m=block_m, out_dtype=compute_dtype)
        res = (m2d.reshape(N, H, W, -1), m_col) if shortcut else None
        m4d = conv3x3_bn_silu(t2d.reshape(N, H, W, c_p), bp["w2"], bp["sb2"],
                              residual=res, out_dtype=compute_dtype)
        m2d, m_col = m4d.reshape(M, c_p), 0

    # cv3 with concat([m, y2]) fused: two accumulated dots, no HBM concat.
    out2d = fused_pointwise([(m2d, c_p, m_col), (y12, c_p, 1)],
                            [packed["w3a"], packed["w3b"]], packed["sb3"],
                            block_m=block_m, out_dtype=jnp.float32)
    return out2d.reshape(N, H, W, c2_p)[..., :out_channels]


def c3_forward_nchw(x_nchw, packed, *, out_channels, shortcut=True,
                    block_m=_DEF_BLOCK_M, compute_dtype=jnp.bfloat16):
    # NOTE: real deployments should keep NHWC end-to-end; these transposes only
    # exist to mirror the PyTorch NCHW interface.
    x_nhwc = jnp.transpose(x_nchw, (0, 2, 3, 1))
    out = c3_forward_nhwc(x_nhwc, packed, out_channels=out_channels,
                          shortcut=shortcut, block_m=block_m,
                          compute_dtype=compute_dtype)
    return jnp.transpose(out, (0, 3, 1, 2))


# ---------------------------------------------------------------------------
# Pure-JAX reference (f32) for correctness checking
# ---------------------------------------------------------------------------
def conv_bn_silu_reference(x_nchw, p):
    y = jax.lax.conv_general_dilated(
        x_nchw, p["w_oihw"], window_strides=(1, 1), padding="SAME",
        dimension_numbers=("NCHW", "OIHW", "NCHW"))
    y = y * p["scale"][None, :, None, None] + p["bias"][None, :, None, None]
    return y * jax.nn.sigmoid(y)


def c3_reference_nchw(x_nchw, params, shortcut=True):
    y1 = conv_bn_silu_reference(x_nchw, params["cv1"])
    y2 = conv_bn_silu_reference(x_nchw, params["cv2"])
    m = y1
    for bp in params["m"]:
        t = conv_bn_silu_reference(m, bp["cv1"])
        t = conv_bn_silu_reference(t, bp["cv2"])
        m = m + t if shortcut else t
    cat = jnp.concatenate([m, y2], axis=1)
    return conv_bn_silu_reference(cat, params["cv3"])


# ---------------------------------------------------------------------------
if __name__ == "__main__":
    key = jax.random.PRNGKey(0)
    N, C1, H, W = 2, 16, 16, 16          # NCHW, matching the PyTorch interface
    C2, n_btl, e = 16, 1, 0.5
    c_ = int(C2 * e)

    keys = jax.random.split(key, 6)
    x_nchw = jax.random.normal(keys[0], (N, C1, H, W), jnp.float32)

    params = {
        "cv1": make_conv_params(keys[1], C1, c_, 1),
        "cv2": make_conv_params(keys[2], C1, c_, 1),
        "cv3": make_conv_params(keys[3], 2 * c_, C2, 1),
        "m": [{"cv1": make_conv_params(keys[4], c_, c_, 1),
               "cv2": make_conv_params(keys[5], c_, c_, 3)}
              for _ in range(n_btl)],
    }
    packed = pack_c3_params(params, compute_dtype=jnp.bfloat16)

    fwd = jax.jit(functools.partial(
        c3_forward_nchw, out_channels=C2, shortcut=True, block_m=256))
    out = fwd(x_nchw, packed)
    jax.block_until_ready(out)
    assert out.shape == (N, C2, H, W)

    # Correctness vs pure-JAX f32 reference (loose tol: bf16 + approx recip).
    ref = c3_reference_nchw(x_nchw, params, shortcut=True)
    assert jnp.allclose(out, ref, atol=0.1, rtol=0.1), float(
        jnp.max(jnp.abs(out - ref)))
    print("KERNEL_OK")
</pallas_src>

<mosaic_0001>
module attributes {stable_mosaic.version = 11 : i64} {
  func.func @_pointwise_kernel(%arg0: i32, %arg1: memref<256x128xbf16, #tpu.memory_space<vmem>>, %arg2: memref<128x256xbf16, #tpu.memory_space<vmem>>, %arg3: memref<2x256xf32, #tpu.memory_space<vmem>>, %arg4: memref<256x256xbf16, #tpu.memory_space<vmem>>) attributes {dimension_semantics = [#tpu.dimension_semantics<parallel>], iteration_bounds = array<i64: 2>, scalar_prefetch = 0 : i64, scratch_operands = 0 : i64, tpu.core_type = #tpu.core_type<tc>, window_params = [{transform_indices = @transform_0, window_bounds = array<i64: 256, 128>}, {pipeline_mode = #tpu.pipeline_mode<synchronous>, transform_indices = @transform_1, window_bounds = array<i64: 128, 256>}, {pipeline_mode = #tpu.pipeline_mode<synchronous>, transform_indices = @transform_2, window_bounds = array<i64: 2, 256>}, {transform_indices = @transform_3, window_bounds = array<i64: 256, 256>}]} {
    %c0 = arith.constant 0 : index
    %c0_0 = arith.constant 0 : index
    %0 = vector.load %arg1[%c0, %c0_0] : memref<256x128xbf16, #tpu.memory_space<vmem>>, vector<256x128xbf16>
    %c0_1 = arith.constant 0 : index
    %c0_2 = arith.constant 0 : index
    %1 = vector.load %arg2[%c0_1, %c0_2] : memref<128x256xbf16, #tpu.memory_space<vmem>>, vector<128x256xbf16>
    %cst = arith.constant dense<0.000000e+00> : vector<256x256xf32>
    %2 = tpu.matmul %0, %1, %cst {dimension_numbers = #tpu.dot_dimension_numbers<[1], [0], [0], [1], [0, 0, 1, 1], [], []>} : vector<256x128xbf16>, vector<128x256xbf16>, vector<256x256xf32> -> vector<256x256xf32>
    %c0_3 = arith.constant 0 : index
    %c0_4 = arith.constant 0 : index
    %3 = vector.load %arg3[%c0_3, %c0_4] : memref<2x256xf32, #tpu.memory_space<vmem>>, vector<1x256xf32>
    %4 = vector.broadcast %3 : vector<1x256xf32> to vector<256x256xf32>
    %5 = arith.mulf %2, %4 : vector<256x256xf32>
    %c1 = arith.constant 1 : index
    %c0_5 = arith.constant 0 : index
    %6 = vector.load %arg3[%c1, %c0_5] : memref<2x256xf32, #tpu.memory_space<vmem>>, vector<1x256xf32>
    %7 = vector.broadcast %6 : vector<1x256xf32> to vector<256x256xf32>
    %8 = arith.addf %5, %7 : vector<256x256xf32>
    %cst_6 = arith.constant 0.000000e+00 : f32
    %9 = vector.broadcast %cst_6 : f32 to vector<256x256xf32>
    %10 = arith.subf %9, %8 : vector<256x256xf32>
    %11 = math.exp %10 : vector<256x256xf32>
    %cst_7 = arith.constant 1.000000e+00 : f32
    %12 = vector.broadcast %cst_7 : f32 to vector<256x256xf32>
    %13 = arith.addf %12, %11 : vector<256x256xf32>
    %14 = tpu.reciprocal %13 {approx = true} : vector<256x256xf32> -> vector<256x256xf32>
    %15 = arith.mulf %8, %14 : vector<256x256xf32>
    %16 = arith.truncf %15 : vector<256x256xf32> to vector<256x256xbf16>
    %c0_8 = arith.constant 0 : index
    %c0_9 = arith.constant 0 : index
    %17 = vector.load %arg4[%c0_8, %c0_9] : memref<256x256xbf16, #tpu.memory_space<vmem>>, vector<256x256xbf16>
    tpu.vector_store %arg4[%c0_8, %c0_9], %16 {strides = array<i32>} : memref<256x256xbf16, #tpu.memory_space<vmem>>, vector<256x256xbf16>,
    return
  }
  func.func @transform_0(%arg0: i32) -> (i32, i32) {
    %c0_i32 = arith.constant 0 : i32
    %c0_i32_0 = arith.constant 0 : i32
    return %arg0, %c0_i32 : i32, i32
  }
  func.func @transform_1(%arg0: i32) -> (i32, i32) {
    %c0_i32 = arith.constant 0 : i32
    %c0_i32_0 = arith.constant 0 : i32
    %c0_i32_1 = arith.constant 0 : i32
    return %c0_i32, %c0_i32_0 : i32, i32
  }
  func.func @transform_2(%arg0: i32) -> (i32, i32) {
    %c0_i32 = arith.constant 0 : i32
    %c0_i32_0 = arith.constant 0 : i32
    %c0_i32_1 = arith.constant 0 : i32
    return %c0_i32, %c0_i32_0 : i32, i32
  }
  func.func @transform_3(%arg0: i32) -> (i32, i32) {
    %c0_i32 = arith.constant 0 : i32
    %c0_i32_0 = arith.constant 0 : i32
    return %arg0, %c0_i32 : i32, i32
  }
}

module attributes {stable_mosaic.version = 11 : i64} {
  func.func @_pointwise_kernel(%arg0: i32, %arg1: memref<256x128xbf16, #tpu.memory_space<vmem>>, %arg2: memref<128x128xbf16, #tpu.memory_space<vmem>>, %arg3: memref<2x128xf32, #tpu.memory_space<vmem>>, %arg4: memref<256x128xbf16, #tpu.memory_space<vmem>>) attributes {dimension_semantics = [#tpu.dimension_semantics<parallel>], iteration_bounds = array<i64: 2>, scalar_prefetch = 0 : i64, scratch_operands = 0 : i64, tpu.core_type = #tpu.core_type<tc>, window_params = [{transform_indices = @transform_0, window_bounds = array<i64: 256, 128>}, {pipeline_mode = #tpu.pipeline_mode<synchronous>, transform_indices = @transform_1, window_bounds = array<i64: 128, 128>}, {pipeline_mode = #tpu.pipeline_mode<synchronous>, transform_indices = @transform_2, window_bounds = array<i64: 2, 128>}, {transform_indices = @transform_3, window_bounds = array<i64: 256, 128>}]} {
    %c0 = arith.constant 0 : index
    %c0_0 = arith.constant 0 : index
    %0 = vector.load %arg1[%c0, %c0_0] : memref<256x128xbf16, #tpu.memory_space<vmem>>, vector<256x128xbf16>
    %c0_1 = arith.constant 0 : index
    %c0_2 = arith.constant 0 : index
    %1 = vector.load %arg2[%c0_1, %c0_2] : memref<128x128xbf16, #tpu.memory_space<vmem>>, vector<128x128xbf16>
    %cst = arith.constant dense<0.000000e+00> : vector<256x128xf32>
    %2 = tpu.matmul %0, %1, %cst {dimension_numbers = #tpu.dot_dimension_numbers<[1], [0], [0], [1], [0, 0, 1, 1], [], []>} : vector<256x128xbf16>, vector<128x128xbf16>, vector<256x128xf32> -> vector<256x128xf32>
    %c0_3 = arith.constant 0 : index
    %c0_4 = arith.constant 0 : index
    %3 = vector.load %arg3[%c0_3, %c0_4] : memref<2x128xf32, #tpu.memory_space<vmem>>, vector<1x128xf32>
    %4 = vector.broadcast %3 : vector<1x128xf32> to vector<256x128xf32>
    %5 = arith.mulf %2, %4 : vector<256x128xf32>
    %c1 = arith.constant 1 : index
    %c0_5 = arith.constant 0 : index
    %6 = vector.load %arg3[%c1, %c0_5] : memref<2x128xf32, #tpu.memory_space<vmem>>, vector<1x128xf32>
    %7 = vector.broadcast %6 : vector<1x128xf32> to vector<256x128xf32>
    %8 = arith.addf %5, %7 : vector<256x128xf32>
    %cst_6 = arith.constant 0.000000e+00 : f32
    %9 = vector.broadcast %cst_6 : f32 to vector<256x128xf32>
    %10 = arith.subf %9, %8 : vector<256x128xf32>
    %11 = math.exp %10 : vector<256x128xf32>
    %cst_7 = arith.constant 1.000000e+00 : f32
    %12 = vector.broadcast %cst_7 : f32 to vector<256x128xf32>
    %13 = arith.addf %12, %11 : vector<256x128xf32>
    %14 = tpu.reciprocal %13 {approx = true} : vector<256x128xf32> -> vector<256x128xf32>
    %15 = arith.mulf %8, %14 : vector<256x128xf32>
    %16 = arith.truncf %15 : vector<256x128xf32> to vector<256x128xbf16>
    %c0_8 = arith.constant 0 : index
    %c0_9 = arith.constant 0 : index
    %17 = vector.load %arg4[%c0_8, %c0_9] : memref<256x128xbf16, #tpu.memory_space<vmem>>, vector<256x128xbf16>
    tpu.vector_store %arg4[%c0_8, %c0_9], %16 {strides = array<i32>} : memref<256x128xbf16, #tpu.memory_space<vmem>>, vector<256x128xbf16>,
    return
  }
  func.func @transform_0(%arg0: i32) -> (i32, i32) {
    %c0_i32 = arith.constant 0 : i32
    %c0_i32_0 = arith.constant 0 : i32
    return %arg0, %c0_i32 : i32, i32
  }
  func.func @transform_1(%arg0: i32) -> (i32, i32) {
    %c0_i32 = arith.constant 0 : i32
    %c0_i32_0 = arith.constant 0 : i32
    %c0_i32_1 = arith.constant 0 : i32
    return %c0_i32, %c0_i32_0 : i32, i32
  }
  func.func @transform_2(%arg0: i32) -> (i32, i32) {
    %c0_i32 = arith.constant 0 : i32
    %c0_i32_0 = arith.constant 0 : i32
    %c0_i32_1 = arith.constant 0 : i32
    return %c0_i32, %c0_i32_0 : i32, i32
  }
  func.func @transform_3(%arg0: i32) -> (i32, i32) {
    %c0_i32 = arith.constant 0 : i32
    %c0_i32_0 = arith.constant 0 : i32
    return %arg0, %c0_i32 : i32, i32
  }
}

module attributes {stable_mosaic.version = 11 : i64} {
  func.func @_conv3x3_kernel(%arg0: i32, %arg1: memref<1x18x18x128xbf16, #tpu.memory_space<vmem>>, %arg2: memref<9x128x128xbf16, #tpu.memory_space<vmem>>, %arg3: memref<2x128xf32, #tpu.memory_space<vmem>>, %arg4: memref<1x16x16x128xbf16, #tpu.memory_space<vmem>>, %arg5: memref<1x16x16x128xbf16, #tpu.memory_space<vmem>>) attributes {dimension_semantics = [#tpu.dimension_semantics<parallel>], iteration_bounds = array<i64: 2>, scalar_prefetch = 0 : i64, scratch_operands = 0 : i64, tpu.core_type = #tpu.core_type<tc>, window_params = [{transform_indices = @transform_0, window_bounds = array<i64: 1, 18, 18, 128>}, {pipeline_mode = #tpu.pipeline_mode<synchronous>, transform_indices = @transform_1, window_bounds = array<i64: 9, 128, 128>}, {pipeline_mode = #tpu.pipeline_mode<synchronous>, transform_indices = @transform_2, window_bounds = array<i64: 2, 128>}, {transform_indices = @transform_3, window_bounds = array<i64: 1, 16, 16, 128>}, {transform_indices = @transform_4, window_bounds = array<i64: 1, 16, 16, 128>}]} {
    %cst = arith.constant 0.000000e+00 : f32
    %0 = vector.broadcast %cst : f32 to vector<256x128xf32>
    %c0 = arith.constant 0 : index
    %c0_0 = arith.constant 0 : index
    %c0_1 = arith.constant 0 : index
    %c0_2 = arith.constant 0 : index
    %1 = vector.load %arg1[%c0, %c0_0, %c0_1, %c0_2] : memref<1x18x18x128xbf16, #tpu.memory_space<vmem>>, vector<1x16x16x128xbf16>
    %2 = vector.shape_cast %1 : vector<1x16x16x128xbf16> to vector<16x16x128xbf16>
    %3 = vector.shape_cast %2 : vector<16x16x128xbf16> to vector<256x128xbf16>
    %c0_3 = arith.constant 0 : index
    %c0_4 = arith.constant 0 : index
    %c0_5 = arith.constant 0 : index
    %4 = vector.load %arg2[%c0_3, %c0_4, %c0_5] : memref<9x128x128xbf16, #tpu.memory_space<vmem>>, vector<1x128x128xbf16>
    %5 = vector.shape_cast %4 : vector<1x128x128xbf16> to vector<128x128xbf16>
    %cst_6 = arith.constant dense<0.000000e+00> : vector<256x128xf32>
    %6 = tpu.matmul %3, %5, %cst_6 {dimension_numbers = #tpu.dot_dimension_numbers<[1], [0], [0], [1], [0, 0, 1, 1], [], []>} : vector<256x128xbf16>, vector<128x128xbf16>, vector<256x128xf32> -> vector<256x128xf32>
    %7 = arith.addf %0, %6 : vector<256x128xf32>
    %c0_7 = arith.constant 0 : index
    %c0_8 = arith.constant 0 : index
    %c1 = arith.constant 1 : index
    %c0_9 = arith.constant 0 : index
    %8 = vector.load %arg1[%c0_7, %c0_8, %c1, %c0_9] : memref<1x18x18x128xbf16, #tpu.memory_space<vmem>>, vector<1x16x16x128xbf16>
    %9 = vector.shape_cast %8 : vector<1x16x16x128xbf16> to vector<16x16x128xbf16>
    %10 = vector.shape_cast %9 : vector<16x16x128xbf16> to vector<256x128xbf16>
    %c1_10 = arith.constant 1 : index
    %c0_11 = arith.constant 0 : index
    %c0_12 = arith.constant 0 : index
    %11 = vector.load %arg2[%c1_10, %c0_11, %c0_12] : memref<9x128x128xbf16, #tpu.memory_space<vmem>>, vector<1x128x128xbf16>
    %12 = vector.shape_cast %11 : vector<1x128x128xbf16> to vector<128x128xbf16>
    %cst_13 = arith.constant dense<0.000000e+00> : vector<256x128xf32>
    %13 = tpu.matmul %10, %12, %cst_13 {dimension_numbers = #tpu.dot_dimension_numbers<[1], [0], [0], [1], [0, 0, 1, 1], [], []>} : vector<256x128xbf16>, vector<128x128xbf16>, vector<256x128xf32> -> vector<256x128xf32>
    %14 = arith.addf %7, %13 : vector<256x128xf32>
    %c0_14 = arith.constant 0 : index
    %c0_15 = arith.constant 0 : index
    %c2 = arith.constant 2 : index
    %c0_16 = arith.constant 0 : index
    %15 = vector.load %arg1[%c0_14, %c0_15, %c2, %c0_16] : memref<1x18x18x128xbf16, #tpu.memory_space<vmem>>, vector<1x16x16x128xbf16>
    %16 = vector.shape_cast %15 : vector<1x16x16x128xbf16> to vector<16x16x128xbf16>
    %17 = vector.shape_cast %16 : vector<16x16x128xbf16> to vector<256x128xbf16>
    %c2_17 = arith.constant 2 : index
    %c0_18 = arith.constant 0 : index
    %c0_19 = arith.constant 0 : index
    %18 = vector.load %arg2[%c2_17, %c0_18, %c0_19] : memref<9x128x128xbf16, #tpu.memory_space<vmem>>, vector<1x128x128xbf16>
    %19 = vector.shape_cast %18 : vector<1x128x128xbf16> to vector<128x128xbf16>
    %cst_20 = arith.constant dense<0.000000e+00> : vector<256x128xf32>
    %20 = tpu.matmul %17, %19, %cst_20 {dimension_numbers = #tpu.dot_dimension_numbers<[1], [0], [0], [1], [0, 0, 1, 1], [], []>} : vector<256x128xbf16>, vector<128x128xbf16>, vector<256x128xf32> -> vector<256x128xf32>
    %21 = arith.addf %14, %20 : vector<256x128xf32>
    %c0_21 = arith.constant 0 : index
    %c1_22 = arith.constant 1 : index
    %c0_23 = arith.constant 0 : index
    %c0_24 = arith.constant 0 : index
    %22 = vector.load %arg1[%c0_21, %c1_22, %c0_23, %c0_24] : memref<1x18x18x128xbf16, #tpu.memory_space<vmem>>, vector<1x16x16x128xbf16>
    %23 = vector.shape_cast %22 : vector<1x16x16x128xbf16> to vector<16x16x128xbf16>
    %24 = vector.shape_cast %23 : vector<16x16x128xbf16> to vector<256x128xbf16>
    %c3 = arith.constant 3 : index
    %c0_25 = arith.constant 0 : index
    %c0_26 = arith.constant 0 : index
    %25 = vector.load %arg2[%c3, %c0_25, %c0_26] : memref<9x128x128xbf16, #tpu.memory_space<vmem>>, vector<1x128x128xbf16>
    %26 = vector.shape_cast %25 : vector<1x128x128xbf16> to vector<128x128xbf16>
    %cst_27 = arith.constant dense<0.000000e+00> : vector<256x128xf32>
    %27 = tpu.matmul %24, %26, %cst_27 {dimension_numbers = #tpu.dot_dimension_numbers<[1], [0], [0], [1], [0, 0, 1, 1], [], []>} : vector<256x128xbf16>, vector<128x128xbf16>, vector<256x128xf32> -> vector<256x128xf32>
    %28 = arith.addf %21, %27 : vector<256x128xf32>
    %c0_28 = arith.constant 0 : index
    %c1_29 = arith.constant 1 : index
    %c1_30 = arith.constant 1 : index
    %c0_31 = arith.constant 0 : index
    %29 = vector.load %arg1[%c0_28, %c1_29, %c1_30, %c0_31] : memref<1x18x18x128xbf16, #tpu.memory_space<vmem>>, vector<1x16x16x128xbf16>
    %30 = vector.shape_cast %29 : vector<1x16x16x128xbf16> to vector<16x16x128xbf16>
    %31 = vector.shape_cast %30 : vector<16x16x128xbf16> to vector<256x128xbf16>
    %c4 = arith.constant 4 : index
    %c0_32 = arith.constant 0 : index
    %c0_33 = arith.constant 0 : index
    %32 = vector.load %arg2[%c4, %c0_32, %c0_33] : memref<9x128x128xbf16, #tpu.memory_space<vmem>>, vector<1x128x128xbf16>
    %33 = vector.shape_cast %32 : vector<1x128x128xbf16> to vector<128x128xbf16>
    %cst_34 = arith.constant dense<0.000000e+00> : vector<256x128xf32>
    %34 = tpu.matmul %31, %33, %cst_34 {dimension_numbers = #tpu.dot_dimension_numbers<[1], [0], [0], [1], [0, 0, 1, 1], [], []>} : vector<256x128xbf16>, vector<128x128xbf16>, vector<256x128xf32> -> vector<256x128xf32>
    %35 = arith.addf %28, %34 : vector<256x128xf32>
    %c0_35 = arith.constant 0 : index
    %c1_36 = arith.constant 1 : index
    %c2_37 = arith.constant 2 : index
    %c0_38 = arith.constant 0 : index
    %36 = vector.load %arg1[%c0_35, %c1_36, %c2_37, %c0_38] : memref<1x18x18x128xbf16, #tpu.memory_space<vmem>>, vector<1x16x16x128xbf16>
    %37 = vector.shape_cast %36 : vector<1x16x16x128xbf16> to vector<16x16x128xbf16>
    %38 = vector.shape_cast %37 : vector<16x16x128xbf16> to vector<256x128xbf16>
    %c5 = arith.constant 5 : index
    %c0_39 = arith.constant 0 : index
    %c0_40 = arith.constant 0 : index
    %39 = vector.load %arg2[%c5, %c0_39, %c0_40] : memref<9x128x128xbf16, #tpu.memory_space<vmem>>, vector<1x128x128xbf16>
    %40 = vector.shape_cast %39 : vector<1x128x128xbf16> to vector<128x128xbf16>
    %cst_41 = arith.constant dense<0.000000e+00> : vector<256x128xf32>
    %41 = tpu.matmul %38, %40, %cst_41 {dimension_numbers = #tpu.dot_dimension_numbers<[1], [0], [0], [1], [0, 0, 1, 1], [], []>} : vector<256x128xbf16>, vector<128x128xbf16>, vector<256x128xf32> -> vector<256x128xf32>
    %42 = arith.addf %35, %41 : vector<256x128xf32>
    %c0_42 = arith.constant 0 : index
    %c2_43 = arith.constant 2 : index
    %c0_44 = arith.constant 0 : index
    %c0_45 = arith.constant 0 : index
    %43 = vector.load %arg1[%c0_42, %c2_43, %c0_44, %c0_45] : memref<1x18x18x128xbf16, #tpu.memory_space<vmem>>, vector<1x16x16x128xbf16>
    %44 = vector.shape_cast %43 : vector<1x16x16x128xbf16> to vector<16x16x128xbf16>
    %45 = vector.shape_cast %44 : vector<16x16x128xbf16> to vector<256x128xbf16>
    %c6 = arith.constant 6 : index
    %c0_46 = arith.constant 0 : index
    %c0_47 = arith.constant 0 : index
    %46 = vector.load %arg2[%c6, %c0_46, %c0_47] : memref<9x128x128xbf16, #tpu.memory_space<vmem>>, vector<1x128x128xbf16>
    %47 = vector.shape_cast %46 : vector<1x128x128xbf16> to vector<128x128xbf16>
    %cst_48 = arith.constant dense<0.000000e+00> : vector<256x128xf32>
    %48 = tpu.matmul %45, %47, %cst_48 {dimension_numbers = #tpu.dot_dimension_numbers<[1], [0], [0], [1], [0, 0, 1, 1], [], []>} : vector<256x128xbf16>, vector<128x128xbf16>, vector<256x128xf32> -> vector<256x128xf32>
    %49 = arith.addf %42, %48 : vector<256x128xf32>
    %c0_49 = arith.constant 0 : index
    %c2_50 = arith.constant 2 : index
    %c1_51 = arith.constant 1 : index
    %c0_52 = arith.constant 0 : index
    %50 = vector.load %arg1[%c0_49, %c2_50, %c1_51, %c0_52] : memref<1x18x18x128xbf16, #tpu.memory_space<vmem>>, vector<1x16x16x128xbf16>
    %51 = vector.shape_cast %50 : vector<1x16x16x128xbf16> to vector<16x16x128xbf16>
    %52 = vector.shape_cast %51 : vector<16x16x128xbf16> to vector<256x128xbf16>
    %c7 = arith.constant 7 : index
    %c0_53 = arith.constant 0 : index
    %c0_54 = arith.constant 0 : index
    %53 = vector.load %arg2[%c7, %c0_53, %c0_54] : memref<9x128x128xbf16, #tpu.memory_space<vmem>>, vector<1x128x128xbf16>
    %54 = vector.shape_cast %53 : vector<1x128x128xbf16> to vector<128x128xbf16>
    %cst_55 = arith.constant dense<0.000000e+00> : vector<256x128xf32>
    %55 = tpu.matmul %52, %54, %cst_55 {dimension_numbers = #tpu.dot_dimension_numbers<[1], [0], [0], [1], [0, 0, 1, 1], [], []>} : vector<256x128xbf16>, vector<128x128xbf16>, vector<256x128xf32> -> vector<256x128xf32>
    %56 = arith.addf %49, %55 : vector<256x128xf32>
    %c0_56 = arith.constant 0 : index
    %c2_57 = arith.constant 2 : index
    %c2_58 = arith.constant 2 : index
    %c0_59 = arith.constant 0 : index
    %57 = vector.load %arg1[%c0_56, %c2_57, %c2_58, %c0_59] : memref<1x18x18x128xbf16, #tpu.memory_space<vmem>>, vector<1x16x16x128xbf16>
    %58 = vector.shape_cast %57 : vector<1x16x16x128xbf16> to vector<16x16x128xbf16>
    %59 = vector.shape_cast %58 : vector<16x16x128xbf16> to vector<256x128xbf16>
    %c8 = arith.constant 8 : index
    %c0_60 = arith.constant 0 : index
    %c0_61 = arith.constant 0 : index
    %60 = vector.load %arg2[%c8, %c0_60, %c0_61] : memref<9x128x128xbf16, #tpu.memory_space<vmem>>, vector<1x128x128xbf16>
    %61 = vector.shape_cast %60 : vector<1x128x128xbf16> to vector<128x128xbf16>
    %cst_62 = arith.constant dense<0.000000e+00> : vector<256x128xf32>
    %62 = tpu.matmul %59, %61, %cst_62 {dimension_numbers = #tpu.dot_dimension_numbers<[1], [0], [0], [1], [0, 0, 1, 1], [], []>} : vector<256x128xbf16>, vector<128x128xbf16>, vector<256x128xf32> -> vector<256x128xf32>
    %63 = arith.addf %56, %62 : vector<256x128xf32>
    %c0_63 = arith.constant 0 : index
    %c0_64 = arith.constant 0 : index
    %64 = vector.load %arg3[%c0_63, %c0_64] : memref<2x128xf32, #tpu.memory_space<vmem>>, vector<1x128xf32>
    %65 = vector.broadcast %64 : vector<1x128xf32> to vector<256x128xf32>
    %66 = arith.mulf %63, %65 : vector<256x128xf32>
    %c1_65 = arith.constant 1 : index
    %c0_66 = arith.constant 0 : index
    %67 = vector.load %arg3[%c1_65, %c0_66] : memref<2x128xf32, #tpu.memory_space<vmem>>, vector<1x128xf32>
    %68 = vector.broadcast %67 : vector<1x128xf32> to vector<256x128xf32>
    %69 = arith.addf %66, %68 : vector<256x128xf32>
    %cst_67 = arith.constant 0.000000e+00 : f32
    %70 = vector.broadcast %cst_67 : f32 to vector<256x128xf32>
    %71 = arith.subf %70, %69 : vector<256x128xf32>
    %72 = math.exp %71 : vector<256x128xf32>
    %cst_68 = arith.constant 1.000000e+00 : f32
    %73 = vector.broadcast %cst_68 : f32 to vector<256x128xf32>
    %74 = arith.addf %73, %72 : vector<256x128xf32>
    %75 = tpu.reciprocal %74 {approx = true} : vector<256x128xf32> -> vector<256x128xf32>
    %76 = arith.mulf %69, %75 : vector<256x128xf32>
    %c0_69 = arith.constant 0 : index
    %c0_70 = arith.constant 0 : index
    %c0_71 = arith.constant 0 : index
    %c0_72 = arith.constant 0 : index
    %77 = vector.load %arg4[%c0_69, %c0_70, %c0_71, %c0_72] : memref<1x16x16x128xbf16, #tpu.memory_space<vmem>>, vector<1x16x16x128xbf16>
    %78 = vector.shape_cast %77 : vector<1x16x16x128xbf16> to vector<16x16x128xbf16>
    %79 = vector.shape_cast %78 : vector<16x16x128xbf16> to vector<256x128xbf16>
    %80 = arith.extf %79 : vector<256x128xbf16> to vector<256x128xf32>
    %81 = arith.addf %76, %80 : vector<256x128xf32>
    %82 = vector.shape_cast %81 : vector<256x128xf32> to vector<1x16x16x128xf32>
    %83 = arith.truncf %82 : vector<1x16x16x128xf32> to vector<1x16x16x128xbf16>
    %c0_73 = arith.constant 0 : index
    %c0_74 = arith.constant 0 : index
    %c0_75 = arith.constant 0 : index
    %c0_76 = arith.constant 0 : index
    %84 = vector.load %arg5[%c0_73, %c0_74, %c0_75, %c0_76] : memref<1x16x16x128xbf16, #tpu.memory_space<vmem>>, vector<1x16x16x128xbf16>
    tpu.vector_store %arg5[%c0_73, %c0_74, %c0_75, %c0_76], %83 {strides = array<i32>} : memref<1x16x16x128xbf16, #tpu.memory_space<vmem>>, vector<1x16x16x128xbf16>,
    return
  }
  func.func @transform_0(%arg0: i32) -> (i32, i32, i32, i32) {
    %c0_i32 = arith.constant 0 : i32
    %c0_i32_0 = arith.constant 0 : i32
    %c0_i32_1 = arith.constant 0 : i32
    %c0_i32_2 = arith.constant 0 : i32
    return %arg0, %c0_i32, %c0_i32_0, %c0_i32_1 : i32, i32, i32, i32
  }
  func.func @transform_1(%arg0: i32) -> (i32, i32, i32) {
    %c0_i32 = arith.constant 0 : i32
    %c0_i32_0 = arith.constant 0 : i32
    %c0_i32_1 = arith.constant 0 : i32
    %c0_i32_2 = arith.constant 0 : i32
    return %c0_i32, %c0_i32_0, %c0_i32_1 : i32, i32, i32
  }
  func.func @transform_2(%arg0: i32) -> (i32, i32) {
    %c0_i32 = arith.constant 0 : i32
    %c0_i32_0 = arith.constant 0 : i32
    %c0_i32_1 = arith.constant 0 : i32
    return %c0_i32, %c0_i32_0 : i32, i32
  }
  func.func @transform_3(%arg0: i32) -> (i32, i32, i32, i32) {
    %c0_i32 = arith.constant 0 : i32
    %c0_i32_0 = arith.constant 0 : i32
    %c0_i32_1 = arith.constant 0 : i32
    %c0_i32_2 = arith.constant 0 : i32
    return %arg0, %c0_i32, %c0_i32_0, %c0_i32_1 : i32, i32, i32, i32
  }
  func.func @transform_4(%arg0: i32) -> (i32, i32, i32, i32) {
    %c0_i32 = arith.constant 0 : i32
    %c0_i32_0 = arith.constant 0 : i32
    %c0_i32_1 = arith.constant 0 : i32
    %c0_i32_2 = arith.constant 0 : i32
    return %arg0, %c0_i32, %c0_i32_0, %c0_i32_1 : i32, i32, i32, i32
  }
}

module attributes {stable_mosaic.version = 11 : i64} {
  func.func @_pointwise_kernel(%arg0: i32, %arg1: memref<256x128xbf16, #tpu.memory_space<vmem>>, %arg2: memref<256x128xbf16, #tpu.memory_space<vmem>>, %arg3: memref<128x128xbf16, #tpu.memory_space<vmem>>, %arg4: memref<128x128xbf16, #tpu.memory_space<vmem>>, %arg5: memref<2x128xf32, #tpu.memory_space<vmem>>, %arg6: memref<256x128xf32, #tpu.memory_space<vmem>>) attributes {dimension_semantics = [#tpu.dimension_semantics<parallel>], iteration_bounds = array<i64: 2>, scalar_prefetch = 0 : i64, scratch_operands = 0 : i64, tpu.core_type = #tpu.core_type<tc>, window_params = [{transform_indices = @transform_0, window_bounds = array<i64: 256, 128>}, {transform_indices = @transform_1, window_bounds = array<i64: 256, 128>}, {pipeline_mode = #tpu.pipeline_mode<synchronous>, transform_indices = @transform_2, window_bounds = array<i64: 128, 128>}, {pipeline_mode = #tpu.pipeline_mode<synchronous>, transform_indices = @transform_3, window_bounds = array<i64: 128, 128>}, {pipeline_mode = #tpu.pipeline_mode<synchronous>, transform_indices = @transform_4, window_bounds = array<i64: 2, 128>}, {transform_indices = @transform_5, window_bounds = array<i64: 256, 128>}]} {
    %c0 = arith.constant 0 : index
    %c0_0 = arith.constant 0 : index
    %0 = vector.load %arg1[%c0, %c0_0] : memref<256x128xbf16, #tpu.memory_space<vmem>>, vector<256x128xbf16>
    %c0_1 = arith.constant 0 : index
    %c0_2 = arith.constant 0 : index
    %1 = vector.load %arg3[%c0_1, %c0_2] : memref<128x128xbf16, #tpu.memory_space<vmem>>, vector<128x128xbf16>
    %cst = arith.constant dense<0.000000e+00> : vector<256x128xf32>
    %2 = tpu.matmul %0, %1, %cst {dimension_numbers = #tpu.dot_dimension_numbers<[1], [0], [0], [1], [0, 0, 1, 1], [], []>} : vector<256x128xbf16>, vector<128x128xbf16>, vector<256x128xf32> -> vector<256x128xf32>
    %c0_3 = arith.constant 0 : index
    %c0_4 = arith.constant 0 : index
    %3 = vector.load %arg2[%c0_3, %c0_4] : memref<256x128xbf16, #tpu.memory_space<vmem>>, vector<256x128xbf16>
    %c0_5 = arith.constant 0 : index
    %c0_6 = arith.constant 0 : index
    %4 = vector.load %arg4[%c0_5, %c0_6] : memref<128x128xbf16, #tpu.memory_space<vmem>>, vector<128x128xbf16>
    %cst_7 = arith.constant dense<0.000000e+00> : vector<256x128xf32>
    %5 = tpu.matmul %3, %4, %cst_7 {dimension_numbers = #tpu.dot_dimension_numbers<[1], [0], [0], [1], [0, 0, 1, 1], [], []>} : vector<256x128xbf16>, vector<128x128xbf16>, vector<256x128xf32> -> vector<256x128xf32>
    %6 = arith.addf %2, %5 : vector<256x128xf32>
    %c0_8 = arith.constant 0 : index
    %c0_9 = arith.constant 0 : index
    %7 = vector.load %arg5[%c0_8, %c0_9] : memref<2x128xf32, #tpu.memory_space<vmem>>, vector<1x128xf32>
    %8 = vector.broadcast %7 : vector<1x128xf32> to vector<256x128xf32>
    %9 = arith.mulf %6, %8 : vector<256x128xf32>
    %c1 = arith.constant 1 : index
    %c0_10 = arith.constant 0 : index
    %10 = vector.load %arg5[%c1, %c0_10] : memref<2x128xf32, #tpu.memory_space<vmem>>, vector<1x128xf32>
    %11 = vector.broadcast %10 : vector<1x128xf32> to vector<256x128xf32>
    %12 = arith.addf %9, %11 : vector<256x128xf32>
    %cst_11 = arith.constant 0.000000e+00 : f32
    %13 = vector.broadcast %cst_11 : f32 to vector<256x128xf32>
    %14 = arith.subf %13, %12 : vector<256x128xf32>
    %15 = math.exp %14 : vector<256x128xf32>
    %cst_12 = arith.constant 1.000000e+00 : f32
    %16 = vector.broadcast %cst_12 : f32 to vector<256x128xf32>
    %17 = arith.addf %16, %15 : vector<256x128xf32>
    %18 = tpu.reciprocal %17 {approx = true} : vector<256x128xf32> -> vector<256x128xf32>
    %19 = arith.mulf %12, %18 : vector<256x128xf32>
    %c0_13 = arith.constant 0 : index
    %c0_14 = arith.constant 0 : index
    %20 = vector.load %arg6[%c0_13, %c0_14] : memref<256x128xf32, #tpu.memory_space<vmem>>, vector<256x128xf32>
    tpu.vector_store %arg6[%c0_13, %c0_14], %19 {strides = array<i32>} : memref<256x128xf32, #tpu.memory_space<vmem>>, vector<256x128xf32>,
    return
  }
  func.func @transform_0(%arg0: i32) -> (i32, i32) {
    %c0_i32 = arith.constant 0 : i32
    %c0_i32_0 = arith.constant 0 : i32
    return %arg0, %c0_i32 : i32, i32
  }
  func.func @transform_1(%arg0: i32) -> (i32, i32) {
    %c1_i32 = arith.constant 1 : i32
    %c0_i32 = arith.constant 0 : i32
    return %arg0, %c1_i32 : i32, i32
  }
  func.func @transform_2(%arg0: i32) -> (i32, i32) {
    %c0_i32 = arith.constant 0 : i32
    %c0_i32_0 = arith.constant 0 : i32
    %c0_i32_1 = arith.constant 0 : i32
    return %c0_i32, %c0_i32_0 : i32, i32
  }
  func.func @transform_3(%arg0: i32) -> (i32, i32) {
    %c0_i32 = arith.constant 0 : i32
    %c0_i32_0 = arith.constant 0 : i32
    %c0_i32_1 = arith.constant 0 : i32
    return %c0_i32, %c0_i32_0 : i32, i32
  }
  func.func @transform_4(%arg0: i32) -> (i32, i32) {
    %c0_i32 = arith.constant 0 : i32
    %c0_i32_0 = arith.constant 0 : i32
    %c0_i32_1 = arith.constant 0 : i32
    return %c0_i32, %c0_i32_0 : i32, i32
  }
  func.func @transform_5(%arg0: i32) -> (i32, i32) {
    %c0_i32 = arith.constant 0 : i32
    %c0_i32_0 = arith.constant 0 : i32
    return %arg0, %c0_i32 : i32, i32
  }
}

</mosaic_0001>

<llo_original>
// kernel: c3_forward_nchw.4
$region0: #{c3_forward_nchw.4}
  #allocation0 [shape = 'u32[]', space=smem, size = 0x4, offset = 0x4, fixed_abs, tag = 'smem constant byte address 0x4 - core index']
  #allocation1 [shape = 'u32[144,128]{1,0:T(1,128)}', space=vmem, size = 0x12000, scoped, tag = 'internal scratch']
  %s0 = inlined_call_operand.vmem [shape: bf16[512,128], index: 0, kind: input, shape index: {}]
  %s1 = inlined_call_operand.vmem [shape: bf16[128,256], index: 1, kind: input, shape index: {}]
  %s2 = inlined_call_operand.vmem [shape: f32[2,256], index: 2, kind: input, shape index: {}]
  %s3 = inlined_call_operand.vmem [shape: bf16[512,256], index: 3, kind: output, shape index: {}]
  %s4 = sld [smem:[#allocation0]]
  $region45: #{c3_forward_nchw.4} parent=0
    _
  %s6 = ssub.s32 1, %s4
  %s7 = scalar_select 0, %s6, %s4
  loop: start=0, step=1, limit=4
  $region2: #{c3_forward_nchw.4} parent=0 // loop_pre_header
    _
  $region3: #{c3_forward_nchw.4} parent=0 // loop_header
    %s9 = sphi 0, %s13
    %p10 = scmp.ge.s32.totalorder %s9, 4
    %s19 = sphi 0, %s21
    %s22 = sphi 0, %s19
    %s23 = sphi 0, %s22
    %s39 = sphi 0, %s23
    %s43 = sphi 0, %s43
    %s45 = sphi 0, %s43
    %s46 = sphi 0, %s45
    %s60 = sphi 0, %s46
    %s64 = sphi 0, %s64
    %s66 = sphi 0, %s64
    %s67 = sphi 0, %s66
    %s81 = sphi 0, %s67
    %s87 = sphi 0, %s89
    %s90 = sphi 0, %s87
    %s91 = sphi 0, %s90
    %s107 = sphi 0, %s91
  $region4: #{c3_forward_nchw.4} parent=0 // loop_header_branch
    %12 = sbr.rel (%p10) target = $region8
  $region5: #{c3_forward_nchw.4} parent=0 // loop_body
    %s14 = ssub.s32 %s9, 1
    %s15 = ssub.s32 %s9, 2
    %s16 = sadd.s32 %s9, 1
    %s17 = ssub.s32 %s9, %s16
    %p18 = scmp.eq.s32.totalorder %s17, 0
    %s20 = sadd.s32 %s19, 1
    %s21 = scalar_select %p18, %s19, %s20
    %p24 = pneg %p18
    %p25 = scmp.eq.s32.totalorder %s9, 1
    %p26 = por %p24, %p25
    %p27 = scmp.ne.s32.totalorder %s19, %s22
    %p28 = scmp.eq.s32.totalorder %s9, 0
    %p29 = por %p27, %p28
    %p30 = scmp.ne.s32.totalorder %s19, %s22
    %p31 = scmp.eq.s32.totalorder %s14, 1
    %p32 = por %p30, %p31
    %p33 = scmp.ne.s32.totalorder %s22, %s23
    %p34 = scmp.eq.s32.totalorder %s14, 0
    %p35 = por %p33, %p34
    %p36 = scmp.ne.s32.totalorder %s22, %s23
    %p37 = scmp.eq.s32.totalorder %s15, 1
    %p38 = por %p36, %p37
    %p40 = scmp.ne.s32.totalorder %s23, %s39
    %p41 = scmp.eq.s32.totalorder %s15, 0
    %p42 = por %p40, %p41
    %s44 = sadd.s32 %s43, 1
    %p47 = scmp.eq.s32.totalorder %s9, 1
    %p48 = scmp.ne.s32.totalorder %s43, %s45
    %p49 = scmp.eq.s32.totalorder %s9, 0
    %p50 = por %p48, %p49
    %p51 = scmp.ne.s32.totalorder %s43, %s45
    %p52 = scmp.eq.s32.totalorder %s14, 1
    %p53 = por %p51, %p52
    %p54 = scmp.ne.s32.totalorder %s45, %s46
    %p55 = scmp.eq.s32.totalorder %s14, 0
    %p56 = por %p54, %p55
    %p57 = scmp.ne.s32.totalorder %s45, %s46
    %p58 = scmp.eq.s32.totalorder %s15, 1
    %p59 = por %p57, %p58
    %p61 = scmp.ne.s32.totalorder %s46, %s60
    %p62 = scmp.eq.s32.totalorder %s15, 0
    %p63 = por %p61, %p62
    %s65 = sadd.s32 %s64, 1
    %p68 = scmp.eq.s32.totalorder %s9, 1
    %p69 = scmp.ne.s32.totalorder %s64, %s66
    %p70 = scmp.eq.s32.totalorder %s9, 0
    %p71 = por %p69, %p70
    %p72 = scmp.ne.s32.totalorder %s64, %s66
    %p73 = scmp.eq.s32.totalorder %s14, 1
    %p74 = por %p72, %p73
    %p75 = scmp.ne.s32.totalorder %s66, %s67
    %p76 = scmp.eq.s32.totalorder %s14, 0
    %p77 = por %p75, %p76
    %p78 = scmp.ne.s32.totalorder %s66, %s67
    %p79 = scmp.eq.s32.totalorder %s15, 1
    %p80 = por %p78, %p79
    %p82 = scmp.ne.s32.totalorder %s67, %s81
    %p83 = scmp.eq.s32.totalorder %s15, 0
    %p84 = por %p82, %p83
    %s85 = ssub.s32 %s9, %s16
    %p86 = scmp.eq.s32.totalorder %s85, 0
    %s88 = sadd.s32 %s87, 1
    %s89 = scalar_select %p86, %s87, %s88
    %p92 = pneg %p86
    %p93 = scmp.eq.s32.totalorder %s9, 1
    %p94 = por %p92, %p93
    %p95 = scmp.ne.s32.totalorder %s87, %s90
    %p96 = scmp.eq.s32.totalorder %s9, 0
    %p97 = por %p95, %p96
    %p98 = scmp.ne.s32.totalorder %s87, %s90
    %p99 = scmp.eq.s32.totalorder %s14, 1
    %p100 = por %p98, %p99
    %p101 = scmp.ne.s32.totalorder %s90, %s91
    %p102 = scmp.eq.s32.totalorder %s14, 0
    %p103 = por %p101, %p102
    %p104 = scmp.ne.s32.totalorder %s90, %s91
    %p105 = scmp.eq.s32.totalorder %s15, 1
    %p106 = por %p104, %p105
    %p108 = scmp.ne.s32.totalorder %s91, %s107
    %p109 = scmp.eq.s32.totalorder %s15, 0
    %p110 = por %p108, %p109
    %p111 = scmp.le.s32.totalorder 1, %s9
    %p112 = scmp.lt.s32.totalorder %s9, 3
    %p113 = pnand %p111, %p112
    %p114 = pneg %p113
    // Predicated region
    $region9: #{c3_forward_nchw.4} parent=5 // pred_check
      _
    $region10: #{c3_forward_nchw.4} parent=5 // pred_check_branch
      %116 = sbr.rel (%p113) target = $region12
    $region11: #{c3_forward_nchw.4} parent=5 // pred_region
      %s117 = ssub.s32 %s9, 1
      // Predicated region
      $region13: #{c3_forward_nchw.4} parent=11 // pred_check
        %p118 = pneg %p56
      $region14: #{c3_forward_nchw.4} parent=11 // pred_check_branch
        %120 = sbr.rel (%p118) target = $region16
      $region15: #{c3_forward_nchw.4} parent=11 // pred_region
        _
      $region16: #{c3_forward_nchw.4} parent=11 // pred_fallthru
        _
      // Predicated region
      $region17: #{c3_forward_nchw.4} parent=11 // pred_check
        %p121 = pneg %p77
      $region18: #{c3_forward_nchw.4} parent=11 // pred_check_branch
        %123 = sbr.rel (%p121) target = $region20
      $region19: #{c3_forward_nchw.4} parent=11 // pred_region
        _
      $region20: #{c3_forward_nchw.4} parent=11 // pred_fallthru
        _
    $region12: #{c3_forward_nchw.4} parent=5 // pred_fallthru
      _
    %p124 = scmp.lt.s32.totalorder %s9, 2
    // Predicated region
    $region21: #{c3_forward_nchw.4} parent=5 // pred_check
      %p125 = pneg %p124
    $region22: #{c3_forward_nchw.4} parent=5 // pred_check_branch
      %127 = sbr.rel (%p125) target = $region24
    $region23: #{c3_forward_nchw.4} parent=5 // pred_region
      // Predicated region
      $region25: #{c3_forward_nchw.4} parent=23 // pred_check
        %p128 = pneg %p29
      $region26: #{c3_forward_nchw.4} parent=23 // pred_check_branch
        %130 = sbr.rel (%p128) target = $region28
      $region27: #{c3_forward_nchw.4} parent=23 // pred_region
        %s131 = smul.u32 32, %s9
        %p132 = scmp.lt.s32.totalorder %s131, 63
        %s133 = scalar_select %p132, %s131, 63
        %s134 = smul.addr %s133, 4
        %s135 = scalar_lea.vmem %s0, %s134
        %s136 = smul.u32 32, %s9
      $region28: #{c3_forward_nchw.4} parent=23 // pred_fallthru
        _
    $region24: #{c3_forward_nchw.4} parent=5 // pred_fallthru
      _
    %p137 = scmp.le.s32.totalorder 1, %s9
    %p138 = scmp.lt.s32.totalorder %s9, 3
    %p139 = pnand %p137, %p138
    %p140 = pneg %p139
    // Predicated region
    $region29: #{c3_forward_nchw.4} parent=5 // pred_check
      _
    $region30: #{c3_forward_nchw.4} parent=5 // pred_check_branch
      %142 = sbr.rel (%p139) target = $region32
    $region31: #{c3_forward_nchw.4} parent=5 // pred_region
      %s143 = ssub.s32 %s9, 1
      %s144 = smul.u32 32, %s14
      %p145 = scmp.lt.s32.totalorder %s144, 63
      %s146 = scalar_select %p145, %s144, 63
      %s147 = smul.addr %s146, 4
      %s148 = scalar_lea.vmem %s0, %s147
      %p149 = pneg %p35
      %p150 = pneg %p32
      %p151 = pneg %p56
      %p152 = pneg %p53
      %p153 = pneg %p77
      %p154 = pneg %p74
      %p155 = pneg %p103
      %p156 = pneg %p100
      %s157 = smul.u32 32, %s14
      %p158 = scmp.lt.s32.totalorder %s157, 63
      %s159 = scalar_select %p158, %s157, 63
      %s160 = smul.addr %s159, 2
      %s161 = smul.addr %s160, 4
      %s162 = scalar_lea.vmem %s3, %s161
      %s163 = smul.u32 32, %s14
      %p164 = scmp.lt.s32.totalorder %s163, 63
      %s165 = scalar_select %p164, %s163, 63
      %s166 = smul.addr %s165, 4
      %s167 = scalar_lea.vmem %s0, %s166
      %s168 = smul.u32 32, %s14
      %s169 = smul.u32 32, %s14
      %p170 = scmp.lt.s32.totalorder %s169, 63
      %s171 = scalar_select %p170, %s169, 63
      %s172 = smul.addr %s171, 2
      %s173 = smul.addr %s172, 4
      %s174 = scalar_lea.vmem %s3, %s173
      %s175 = smul.u32 32, %s14
      %v177 = vld [vmem:[%s167] sm:$0xf]
      %v178 = vld [vmem:[%s167 + $0x4] sm:$0xf]
      %v179 = vld [vmem:[%s167 + $0x8] sm:$0xf]
      %v180 = vld [vmem:[%s167 + $0xc] sm:$0xf]
      %v181 = vld [vmem:[%s167 + $0x10] sm:$0xf]
      %v182 = vld [vmem:[%s167 + $0x14] sm:$0xf]
      %v183 = vld [vmem:[%s167 + $0x18] sm:$0xf]
      %v184 = vld [vmem:[%s167 + $0x1c] sm:$0xf]
      %v185 = vld [vmem:[%s167 + $0x20] sm:$0xf]
      %v186 = vld [vmem:[%s167 + $0x24] sm:$0xf]
      %v187 = vld [vmem:[%s167 + $0x28] sm:$0xf]
      %v188 = vld [vmem:[%s167 + $0x2c] sm:$0xf]
      %v189 = vld [vmem:[%s167 + $0x30] sm:$0xf]
      %v190 = vld [vmem:[%s167 + $0x34] sm:$0xf]
      %v191 = vld [vmem:[%s167 + $0x38] sm:$0xf]
      %v192 = vld [vmem:[%s167 + $0x3c] sm:$0xf]
      %v193 = vld [vmem:[%s167 + $0x40] sm:$0xf]
      %v194 = vld [vmem:[%s167 + $0x44] sm:$0xf]
      %v195 = vld [vmem:[%s167 + $0x48] sm:$0xf]
      %v196 = vld [vmem:[%s167 + $0x4c] sm:$0xf]
      %v197 = vld [vmem:[%s167 + $0x50] sm:$0xf]
      %v198 = vld [vmem:[%s167 + $0x54] sm:$0xf]
      %v199 = vld [vmem:[%s167 + $0x58] sm:$0xf]
      %v200 = vld [vmem:[%s167 + $0x5c] sm:$0xf]
      %v201 = vld [vmem:[%s167 + $0x60] sm:$0xf]
      %v202 = vld [vmem:[%s167 + $0x64] sm:$0xf]
      %v203 = vld [vmem:[%s167 + $0x68] sm:$0xf]
      %v204 = vld [vmem:[%s167 + $0x6c] sm:$0xf]
      %v205 = vld [vmem:[%s167 + $0x70] sm:$0xf]
      %v206 = vld [vmem:[%s167 + $0x74] sm:$0xf]
      %v207 = vld [vmem:[%s167 + $0x78] sm:$0xf]
      %v208 = vld [vmem:[%s167 + $0x7c] sm:$0xf]
      %v209 = vld [vmem:[%s1] sm:$0xff]
      %v210 = vld [vmem:[%s1 + $0x8] sm:$0xff]
      %v211 = vld [vmem:[%s1 + $0x10] sm:$0xff]
      %v212 = vld [vmem:[%s1 + $0x18] sm:$0xff]
      %v213 = vld [vmem:[%s1 + $0x20] sm:$0xff]
      %v214 = vld [vmem:[%s1 + $0x28] sm:$0xff]
      %v215 = vld [vmem:[%s1 + $0x30] sm:$0xff]
      %v216 = vld [vmem:[%s1 + $0x38] sm:$0xff]
      %v217 = vld [vmem:[%s1 + $0x40] sm:$0xff]
      %v218 = vld [vmem:[%s1 + $0x48] sm:$0xff]
      %v219 = vld [vmem:[%s1 + $0x50] sm:$0xff]
      %v220 = vld [vmem:[%s1 + $0x58] sm:$0xff]
      %v221 = vld [vmem:[%s1 + $0x60] sm:$0xff]
      %v222 = vld [vmem:[%s1 + $0x68] sm:$0xff]
      %v223 = vld [vmem:[%s1 + $0x70] sm:$0xff]
      %v224 = vld [vmem:[%s1 + $0x78] sm:$0xff]
      %v257 = vunpack.c.l.b16 %v177
      %v258 = vunpack.c.l.b16 %v178
      %v259 = vunpack.c.l.b16 %v179
      %v260 = vunpack.c.l.b16 %v180
      %v261 = vunpack.c.l.b16 %v181
      %v262 = vunpack.c.l.b16 %v182
      %v263 = vunpack.c.l.b16 %v183
      %v264 = vunpack.c.l.b16 %v184
      %v265 = vunpack.c.l.b16 %v185
      %v266 = vunpack.c.l.b16 %v186
      %v267 = vunpack.c.l.b16 %v187
      %v268 = vunpack.c.l.b16 %v188
      %v269 = vunpack.c.l.b16 %v189
      %v270 = vunpack.c.l.b16 %v190
      %v271 = vunpack.c.l.b16 %v191
      %v272 = vunpack.c.l.b16 %v192
      %v273 = vunpack.c.l.b16 %v193
      %v274 = vunpack.c.l.b16 %v194
      %v275 = vunpack.c.l.b16 %v195
      %v276 = vunpack.c.l.b16 %v196
      %v277 = vunpack.c.l.b16 %v197
      %v278 = vunpack.c.l.b16 %v198
      %v279 = vunpack.c.l.b16 %v199
      %v280 = vunpack.c.l.b16 %v200
      %v281 = vunpack.c.l.b16 %v201
      %v282 = vunpack.c.l.b16 %v202
      %v283 = vunpack.c.l.b16 %v203
      %v284 = vunpack.c.l.b16 %v204
      %v285 = vunpack.c.l.b16 %v205
      %v286 = vunpack.c.l.b16 %v206
      %v287 = vunpack.c.l.b16 %v207
      %v288 = vunpack.c.l.b16 %v208
      %v289 = vpack.c.b16 %v258, %v257
      %v290 = vpack.c.b16 %v260, %v259
      %v291 = vpack.c.b16 %v262, %v261
      %v292 = vpack.c.b16 %v264, %v263
      %v293 = vpack.c.b16 %v266, %v265
      %v294 = vpack.c.b16 %v268, %v267
      %v295 = vpack.c.b16 %v270, %v269
      %v296 = vpack.c.b16 %v272, %v271
      %v297 = vpack.c.b16 %v274, %v273
      %v298 = vpack.c.b16 %v276, %v275
      %v299 = vpack.c.b16 %v278, %v277
      %v300 = vpack.c.b16 %v280, %v279
      %v301 = vpack.c.b16 %v282, %v281
      %v302 = vpack.c.b16 %v284, %v283
      %v303 = vpack.c.b16 %v286, %v285
      %v304 = vpack.c.b16 %v288, %v287
      %v337 = vunpack.c.l.b16 %v209
      %v338 = vunpack.c.h.b16 %v209
      %v339 = vunpack.c.l.b16 %v210
      %v340 = vunpack.c.h.b16 %v210
      %v341 = vunpack.c.l.b16 %v211
      %v342 = vunpack.c.h.b16 %v211
      %v343 = vunpack.c.l.b16 %v212
      %v344 = vunpack.c.h.b16 %v212
      %v345 = vunpack.c.l.b16 %v213
      %v346 = vunpack.c.h.b16 %v213
      %v347 = vunpack.c.l.b16 %v214
      %v348 = vunpack.c.h.b16 %v214
      %v349 = vunpack.c.l.b16 %v215
      %v350 = vunpack.c.h.b16 %v215
      %v351 = vunpack.c.l.b16 %v216
      %v352 = vunpack.c.h.b16 %v216
      %v353 = vunpack.c.l.b16 %v217
      %v354 = vunpack.c.h.b16 %v217
      %v355 = vunpack.c.l.b16 %v218
      %v356 = vunpack.c.h.b16 %v218
      %v357 = vunpack.c.l.b16 %v219
      %v358 = vunpack.c.h.b16 %v219
      %v359 = vunpack.c.l.b16 %v220
      %v360 = vunpack.c.h.b16 %v220
      %v361 = vunpack.c.l.b16 %v221
      %v362 = vunpack.c.h.b16 %v221
      %v363 = vunpack.c.l.b16 %v222
      %v364 = vunpack.c.h.b16 %v222
      %v365 = vunpack.c.l.b16 %v223
      %v366 = vunpack.c.h.b16 %v223
      %v367 = vunpack.c.l.b16 %v224
      %v368 = vunpack.c.h.b16 %v224
      %v369 = vpack.c.b16 %v339, %v337
      %v370 = vpack.c.b16 %v340, %v338
      %v371 = vpack.c.b16 %v343, %v341
      %v372 = vpack.c.b16 %v344, %v342
      %v373 = vpack.c.b16 %v347, %v345
      %v374 = vpack.c.b16 %v348, %v346
      %v375 = vpack.c.b16 %v351, %v349
      %v376 = vpack.c.b16 %v352, %v350
      %v377 = vpack.c.b16 %v355, %v353
      %v378 = vpack.c.b16 %v356, %v354
      %v379 = vpack.c.b16 %v359, %v357
      %v380 = vpack.c.b16 %v360, %v358
      %v381 = vpack.c.b16 %v363, %v361
      %v382 = vpack.c.b16 %v364, %v362
      %v383 = vpack.c.b16 %v367, %v365
      %v384 = vpack.c.b16 %v368, %v366
      %401 = vmatprep.subr.bf16.mxu0 %v384
      %402 = vmatpush1.bf16.msra.mxu0 %v383
      %403 = vmatprep.subr.bf16.mxu0 %v382
      %404 = vmatpush1.bf16.msra.mxu0 %v381
      %405 = vmatprep.subr.bf16.mxu0 %v380
      %406 = vmatpush1.bf16.msra.mxu0 %v379
      %407 = vmatprep.subr.bf16.mxu0 %v378
      %408 = vmatpush1.bf16.msra.mxu0 %v377
      %409 = vmatprep.subr.bf16.mxu0 %v376
      %410 = vmatpush1.bf16.msra.mxu0 %v375
      %411 = vmatprep.subr.bf16.mxu0 %v374
      %412 = vmatpush1.bf16.msra.mxu0 %v373
      %413 = vmatprep.subr.bf16.mxu0 %v372
      %414 = vmatpush1.bf16.msra.mxu0 %v371
      %415 = vmatprep.subr.bf16.mxu0 %v370
      %416 = vmatpush1.bf16.msra.mxu0 %v369
      %417 = vmatprep.subr.bf16.mxu0 0
      %418 = vmatpush2.bf16.msra.mxu0 0
      %419 = vmatprep.subr.bf16.mxu0 0
      %420 = vmatpush2.bf16.msra.mxu0 0
      %421 = vmatprep.subr.bf16.mxu0 0
      %422 = vmatpush2.bf16.msra.mxu0 0
      %423 = vmatprep.subr.bf16.mxu0 0
      %424 = vmatpush2.bf16.msra.mxu0 0
      %425 = vmatprep.subr.bf16.mxu0 0
      %426 = vmatpush2.bf16.msra.mxu0 0
      %427 = vmatprep.subr.bf16.mxu0 0
      %428 = vmatpush2.bf16.msra.mxu0 0
      %429 = vmatprep.subr.bf16.mxu0 0
      %430 = vmatpush2.bf16.msra.mxu0 0
      %431 = vmatprep.subr.bf16.mxu0 0
      %432 = vmatpush2.bf16.msra.mxu0 0
      %433 = vmatprep.mubr.bf16.mxu0 0
      %434 = vmatmul.mubr.bf16.gmra.mxu0 %v289
      %v435 = vpop.f32.mrf.mxu0
      %v436 = vadd.f32 0.0, %v435
      %v437 = vpop.f32.mrf.mxu0
      %v438 = vadd.f32 0.0, %v437
      %v439 = vpop.f32.mrf.mxu0
      %v440 = vadd.f32 0.0, %v439
      %v441 = vpop.f32.mrf.mxu0
      %v442 = vadd.f32 0.0, %v441
      %443 = vmatprep.mubr.bf16.mxu0 0
      %444 = vmatmul.mubr.bf16.gmra.mxu0 %v290
      %v445 = vpop.f32.mrf.mxu0
      %v446 = vadd.f32 0.0, %v445
      %v447 = vpop.f32.mrf.mxu0
      %v448 = vadd.f32 0.0, %v447
      %v449 = vpop.f32.mrf.mxu0
      %v450 = vadd.f32 0.0, %v449
      %v451 = vpop.f32.mrf.mxu0
      %v452 = vadd.f32 0.0, %v451
      %453 = vmatprep.mubr.bf16.mxu0 0
      %454 = vmatmul.mubr.bf16.gmra.mxu0 %v291
      %v455 = vpop.f32.mrf.mxu0
      %v456 = vadd.f32 0.0, %v455
      %v457 = vpop.f32.mrf.mxu0
      %v458 = vadd.f32 0.0, %v457
      %v459 = vpop.f32.mrf.mxu0
      %v460 = vadd.f32 0.0, %v459
      %v461 = vpop.f32.mrf.mxu0
      %v462 = vadd.f32 0.0, %v461
      %463 = vmatprep.mubr.bf16.mxu0 0
      %464 = vmatmul.mubr.bf16.gmra.mxu0 %v292
      %v465 = vpop.f32.mrf.mxu0
      %v466 = vadd.f32 0.0, %v465
      %v467 = vpop.f32.mrf.mxu0
      %v468 = vadd.f32 0.0, %v467
      %v469 = vpop.f32.mrf.mxu0
      %v470 = vadd.f32 0.0, %v469
      %v471 = vpop.f32.mrf.mxu0
      %v472 = vadd.f32 0.0, %v471
      %473 = vmatprep.mubr.bf16.mxu0 0
      %474 = vmatmul.mubr.bf16.gmra.mxu0 %v293
      %v475 = vpop.f32.mrf.mxu0
      %v476 = vadd.f32 0.0, %v475
      %v477 = vpop.f32.mrf.mxu0
      %v478 = vadd.f32 0.0, %v477
      %v479 = vpop.f32.mrf.mxu0
      %v480 = vadd.f32 0.0, %v479
      %v481 = vpop.f32.mrf.mxu0
      %v482 = vadd.f32 0.0, %v481
      %483 = vmatprep.mubr.bf16.mxu0 0
      %484 = vmatmul.mubr.bf16.gmra.mxu0 %v294
      %v485 = vpop.f32.mrf.mxu0
      %v486 = vadd.f32 0.0, %v485
      %v487 = vpop.f32.mrf.mxu0
      %v488 = vadd.f32 0.0, %v487
      %v489 = vpop.f32.mrf.mxu0
      %v490 = vadd.f32 0.0, %v489
      %v491 = vpop.f32.mrf.mxu0
      %v492 = vadd.f32 0.0, %v491
      %493 = vmatprep.mubr.bf16.mxu0 0
      %494 = vmatmul.mubr.bf16.gmra.mxu0 %v295
      %v495 = vpop.f32.mrf.mxu0
      %v496 = vadd.f32 0.0, %v495
      %v497 = vpop.f32.mrf.mxu0
      %v498 = vadd.f32 0.0, %v497
      %v499 = vpop.f32.mrf.mxu0
      %v500 = vadd.f32 0.0, %v499
      %v501 = vpop.f32.mrf.mxu0
      %v502 = vadd.f32 0.0, %v501
      %503 = vmatprep.mubr.bf16.mxu0 0
      %504 = vmatmul.mubr.bf16.gmra.mxu0 %v296
      %v505 = vpop.f32.mrf.mxu0
      %v506 = vadd.f32 0.0, %v505
      %v507 = vpop.f32.mrf.mxu0
      %v508 = vadd.f32 0.0, %v507
      %v509 = vpop.f32.mrf.mxu0
      %v510 = vadd.f32 0.0, %v509
      %v511 = vpop.f32.mrf.mxu0
      %v512 = vadd.f32 0.0, %v511
      %513 = vmatprep.mubr.bf16.mxu0 0
      %514 = vmatmul.mubr.bf16.gmra.mxu0 %v297
      %v515 = vpop.f32.mrf.mxu0
      %v516 = vadd.f32 0.0, %v515
      %v517 = vpop.f32.mrf.mxu0
      %v518 = vadd.f32 0.0, %v517
      %v519 = vpop.f32.mrf.mxu0
      %v520 = vadd.f32 0.0, %v519
      %v521 = vpop.f32.mrf.mxu0
      %v522 = vadd.f32 0.0, %v521
      %523 = vmatprep.mubr.bf16.mxu0 0
      %524 = vmatmul.mubr.bf16.gmra.mxu0 %v298
      %v525 = vpop.f32.mrf.mxu0
      %v526 = vadd.f32 0.0, %v525
      %v527 = vpop.f32.mrf.mxu0
      %v528 = vadd.f32 0.0, %v527
      %v529 = vpop.f32.mrf.mxu0
      %v530 = vadd.f32 0.0, %v529
      %v531 = vpop.f32.mrf.mxu0
      %v532 = vadd.f32 0.0, %v531
      %533 = vmatprep.mubr.bf16.mxu0 0
      %534 = vmatmul.mubr.bf16.gmra.mxu0 %v299
      %v535 = vpop.f32.mrf.mxu0
      %v536 = vadd.f32 0.0, %v535
      %v537 = vpop.f32.mrf.mxu0
      %v538 = vadd.f32 0.0, %v537
      %v539 = vpop.f32.mrf.mxu0
      %v540 = vadd.f32 0.0, %v539
      %v541 = vpop.f32.mrf.mxu0
      %v542 = vadd.f32 0.0, %v541
      %543 = vmatprep.mubr.bf16.mxu0 0
      %544 = vmatmul.mubr.bf16.gmra.mxu0 %v300
      %v545 = vpop.f32.mrf.mxu0
      %v546 = vadd.f32 0.0, %v545
      %v547 = vpop.f32.mrf.mxu0
      %v548 = vadd.f32 0.0, %v547
      %v549 = vpop.f32.mrf.mxu0
      %v550 = vadd.f32 0.0, %v549
      %v551 = vpop.f32.mrf.mxu0
      %v552 = vadd.f32 0.0, %v551
      %553 = vmatprep.mubr.bf16.mxu0 0
      %554 = vmatmul.mubr.bf16.gmra.mxu0 %v301
      %v555 = vpop.f32.mrf.mxu0
      %v556 = vadd.f32 0.0, %v555
      %v557 = vpop.f32.mrf.mxu0
      %v558 = vadd.f32 0.0, %v557
      %v559 = vpop.f32.mrf.mxu0
      %v560 = vadd.f32 0.0, %v559
      %v561 = vpop.f32.mrf.mxu0
      %v562 = vadd.f32 0.0, %v561
      %563 = vmatprep.mubr.bf16.mxu0 0
      %564 = vmatmul.mubr.bf16.gmra.mxu0 %v302
      %v565 = vpop.f32.mrf.mxu0
      %v566 = vadd.f32 0.0, %v565
      %v567 = vpop.f32.mrf.mxu0
      %v568 = vadd.f32 0.0, %v567
      %v569 = vpop.f32.mrf.mxu0
      %v570 = vadd.f32 0.0, %v569
      %v571 = vpop.f32.mrf.mxu0
      %v572 = vadd.f32 0.0, %v571
      %573 = vmatprep.mubr.bf16.mxu0 0
      %574 = vmatmul.mubr.bf16.gmra.mxu0 %v303
      %v575 = vpop.f32.mrf.mxu0
      %v576 = vadd.f32 0.0, %v575
      %v577 = vpop.f32.mrf.mxu0
      %v578 = vadd.f32 0.0, %v577
      %v579 = vpop.f32.mrf.mxu0
      %v580 = vadd.f32 0.0, %v579
      %v581 = vpop.f32.mrf.mxu0
      %v582 = vadd.f32 0.0, %v581
      %583 = vmatprep.mubr.bf16.mxu0 0
      %584 = vmatmul.mubr.bf16.gmra.mxu0 %v304
      %v585 = vpop.f32.mrf.mxu0
      %v586 = vadd.f32 0.0, %v585
      %v587 = vpop.f32.mrf.mxu0
      %v588 = vadd.f32 0.0, %v587
      %v589 = vpop.f32.mrf.mxu0
      %v590 = vadd.f32 0.0, %v589
      %v591 = vpop.f32.mrf.mxu0
      %v592 = vadd.f32 0.0, %v591
      %593 = vdwg.mxu0
      %v594 = vld [vmem:[%s2] ss:$2 sm:$0x3]
      %v596 = vlaneseq
      %v597 = vshrl.u32 %v596, 7
      %v598 = vsub.s32 0, %v597
      %v599 = vrot.slane %v594, %v598
      %v600 = vlaneseq
      %v601 = vshrl.u32 %v600, 7
      %v602 = vsub.s32 1, %v601
      %v603 = vrot.slane %v594, %v602
      %v606 = vmul.f32 %v436, %v599
      %v607 = vmul.f32 %v438, %v603
      %v608 = vmul.f32 %v440, %v599
      %v609 = vmul.f32 %v442, %v603
      %v610 = vmul.f32 %v446, %v599
      %v611 = vmul.f32 %v448, %v603
      %v612 = vmul.f32 %v450, %v599
      %v613 = vmul.f32 %v452, %v603
      %v614 = vmul.f32 %v456, %v599
      %v615 = vmul.f32 %v458, %v603
      %v616 = vmul.f32 %v460, %v599
      %v617 = vmul.f32 %v462, %v603
      %v618 = vmul.f32 %v466, %v599
      %v619 = vmul.f32 %v468, %v603
      %v620 = vmul.f32 %v470, %v599
      %v621 = vmul.f32 %v472, %v603
      %v622 = vmul.f32 %v476, %v599
      %v623 = vmul.f32 %v478, %v603
      %v624 = vmul.f32 %v480, %v599
      %v625 = vmul.f32 %v482, %v603
      %v626 = vmul.f32 %v486, %v599
      %v627 = vmul.f32 %v488, %v603
      %v628 = vmul.f32 %v490, %v599
      %v629 = vmul.f32 %v492, %v603
      %v630 = vmul.f32 %v496, %v599
      %v631 = vmul.f32 %v498, %v603
      %v632 = vmul.f32 %v500, %v599
      %v633 = vmul.f32 %v502, %v603
      %v634 = vmul.f32 %v506, %v599
      %v635 = vmul.f32 %v508, %v603
      %v636 = vmul.f32 %v510, %v599
      %v637 = vmul.f32 %v512, %v603
      %v638 = vmul.f32 %v516, %v599
      %v639 = vmul.f32 %v518, %v603
      %v640 = vmul.f32 %v520, %v599
      %v641 = vmul.f32 %v522, %v603
      %v642 = vmul.f32 %v526, %v599
      %v643 = vmul.f32 %v528, %v603
      %v644 = vmul.f32 %v530, %v599
      %v645 = vmul.f32 %v532, %v603
      %v646 = vmul.f32 %v536, %v599
      %v647 = vmul.f32 %v538, %v603
      %v648 = vmul.f32 %v540, %v599
      %v649 = vmul.f32 %v542, %v603
      %v650 = vmul.f32 %v546, %v599
      %v651 = vmul.f32 %v548, %v603
      %v652 = vmul.f32 %v550, %v599
      %v653 = vmul.f32 %v552, %v603
      %v654 = vmul.f32 %v556, %v599
      %v655 = vmul.f32 %v558, %v603
      %v656 = vmul.f32 %v560, %v599
      %v657 = vmul.f32 %v562, %v603
      %v658 = vmul.f32 %v566, %v599
      %v659 = vmul.f32 %v568, %v603
      %v660 = vmul.f32 %v570, %v599
      %v661 = vmul.f32 %v572, %v603
      %v662 = vmul.f32 %v576, %v599
      %v663 = vmul.f32 %v578, %v603
      %v664 = vmul.f32 %v580, %v599
      %v665 = vmul.f32 %v582, %v603
      %v666 = vmul.f32 %v586, %v599
      %v667 = vmul.f32 %v588, %v603
      %v668 = vmul.f32 %v590, %v599
      %v669 = vmul.f32 %v592, %v603
      %s670 = scalar_lea.vmem %s2, 1
      %v671 = vld [vmem:[%s670] ss:$2 sm:$0x3]
      %v673 = vlaneseq
      %v674 = vshrl.u32 %v673, 7
      %v675 = vsub.s32 0, %v674
      %v676 = vrot.slane %v671, %v675
      %v677 = vlaneseq
      %v678 = vshrl.u32 %v677, 7
      %v679 = vsub.s32 1, %v678
      %v680 = vrot.slane %v671, %v679
      %v683 = vadd.f32 %v606, %v676
      %v684 = vadd.f32 %v607, %v680
      %v685 = vadd.f32 %v608, %v676
      %v686 = vadd.f32 %v609, %v680
      %v687 = vadd.f32 %v610, %v676
      %v688 = vadd.f32 %v611, %v680
      %v689 = vadd.f32 %v612, %v676
      %v690 = vadd.f32 %v613, %v680
      %v691 = vadd.f32 %v614, %v676
      %v692 = vadd.f32 %v615, %v680
      %v693 = vadd.f32 %v616, %v676
      %v694 = vadd.f32 %v617, %v680
      %v695 = vadd.f32 %v618, %v676
      %v696 = vadd.f32 %v619, %v680
      %v697 = vadd.f32 %v620, %v676
      %v698 = vadd.f32 %v621, %v680
      %v699 = vadd.f32 %v622, %v676
      %v700 = vadd.f32 %v623, %v680
      %v701 = vadd.f32 %v624, %v676
      %v702 = vadd.f32 %v625, %v680
      %v703 = vadd.f32 %v626, %v676
      %v704 = vadd.f32 %v627, %v680
      %v705 = vadd.f32 %v628, %v676
      %v706 = vadd.f32 %v629, %v680
      %v707 = vadd.f32 %v630, %v676
      %v708 = vadd.f32 %v631, %v680
      %v709 = vadd.f32 %v632, %v676
      %v710 = vadd.f32 %v633, %v680
      %v711 = vadd.f32 %v634, %v676
      %v712 = vadd.f32 %v635, %v680
      %v713 = vadd.f32 %v636, %v676
      %v714 = vadd.f32 %v637, %v680
      %v715 = vadd.f32 %v638, %v676
      %v716 = vadd.f32 %v639, %v680
      %v717 = vadd.f32 %v640, %v676
      %v718 = vadd.f32 %v641, %v680
      %v719 = vadd.f32 %v642, %v676
      %v720 = vadd.f32 %v643, %v680
      %v721 = vadd.f32 %v644, %v676
      %v722 = vadd.f32 %v645, %v680
      %v723 = vadd.f32 %v646, %v676
      %v724 = vadd.f32 %v647, %v680
      %v725 = vadd.f32 %v648, %v676
      %v726 = vadd.f32 %v649, %v680
      %v727 = vadd.f32 %v650, %v676
      %v728 = vadd.f32 %v651, %v680
      %v729 = vadd.f32 %v652, %v676
      %v730 = vadd.f32 %v653, %v680
      %v731 = vadd.f32 %v654, %v676
      %v732 = vadd.f32 %v655, %v680
      %v733 = vadd.f32 %v656, %v676
      %v734 = vadd.f32 %v657, %v680
      %v735 = vadd.f32 %v658, %v676
      %v736 = vadd.f32 %v659, %v680
      %v737 = vadd.f32 %v660, %v676
      %v738 = vadd.f32 %v661, %v680
      %v739 = vadd.f32 %v662, %v676
      %v740 = vadd.f32 %v663, %v680
      %v741 = vadd.f32 %v664, %v676
      %v742 = vadd.f32 %v665, %v680
      %v743 = vadd.f32 %v666, %v676
      %v744 = vadd.f32 %v667, %v680
      %v745 = vadd.f32 %v668, %v676
      %v746 = vadd.f32 %v669, %v680
      %v747 = vsub.f32 0.0, %v683
      %v748 = vsub.f32 0.0, %v684
      %v749 = vsub.f32 0.0, %v685
      %v750 = vsub.f32 0.0, %v686
      %v751 = vsub.f32 0.0, %v687
      %v752 = vsub.f32 0.0, %v688
      %v753 = vsub.f32 0.0, %v689
      %v754 = vsub.f32 0.0, %v690
      %v755 = vsub.f32 0.0, %v691
      %v756 = vsub.f32 0.0, %v692
      %v757 = vsub.f32 0.0, %v693
      %v758 = vsub.f32 0.0, %v694
      %v759 = vsub.f32 0.0, %v695
      %v760 = vsub.f32 0.0, %v696
      %v761 = vsub.f32 0.0, %v697
      %v762 = vsub.f32 0.0, %v698
      %v763 = vsub.f32 0.0, %v699
      %v764 = vsub.f32 0.0, %v700
      %v765 = vsub.f32 0.0, %v701
      %v766 = vsub.f32 0.0, %v702
      %v767 = vsub.f32 0.0, %v703
      %v768 = vsub.f32 0.0, %v704
      %v769 = vsub.f32 0.0, %v705
      %v770 = vsub.f32 0.0, %v706
      %v771 = vsub.f32 0.0, %v707
      %v772 = vsub.f32 0.0, %v708
      %v773 = vsub.f32 0.0, %v709
      %v774 = vsub.f32 0.0, %v710
      %v775 = vsub.f32 0.0, %v711
      %v776 = vsub.f32 0.0, %v712
      %v777 = vsub.f32 0.0, %v713
      %v778 = vsub.f32 0.0, %v714
      %v779 = vsub.f32 0.0, %v715
      %v780 = vsub.f32 0.0, %v716
      %v781 = vsub.f32 0.0, %v717
      %v782 = vsub.f32 0.0, %v718
      %v783 = vsub.f32 0.0, %v719
      %v784 = vsub.f32 0.0, %v720
      %v785 = vsub.f32 0.0, %v721
      %v786 = vsub.f32 0.0, %v722
      %v787 = vsub.f32 0.0, %v723
      %v788 = vsub.f32 0.0, %v724
      %v789 = vsub.f32 0.0, %v725
      %v790 = vsub.f32 0.0, %v726
      %v791 = vsub.f32 0.0, %v727
      %v792 = vsub.f32 0.0, %v728
      %v793 = vsub.f32 0.0, %v729
      %v794 = vsub.f32 0.0, %v730
      %v795 = vsub.f32 0.0, %v731
      %v796 = vsub.f32 0.0, %v732
      %v797 = vsub.f32 0.0, %v733
      %v798 = vsub.f32 0.0, %v734
      %v799 = vsub.f32 0.0, %v735
      %v800 = vsub.f32 0.0, %v736
      %v801 = vsub.f32 0.0, %v737
      %v802 = vsub.f32 0.0, %v738
      %v803 = vsub.f32 0.0, %v739
      %v804 = vsub.f32 0.0, %v740
      %v805 = vsub.f32 0.0, %v741
      %v806 = vsub.f32 0.0, %v742
      %v807 = vsub.f32 0.0, %v743
      %v808 = vsub.f32 0.0, %v744
      %v809 = vsub.f32 0.0, %v745
      %v810 = vsub.f32 0.0, %v746
      %v811 = vmul.f32 %v747, 1.442695
      %v812 = vpow.pop %v811
      %v813 = vmul.f32 %v748, 1.442695
      %v814 = vpow.pop %v813
      %v815 = vmul.f32 %v749, 1.442695
      %v816 = vpow.pop %v815
      %v817 = vmul.f32 %v750, 1.442695
      %v818 = vpow.pop %v817
      %v819 = vmul.f32 %v751, 1.442695
      %v820 = vpow.pop %v819
      %v821 = vmul.f32 %v752, 1.442695
      %v822 = vpow.pop %v821
      %v823 = vmul.f32 %v753, 1.442695
      %v824 = vpow.pop %v823
      %v825 = vmul.f32 %v754, 1.442695
      %v826 = vpow.pop %v825
      %v827 = vmul.f32 %v755, 1.442695
      %v828 = vpow.pop %v827
      %v829 = vmul.f32 %v756, 1.442695
      %v830 = vpow.pop %v829
      %v831 = vmul.f32 %v757, 1.442695
      %v832 = vpow.pop %v831
      %v833 = vmul.f32 %v758, 1.442695
      %v834 = vpow.pop %v833
      %v835 = vmul.f32 %v759, 1.442695
      %v836 = vpow.pop %v835
      %v837 = vmul.f32 %v760, 1.442695
      %v838 = vpow.pop %v837
      %v839 = vmul.f32 %v761, 1.442695
      %v840 = vpow.pop %v839
      %v841 = vmul.f32 %v762, 1.442695
      %v842 = vpow.pop %v841
      %v843 = vmul.f32 %v763, 1.442695
      %v844 = vpow.pop %v843
      %v845 = vmul.f32 %v764, 1.442695
      %v846 = vpow.pop %v845
      %v847 = vmul.f32 %v765, 1.442695
      %v848 = vpow.pop %v847
      %v849 = vmul.f32 %v766, 1.442695
      %v850 = vpow.pop %v849
      %v851 = vmul.f32 %v767, 1.442695
      %v852 = vpow.pop %v851
      %v853 = vmul.f32 %v768, 1.442695
      %v854 = vpow.pop %v853
      %v855 = vmul.f32 %v769, 1.442695
      %v856 = vpow.pop %v855
      %v857 = vmul.f32 %v770, 1.442695
      %v858 = vpow.pop %v857
      %v859 = vmul.f32 %v771, 1.442695
      %v860 = vpow.pop %v859
      %v861 = vmul.f32 %v772, 1.442695
      %v862 = vpow.pop %v861
      %v863 = vmul.f32 %v773, 1.442695
      %v864 = vpow.pop %v863
      %v865 = vmul.f32 %v774, 1.442695
      %v866 = vpow.pop %v865
      %v867 = vmul.f32 %v775, 1.442695
      %v868 = vpow.pop %v867
      %v869 = vmul.f32 %v776, 1.442695
      %v870 = vpow.pop %v869
      %v871 = vmul.f32 %v777, 1.442695
      %v872 = vpow.pop %v871
      %v873 = vmul.f32 %v778, 1.442695
      %v874 = vpow.pop %v873
      %v875 = vmul.f32 %v779, 1.442695
      %v876 = vpow.pop %v875
      %v877 = vmul.f32 %v780, 1.442695
      %v878 = vpow.pop %v877
      %v879 = vmul.f32 %v781, 1.442695
      %v880 = vpow.pop %v879
      %v881 = vmul.f32 %v782, 1.442695
      %v882 = vpow.pop %v881
      %v883 = vmul.f32 %v783, 1.442695
      %v884 = vpow.pop %v883
      %v885 = vmul.f32 %v784, 1.442695
      %v886 = vpow.pop %v885
      %v887 = vmul.f32 %v785, 1.442695
      %v888 = vpow.pop %v887
      %v889 = vmul.f32 %v786, 1.442695
      %v890 = vpow.pop %v889
      %v891 = vmul.f32 %v787, 1.442695
      %v892 = vpow.pop %v891
      %v893 = vmul.f32 %v788, 1.442695
      %v894 = vpow.pop %v893
      %v895 = vmul.f32 %v789, 1.442695
      %v896 = vpow.pop %v895
      %v897 = vmul.f32 %v790, 1.442695
      %v898 = vpow.pop %v897
      %v899 = vmul.f32 %v791, 1.442695
      %v900 = vpow.pop %v899
      %v901 = vmul.f32 %v792, 1.442695
      %v902 = vpow.pop %v901
      %v903 = vmul.f32 %v793, 1.442695
      %v904 = vpow.pop %v903
      %v905 = vmul.f32 %v794, 1.442695
      %v906 = vpow.pop %v905
      %v907 = vmul.f32 %v795, 1.442695
      %v908 = vpow.pop %v907
      %v909 = vmul.f32 %v796, 1.442695
      %v910 = vpow.pop %v909
      %v911 = vmul.f32 %v797, 1.442695
      %v912 = vpow.pop %v911
      %v913 = vmul.f32 %v798, 1.442695
      %v914 = vpow.pop %v913
      %v915 = vmul.f32 %v799, 1.442695
      %v916 = vpow.pop %v915
      %v917 = vmul.f32 %v800, 1.442695
      %v918 = vpow.pop %v917
      %v919 = vmul.f32 %v801, 1.442695
      %v920 = vpow.pop %v919
      %v921 = vmul.f32 %v802, 1.442695
      %v922 = vpow.pop %v921
      %v923 = vmul.f32 %v803, 1.442695
      %v924 = vpow.pop %v923
      %v925 = vmul.f32 %v804, 1.442695
      %v926 = vpow.pop %v925
      %v927 = vmul.f32 %v805, 1.442695
      %v928 = vpow.pop %v927
      %v929 = vmul.f32 %v806, 1.442695
      %v930 = vpow.pop %v929
      %v931 = vmul.f32 %v807, 1.442695
      %v932 = vpow.pop %v931
      %v933 = vmul.f32 %v808, 1.442695
      %v934 = vpow.pop %v933
      %v935 = vmul.f32 %v809, 1.442695
      %v936 = vpow.pop %v935
      %v937 = vmul.f32 %v810, 1.442695
      %v938 = vpow.pop %v937
      %v939 = vadd.f32 %v812, 1.0
      %v940 = vadd.f32 %v814, 1.0
      %v941 = vadd.f32 %v816, 1.0
      %v942 = vadd.f32 %v818, 1.0
      %v943 = vadd.f32 %v820, 1.0
      %v944 = vadd.f32 %v822, 1.0
      %v945 = vadd.f32 %v824, 1.0
      %v946 = vadd.f32 %v826, 1.0
      %v947 = vadd.f32 %v828, 1.0
      %v948 = vadd.f32 %v830, 1.0
      %v949 = vadd.f32 %v832, 1.0
      %v950 = vadd.f32 %v834, 1.0
      %v951 = vadd.f32 %v836, 1.0
      %v952 = vadd.f32 %v838, 1.0
      %v953 = vadd.f32 %v840, 1.0
      %v954 = vadd.f32 %v842, 1.0
      %v955 = vadd.f32 %v844, 1.0
      %v956 = vadd.f32 %v846, 1.0
      %v957 = vadd.f32 %v848, 1.0
      %v958 = vadd.f32 %v850, 1.0
      %v959 = vadd.f32 %v852, 1.0
      %v960 = vadd.f32 %v854, 1.0
      %v961 = vadd.f32 %v856, 1.0
      %v962 = vadd.f32 %v858, 1.0
      %v963 = vadd.f32 %v860, 1.0
      %v964 = vadd.f32 %v862, 1.0
      %v965 = vadd.f32 %v864, 1.0
      %v966 = vadd.f32 %v866, 1.0
      %v967 = vadd.f32 %v868, 1.0
      %v968 = vadd.f32 %v870, 1.0
      %v969 = vadd.f32 %v872, 1.0
      %v970 = vadd.f32 %v874, 1.0
      %v971 = vadd.f32 %v876, 1.0
      %v972 = vadd.f32 %v878, 1.0
      %v973 = vadd.f32 %v880, 1.0
      %v974 = vadd.f32 %v882, 1.0
      %v975 = vadd.f32 %v884, 1.0
      %v976 = vadd.f32 %v886, 1.0
      %v977 = vadd.f32 %v888, 1.0
      %v978 = vadd.f32 %v890, 1.0
      %v979 = vadd.f32 %v892, 1.0
      %v980 = vadd.f32 %v894, 1.0
      %v981 = vadd.f32 %v896, 1.0
      %v982 = vadd.f32 %v898, 1.0
      %v983 = vadd.f32 %v900, 1.0
      %v984 = vadd.f32 %v902, 1.0
      %v985 = vadd.f32 %v904, 1.0
      %v986 = vadd.f32 %v906, 1.0
      %v987 = vadd.f32 %v908, 1.0
      %v988 = vadd.f32 %v910, 1.0
      %v989 = vadd.f32 %v912, 1.0
      %v990 = vadd.f32 %v914, 1.0
      %v991 = vadd.f32 %v916, 1.0
      %v992 = vadd.f32 %v918, 1.0
      %v993 = vadd.f32 %v920, 1.0
      %v994 = vadd.f32 %v922, 1.0
      %v995 = vadd.f32 %v924, 1.0
      %v996 = vadd.f32 %v926, 1.0
      %v997 = vadd.f32 %v928, 1.0
      %v998 = vadd.f32 %v930, 1.0
      %v999 = vadd.f32 %v932, 1.0
      %v1000 = vadd.f32 %v934, 1.0
      %v1001 = vadd.f32 %v936, 1.0
      %v1002 = vadd.f32 %v938, 1.0
      %v1003 = vrcp.pop %v939
      %v1004 = vrcp.pop %v940
      %v1005 = vrcp.pop %v941
      %v1006 = vrcp.pop %v942
      %v1007 = vrcp.pop %v943
      %v1008 = vrcp.pop %v944
      %v1009 = vrcp.pop %v945
      %v1010 = vrcp.pop %v946
      %v1011 = vrcp.pop %v947
      %v1012 = vrcp.pop %v948
      %v1013 = vrcp.pop %v949
      %v1014 = vrcp.pop %v950
      %v1015 = vrcp.pop %v951
      %v1016 = vrcp.pop %v952
      %v1017 = vrcp.pop %v953
      %v1018 = vrcp.pop %v954
      %v1019 = vrcp.pop %v955
      %v1020 = vrcp.pop %v956
      %v1021 = vrcp.pop %v957
      %v1022 = vrcp.pop %v958
      %v1023 = vrcp.pop %v959
      %v1024 = vrcp.pop %v960
      %v1025 = vrcp.pop %v961
      %v1026 = vrcp.pop %v962
      %v1027 = vrcp.pop %v963
      %v1028 = vrcp.pop %v964
      %v1029 = vrcp.pop %v965
      %v1030 = vrcp.pop %v966
      %v1031 = vrcp.pop %v967
      %v1032 = vrcp.pop %v968
      %v1033 = vrcp.pop %v969
      %v1034 = vrcp.pop %v970
      %v1035 = vrcp.pop %v971
      %v1036 = vrcp.pop %v972
      %v1037 = vrcp.pop %v973
      %v1038 = vrcp.pop %v974
      %v1039 = vrcp.pop %v975
      %v1040 = vrcp.pop %v976
      %v1041 = vrcp.pop %v977
      %v1042 = vrcp.pop %v978
      %v1043 = vrcp.pop %v979
      %v1044 = vrcp.pop %v980
      %v1045 = vrcp.pop %v981
      %v1046 = vrcp.pop %v982
      %v1047 = vrcp.pop %v983
      %v1048 = vrcp.pop %v984
      %v1049 = vrcp.pop %v985
      %v1050 = vrcp.pop %v986
      %v1051 = vrcp.pop %v987
      %v1052 = vrcp.pop %v988
      %v1053 = vrcp.pop %v989
      %v1054 = vrcp.pop %v990
      %v1055 = vrcp.pop %v991
      %v1056 = vrcp.pop %v992
      %v1057 = vrcp.pop %v993
      %v1058 = vrcp.pop %v994
      %v1059 = vrcp.pop %v995
      %v1060 = vrcp.pop %v996
      %v1061 = vrcp.pop %v997
      %v1062 = vrcp.pop %v998
      %v1063 = vrcp.pop %v999
      %v1064 = vrcp.pop %v1000
      %v1065 = vrcp.pop %v1001
      %v1066 = vrcp.pop %v1002
      %v1067 = vmul.f32 %v683, %v1003
      %v1068 = vmul.f32 %v684, %v1004
      %v1069 = vmul.f32 %v685, %v1005
      %v1070 = vmul.f32 %v686, %v1006
      %v1071 = vmul.f32 %v687, %v1007
      %v1072 = vmul.f32 %v688, %v1008
      %v1073 = vmul.f32 %v689, %v1009
      %v1074 = vmul.f32 %v690, %v1010
      %v1075 = vmul.f32 %v691, %v1011
      %v1076 = vmul.f32 %v692, %v1012
      %v1077 = vmul.f32 %v693, %v1013
      %v1078 = vmul.f32 %v694, %v1014
      %v1079 = vmul.f32 %v695, %v1015
      %v1080 = vmul.f32 %v696, %v1016
      %v1081 = vmul.f32 %v697, %v1017
      %v1082 = vmul.f32 %v698, %v1018
      %v1083 = vmul.f32 %v699, %v1019
      %v1084 = vmul.f32 %v700, %v1020
      %v1085 = vmul.f32 %v701, %v1021
      %v1086 = vmul.f32 %v702, %v1022
      %v1087 = vmul.f32 %v703, %v1023
      %v1088 = vmul.f32 %v704, %v1024
      %v1089 = vmul.f32 %v705, %v1025
      %v1090 = vmul.f32 %v706, %v1026
      %v1091 = vmul.f32 %v707, %v1027
      %v1092 = vmul.f32 %v708, %v1028
      %v1093 = vmul.f32 %v709, %v1029
      %v1094 = vmul.f32 %v710, %v1030
      %v1095 = vmul.f32 %v711, %v1031
      %v1096 = vmul.f32 %v712, %v1032
      %v1097 = vmul.f32 %v713, %v1033
      %v1098 = vmul.f32 %v714, %v1034
      %v1099 = vmul.f32 %v715, %v1035
      %v1100 = vmul.f32 %v716, %v1036
      %v1101 = vmul.f32 %v717, %v1037
      %v1102 = vmul.f32 %v718, %v1038
      %v1103 = vmul.f32 %v719, %v1039
      %v1104 = vmul.f32 %v720, %v1040
      %v1105 = vmul.f32 %v721, %v1041
      %v1106 = vmul.f32 %v722, %v1042
      %v1107 = vmul.f32 %v723, %v1043
      %v1108 = vmul.f32 %v724, %v1044
      %v1109 = vmul.f32 %v725, %v1045
      %v1110 = vmul.f32 %v726, %v1046
      %v1111 = vmul.f32 %v727, %v1047
      %v1112 = vmul.f32 %v728, %v1048
      %v1113 = vmul.f32 %v729, %v1049
      %v1114 = vmul.f32 %v730, %v1050
      %v1115 = vmul.f32 %v731, %v1051
      %v1116 = vmul.f32 %v732, %v1052
      %v1117 = vmul.f32 %v733, %v1053
      %v1118 = vmul.f32 %v734, %v1054
      %v1119 = vmul.f32 %v735, %v1055
      %v1120 = vmul.f32 %v736, %v1056
      %v1121 = vmul.f32 %v737, %v1057
      %v1122 = vmul.f32 %v738, %v1058
      %v1123 = vmul.f32 %v739, %v1059
      %v1124 = vmul.f32 %v740, %v1060
      %v1125 = vmul.f32 %v741, %v1061
      %v1126 = vmul.f32 %v742, %v1062
      %v1127 = vmul.f32 %v743, %v1063
      %v1128 = vmul.f32 %v744, %v1064
      %v1129 = vmul.f32 %v745, %v1065
      %v1130 = vmul.f32 %v746, %v1066
      %v1131 = vpack.c.bf16 %v1069, %v1067
      %v1132 = vpack.c.bf16 %v1070, %v1068
      %v1133 = vpack.c.bf16 %v1073, %v1071
      %v1134 = vpack.c.bf16 %v1074, %v1072
      %v1135 = vpack.c.bf16 %v1077, %v1075
      %v1136 = vpack.c.bf16 %v1078, %v1076
      %v1137 = vpack.c.bf16 %v1081, %v1079
      %v1138 = vpack.c.bf16 %v1082, %v1080
      %v1139 = vpack.c.bf16 %v1085, %v1083
      %v1140 = vpack.c.bf16 %v1086, %v1084
      %v1141 = vpack.c.bf16 %v1089, %v1087
      %v1142 = vpack.c.bf16 %v1090, %v1088
      %v1143 = vpack.c.bf16 %v1093, %v1091
      %v1144 = vpack.c.bf16 %v1094, %v1092
      %v1145 = vpack.c.bf16 %v1097, %v1095
      %v1146 = vpack.c.bf16 %v1098, %v1096
      %v1147 = vpack.c.bf16 %v1101, %v1099
      %v1148 = vpack.c.bf16 %v1102, %v1100
      %v1149 = vpack.c.bf16 %v1105, %v1103
      %v1150 = vpack.c.bf16 %v1106, %v1104
      %v1151 = vpack.c.bf16 %v1109, %v1107
      %v1152 = vpack.c.bf16 %v1110, %v1108
      %v1153 = vpack.c.bf16 %v1113, %v1111
      %v1154 = vpack.c.bf16 %v1114, %v1112
      %v1155 = vpack.c.bf16 %v1117, %v1115
      %v1156 = vpack.c.bf16 %v1118, %v1116
      %v1157 = vpack.c.bf16 %v1121, %v1119
      %v1158 = vpack.c.bf16 %v1122, %v1120
      %v1159 = vpack.c.bf16 %v1125, %v1123
      %v1160 = vpack.c.bf16 %v1126, %v1124
      %v1161 = vpack.c.bf16 %v1129, %v1127
      %v1162 = vpack.c.bf16 %v1130, %v1128
      %v1195 = vunpack.c.l.b16 %v1131
      %v1196 = vunpack.c.l.b16 %v1132
      %v1197 = vunpack.c.h.b16 %v1131
      %v1198 = vunpack.c.h.b16 %v1132
      %v1199 = vunpack.c.l.b16 %v1133
      %v1200 = vunpack.c.l.b16 %v1134
      %v1201 = vunpack.c.h.b16 %v1133
      %v1202 = vunpack.c.h.b16 %v1134
      %v1203 = vunpack.c.l.b16 %v1135
      %v1204 = vunpack.c.l.b16 %v1136
      %v1205 = vunpack.c.h.b16 %v1135
      %v1206 = vunpack.c.h.b16 %v1136
      %v1207 = vunpack.c.l.b16 %v1137
      %v1208 = vunpack.c.l.b16 %v1138
      %v1209 = vunpack.c.h.b16 %v1137
      %v1210 = vunpack.c.h.b16 %v1138
      %v1211 = vunpack.c.l.b16 %v1139
      %v1212 = vunpack.c.l.b16 %v1140
      %v1213 = vunpack.c.h.b16 %v1139
      %v1214 = vunpack.c.h.b16 %v1140
      %v1215 = vunpack.c.l.b16 %v1141
      %v1216 = vunpack.c.l.b16 %v1142
      %v1217 = vunpack.c.h.b16 %v1141
      %v1218 = vunpack.c.h.b16 %v1142
      %v1219 = vunpack.c.l.b16 %v1143
      %v1220 = vunpack.c.l.b16 %v1144
      %v1221 = vunpack.c.h.b16 %v1143
      %v1222 = vunpack.c.h.b16 %v1144
      %v1223 = vunpack.c.l.b16 %v1145
      %v1224 = vunpack.c.l.b16 %v1146
      %v1225 = vunpack.c.h.b16 %v1145
      %v1226 = vunpack.c.h.b16 %v1146
      %v1227 = vunpack.c.l.b16 %v1147
      %v1228 = vunpack.c.l.b16 %v1148
      %v1229 = vunpack.c.h.b16 %v1147
      %v1230 = vunpack.c.h.b16 %v1148
      %v1231 = vunpack.c.l.b16 %v1149
      %v1232 = vunpack.c.l.b16 %v1150
      %v1233 = vunpack.c.h.b16 %v1149
      %v1234 = vunpack.c.h.b16 %v1150
      %v1235 = vunpack.c.l.b16 %v1151
      %v1236 = vunpack.c.l.b16 %v1152
      %v1237 = vunpack.c.h.b16 %v1151
      %v1238 = vunpack.c.h.b16 %v1152
      %v1239 = vunpack.c.l.b16 %v1153
      %v1240 = vunpack.c.l.b16 %v1154
      %v1241 = vunpack.c.h.b16 %v1153
      %v1242 = vunpack.c.h.b16 %v1154
      %v1243 = vunpack.c.l.b16 %v1155
      %v1244 = vunpack.c.l.b16 %v1156
      %v1245 = vunpack.c.h.b16 %v1155
      %v1246 = vunpack.c.h.b16 %v1156
      %v1247 = vunpack.c.l.b16 %v1157
      %v1248 = vunpack.c.l.b16 %v1158
      %v1249 = vunpack.c.h.b16 %v1157
      %v1250 = vunpack.c.h.b16 %v1158
      %v1251 = vunpack.c.l.b16 %v1159
      %v1252 = vunpack.c.l.b16 %v1160
      %v1253 = vunpack.c.h.b16 %v1159
      %v1254 = vunpack.c.h.b16 %v1160
      %v1255 = vunpack.c.l.b16 %v1161
      %v1256 = vunpack.c.l.b16 %v1162
      %v1257 = vunpack.c.h.b16 %v1161
      %v1258 = vunpack.c.h.b16 %v1162
      %v1259 = vpack.c.b16 %v1196, %v1195
      %v1260 = vpack.c.b16 %v1198, %v1197
      %v1261 = vpack.c.b16 %v1200, %v1199
      %v1262 = vpack.c.b16 %v1202, %v1201
      %v1263 = vpack.c.b16 %v1204, %v1203
      %v1264 = vpack.c.b16 %v1206, %v1205
      %v1265 = vpack.c.b16 %v1208, %v1207
      %v1266 = vpack.c.b16 %v1210, %v1209
      %v1267 = vpack.c.b16 %v1212, %v1211
      %v1268 = vpack.c.b16 %v1214, %v1213
      %v1269 = vpack.c.b16 %v1216, %v1215
      %v1270 = vpack.c.b16 %v1218, %v1217
      %v1271 = vpack.c.b16 %v1220, %v1219
      %v1272 = vpack.c.b16 %v1222, %v1221
      %v1273 = vpack.c.b16 %v1224, %v1223
      %v1274 = vpack.c.b16 %v1226, %v1225
      %v1275 = vpack.c.b16 %v1228, %v1227
      %v1276 = vpack.c.b16 %v1230, %v1229
      %v1277 = vpack.c.b16 %v1232, %v1231
      %v1278 = vpack.c.b16 %v1234, %v1233
      %v1279 = vpack.c.b16 %v1236, %v1235
      %v1280 = vpack.c.b16 %v1238, %v1237
      %v1281 = vpack.c.b16 %v1240, %v1239
      %v1282 = vpack.c.b16 %v1242, %v1241
      %v1283 = vpack.c.b16 %v1244, %v1243
      %v1284 = vpack.c.b16 %v1246, %v1245
      %v1285 = vpack.c.b16 %v1248, %v1247
      %v1286 = vpack.c.b16 %v1250, %v1249
      %v1287 = vpack.c.b16 %v1252, %v1251
      %v1288 = vpack.c.b16 %v1254, %v1253
      %v1289 = vpack.c.b16 %v1256, %v1255
      %v1290 = vpack.c.b16 %v1258, %v1257
      %1323 = vst [vmem:[%s174] sm:$0xff] %v1259
      %1324 = vst [vmem:[%s174 + $0x8] sm:$0xff] %v1260
      %1325 = vst [vmem:[%s174 + $0x10] sm:$0xff] %v1261
      %1326 = vst [vmem:[%s174 + $0x18] sm:$0xff] %v1262
      %1327 = vst [vmem:[%s174 + $0x20] sm:$0xff] %v1263
      %1328 = vst [vmem:[%s174 + $0x28] sm:$0xff] %v1264
      %1329 = vst [vmem:[%s174 + $0x30] sm:$0xff] %v1265
      %1330 = vst [vmem:[%s174 + $0x38] sm:$0xff] %v1266
      %1331 = vst [vmem:[%s174 + $0x40] sm:$0xff] %v1267
      %1332 = vst [vmem:[%s174 + $0x48] sm:$0xff] %v1268
      %1333 = vst [vmem:[%s174 + $0x50] sm:$0xff] %v1269
      %1334 = vst [vmem:[%s174 + $0x58] sm:$0xff] %v1270
      %1335 = vst [vmem:[%s174 + $0x60] sm:$0xff] %v1271
      %1336 = vst [vmem:[%s174 + $0x68] sm:$0xff] %v1272
      %1337 = vst [vmem:[%s174 + $0x70] sm:$0xff] %v1273
      %1338 = vst [vmem:[%s174 + $0x78] sm:$0xff] %v1274
      %1339 = vst [vmem:[%s174 + $0x80] sm:$0xff] %v1275
      %1340 = vst [vmem:[%s174 + $0x88] sm:$0xff] %v1276
      %1341 = vst [vmem:[%s174 + $0x90] sm:$0xff] %v1277
      %1342 = vst [vmem:[%s174 + $0x98] sm:$0xff] %v1278
      %1343 = vst [vmem:[%s174 + $0xa0] sm:$0xff] %v1279
      %1344 = vst [vmem:[%s174 + $0xa8] sm:$0xff] %v1280
      %1345 = vst [vmem:[%s174 + $0xb0] sm:$0xff] %v1281
      %1346 = vst [vmem:[%s174 + $0xb8] sm:$0xff] %v1282
      %1347 = vst [vmem:[%s174 + $0xc0] sm:$0xff] %v1283
      %1348 = vst [vmem:[%s174 + $0xc8] sm:$0xff] %v1284
      %1349 = vst [vmem:[%s174 + $0xd0] sm:$0xff] %v1285
      %1350 = vst [vmem:[%s174 + $0xd8] sm:$0xff] %v1286
      %1351 = vst [vmem:[%s174 + $0xe0] sm:$0xff] %v1287
      %1352 = vst [vmem:[%s174 + $0xe8] sm:$0xff] %v1288
      %1353 = vst [vmem:[%s174 + $0xf0] sm:$0xff] %v1289
      %1354 = vst [vmem:[%s174 + $0xf8] sm:$0xff] %v1290
      %s1355 = smul.u32 32, %s14
      %p1356 = scmp.lt.s32.totalorder %s1355, 63
      %s1357 = scalar_select %p1356, %s1355, 63
      %s1358 = smul.addr %s1357, 2
      %s1359 = smul.addr %s1358, 4
      %s1360 = scalar_lea.vmem %s3, %s1359
      // Predicated region
      $region33: #{c3_forward_nchw.4} parent=31 // pred_check
        %p1361 = pneg %p100
      $region34: #{c3_forward_nchw.4} parent=31 // pred_check_branch
        %1363 = sbr.rel (%p1361) target = $region36
      $region35: #{c3_forward_nchw.4} parent=31 // pred_region
        %s1364 = smul.u32 32, %s14
      $region36: #{c3_forward_nchw.4} parent=31 // pred_fallthru
        _
    $region32: #{c3_forward_nchw.4} parent=5 // pred_fallthru
      _
    %p1365 = scmp.le.s32.totalorder 2, %s9
    // Predicated region
    $region37: #{c3_forward_nchw.4} parent=5 // pred_check
      %p1366 = pneg %p1365
    $region38: #{c3_forward_nchw.4} parent=5 // pred_check_branch
      %1368 = sbr.rel (%p1366) target = $region40
    $region39: #{c3_forward_nchw.4} parent=5 // pred_region
      %s1369 = ssub.s32 %s9, 2
      // Predicated region
      $region41: #{c3_forward_nchw.4} parent=39 // pred_check
        %p1370 = pneg %p106
      $region42: #{c3_forward_nchw.4} parent=39 // pred_check_branch
        %1372 = sbr.rel (%p1370) target = $region44
      $region43: #{c3_forward_nchw.4} parent=39 // pred_region
        %s1373 = smul.u32 32, %s15
        %p1374 = scmp.lt.s32.totalorder %s1373, 63
        %s1375 = scalar_select %p1374, %s1373, 63
        %s1376 = smul.addr %s1375, 2
        %s1377 = smul.addr %s1376, 4
        %s1378 = scalar_lea.vmem %s3, %s1377
      $region44: #{c3_forward_nchw.4} parent=39 // pred_fallthru
        _
    $region40: #{c3_forward_nchw.4} parent=5 // pred_fallthru
      _
  $region6: #{c3_forward_nchw.4} parent=0 // loop_footer
    %s13 = sadd.s32 1, %s9
  $region7: #{c3_forward_nchw.4} parent=0 // loop_footer_branch
    %8 = sbr.rel target = $region3
  $region8: #{c3_forward_nchw.4} parent=0 // loop_exit
    _

// kernel: c3_forward_nchw.5
$region0: #{c3_forward_nchw.5}
  #allocation0 [shape = 'u32[]', space=smem, size = 0x4, offset = 0x4, fixed_abs, tag = 'smem constant byte address 0x4 - core index']
  #allocation1 [shape = 'u32[144,128]{1,0:T(1,128)}', space=vmem, size = 0x12000, scoped, tag = 'internal scratch']
  %s0 = inlined_call_operand.vmem [shape: bf16[512,256], index: 0, kind: input, shape index: {}]
  %s1 = inlined_call_operand.vmem [shape: bf16[128,128], index: 1, kind: input, shape index: {}]
  %s2 = inlined_call_operand.vmem [shape: f32[2,128], index: 2, kind: input, shape index: {}]
  %s3 = inlined_call_operand.vmem [shape: bf16[512,128], index: 3, kind: output, shape index: {}]
  %s4 = sld [smem:[#allocation0]]
  $region86: #{c3_forward_nchw.5} parent=0
    _
  %s6 = ssub.s32 1, %s4
  %s7 = scalar_select 0, %s6, %s4
  $region1: #{c3_forward_nchw.5} parent=0
    #allocation2 [shape = 'u8[131072]{0}', space=vmem, size = 0x20000, scoped, tag = 'input window, operand 0']
    loop: start=0, step=1, limit=4
    $region2: #{c3_forward_nchw.5} parent=1 // loop_pre_header
      _
    $region3: #{c3_forward_nchw.5} parent=1 // loop_header
      %s9 = sphi 0, %s13
      %p10 = scmp.ge.s32.totalorder %s9, 4
      %s19 = sphi 0, %s21
      %s22 = sphi 0, %s19
      %s23 = sphi 0, %s22
      %s39 = sphi 0, %s23
      %s43 = sphi 0, %s43
      %s45 = sphi 0, %s43
      %s46 = sphi 0, %s45
      %s60 = sphi 0, %s46
      %s64 = sphi 0, %s64
      %s66 = sphi 0, %s64
      %s67 = sphi 0, %s66
      %s81 = sphi 0, %s67
      %s87 = sphi 0, %s89
      %s90 = sphi 0, %s87
      %s91 = sphi 0, %s90
      %s107 = sphi 0, %s91
    $region4: #{c3_forward_nchw.5} parent=1 // loop_header_branch
      %12 = sbr.rel (%p10) target = $region8
    $region5: #{c3_forward_nchw.5} parent=1 // loop_body
      %s14 = ssub.s32 %s9, 1
      %s15 = ssub.s32 %s9, 2
      %s16 = sadd.s32 %s9, 1
      %s17 = ssub.s32 %s9, %s16
      %p18 = scmp.eq.s32.totalorder %s17, 0
      %s20 = sadd.s32 %s19, 1
      %s21 = scalar_select %p18, %s19, %s20
      %p24 = pneg %p18
      %p25 = scmp.eq.s32.totalorder %s9, 1
      %p26 = por %p24, %p25
      %p27 = scmp.ne.s32.totalorder %s19, %s22
      %p28 = scmp.eq.s32.totalorder %s9, 0
      %p29 = por %p27, %p28
      %p30 = scmp.ne.s32.totalorder %s19, %s22
      %p31 = scmp.eq.s32.totalorder %s14, 1
      %p32 = por %p30, %p31
      %p33 = scmp.ne.s32.totalorder %s22, %s23
      %p34 = scmp.eq.s32.totalorder %s14, 0
      %p35 = por %p33, %p34
      %p36 = scmp.ne.s32.totalorder %s22, %s23
      %p37 = scmp.eq.s32.totalorder %s15, 1
      %p38 = por %p36, %p37
      %p40 = scmp.ne.s32.totalorder %s23, %s39
      %p41 = scmp.eq.s32.totalorder %s15, 0
      %p42 = por %p40, %p41
      %s44 = sadd.s32 %s43, 1
      %p47 = scmp.eq.s32.totalorder %s9, 1
      %p48 = scmp.ne.s32.totalorder %s43, %s45
      %p49 = scmp.eq.s32.totalorder %s9, 0
      %p50 = por %p48, %p49
      %p51 = scmp.ne.s32.totalorder %s43, %s45
      %p52 = scmp.eq.s32.totalorder %s14, 1
      %p53 = por %p51, %p52
      %p54 = scmp.ne.s32.totalorder %s45, %s46
      %p55 = scmp.eq.s32.totalorder %s14, 0
      %p56 = por %p54, %p55
      %p57 = scmp.ne.s32.totalorder %s45, %s46
      %p58 = scmp.eq.s32.totalorder %s15, 1
      %p59 = por %p57, %p58
      %p61 = scmp.ne.s32.totalorder %s46, %s60
      %p62 = scmp.eq.s32.totalorder %s15, 0
      %p63 = por %p61, %p62
      %s65 = sadd.s32 %s64, 1
      %p68 = scmp.eq.s32.totalorder %s9, 1
      %p69 = scmp.ne.s32.totalorder %s64, %s66
      %p70 = scmp.eq.s32.totalorder %s9, 0
      %p71 = por %p69, %p70
      %p72 = scmp.ne.s32.totalorder %s64, %s66
      %p73 = scmp.eq.s32.totalorder %s14, 1
      %p74 = por %p72, %p73
      %p75 = scmp.ne.s32.totalorder %s66, %s67
      %p76 = scmp.eq.s32.totalorder %s14, 0
      %p77 = por %p75, %p76
      %p78 = scmp.ne.s32.totalorder %s66, %s67
      %p79 = scmp.eq.s32.totalorder %s15, 1
      %p80 = por %p78, %p79
      %p82 = scmp.ne.s32.totalorder %s67, %s81
      %p83 = scmp.eq.s32.totalorder %s15, 0
      %p84 = por %p82, %p83
      %s85 = ssub.s32 %s9, %s16
      %p86 = scmp.eq.s32.totalorder %s85, 0
      %s88 = sadd.s32 %s87, 1
      %s89 = scalar_select %p86, %s87, %s88
      %p92 = pneg %p86
      %p93 = scmp.eq.s32.totalorder %s9, 1
      %p94 = por %p92, %p93
      %p95 = scmp.ne.s32.totalorder %s87, %s90
      %p96 = scmp.eq.s32.totalorder %s9, 0
      %p97 = por %p95, %p96
      %p98 = scmp.ne.s32.totalorder %s87, %s90
      %p99 = scmp.eq.s32.totalorder %s14, 1
      %p100 = por %p98, %p99
      %p101 = scmp.ne.s32.totalorder %s90, %s91
      %p102 = scmp.eq.s32.totalorder %s14, 0
      %p103 = por %p101, %p102
      %p104 = scmp.ne.s32.totalorder %s90, %s91
      %p105 = scmp.eq.s32.totalorder %s15, 1
      %p106 = por %p104, %p105
      %p108 = scmp.ne.s32.totalorder %s91, %s107
      %p109 = scmp.eq.s32.totalorder %s15, 0
      %p110 = por %p108, %p109
      %p111 = scmp.le.s32.totalorder 1, %s9
      %p112 = scmp.lt.s32.totalorder %s9, 3
      %p113 = pnand %p111, %p112
      %p114 = pneg %p113
      // Predicated region
      $region9: #{c3_forward_nchw.5} parent=5 // pred_check
        _
      $region10: #{c3_forward_nchw.5} parent=5 // pred_check_branch
        %116 = sbr.rel (%p113) target = $region12
      $region11: #{c3_forward_nchw.5} parent=5 // pred_region
        %s117 = ssub.s32 %s9, 1
        // Predicated region
        $region13: #{c3_forward_nchw.5} parent=11 // pred_check
          %p118 = pneg %p56
        $region14: #{c3_forward_nchw.5} parent=11 // pred_check_branch
          %120 = sbr.rel (%p118) target = $region16
        $region15: #{c3_forward_nchw.5} parent=11 // pred_region
          _
        $region16: #{c3_forward_nchw.5} parent=11 // pred_fallthru
          _
        // Predicated region
        $region17: #{c3_forward_nchw.5} parent=11 // pred_check
          %p121 = pneg %p77
        $region18: #{c3_forward_nchw.5} parent=11 // pred_check_branch
          %123 = sbr.rel (%p121) target = $region20
        $region19: #{c3_forward_nchw.5} parent=11 // pred_region
          _
        $region20: #{c3_forward_nchw.5} parent=11 // pred_fallthru
          _
      $region12: #{c3_forward_nchw.5} parent=5 // pred_fallthru
        _
      %p124 = scmp.lt.s32.totalorder %s9, 2
      // Predicated region
      $region21: #{c3_forward_nchw.5} parent=5 // pred_check
        %p125 = pneg %p124
      $region22: #{c3_forward_nchw.5} parent=5 // pred_check_branch
        %127 = sbr.rel (%p125) target = $region24
      $region23: #{c3_forward_nchw.5} parent=5 // pred_region
        // Predicated region
        $region25: #{c3_forward_nchw.5} parent=23 // pred_check
          %p128 = pneg %p29
        $region26: #{c3_forward_nchw.5} parent=23 // pred_check_branch
          %130 = sbr.rel (%p128) target = $region28
        $region27: #{c3_forward_nchw.5} parent=23 // pred_region
          %s131 = sand.u32 %s19, 1
          %s132 = sand.u32 %s19, 1
          %s133 = smul.addr %s132, 128
          %s134 = scalar_lea.vmem [#allocation2], %s133
          %s135 = smul.u32 32, %s9
          %s136 = smul.addr %s135, 2
          %s137 = smul.addr %s136, 4
          %s138 = scalar_lea.vmem %s0, %s137
          // Predicated region
          $region29: #{c3_forward_nchw.5} parent=27 // pred_check
            _
          $region30: #{c3_forward_nchw.5} parent=27 // pred_check_branch
            %140 = sbr.rel (0) target = $region32
          $region31: #{c3_forward_nchw.5} parent=27 // pred_region
            // Predicated region
            $region33: #{c3_forward_nchw.5} parent=31 // pred_check
              _
            $region34: #{c3_forward_nchw.5} parent=31 // pred_check_branch
              %142 = sbr.rel target = $region36
            $region35: #{c3_forward_nchw.5} parent=31 // pred_region
              // Predicated region
              $region48: #{c3_forward_nchw.5} parent=35 // pred_check
                _
              $region49: #{c3_forward_nchw.5} parent=35 // pred_check_branch
                %220 = sbr.rel (0) target = $region51
              $region50: #{c3_forward_nchw.5} parent=35 // pred_region
                loop: start=0, step=1, limit=1
                $region52: #{c3_forward_nchw.5} parent=50 // loop_pre_header
                  _
                $region53: #{c3_forward_nchw.5} parent=50 // loop_header
                  %s222 = sphi 0, %s226
                  %p223 = scmp.ge.s32.totalorder %s222, 1
                  %s227 = sphi %s138, %s138
                  %s228 = sphi %s134, %s134
                $region54: #{c3_forward_nchw.5} parent=50 // loop_header_branch
                  %225 = sbr.rel (%p223) target = $region58
                $region55: #{c3_forward_nchw.5} parent=50 // loop_body
                  _
                $region56: #{c3_forward_nchw.5} parent=50 // loop_footer
                  %s226 = sadd.s32 1, %s222
                $region57: #{c3_forward_nchw.5} parent=50 // loop_footer_branch
                  %221 = sbr.rel target = $region53
                $region58: #{c3_forward_nchw.5} parent=50 // loop_exit
                  _
                %s230 = ssub.s32 16, 1
                loop: start=0, step=1, limit=1
                $region59: #{c3_forward_nchw.5} parent=50 // loop_pre_header
                  _
                $region60: #{c3_forward_nchw.5} parent=50 // loop_header
                  %s232 = sphi 0, %s236
                  %p233 = scmp.ge.s32.totalorder %s232, 1
                  %s237 = sphi %s138, %s138
                  %s238 = sphi %s134, %s134
                $region61: #{c3_forward_nchw.5} parent=50 // loop_header_branch
                  %235 = sbr.rel (%p233) target = $region65
                $region62: #{c3_forward_nchw.5} parent=50 // loop_body
                  %v239 = vld [vmem:[%s237] sm:%s230]
                  %240 = vst [vmem:[%s238] sm:%s230] %v239
                  %v241 = vld [vmem:[%s237 + $0x8] sm:%s230]
                  %242 = vst [vmem:[%s238 + $0x4] sm:%s230] %v241
                  %v243 = vld [vmem:[%s237 + $0x10] sm:%s230]
                  %244 = vst [vmem:[%s238 + $0x8] sm:%s230] %v243
                  %v245 = vld [vmem:[%s237 + $0x18] sm:%s230]
                  %246 = vst [vmem:[%s238 + $0xc] sm:%s230] %v245
                  %v247 = vld [vmem:[%s237 + $0x20] sm:%s230]
                  %248 = vst [vmem:[%s238 + $0x10] sm:%s230] %v247
                  %v249 = vld [vmem:[%s237 + $0x28] sm:%s230]
                  %250 = vst [vmem:[%s238 + $0x14] sm:%s230] %v249
                  %v251 = vld [vmem:[%s237 + $0x30] sm:%s230]
                  %252 = vst [vmem:[%s238 + $0x18] sm:%s230] %v251
                  %v253 = vld [vmem:[%s237 + $0x38] sm:%s230]
                  %254 = vst [vmem:[%s238 + $0x1c] sm:%s230] %v253
                  %v255 = vld [vmem:[%s237 + $0x40] sm:%s230]
                  %256 = vst [vmem:[%s238 + $0x20] sm:%s230] %v255
                  %v257 = vld [vmem:[%s237 + $0x48] sm:%s230]
                  %258 = vst [vmem:[%s238 + $0x24] sm:%s230] %v257
                  %v259 = vld [vmem:[%s237 + $0x50] sm:%s230]
                  %260 = vst [vmem:[%s238 + $0x28] sm:%s230] %v259
                  %v261 = vld [vmem:[%s237 + $0x58] sm:%s230]
                  %262 = vst [vmem:[%s238 + $0x2c] sm:%s230] %v261
                  %v263 = vld [vmem:[%s237 + $0x60] sm:%s230]
                  %264 = vst [vmem:[%s238 + $0x30] sm:%s230] %v263
                  %v265 = vld [vmem:[%s237 + $0x68] sm:%s230]
                  %266 = vst [vmem:[%s238 + $0x34] sm:%s230] %v265
                  %v267 = vld [vmem:[%s237 + $0x70] sm:%s230]
                  %268 = vst [vmem:[%s238 + $0x38] sm:%s230] %v267
                  %v269 = vld [vmem:[%s237 + $0x78] sm:%s230]
                  %270 = vst [vmem:[%s238 + $0x3c] sm:%s230] %v269
                  %v271 = vld [vmem:[%s237 + $0x80] sm:%s230]
                  %272 = vst [vmem:[%s238 + $0x40] sm:%s230] %v271
                  %v273 = vld [vmem:[%s237 + $0x88] sm:%s230]
                  %274 = vst [vmem:[%s238 + $0x44] sm:%s230] %v273
                  %v275 = vld [vmem:[%s237 + $0x90] sm:%s230]
                  %276 = vst [vmem:[%s238 + $0x48] sm:%s230] %v275
                  %v277 = vld [vmem:[%s237 + $0x98] sm:%s230]
                  %278 = vst [vmem:[%s238 + $0x4c] sm:%s230] %v277
                  %v279 = vld [vmem:[%s237 + $0xa0] sm:%s230]
                  %280 = vst [vmem:[%s238 + $0x50] sm:%s230] %v279
                  %v281 = vld [vmem:[%s237 + $0xa8] sm:%s230]
                  %282 = vst [vmem:[%s238 + $0x54] sm:%s230] %v281
                  %v283 = vld [vmem:[%s237 + $0xb0] sm:%s230]
                  %284 = vst [vmem:[%s238 + $0x58] sm:%s230] %v283
                  %v285 = vld [vmem:[%s237 + $0xb8] sm:%s230]
                  %286 = vst [vmem:[%s238 + $0x5c] sm:%s230] %v285
                  %v287 = vld [vmem:[%s237 + $0xc0] sm:%s230]
                  %288 = vst [vmem:[%s238 + $0x60] sm:%s230] %v287
                  %v289 = vld [vmem:[%s237 + $0xc8] sm:%s230]
                  %290 = vst [vmem:[%s238 + $0x64] sm:%s230] %v289
                  %v291 = vld [vmem:[%s237 + $0xd0] sm:%s230]
                  %292 = vst [vmem:[%s238 + $0x68] sm:%s230] %v291
                  %v293 = vld [vmem:[%s237 + $0xd8] sm:%s230]
                  %294 = vst [vmem:[%s238 + $0x6c] sm:%s230] %v293
                  %v295 = vld [vmem:[%s237 + $0xe0] sm:%s230]
                  %296 = vst [vmem:[%s238 + $0x70] sm:%s230] %v295
                  %v297 = vld [vmem:[%s237 + $0xe8] sm:%s230]
                  %298 = vst [vmem:[%s238 + $0x74] sm:%s230] %v297
                  %v299 = vld [vmem:[%s237 + $0xf0] sm:%s230]
                  %300 = vst [vmem:[%s238 + $0x78] sm:%s230] %v299
                  %v301 = vld [vmem:[%s237 + $0xf8] sm:%s230]
                  %302 = vst [vmem:[%s238 + $0x7c] sm:%s230] %v301
                $region63: #{c3_forward_nchw.5} parent=50 // loop_footer
                  %s236 = sadd.s32 1, %s232
                $region64: #{c3_forward_nchw.5} parent=50 // loop_footer_branch
                  %231 = sbr.rel target = $region60
                $region65: #{c3_forward_nchw.5} parent=50 // loop_exit
                  _
              $region51: #{c3_forward_nchw.5} parent=35 // pred_fallthru
                _
            $region36: #{c3_forward_nchw.5} parent=31 // pred_fallthru
              _
            // Predicated region
            $region37: #{c3_forward_nchw.5} parent=31 // pred_check
              _
            $region38: #{c3_forward_nchw.5} parent=31 // pred_check_branch
              %144 = sbr.rel (0) target = $region40
            $region39: #{c3_forward_nchw.5} parent=31 // pred_region
              %s146 = ssub.s32 16, 1
              loop: start=0, step=1, limit=1
              $region41: #{c3_forward_nchw.5} parent=39 // loop_pre_header
                _
              $region42: #{c3_forward_nchw.5} parent=39 // loop_header
                %s148 = sphi 0, %s152
                %p149 = scmp.ge.s32.totalorder %s148, 1
                %s153 = sphi %s138, %s138
                %s154 = sphi %s134, %s134
              $region43: #{c3_forward_nchw.5} parent=39 // loop_header_branch
                %151 = sbr.rel (%p149) target = $region47
              $region44: #{c3_forward_nchw.5} parent=39 // loop_body
                %v155 = vld [vmem:[%s153] sm:%s146]
                %156 = vst [vmem:[%s154] sm:%s146] %v155
                %v157 = vld [vmem:[%s153 + $0x8] sm:%s146]
                %158 = vst [vmem:[%s154 + $0x4] sm:%s146] %v157
                %v159 = vld [vmem:[%s153 + $0x10] sm:%s146]
                %160 = vst [vmem:[%s154 + $0x8] sm:%s146] %v159
                %v161 = vld [vmem:[%s153 + $0x18] sm:%s146]
                %162 = vst [vmem:[%s154 + $0xc] sm:%s146] %v161
                %v163 = vld [vmem:[%s153 + $0x20] sm:%s146]
                %164 = vst [vmem:[%s154 + $0x10] sm:%s146] %v163
                %v165 = vld [vmem:[%s153 + $0x28] sm:%s146]
                %166 = vst [vmem:[%s154 + $0x14] sm:%s146] %v165
                %v167 = vld [vmem:[%s153 + $0x30] sm:%s146]
                %168 = vst [vmem:[%s154 + $0x18] sm:%s146] %v167
                %v169 = vld [vmem:[%s153 + $0x38] sm:%s146]
                %170 = vst [vmem:[%s154 + $0x1c] sm:%s146] %v169
                %v171 = vld [vmem:[%s153 + $0x40] sm:%s146]
                %172 = vst [vmem:[%s154 + $0x20] sm:%s146] %v171
                %v173 = vld [vmem:[%s153 + $0x48] sm:%s146]
                %174 = vst [vmem:[%s154 + $0x24] sm:%s146] %v173
                %v175 = vld [vmem:[%s153 + $0x50] sm:%s146]
                %176 = vst [vmem:[%s154 + $0x28] sm:%s146] %v175
                %v177 = vld [vmem:[%s153 + $0x58] sm:%s146]
                %178 = vst [vmem:[%s154 + $0x2c] sm:%s146] %v177
                %v179 = vld [vmem:[%s153 + $0x60] sm:%s146]
                %180 = vst [vmem:[%s154 + $0x30] sm:%s146] %v179
                %v181 = vld [vmem:[%s153 + $0x68] sm:%s146]
                %182 = vst [vmem:[%s154 + $0x34] sm:%s146] %v181
                %v183 = vld [vmem:[%s153 + $0x70] sm:%s146]
                %184 = vst [vmem:[%s154 + $0x38] sm:%s146] %v183
                %v185 = vld [vmem:[%s153 + $0x78] sm:%s146]
                %186 = vst [vmem:[%s154 + $0x3c] sm:%s146] %v185
                %v187 = vld [vmem:[%s153 + $0x80] sm:%s146]
                %188 = vst [vmem:[%s154 + $0x40] sm:%s146] %v187
                %v189 = vld [vmem:[%s153 + $0x88] sm:%s146]
                %190 = vst [vmem:[%s154 + $0x44] sm:%s146] %v189
                %v191 = vld [vmem:[%s153 + $0x90] sm:%s146]
                %192 = vst [vmem:[%s154 + $0x48] sm:%s146] %v191
                %v193 = vld [vmem:[%s153 + $0x98] sm:%s146]
                %194 = vst [vmem:[%s154 + $0x4c] sm:%s146] %v193
                %v195 = vld [vmem:[%s153 + $0xa0] sm:%s146]
                %196 = vst [vmem:[%s154 + $0x50] sm:%s146] %v195
                %v197 = vld [vmem:[%s153 + $0xa8] sm:%s146]
                %198 = vst [vmem:[%s154 + $0x54] sm:%s146] %v197
                %v199 = vld [vmem:[%s153 + $0xb0] sm:%s146]
                %200 = vst [vmem:[%s154 + $0x58] sm:%s146] %v199
                %v201 = vld [vmem:[%s153 + $0xb8] sm:%s146]
                %202 = vst [vmem:[%s154 + $0x5c] sm:%s146] %v201
                %v203 = vld [vmem:[%s153 + $0xc0] sm:%s146]
                %204 = vst [vmem:[%s154 + $0x60] sm:%s146] %v203
                %v205 = vld [vmem:[%s153 + $0xc8] sm:%s146]
                %206 = vst [vmem:[%s154 + $0x64] sm:%s146] %v205
                %v207 = vld [vmem:[%s153 + $0xd0] sm:%s146]
                %208 = vst [vmem:[%s154 + $0x68] sm:%s146] %v207
                %v209 = vld [vmem:[%s153 + $0xd8] sm:%s146]
                %210 = vst [vmem:[%s154 + $0x6c] sm:%s146] %v209
                %v211 = vld [vmem:[%s153 + $0xe0] sm:%s146]
                %212 = vst [vmem:[%s154 + $0x70] sm:%s146] %v211
                %v213 = vld [vmem:[%s153 + $0xe8] sm:%s146]
                %214 = vst [vmem:[%s154 + $0x74] sm:%s146] %v213
                %v215 = vld [vmem:[%s153 + $0xf0] sm:%s146]
                %216 = vst [vmem:[%s154 + $0x78] sm:%s146] %v215
                %v217 = vld [vmem:[%s153 + $0xf8] sm:%s146]
                %218 = vst [vmem:[%s154 + $0x7c] sm:%s146] %v217
              $region45: #{c3_forward_nchw.5} parent=39 // loop_footer
                %s152 = sadd.s32 1, %s148
              $region46: #{c3_forward_nchw.5} parent=39 // loop_footer_branch
                %147 = sbr.rel target = $region42
              $region47: #{c3_forward_nchw.5} parent=39 // loop_exit
                _
            $region40: #{c3_forward_nchw.5} parent=31 // pred_fallthru
              _
          $region32: #{c3_forward_nchw.5} parent=27 // pred_fallthru
            _
          %303 = vnop
        $region28: #{c3_forward_nchw.5} parent=23 // pred_fallthru
          _
      $region24: #{c3_forward_nchw.5} parent=5 // pred_fallthru
        _
      %p304 = scmp.le.s32.totalorder 1, %s9
      %p305 = scmp.lt.s32.totalorder %s9, 3
      %p306 = pnand %p304, %p305
      %p307 = pneg %p306
      // Predicated region
      $region66: #{c3_forward_nchw.5} parent=5 // pred_check
        _
      $region67: #{c3_forward_nchw.5} parent=5 // pred_check_branch
        %309 = sbr.rel (%p306) target = $region69
      $region68: #{c3_forward_nchw.5} parent=5 // pred_region
        %s310 = ssub.s32 %s9, 1
        %s311 = sand.u32 %s22, 1
        %s312 = sand.u32 %s22, 1
        %s313 = smul.addr %s312, 128
        %s314 = scalar_lea.vmem [#allocation2], %s313
        // Predicated region
        $region70: #{c3_forward_nchw.5} parent=68 // pred_check
          %p315 = pneg %p35
        $region71: #{c3_forward_nchw.5} parent=68 // pred_check_branch
          %317 = sbr.rel (%p315) target = $region73
        $region72: #{c3_forward_nchw.5} parent=68 // pred_region
          _
        $region73: #{c3_forward_nchw.5} parent=68 // pred_fallthru
          _
        %s318 = sand.u32 %s22, 1
        %s319 = sand.u32 %s22, 1
        %s320 = smul.addr %s319, 128
        %s321 = scalar_lea.vmem [#allocation2], %s320
        %p322 = pneg %p35
        %p323 = pneg %p32
        %p324 = pneg %p56
        %p325 = pneg %p53
        %p326 = pneg %p77
        %p327 = pneg %p74
        %p328 = pneg %p103
        %p329 = pneg %p100
        %s330 = smul.u32 32, %s14
        %p331 = scmp.lt.s32.totalorder %s330, 63
        %s332 = scalar_select %p331, %s330, 63
        %s333 = smul.addr %s332, 4
        %s334 = scalar_lea.vmem %s3, %s333
        %s335 = smul.u32 32, %s14
        %s336 = smul.u32 32, %s14
        %p337 = scmp.lt.s32.totalorder %s336, 63
        %s338 = scalar_select %p337, %s336, 63
        %s339 = smul.addr %s338, 4
        %s340 = scalar_lea.vmem %s3, %s339
        %s341 = smul.u32 32, %s14
        %v343 = vld [vmem:[%s314] sm:$0xf]
        %v344 = vld [vmem:[%s314 + $0x4] sm:$0xf]
        %v345 = vld [vmem:[%s314 + $0x8] sm:$0xf]
        %v346 = vld [vmem:[%s314 + $0xc] sm:$0xf]
        %v347 = vld [vmem:[%s314 + $0x10] sm:$0xf]
        %v348 = vld [vmem:[%s314 + $0x14] sm:$0xf]
        %v349 = vld [vmem:[%s314 + $0x18] sm:$0xf]
        %v350 = vld [vmem:[%s314 + $0x1c] sm:$0xf]
        %v351 = vld [vmem:[%s314 + $0x20] sm:$0xf]
        %v352 = vld [vmem:[%s314 + $0x24] sm:$0xf]
        %v353 = vld [vmem:[%s314 + $0x28] sm:$0xf]
        %v354 = vld [vmem:[%s314 + $0x2c] sm:$0xf]
        %v355 = vld [vmem:[%s314 + $0x30] sm:$0xf]
        %v356 = vld [vmem:[%s314 + $0x34] sm:$0xf]
        %v357 = vld [vmem:[%s314 + $0x38] sm:$0xf]
        %v358 = vld [vmem:[%s314 + $0x3c] sm:$0xf]
        %v359 = vld [vmem:[%s314 + $0x40] sm:$0xf]
        %v360 = vld [vmem:[%s314 + $0x44] sm:$0xf]
        %v361 = vld [vmem:[%s314 + $0x48] sm:$0xf]
        %v362 = vld [vmem:[%s314 + $0x4c] sm:$0xf]
        %v363 = vld [vmem:[%s314 + $0x50] sm:$0xf]
        %v364 = vld [vmem:[%s314 + $0x54] sm:$0xf]
        %v365 = vld [vmem:[%s314 + $0x58] sm:$0xf]
        %v366 = vld [vmem:[%s314 + $0x5c] sm:$0xf]
        %v367 = vld [vmem:[%s314 + $0x60] sm:$0xf]
        %v368 = vld [vmem:[%s314 + $0x64] sm:$0xf]
        %v369 = vld [vmem:[%s314 + $0x68] sm:$0xf]
        %v370 = vld [vmem:[%s314 + $0x6c] sm:$0xf]
        %v371 = vld [vmem:[%s314 + $0x70] sm:$0xf]
        %v372 = vld [vmem:[%s314 + $0x74] sm:$0xf]
        %v373 = vld [vmem:[%s314 + $0x78] sm:$0xf]
        %v374 = vld [vmem:[%s314 + $0x7c] sm:$0xf]
        %v375 = vld [vmem:[%s1] sm:$0xf]
        %v376 = vld [vmem:[%s1 + $0x4] sm:$0xf]
        %v377 = vld [vmem:[%s1 + $0x8] sm:$0xf]
        %v378 = vld [vmem:[%s1 + $0xc] sm:$0xf]
        %v379 = vld [vmem:[%s1 + $0x10] sm:$0xf]
        %v380 = vld [vmem:[%s1 + $0x14] sm:$0xf]
        %v381 = vld [vmem:[%s1 + $0x18] sm:$0xf]
        %v382 = vld [vmem:[%s1 + $0x1c] sm:$0xf]
        %v383 = vld [vmem:[%s1 + $0x20] sm:$0xf]
        %v384 = vld [vmem:[%s1 + $0x24] sm:$0xf]
        %v385 = vld [vmem:[%s1 + $0x28] sm:$0xf]
        %v386 = vld [vmem:[%s1 + $0x2c] sm:$0xf]
        %v387 = vld [vmem:[%s1 + $0x30] sm:$0xf]
        %v388 = vld [vmem:[%s1 + $0x34] sm:$0xf]
        %v389 = vld [vmem:[%s1 + $0x38] sm:$0xf]
        %v390 = vld [vmem:[%s1 + $0x3c] sm:$0xf]
        %v423 = vunpack.c.l.b16 %v343
        %v424 = vunpack.c.l.b16 %v344
        %v425 = vunpack.c.l.b16 %v345
        %v426 = vunpack.c.l.b16 %v346
        %v427 = vunpack.c.l.b16 %v347
        %v428 = vunpack.c.l.b16 %v348
        %v429 = vunpack.c.l.b16 %v349
        %v430 = vunpack.c.l.b16 %v350
        %v431 = vunpack.c.l.b16 %v351
        %v432 = vunpack.c.l.b16 %v352
        %v433 = vunpack.c.l.b16 %v353
        %v434 = vunpack.c.l.b16 %v354
        %v435 = vunpack.c.l.b16 %v355
        %v436 = vunpack.c.l.b16 %v356
        %v437 = vunpack.c.l.b16 %v357
        %v438 = vunpack.c.l.b16 %v358
        %v439 = vunpack.c.l.b16 %v359
        %v440 = vunpack.c.l.b16 %v360
        %v441 = vunpack.c.l.b16 %v361
        %v442 = vunpack.c.l.b16 %v362
        %v443 = vunpack.c.l.b16 %v363
        %v444 = vunpack.c.l.b16 %v364
        %v445 = vunpack.c.l.b16 %v365
        %v446 = vunpack.c.l.b16 %v366
        %v447 = vunpack.c.l.b16 %v367
        %v448 = vunpack.c.l.b16 %v368
        %v449 = vunpack.c.l.b16 %v369
        %v450 = vunpack.c.l.b16 %v370
        %v451 = vunpack.c.l.b16 %v371
        %v452 = vunpack.c.l.b16 %v372
        %v453 = vunpack.c.l.b16 %v373
        %v454 = vunpack.c.l.b16 %v374
        %v455 = vpack.c.b16 %v424, %v423
        %v456 = vpack.c.b16 %v426, %v425
        %v457 = vpack.c.b16 %v428, %v427
        %v458 = vpack.c.b16 %v430, %v429
        %v459 = vpack.c.b16 %v432, %v431
        %v460 = vpack.c.b16 %v434, %v433
        %v461 = vpack.c.b16 %v436, %v435
        %v462 = vpack.c.b16 %v438, %v437
        %v463 = vpack.c.b16 %v440, %v439
        %v464 = vpack.c.b16 %v442, %v441
        %v465 = vpack.c.b16 %v444, %v443
        %v466 = vpack.c.b16 %v446, %v445
        %v467 = vpack.c.b16 %v448, %v447
        %v468 = vpack.c.b16 %v450, %v449
        %v469 = vpack.c.b16 %v452, %v451
        %v470 = vpack.c.b16 %v454, %v453
        %v503 = vunpack.c.l.b16 %v375
        %v504 = vunpack.c.l.b16 %v376
        %v505 = vunpack.c.l.b16 %v377
        %v506 = vunpack.c.l.b16 %v378
        %v507 = vunpack.c.l.b16 %v379
        %v508 = vunpack.c.l.b16 %v380
        %v509 = vunpack.c.l.b16 %v381
        %v510 = vunpack.c.l.b16 %v382
        %v511 = vunpack.c.l.b16 %v383
        %v512 = vunpack.c.l.b16 %v384
        %v513 = vunpack.c.l.b16 %v385
        %v514 = vunpack.c.l.b16 %v386
        %v515 = vunpack.c.l.b16 %v387
        %v516 = vunpack.c.l.b16 %v388
        %v517 = vunpack.c.l.b16 %v389
        %v518 = vunpack.c.l.b16 %v390
        %v519 = vpack.c.b16 %v504, %v503
        %v520 = vpack.c.b16 %v506, %v505
        %v521 = vpack.c.b16 %v508, %v507
        %v522 = vpack.c.b16 %v510, %v509
        %v523 = vpack.c.b16 %v512, %v511
        %v524 = vpack.c.b16 %v514, %v513
        %v525 = vpack.c.b16 %v516, %v515
        %v526 = vpack.c.b16 %v518, %v517
        %535 = vmatprep.subr.bf16.mxu0 0
        %536 = vmatpush1.bf16.msra.mxu0 %v526
        %537 = vmatprep.subr.bf16.mxu0 0
        %538 = vmatpush1.bf16.msra.mxu0 %v525
        %539 = vmatprep.subr.bf16.mxu0 0
        %540 = vmatpush1.bf16.msra.mxu0 %v524
        %541 = vmatprep.subr.bf16.mxu0 0
        %542 = vmatpush1.bf16.msra.mxu0 %v523
        %543 = vmatprep.subr.bf16.mxu0 0
        %544 = vmatpush1.bf16.msra.mxu0 %v522
        %545 = vmatprep.subr.bf16.mxu0 0
        %546 = vmatpush1.bf16.msra.mxu0 %v521
        %547 = vmatprep.subr.bf16.mxu0 0
        %548 = vmatpush1.bf16.msra.mxu0 %v520
        %549 = vmatprep.subr.bf16.mxu0 0
        %550 = vmatpush1.bf16.msra.mxu0 %v519
        %551 = vmatprep.subr.bf16.mxu0 0
        %552 = vmatpush2.bf16.msra.mxu0 0
        %553 = vmatprep.subr.bf16.mxu0 0
        %554 = vmatpush2.bf16.msra.mxu0 0
        %555 = vmatprep.subr.bf16.mxu0 0
        %556 = vmatpush2.bf16.msra.mxu0 0
        %557 = vmatprep.subr.bf16.mxu0 0
        %558 = vmatpush2.bf16.msra.mxu0 0
        %559 = vmatprep.subr.bf16.mxu0 0
        %560 = vmatpush2.bf16.msra.mxu0 0
        %561 = vmatprep.subr.bf16.mxu0 0
        %562 = vmatpush2.bf16.msra.mxu0 0
        %563 = vmatprep.subr.bf16.mxu0 0
        %564 = vmatpush2.bf16.msra.mxu0 0
        %565 = vmatprep.subr.bf16.mxu0 0
        %566 = vmatpush2.bf16.msra.mxu0 0
        %567 = vmatprep.mubr.bf16.mxu0 0
        %568 = vmatmul.mubr.bf16.gmra.mxu0 %v455
        %v569 = vpop.f32.mrf.mxu0
        %v570 = vadd.f32 0.0, %v569
        %v571 = vpop.f32.mrf.mxu0
        %v572 = vpop.f32.mrf.mxu0
        %v573 = vadd.f32 0.0, %v572
        %v574 = vpop.f32.mrf.mxu0
        %575 = vmatprep.mubr.bf16.mxu0 0
        %576 = vmatmul.mubr.bf16.gmra.mxu0 %v456
        %v577 = vpop.f32.mrf.mxu0
        %v578 = vadd.f32 0.0, %v577
        %v579 = vpop.f32.mrf.mxu0
        %v580 = vpop.f32.mrf.mxu0
        %v581 = vadd.f32 0.0, %v580
        %v582 = vpop.f32.mrf.mxu0
        %583 = vmatprep.mubr.bf16.mxu0 0
        %584 = vmatmul.mubr.bf16.gmra.mxu0 %v457
        %v585 = vpop.f32.mrf.mxu0
        %v586 = vadd.f32 0.0, %v585
        %v587 = vpop.f32.mrf.mxu0
        %v588 = vpop.f32.mrf.mxu0
        %v589 = vadd.f32 0.0, %v588
        %v590 = vpop.f32.mrf.mxu0
        %591 = vmatprep.mubr.bf16.mxu0 0
        %592 = vmatmul.mubr.bf16.gmra.mxu0 %v458
        %v593 = vpop.f32.mrf.mxu0
        %v594 = vadd.f32 0.0, %v593
        %v595 = vpop.f32.mrf.mxu0
        %v596 = vpop.f32.mrf.mxu0
        %v597 = vadd.f32 0.0, %v596
        %v598 = vpop.f32.mrf.mxu0
        %599 = vmatprep.mubr.bf16.mxu0 0
        %600 = vmatmul.mubr.bf16.gmra.mxu0 %v459
        %v601 = vpop.f32.mrf.mxu0
        %v602 = vadd.f32 0.0, %v601
        %v603 = vpop.f32.mrf.mxu0
        %v604 = vpop.f32.mrf.mxu0
        %v605 = vadd.f32 0.0, %v604
        %v606 = vpop.f32.mrf.mxu0
        %607 = vmatprep.mubr.bf16.mxu0 0
        %608 = vmatmul.mubr.bf16.gmra.mxu0 %v460
        %v609 = vpop.f32.mrf.mxu0
        %v610 = vadd.f32 0.0, %v609
        %v611 = vpop.f32.mrf.mxu0
        %v612 = vpop.f32.mrf.mxu0
        %v613 = vadd.f32 0.0, %v612
        %v614 = vpop.f32.mrf.mxu0
        %615 = vmatprep.mubr.bf16.mxu0 0
        %616 = vmatmul.mubr.bf16.gmra.mxu0 %v461
        %v617 = vpop.f32.mrf.mxu0
        %v618 = vadd.f32 0.0, %v617
        %v619 = vpop.f32.mrf.mxu0
        %v620 = vpop.f32.mrf.mxu0
        %v621 = vadd.f32 0.0, %v620
        %v622 = vpop.f32.mrf.mxu0
        %623 = vmatprep.mubr.bf16.mxu0 0
        %624 = vmatmul.mubr.bf16.gmra.mxu0 %v462
        %v625 = vpop.f32.mrf.mxu0
        %v626 = vadd.f32 0.0, %v625
        %v627 = vpop.f32.mrf.mxu0
        %v628 = vpop.f32.mrf.mxu0
        %v629 = vadd.f32 0.0, %v628
        %v630 = vpop.f32.mrf.mxu0
        %631 = vmatprep.mubr.bf16.mxu0 0
        %632 = vmatmul.mubr.bf16.gmra.mxu0 %v463
        %v633 = vpop.f32.mrf.mxu0
        %v634 = vadd.f32 0.0, %v633
        %v635 = vpop.f32.mrf.mxu0
        %v636 = vpop.f32.mrf.mxu0
        %v637 = vadd.f32 0.0, %v636
        %v638 = vpop.f32.mrf.mxu0
        %639 = vmatprep.mubr.bf16.mxu0 0
        %640 = vmatmul.mubr.bf16.gmra.mxu0 %v464
        %v641 = vpop.f32.mrf.mxu0
        %v642 = vadd.f32 0.0, %v641
        %v643 = vpop.f32.mrf.mxu0
        %v644 = vpop.f32.mrf.mxu0
        %v645 = vadd.f32 0.0, %v644
        %v646 = vpop.f32.mrf.mxu0
        %647 = vmatprep.mubr.bf16.mxu0 0
        %648 = vmatmul.mubr.bf16.gmra.mxu0 %v465
        %v649 = vpop.f32.mrf.mxu0
        %v650 = vadd.f32 0.0, %v649
        %v651 = vpop.f32.mrf.mxu0
        %v652 = vpop.f32.mrf.mxu0
        %v653 = vadd.f32 0.0, %v652
        %v654 = vpop.f32.mrf.mxu0
        %655 = vmatprep.mubr.bf16.mxu0 0
        %656 = vmatmul.mubr.bf16.gmra.mxu0 %v466
        %v657 = vpop.f32.mrf.mxu0
        %v658 = vadd.f32 0.0, %v657
        %v659 = vpop.f32.mrf.mxu0
        %v660 = vpop.f32.mrf.mxu0
        %v661 = vadd.f32 0.0, %v660
        %v662 = vpop.f32.mrf.mxu0
        %663 = vmatprep.mubr.bf16.mxu0 0
        %664 = vmatmul.mubr.bf16.gmra.mxu0 %v467
        %v665 = vpop.f32.mrf.mxu0
        %v666 = vadd.f32 0.0, %v665
        %v667 = vpop.f32.mrf.mxu0
        %v668 = vpop.f32.mrf.mxu0
        %v669 = vadd.f32 0.0, %v668
        %v670 = vpop.f32.mrf.mxu0
        %671 = vmatprep.mubr.bf16.mxu0 0
        %672 = vmatmul.mubr.bf16.gmra.mxu0 %v468
        %v673 = vpop.f32.mrf.mxu0
        %v674 = vadd.f32 0.0, %v673
        %v675 = vpop.f32.mrf.mxu0
        %v676 = vpop.f32.mrf.mxu0
        %v677 = vadd.f32 0.0, %v676
        %v678 = vpop.f32.mrf.mxu0
        %679 = vmatprep.mubr.bf16.mxu0 0
        %680 = vmatmul.mubr.bf16.gmra.mxu0 %v469
        %v681 = vpop.f32.mrf.mxu0
        %v682 = vadd.f32 0.0, %v681
        %v683 = vpop.f32.mrf.mxu0
        %v684 = vpop.f32.mrf.mxu0
        %v685 = vadd.f32 0.0, %v684
        %v686 = vpop.f32.mrf.mxu0
        %687 = vmatprep.mubr.bf16.mxu0 0
        %688 = vmatmul.mubr.bf16.gmra.mxu0 %v470
        %v689 = vpop.f32.mrf.mxu0
        %v690 = vadd.f32 0.0, %v689
        %v691 = vpop.f32.mrf.mxu0
        %v692 = vpop.f32.mrf.mxu0
        %v693 = vadd.f32 0.0, %v692
        %v694 = vpop.f32.mrf.mxu0
        %695 = vdwg.mxu0
        %v696 = vld [vmem:[%s2] sm:$0x1]
        %v697 = vlaneseq
        %v698 = vshrl.u32 %v697, 7
        %v699 = vsub.s32 0, %v698
        %v700 = vrot.slane %v696, %v699
        %v701 = vmul.f32 %v570, %v700
        %v702 = vmul.f32 %v573, %v700
        %v703 = vmul.f32 %v578, %v700
        %v704 = vmul.f32 %v581, %v700
        %v705 = vmul.f32 %v586, %v700
        %v706 = vmul.f32 %v589, %v700
        %v707 = vmul.f32 %v594, %v700
        %v708 = vmul.f32 %v597, %v700
        %v709 = vmul.f32 %v602, %v700
        %v710 = vmul.f32 %v605, %v700
        %v711 = vmul.f32 %v610, %v700
        %v712 = vmul.f32 %v613, %v700
        %v713 = vmul.f32 %v618, %v700
        %v714 = vmul.f32 %v621, %v700
        %v715 = vmul.f32 %v626, %v700
        %v716 = vmul.f32 %v629, %v700
        %v717 = vmul.f32 %v634, %v700
        %v718 = vmul.f32 %v637, %v700
        %v719 = vmul.f32 %v642, %v700
        %v720 = vmul.f32 %v645, %v700
        %v721 = vmul.f32 %v650, %v700
        %v722 = vmul.f32 %v653, %v700
        %v723 = vmul.f32 %v658, %v700
        %v724 = vmul.f32 %v661, %v700
        %v725 = vmul.f32 %v666, %v700
        %v726 = vmul.f32 %v669, %v700
        %v727 = vmul.f32 %v674, %v700
        %v728 = vmul.f32 %v677, %v700
        %v729 = vmul.f32 %v682, %v700
        %v730 = vmul.f32 %v685, %v700
        %v731 = vmul.f32 %v690, %v700
        %v732 = vmul.f32 %v693, %v700
        %v733 = vld [vmem:[%s2 + $0x1] sm:$0x1]
        %v734 = vlaneseq
        %v735 = vshrl.u32 %v734, 7
        %v736 = vsub.s32 0, %v735
        %v737 = vrot.slane %v733, %v736
        %v738 = vadd.f32 %v701, %v737
        %v739 = vadd.f32 %v702, %v737
        %v740 = vadd.f32 %v703, %v737
        %v741 = vadd.f32 %v704, %v737
        %v742 = vadd.f32 %v705, %v737
        %v743 = vadd.f32 %v706, %v737
        %v744 = vadd.f32 %v707, %v737
        %v745 = vadd.f32 %v708, %v737
        %v746 = vadd.f32 %v709, %v737
        %v747 = vadd.f32 %v710, %v737
        %v748 = vadd.f32 %v711, %v737
        %v749 = vadd.f32 %v712, %v737
        %v750 = vadd.f32 %v713, %v737
        %v751 = vadd.f32 %v714, %v737
        %v752 = vadd.f32 %v715, %v737
        %v753 = vadd.f32 %v716, %v737
        %v754 = vadd.f32 %v717, %v737
        %v755 = vadd.f32 %v718, %v737
        %v756 = vadd.f32 %v719, %v737
        %v757 = vadd.f32 %v720, %v737
        %v758 = vadd.f32 %v721, %v737
        %v759 = vadd.f32 %v722, %v737
        %v760 = vadd.f32 %v723, %v737
        %v761 = vadd.f32 %v724, %v737
        %v762 = vadd.f32 %v725, %v737
        %v763 = vadd.f32 %v726, %v737
        %v764 = vadd.f32 %v727, %v737
        %v765 = vadd.f32 %v728, %v737
        %v766 = vadd.f32 %v729, %v737
        %v767 = vadd.f32 %v730, %v737
        %v768 = vadd.f32 %v731, %v737
        %v769 = vadd.f32 %v732, %v737
        %v770 = vsub.f32 0.0, %v738
        %v771 = vsub.f32 0.0, %v739
        %v772 = vsub.f32 0.0, %v740
        %v773 = vsub.f32 0.0, %v741
        %v774 = vsub.f32 0.0, %v742
        %v775 = vsub.f32 0.0, %v743
        %v776 = vsub.f32 0.0, %v744
        %v777 = vsub.f32 0.0, %v745
        %v778 = vsub.f32 0.0, %v746
        %v779 = vsub.f32 0.0, %v747
        %v780 = vsub.f32 0.0, %v748
        %v781 = vsub.f32 0.0, %v749
        %v782 = vsub.f32 0.0, %v750
        %v783 = vsub.f32 0.0, %v751
        %v784 = vsub.f32 0.0, %v752
        %v785 = vsub.f32 0.0, %v753
        %v786 = vsub.f32 0.0, %v754
        %v787 = vsub.f32 0.0, %v755
        %v788 = vsub.f32 0.0, %v756
        %v789 = vsub.f32 0.0, %v757
        %v790 = vsub.f32 0.0, %v758
        %v791 = vsub.f32 0.0, %v759
        %v792 = vsub.f32 0.0, %v760
        %v793 = vsub.f32 0.0, %v761
        %v794 = vsub.f32 0.0, %v762
        %v795 = vsub.f32 0.0, %v763
        %v796 = vsub.f32 0.0, %v764
        %v797 = vsub.f32 0.0, %v765
        %v798 = vsub.f32 0.0, %v766
        %v799 = vsub.f32 0.0, %v767
        %v800 = vsub.f32 0.0, %v768
        %v801 = vsub.f32 0.0, %v769
        %v802 = vmul.f32 %v770, 1.442695
        %v803 = vpow.pop %v802
        %v804 = vmul.f32 %v771, 1.442695
        %v805 = vpow.pop %v804
        %v806 = vmul.f32 %v772, 1.442695
        %v807 = vpow.pop %v806
        %v808 = vmul.f32 %v773, 1.442695
        %v809 = vpow.pop %v808
        %v810 = vmul.f32 %v774, 1.442695
        %v811 = vpow.pop %v810
        %v812 = vmul.f32 %v775, 1.442695
        %v813 = vpow.pop %v812
        %v814 = vmul.f32 %v776, 1.442695
        %v815 = vpow.pop %v814
        %v816 = vmul.f32 %v777, 1.442695
        %v817 = vpow.pop %v816
        %v818 = vmul.f32 %v778, 1.442695
        %v819 = vpow.pop %v818
        %v820 = vmul.f32 %v779, 1.442695
        %v821 = vpow.pop %v820
        %v822 = vmul.f32 %v780, 1.442695
        %v823 = vpow.pop %v822
        %v824 = vmul.f32 %v781, 1.442695
        %v825 = vpow.pop %v824
        %v826 = vmul.f32 %v782, 1.442695
        %v827 = vpow.pop %v826
        %v828 = vmul.f32 %v783, 1.442695
        %v829 = vpow.pop %v828
        %v830 = vmul.f32 %v784, 1.442695
        %v831 = vpow.pop %v830
        %v832 = vmul.f32 %v785, 1.442695
        %v833 = vpow.pop %v832
        %v834 = vmul.f32 %v786, 1.442695
        %v835 = vpow.pop %v834
        %v836 = vmul.f32 %v787, 1.442695
        %v837 = vpow.pop %v836
        %v838 = vmul.f32 %v788, 1.442695
        %v839 = vpow.pop %v838
        %v840 = vmul.f32 %v789, 1.442695
        %v841 = vpow.pop %v840
        %v842 = vmul.f32 %v790, 1.442695
        %v843 = vpow.pop %v842
        %v844 = vmul.f32 %v791, 1.442695
        %v845 = vpow.pop %v844
        %v846 = vmul.f32 %v792, 1.442695
        %v847 = vpow.pop %v846
        %v848 = vmul.f32 %v793, 1.442695
        %v849 = vpow.pop %v848
        %v850 = vmul.f32 %v794, 1.442695
        %v851 = vpow.pop %v850
        %v852 = vmul.f32 %v795, 1.442695
        %v853 = vpow.pop %v852
        %v854 = vmul.f32 %v796, 1.442695
        %v855 = vpow.pop %v854
        %v856 = vmul.f32 %v797, 1.442695
        %v857 = vpow.pop %v856
        %v858 = vmul.f32 %v798, 1.442695
        %v859 = vpow.pop %v858
        %v860 = vmul.f32 %v799, 1.442695
        %v861 = vpow.pop %v860
        %v862 = vmul.f32 %v800, 1.442695
        %v863 = vpow.pop %v862
        %v864 = vmul.f32 %v801, 1.442695
        %v865 = vpow.pop %v864
        %v866 = vadd.f32 %v803, 1.0
        %v867 = vadd.f32 %v805, 1.0
        %v868 = vadd.f32 %v807, 1.0
        %v869 = vadd.f32 %v809, 1.0
        %v870 = vadd.f32 %v811, 1.0
        %v871 = vadd.f32 %v813, 1.0
        %v872 = vadd.f32 %v815, 1.0
        %v873 = vadd.f32 %v817, 1.0
        %v874 = vadd.f32 %v819, 1.0
        %v875 = vadd.f32 %v821, 1.0
        %v876 = vadd.f32 %v823, 1.0
        %v877 = vadd.f32 %v825, 1.0
        %v878 = vadd.f32 %v827, 1.0
        %v879 = vadd.f32 %v829, 1.0
        %v880 = vadd.f32 %v831, 1.0
        %v881 = vadd.f32 %v833, 1.0
        %v882 = vadd.f32 %v835, 1.0
        %v883 = vadd.f32 %v837, 1.0
        %v884 = vadd.f32 %v839, 1.0
        %v885 = vadd.f32 %v841, 1.0
        %v886 = vadd.f32 %v843, 1.0
        %v887 = vadd.f32 %v845, 1.0
        %v888 = vadd.f32 %v847, 1.0
        %v889 = vadd.f32 %v849, 1.0
        %v890 = vadd.f32 %v851, 1.0
        %v891 = vadd.f32 %v853, 1.0
        %v892 = vadd.f32 %v855, 1.0
        %v893 = vadd.f32 %v857, 1.0
        %v894 = vadd.f32 %v859, 1.0
        %v895 = vadd.f32 %v861, 1.0
        %v896 = vadd.f32 %v863, 1.0
        %v897 = vadd.f32 %v865, 1.0
        %v898 = vrcp.pop %v866
        %v899 = vrcp.pop %v867
        %v900 = vrcp.pop %v868
        %v901 = vrcp.pop %v869
        %v902 = vrcp.pop %v870
        %v903 = vrcp.pop %v871
        %v904 = vrcp.pop %v872
        %v905 = vrcp.pop %v873
        %v906 = vrcp.pop %v874
        %v907 = vrcp.pop %v875
        %v908 = vrcp.pop %v876
        %v909 = vrcp.pop %v877
        %v910 = vrcp.pop %v878
        %v911 = vrcp.pop %v879
        %v912 = vrcp.pop %v880
        %v913 = vrcp.pop %v881
        %v914 = vrcp.pop %v882
        %v915 = vrcp.pop %v883
        %v916 = vrcp.pop %v884
        %v917 = vrcp.pop %v885
        %v918 = vrcp.pop %v886
        %v919 = vrcp.pop %v887
        %v920 = vrcp.pop %v888
        %v921 = vrcp.pop %v889
        %v922 = vrcp.pop %v890
        %v923 = vrcp.pop %v891
        %v924 = vrcp.pop %v892
        %v925 = vrcp.pop %v893
        %v926 = vrcp.pop %v894
        %v927 = vrcp.pop %v895
        %v928 = vrcp.pop %v896
        %v929 = vrcp.pop %v897
        %v930 = vmul.f32 %v738, %v898
        %v931 = vmul.f32 %v739, %v899
        %v932 = vmul.f32 %v740, %v900
        %v933 = vmul.f32 %v741, %v901
        %v934 = vmul.f32 %v742, %v902
        %v935 = vmul.f32 %v743, %v903
        %v936 = vmul.f32 %v744, %v904
        %v937 = vmul.f32 %v745, %v905
        %v938 = vmul.f32 %v746, %v906
        %v939 = vmul.f32 %v747, %v907
        %v940 = vmul.f32 %v748, %v908
        %v941 = vmul.f32 %v749, %v909
        %v942 = vmul.f32 %v750, %v910
        %v943 = vmul.f32 %v751, %v911
        %v944 = vmul.f32 %v752, %v912
        %v945 = vmul.f32 %v753, %v913
        %v946 = vmul.f32 %v754, %v914
        %v947 = vmul.f32 %v755, %v915
        %v948 = vmul.f32 %v756, %v916
        %v949 = vmul.f32 %v757, %v917
        %v950 = vmul.f32 %v758, %v918
        %v951 = vmul.f32 %v759, %v919
        %v952 = vmul.f32 %v760, %v920
        %v953 = vmul.f32 %v761, %v921
        %v954 = vmul.f32 %v762, %v922
        %v955 = vmul.f32 %v763, %v923
        %v956 = vmul.f32 %v764, %v924
        %v957 = vmul.f32 %v765, %v925
        %v958 = vmul.f32 %v766, %v926
        %v959 = vmul.f32 %v767, %v927
        %v960 = vmul.f32 %v768, %v928
        %v961 = vmul.f32 %v769, %v929
        %v962 = vpack.c.bf16 %v931, %v930
        %v963 = vpack.c.bf16 %v933, %v932
        %v964 = vpack.c.bf16 %v935, %v934
        %v965 = vpack.c.bf16 %v937, %v936
        %v966 = vpack.c.bf16 %v939, %v938
        %v967 = vpack.c.bf16 %v941, %v940
        %v968 = vpack.c.bf16 %v943, %v942
        %v969 = vpack.c.bf16 %v945, %v944
        %v970 = vpack.c.bf16 %v947, %v946
        %v971 = vpack.c.bf16 %v949, %v948
        %v972 = vpack.c.bf16 %v951, %v950
        %v973 = vpack.c.bf16 %v953, %v952
        %v974 = vpack.c.bf16 %v955, %v954
        %v975 = vpack.c.bf16 %v957, %v956
        %v976 = vpack.c.bf16 %v959, %v958
        %v977 = vpack.c.bf16 %v961, %v960
        %v994 = vunpack.c.l.b16 %v962
        %v995 = vunpack.c.h.b16 %v962
        %v996 = vunpack.c.l.b16 %v963
        %v997 = vunpack.c.h.b16 %v963
        %v998 = vunpack.c.l.b16 %v964
        %v999 = vunpack.c.h.b16 %v964
        %v1000 = vunpack.c.l.b16 %v965
        %v1001 = vunpack.c.h.b16 %v965
        %v1002 = vunpack.c.l.b16 %v966
        %v1003 = vunpack.c.h.b16 %v966
        %v1004 = vunpack.c.l.b16 %v967
        %v1005 = vunpack.c.h.b16 %v967
        %v1006 = vunpack.c.l.b16 %v968
        %v1007 = vunpack.c.h.b16 %v968
        %v1008 = vunpack.c.l.b16 %v969
        %v1009 = vunpack.c.h.b16 %v969
        %v1010 = vunpack.c.l.b16 %v970
        %v1011 = vunpack.c.h.b16 %v970
        %v1012 = vunpack.c.l.b16 %v971
        %v1013 = vunpack.c.h.b16 %v971
        %v1014 = vunpack.c.l.b16 %v972
        %v1015 = vunpack.c.h.b16 %v972
        %v1016 = vunpack.c.l.b16 %v973
        %v1017 = vunpack.c.h.b16 %v973
        %v1018 = vunpack.c.l.b16 %v974
        %v1019 = vunpack.c.h.b16 %v974
        %v1020 = vunpack.c.l.b16 %v975
        %v1021 = vunpack.c.h.b16 %v975
        %v1022 = vunpack.c.l.b16 %v976
        %v1023 = vunpack.c.h.b16 %v976
        %v1024 = vunpack.c.l.b16 %v977
        %v1025 = vunpack.c.h.b16 %v977
        %v1026 = vpack.c.b16 %v994, %v994
        %v1027 = vpack.c.b16 %v995, %v995
        %v1028 = vpack.c.b16 %v996, %v996
        %v1029 = vpack.c.b16 %v997, %v997
        %v1030 = vpack.c.b16 %v998, %v998
        %v1031 = vpack.c.b16 %v999, %v999
        %v1032 = vpack.c.b16 %v1000, %v1000
        %v1033 = vpack.c.b16 %v1001, %v1001
        %v1034 = vpack.c.b16 %v1002, %v1002
        %v1035 = vpack.c.b16 %v1003, %v1003
        %v1036 = vpack.c.b16 %v1004, %v1004
        %v1037 = vpack.c.b16 %v1005, %v1005
        %v1038 = vpack.c.b16 %v1006, %v1006
        %v1039 = vpack.c.b16 %v1007, %v1007
        %v1040 = vpack.c.b16 %v1008, %v1008
        %v1041 = vpack.c.b16 %v1009, %v1009
        %v1042 = vpack.c.b16 %v1010, %v1010
        %v1043 = vpack.c.b16 %v1011, %v1011
        %v1044 = vpack.c.b16 %v1012, %v1012
        %v1045 = vpack.c.b16 %v1013, %v1013
        %v1046 = vpack.c.b16 %v1014, %v1014
        %v1047 = vpack.c.b16 %v1015, %v1015
        %v1048 = vpack.c.b16 %v1016, %v1016
        %v1049 = vpack.c.b16 %v1017, %v1017
        %v1050 = vpack.c.b16 %v1018, %v1018
        %v1051 = vpack.c.b16 %v1019, %v1019
        %v1052 = vpack.c.b16 %v1020, %v1020
        %v1053 = vpack.c.b16 %v1021, %v1021
        %v1054 = vpack.c.b16 %v1022, %v1022
        %v1055 = vpack.c.b16 %v1023, %v1023
        %v1056 = vpack.c.b16 %v1024, %v1024
        %v1057 = vpack.c.b16 %v1025, %v1025
        %1090 = vst [vmem:[%s340] sm:$0xf] %v1026
        %1091 = vst [vmem:[%s340 + $0x4] sm:$0xf] %v1027
        %1092 = vst [vmem:[%s340 + $0x8] sm:$0xf] %v1028
        %1093 = vst [vmem:[%s340 + $0xc] sm:$0xf] %v1029
        %1094 = vst [vmem:[%s340 + $0x10] sm:$0xf] %v1030
        %1095 = vst [vmem:[%s340 + $0x14] sm:$0xf] %v1031
        %1096 = vst [vmem:[%s340 + $0x18] sm:$0xf] %v1032
        %1097 = vst [vmem:[%s340 + $0x1c] sm:$0xf] %v1033
        %1098 = vst [vmem:[%s340 + $0x20] sm:$0xf] %v1034
        %1099 = vst [vmem:[%s340 + $0x24] sm:$0xf] %v1035
        %1100 = vst [vmem:[%s340 + $0x28] sm:$0xf] %v1036
        %1101 = vst [vmem:[%s340 + $0x2c] sm:$0xf] %v1037
        %1102 = vst [vmem:[%s340 + $0x30] sm:$0xf] %v1038
        %1103 = vst [vmem:[%s340 + $0x34] sm:$0xf] %v1039
        %1104 = vst [vmem:[%s340 + $0x38] sm:$0xf] %v1040
        %1105 = vst [vmem:[%s340 + $0x3c] sm:$0xf] %v1041
        %1106 = vst [vmem:[%s340 + $0x40] sm:$0xf] %v1042
        %1107 = vst [vmem:[%s340 + $0x44] sm:$0xf] %v1043
        %1108 = vst [vmem:[%s340 + $0x48] sm:$0xf] %v1044
        %1109 = vst [vmem:[%s340 + $0x4c] sm:$0xf] %v1045
        %1110 = vst [vmem:[%s340 + $0x50] sm:$0xf] %v1046
        %1111 = vst [vmem:[%s340 + $0x54] sm:$0xf] %v1047
        %1112 = vst [vmem:[%s340 + $0x58] sm:$0xf] %v1048
        %1113 = vst [vmem:[%s340 + $0x5c] sm:$0xf] %v1049
        %1114 = vst [vmem:[%s340 + $0x60] sm:$0xf] %v1050
        %1115 = vst [vmem:[%s340 + $0x64] sm:$0xf] %v1051
        %1116 = vst [vmem:[%s340 + $0x68] sm:$0xf] %v1052
        %1117 = vst [vmem:[%s340 + $0x6c] sm:$0xf] %v1053
        %1118 = vst [vmem:[%s340 + $0x70] sm:$0xf] %v1054
        %1119 = vst [vmem:[%s340 + $0x74] sm:$0xf] %v1055
        %1120 = vst [vmem:[%s340 + $0x78] sm:$0xf] %v1056
        %1121 = vst [vmem:[%s340 + $0x7c] sm:$0xf] %v1057
        %s1122 = smul.u32 32, %s14
        %p1123 = scmp.lt.s32.totalorder %s1122, 63
        %s1124 = scalar_select %p1123, %s1122, 63
        %s1125 = smul.addr %s1124, 4
        %s1126 = scalar_lea.vmem %s3, %s1125
        // Predicated region
        $region74: #{c3_forward_nchw.5} parent=68 // pred_check
          %p1127 = pneg %p100
        $region75: #{c3_forward_nchw.5} parent=68 // pred_check_branch
          %1129 = sbr.rel (%p1127) target = $region77
        $region76: #{c3_forward_nchw.5} parent=68 // pred_region
          %s1130 = smul.u32 32, %s14
        $region77: #{c3_forward_nchw.5} parent=68 // pred_fallthru
          _
      $region69: #{c3_forward_nchw.5} parent=5 // pred_fallthru
        _
      %p1131 = scmp.le.s32.totalorder 2, %s9
      // Predicated region
      $region78: #{c3_forward_nchw.5} parent=5 // pred_check
        %p1132 = pneg %p1131
      $region79: #{c3_forward_nchw.5} parent=5 // pred_check_branch
        %1134 = sbr.rel (%p1132) target = $region81
      $region80: #{c3_forward_nchw.5} parent=5 // pred_region
        %s1135 = ssub.s32 %s9, 2
        // Predicated region
        $region82: #{c3_forward_nchw.5} parent=80 // pred_check
          %p1136 = pneg %p106
        $region83: #{c3_forward_nchw.5} parent=80 // pred_check_branch
          %1138 = sbr.rel (%p1136) target = $region85
        $region84: #{c3_forward_nchw.5} parent=80 // pred_region
          %s1139 = smul.u32 32, %s15
          %p1140 = scmp.lt.s32.totalorder %s1139, 63
          %s1141 = scalar_select %p1140, %s1139, 63
          %s1142 = smul.addr %s1141, 4
          %s1143 = scalar_lea.vmem %s3, %s1142
        $region85: #{c3_forward_nchw.5} parent=80 // pred_fallthru
          _
      $region81: #{c3_forward_nchw.5} parent=5 // pred_fallthru
        _
    $region6: #{c3_forward_nchw.5} parent=1 // loop_footer
      %s13 = sadd.s32 1, %s9
    $region7: #{c3_forward_nchw.5} parent=1 // loop_footer_branch
      %8 = sbr.rel target = $region3
    $region8: #{c3_forward_nchw.5} parent=1 // loop_exit
      _

// kernel: c3_forward_nchw.7
$region0: #{c3_forward_nchw.7}
  #allocation0 [shape = 'u32[]', space=smem, size = 0x4, offset = 0x4, fixed_abs, tag = 'smem constant byte address 0x4 - core index']
  #allocation1 [shape = 'u32[144,128]{1,0:T(1,128)}', space=vmem, size = 0x12000, scoped, tag = 'internal scratch']
  %s0 = inlined_call_operand.vmem [shape: bf16[512,128], index: 0, kind: input, shape index: {}]
  %s1 = inlined_call_operand.vmem [shape: bf16[512,256], index: 1, kind: input, shape index: {}]
  %s2 = inlined_call_operand.vmem [shape: bf16[128,128], index: 2, kind: input, shape index: {}]
  %s3 = inlined_call_operand.vmem [shape: bf16[128,128], index: 3, kind: input, shape index: {}]
  %s4 = inlined_call_operand.vmem [shape: f32[2,128], index: 4, kind: input, shape index: {}]
  %s5 = inlined_call_operand.vmem [shape: f32[512,128], index: 5, kind: output, shape index: {}]
  %s6 = sld [smem:[#allocation0]]
  $region94: #{c3_forward_nchw.7} parent=0
    _
  %s8 = ssub.s32 1, %s6
  %s9 = scalar_select 0, %s8, %s6
  $region1: #{c3_forward_nchw.7} parent=0
    #allocation2 [shape = 'u8[131072]{0}', space=vmem, size = 0x20000, scoped, tag = 'input window, operand 1']
    loop: start=0, step=1, limit=4
    $region2: #{c3_forward_nchw.7} parent=1 // loop_pre_header
      _
    $region3: #{c3_forward_nchw.7} parent=1 // loop_header
      %s11 = sphi 0, %s15
      %p12 = scmp.ge.s32.totalorder %s11, 4
      %s21 = sphi 0, %s23
      %s24 = sphi 0, %s21
      %s25 = sphi 0, %s24
      %s41 = sphi 0, %s25
      %s47 = sphi 0, %s49
      %s50 = sphi 0, %s47
      %s51 = sphi 0, %s50
      %s67 = sphi 0, %s51
      %s71 = sphi 0, %s71
      %s73 = sphi 0, %s71
      %s74 = sphi 0, %s73
      %s88 = sphi 0, %s74
      %s92 = sphi 0, %s92
      %s94 = sphi 0, %s92
      %s95 = sphi 0, %s94
      %s109 = sphi 0, %s95
      %s113 = sphi 0, %s113
      %s115 = sphi 0, %s113
      %s116 = sphi 0, %s115
      %s130 = sphi 0, %s116
      %s136 = sphi 0, %s138
      %s139 = sphi 0, %s136
      %s140 = sphi 0, %s139
      %s156 = sphi 0, %s140
    $region4: #{c3_forward_nchw.7} parent=1 // loop_header_branch
      %14 = sbr.rel (%p12) target = $region8
    $region5: #{c3_forward_nchw.7} parent=1 // loop_body
      %s16 = ssub.s32 %s11, 1
      %s17 = ssub.s32 %s11, 2
      %s18 = sadd.s32 %s11, 1
      %s19 = ssub.s32 %s11, %s18
      %p20 = scmp.eq.s32.totalorder %s19, 0
      %s22 = sadd.s32 %s21, 1
      %s23 = scalar_select %p20, %s21, %s22
      %p26 = pneg %p20
      %p27 = scmp.eq.s32.totalorder %s11, 1
      %p28 = por %p26, %p27
      %p29 = scmp.ne.s32.totalorder %s21, %s24
      %p30 = scmp.eq.s32.totalorder %s11, 0
      %p31 = por %p29, %p30
      %p32 = scmp.ne.s32.totalorder %s21, %s24
      %p33 = scmp.eq.s32.totalorder %s16, 1
      %p34 = por %p32, %p33
      %p35 = scmp.ne.s32.totalorder %s24, %s25
      %p36 = scmp.eq.s32.totalorder %s16, 0
      %p37 = por %p35, %p36
      %p38 = scmp.ne.s32.totalorder %s24, %s25
      %p39 = scmp.eq.s32.totalorder %s17, 1
      %p40 = por %p38, %p39
      %p42 = scmp.ne.s32.totalorder %s25, %s41
      %p43 = scmp.eq.s32.totalorder %s17, 0
      %p44 = por %p42, %p43
      %s45 = ssub.s32 %s11, %s18
      %p46 = scmp.eq.s32.totalorder %s45, 0
      %s48 = sadd.s32 %s47, 1
      %s49 = scalar_select %p46, %s47, %s48
      %p52 = pneg %p46
      %p53 = scmp.eq.s32.totalorder %s11, 1
      %p54 = por %p52, %p53
      %p55 = scmp.ne.s32.totalorder %s47, %s50
      %p56 = scmp.eq.s32.totalorder %s11, 0
      %p57 = por %p55, %p56
      %p58 = scmp.ne.s32.totalorder %s47, %s50
      %p59 = scmp.eq.s32.totalorder %s16, 1
      %p60 = por %p58, %p59
      %p61 = scmp.ne.s32.totalorder %s50, %s51
      %p62 = scmp.eq.s32.totalorder %s16, 0
      %p63 = por %p61, %p62
      %p64 = scmp.ne.s32.totalorder %s50, %s51
      %p65 = scmp.eq.s32.totalorder %s17, 1
      %p66 = por %p64, %p65
      %p68 = scmp.ne.s32.totalorder %s51, %s67
      %p69 = scmp.eq.s32.totalorder %s17, 0
      %p70 = por %p68, %p69
      %s72 = sadd.s32 %s71, 1
      %p75 = scmp.eq.s32.totalorder %s11, 1
      %p76 = scmp.ne.s32.totalorder %s71, %s73
      %p77 = scmp.eq.s32.totalorder %s11, 0
      %p78 = por %p76, %p77
      %p79 = scmp.ne.s32.totalorder %s71, %s73
      %p80 = scmp.eq.s32.totalorder %s16, 1
      %p81 = por %p79, %p80
      %p82 = scmp.ne.s32.totalorder %s73, %s74
      %p83 = scmp.eq.s32.totalorder %s16, 0
      %p84 = por %p82, %p83
      %p85 = scmp.ne.s32.totalorder %s73, %s74
      %p86 = scmp.eq.s32.totalorder %s17, 1
      %p87 = por %p85, %p86
      %p89 = scmp.ne.s32.totalorder %s74, %s88
      %p90 = scmp.eq.s32.totalorder %s17, 0
      %p91 = por %p89, %p90
      %s93 = sadd.s32 %s92, 1
      %p96 = scmp.eq.s32.totalorder %s11, 1
      %p97 = scmp.ne.s32.totalorder %s92, %s94
      %p98 = scmp.eq.s32.totalorder %s11, 0
      %p99 = por %p97, %p98
      %p100 = scmp.ne.s32.totalorder %s92, %s94
      %p101 = scmp.eq.s32.totalorder %s16, 1
      %p102 = por %p100, %p101
      %p103 = scmp.ne.s32.totalorder %s94, %s95
      %p104 = scmp.eq.s32.totalorder %s16, 0
      %p105 = por %p103, %p104
      %p106 = scmp.ne.s32.totalorder %s94, %s95
      %p107 = scmp.eq.s32.totalorder %s17, 1
      %p108 = por %p106, %p107
      %p110 = scmp.ne.s32.totalorder %s95, %s109
      %p111 = scmp.eq.s32.totalorder %s17, 0
      %p112 = por %p110, %p111
      %s114 = sadd.s32 %s113, 1
      %p117 = scmp.eq.s32.totalorder %s11, 1
      %p118 = scmp.ne.s32.totalorder %s113, %s115
      %p119 = scmp.eq.s32.totalorder %s11, 0
      %p120 = por %p118, %p119
      %p121 = scmp.ne.s32.totalorder %s113, %s115
      %p122 = scmp.eq.s32.totalorder %s16, 1
      %p123 = por %p121, %p122
      %p124 = scmp.ne.s32.totalorder %s115, %s116
      %p125 = scmp.eq.s32.totalorder %s16, 0
      %p126 = por %p124, %p125
      %p127 = scmp.ne.s32.totalorder %s115, %s116
      %p128 = scmp.eq.s32.totalorder %s17, 1
      %p129 = por %p127, %p128
      %p131 = scmp.ne.s32.totalorder %s116, %s130
      %p132 = scmp.eq.s32.totalorder %s17, 0
      %p133 = por %p131, %p132
      %s134 = ssub.s32 %s11, %s18
      %p135 = scmp.eq.s32.totalorder %s134, 0
      %s137 = sadd.s32 %s136, 1
      %s138 = scalar_select %p135, %s136, %s137
      %p141 = pneg %p135
      %p142 = scmp.eq.s32.totalorder %s11, 1
      %p143 = por %p141, %p142
      %p144 = scmp.ne.s32.totalorder %s136, %s139
      %p145 = scmp.eq.s32.totalorder %s11, 0
      %p146 = por %p144, %p145
      %p147 = scmp.ne.s32.totalorder %s136, %s139
      %p148 = scmp.eq.s32.totalorder %s16, 1
      %p149 = por %p147, %p148
      %p150 = scmp.ne.s32.totalorder %s139, %s140
      %p151 = scmp.eq.s32.totalorder %s16, 0
      %p152 = por %p150, %p151
      %p153 = scmp.ne.s32.totalorder %s139, %s140
      %p154 = scmp.eq.s32.totalorder %s17, 1
      %p155 = por %p153, %p154
      %p157 = scmp.ne.s32.totalorder %s140, %s156
      %p158 = scmp.eq.s32.totalorder %s17, 0
      %p159 = por %p157, %p158
      %p160 = scmp.le.s32.totalorder 1, %s11
      %p161 = scmp.lt.s32.totalorder %s11, 3
      %p162 = pnand %p160, %p161
      %p163 = pneg %p162
      // Predicated region
      $region9: #{c3_forward_nchw.7} parent=5 // pred_check
        _
      $region10: #{c3_forward_nchw.7} parent=5 // pred_check_branch
        %165 = sbr.rel (%p162) target = $region12
      $region11: #{c3_forward_nchw.7} parent=5 // pred_region
        %s166 = ssub.s32 %s11, 1
        // Predicated region
        $region13: #{c3_forward_nchw.7} parent=11 // pred_check
          %p167 = pneg %p84
        $region14: #{c3_forward_nchw.7} parent=11 // pred_check_branch
          %169 = sbr.rel (%p167) target = $region16
        $region15: #{c3_forward_nchw.7} parent=11 // pred_region
          _
        $region16: #{c3_forward_nchw.7} parent=11 // pred_fallthru
          _
        // Predicated region
        $region17: #{c3_forward_nchw.7} parent=11 // pred_check
          %p170 = pneg %p105
        $region18: #{c3_forward_nchw.7} parent=11 // pred_check_branch
          %172 = sbr.rel (%p170) target = $region20
        $region19: #{c3_forward_nchw.7} parent=11 // pred_region
          _
        $region20: #{c3_forward_nchw.7} parent=11 // pred_fallthru
          _
        // Predicated region
        $region21: #{c3_forward_nchw.7} parent=11 // pred_check
          %p173 = pneg %p126
        $region22: #{c3_forward_nchw.7} parent=11 // pred_check_branch
          %175 = sbr.rel (%p173) target = $region24
        $region23: #{c3_forward_nchw.7} parent=11 // pred_region
          _
        $region24: #{c3_forward_nchw.7} parent=11 // pred_fallthru
          _
      $region12: #{c3_forward_nchw.7} parent=5 // pred_fallthru
        _
      %p176 = scmp.lt.s32.totalorder %s11, 2
      // Predicated region
      $region25: #{c3_forward_nchw.7} parent=5 // pred_check
        %p177 = pneg %p176
      $region26: #{c3_forward_nchw.7} parent=5 // pred_check_branch
        %179 = sbr.rel (%p177) target = $region28
      $region27: #{c3_forward_nchw.7} parent=5 // pred_region
        // Predicated region
        $region29: #{c3_forward_nchw.7} parent=27 // pred_check
          %p180 = pneg %p31
        $region30: #{c3_forward_nchw.7} parent=27 // pred_check_branch
          %182 = sbr.rel (%p180) target = $region32
        $region31: #{c3_forward_nchw.7} parent=27 // pred_region
          %s183 = smul.u32 32, %s11
          %p184 = scmp.lt.s32.totalorder %s183, 63
          %s185 = scalar_select %p184, %s183, 63
          %s186 = smul.addr %s185, 4
          %s187 = scalar_lea.vmem %s0, %s186
          %s188 = smul.u32 32, %s11
        $region32: #{c3_forward_nchw.7} parent=27 // pred_fallthru
          _
        // Predicated region
        $region33: #{c3_forward_nchw.7} parent=27 // pred_check
          %p189 = pneg %p57
        $region34: #{c3_forward_nchw.7} parent=27 // pred_check_branch
          %191 = sbr.rel (%p189) target = $region36
        $region35: #{c3_forward_nchw.7} parent=27 // pred_region
          %s192 = sand.u32 %s47, 1
          %s193 = sand.u32 %s47, 1
          %s194 = smul.addr %s193, 128
          %s195 = scalar_lea.vmem [#allocation2], %s194
          %s196 = smul.u32 32, %s11
          %s197 = smul.addr %s196, 2
          %s198 = sadd.s32 1, %s197
          %s199 = smul.addr %s198, 4
          %s200 = scalar_lea.vmem %s1, %s199
          // Predicated region
          $region37: #{c3_forward_nchw.7} parent=35 // pred_check
            _
          $region38: #{c3_forward_nchw.7} parent=35 // pred_check_branch
            %202 = sbr.rel (0) target = $region40
          $region39: #{c3_forward_nchw.7} parent=35 // pred_region
            // Predicated region
            $region41: #{c3_forward_nchw.7} parent=39 // pred_check
              _
            $region42: #{c3_forward_nchw.7} parent=39 // pred_check_branch
              %204 = sbr.rel target = $region44
            $region43: #{c3_forward_nchw.7} parent=39 // pred_region
              // Predicated region
              $region56: #{c3_forward_nchw.7} parent=43 // pred_check
                _
              $region57: #{c3_forward_nchw.7} parent=43 // pred_check_branch
                %282 = sbr.rel (0) target = $region59
              $region58: #{c3_forward_nchw.7} parent=43 // pred_region
                loop: start=0, step=1, limit=1
                $region60: #{c3_forward_nchw.7} parent=58 // loop_pre_header
                  _
                $region61: #{c3_forward_nchw.7} parent=58 // loop_header
                  %s284 = sphi 0, %s288
                  %p285 = scmp.ge.s32.totalorder %s284, 1
                  %s289 = sphi %s200, %s200
                  %s290 = sphi %s195, %s195
                $region62: #{c3_forward_nchw.7} parent=58 // loop_header_branch
                  %287 = sbr.rel (%p285) target = $region66
                $region63: #{c3_forward_nchw.7} parent=58 // loop_body
                  _
                $region64: #{c3_forward_nchw.7} parent=58 // loop_footer
                  %s288 = sadd.s32 1, %s284
                $region65: #{c3_forward_nchw.7} parent=58 // loop_footer_branch
                  %283 = sbr.rel target = $region61
                $region66: #{c3_forward_nchw.7} parent=58 // loop_exit
                  _
                %s292 = ssub.s32 16, 1
                loop: start=0, step=1, limit=1
                $region67: #{c3_forward_nchw.7} parent=58 // loop_pre_header
                  _
                $region68: #{c3_forward_nchw.7} parent=58 // loop_header
                  %s294 = sphi 0, %s298
                  %p295 = scmp.ge.s32.totalorder %s294, 1
                  %s299 = sphi %s200, %s200
                  %s300 = sphi %s195, %s195
                $region69: #{c3_forward_nchw.7} parent=58 // loop_header_branch
                  %297 = sbr.rel (%p295) target = $region73
                $region70: #{c3_forward_nchw.7} parent=58 // loop_body
                  %v301 = vld [vmem:[%s299] sm:%s292]
                  %302 = vst [vmem:[%s300] sm:%s292] %v301
                  %v303 = vld [vmem:[%s299 + $0x8] sm:%s292]
                  %304 = vst [vmem:[%s300 + $0x4] sm:%s292] %v303
                  %v305 = vld [vmem:[%s299 + $0x10] sm:%s292]
                  %306 = vst [vmem:[%s300 + $0x8] sm:%s292] %v305
                  %v307 = vld [vmem:[%s299 + $0x18] sm:%s292]
                  %308 = vst [vmem:[%s300 + $0xc] sm:%s292] %v307
                  %v309 = vld [vmem:[%s299 + $0x20] sm:%s292]
                  %310 = vst [vmem:[%s300 + $0x10] sm:%s292] %v309
                  %v311 = vld [vmem:[%s299 + $0x28] sm:%s292]
                  %312 = vst [vmem:[%s300 + $0x14] sm:%s292] %v311
                  %v313 = vld [vmem:[%s299 + $0x30] sm:%s292]
                  %314 = vst [vmem:[%s300 + $0x18] sm:%s292] %v313
                  %v315 = vld [vmem:[%s299 + $0x38] sm:%s292]
                  %316 = vst [vmem:[%s300 + $0x1c] sm:%s292] %v315
                  %v317 = vld [vmem:[%s299 + $0x40] sm:%s292]
                  %318 = vst [vmem:[%s300 + $0x20] sm:%s292] %v317
                  %v319 = vld [vmem:[%s299 + $0x48] sm:%s292]
                  %320 = vst [vmem:[%s300 + $0x24] sm:%s292] %v319
                  %v321 = vld [vmem:[%s299 + $0x50] sm:%s292]
                  %322 = vst [vmem:[%s300 + $0x28] sm:%s292] %v321
                  %v323 = vld [vmem:[%s299 + $0x58] sm:%s292]
                  %324 = vst [vmem:[%s300 + $0x2c] sm:%s292] %v323
                  %v325 = vld [vmem:[%s299 + $0x60] sm:%s292]
                  %326 = vst [vmem:[%s300 + $0x30] sm:%s292] %v325
                  %v327 = vld [vmem:[%s299 + $0x68] sm:%s292]
                  %328 = vst [vmem:[%s300 + $0x34] sm:%s292] %v327
                  %v329 = vld [vmem:[%s299 + $0x70] sm:%s292]
                  %330 = vst [vmem:[%s300 + $0x38] sm:%s292] %v329
                  %v331 = vld [vmem:[%s299 + $0x78] sm:%s292]
                  %332 = vst [vmem:[%s300 + $0x3c] sm:%s292] %v331
                  %v333 = vld [vmem:[%s299 + $0x80] sm:%s292]
                  %334 = vst [vmem:[%s300 + $0x40] sm:%s292] %v333
                  %v335 = vld [vmem:[%s299 + $0x88] sm:%s292]
                  %336 = vst [vmem:[%s300 + $0x44] sm:%s292] %v335
                  %v337 = vld [vmem:[%s299 + $0x90] sm:%s292]
                  %338 = vst [vmem:[%s300 + $0x48] sm:%s292] %v337
                  %v339 = vld [vmem:[%s299 + $0x98] sm:%s292]
                  %340 = vst [vmem:[%s300 + $0x4c] sm:%s292] %v339
                  %v341 = vld [vmem:[%s299 + $0xa0] sm:%s292]
                  %342 = vst [vmem:[%s300 + $0x50] sm:%s292] %v341
                  %v343 = vld [vmem:[%s299 + $0xa8] sm:%s292]
                  %344 = vst [vmem:[%s300 + $0x54] sm:%s292] %v343
                  %v345 = vld [vmem:[%s299 + $0xb0] sm:%s292]
                  %346 = vst [vmem:[%s300 + $0x58] sm:%s292] %v345
                  %v347 = vld [vmem:[%s299 + $0xb8] sm:%s292]
                  %348 = vst [vmem:[%s300 + $0x5c] sm:%s292] %v347
                  %v349 = vld [vmem:[%s299 + $0xc0] sm:%s292]
                  %350 = vst [vmem:[%s300 + $0x60] sm:%s292] %v349
                  %v351 = vld [vmem:[%s299 + $0xc8] sm:%s292]
                  %352 = vst [vmem:[%s300 + $0x64] sm:%s292] %v351
                  %v353 = vld [vmem:[%s299 + $0xd0] sm:%s292]
                  %354 = vst [vmem:[%s300 + $0x68] sm:%s292] %v353
                  %v355 = vld [vmem:[%s299 + $0xd8] sm:%s292]
                  %356 = vst [vmem:[%s300 + $0x6c] sm:%s292] %v355
                  %v357 = vld [vmem:[%s299 + $0xe0] sm:%s292]
                  %358 = vst [vmem:[%s300 + $0x70] sm:%s292] %v357
                  %v359 = vld [vmem:[%s299 + $0xe8] sm:%s292]
                  %360 = vst [vmem:[%s300 + $0x74] sm:%s292] %v359
                  %v361 = vld [vmem:[%s299 + $0xf0] sm:%s292]
                  %362 = vst [vmem:[%s300 + $0x78] sm:%s292] %v361
                  %v363 = vld [vmem:[%s299 + $0xf8] sm:%s292]
                  %364 = vst [vmem:[%s300 + $0x7c] sm:%s292] %v363
                $region71: #{c3_forward_nchw.7} parent=58 // loop_footer
                  %s298 = sadd.s32 1, %s294
                $region72: #{c3_forward_nchw.7} parent=58 // loop_footer_branch
                  %293 = sbr.rel target = $region68
                $region73: #{c3_forward_nchw.7} parent=58 // loop_exit
                  _
              $region59: #{c3_forward_nchw.7} parent=43 // pred_fallthru
                _
            $region44: #{c3_forward_nchw.7} parent=39 // pred_fallthru
              _
            // Predicated region
            $region45: #{c3_forward_nchw.7} parent=39 // pred_check
              _
            $region46: #{c3_forward_nchw.7} parent=39 // pred_check_branch
              %206 = sbr.rel (0) target = $region48
            $region47: #{c3_forward_nchw.7} parent=39 // pred_region
              %s208 = ssub.s32 16, 1
              loop: start=0, step=1, limit=1
              $region49: #{c3_forward_nchw.7} parent=47 // loop_pre_header
                _
              $region50: #{c3_forward_nchw.7} parent=47 // loop_header
                %s210 = sphi 0, %s214
                %p211 = scmp.ge.s32.totalorder %s210, 1
                %s215 = sphi %s200, %s200
                %s216 = sphi %s195, %s195
              $region51: #{c3_forward_nchw.7} parent=47 // loop_header_branch
                %213 = sbr.rel (%p211) target = $region55
              $region52: #{c3_forward_nchw.7} parent=47 // loop_body
                %v217 = vld [vmem:[%s215] sm:%s208]
                %218 = vst [vmem:[%s216] sm:%s208] %v217
                %v219 = vld [vmem:[%s215 + $0x8] sm:%s208]
                %220 = vst [vmem:[%s216 + $0x4] sm:%s208] %v219
                %v221 = vld [vmem:[%s215 + $0x10] sm:%s208]
                %222 = vst [vmem:[%s216 + $0x8] sm:%s208] %v221
                %v223 = vld [vmem:[%s215 + $0x18] sm:%s208]
                %224 = vst [vmem:[%s216 + $0xc] sm:%s208] %v223
                %v225 = vld [vmem:[%s215 + $0x20] sm:%s208]
                %226 = vst [vmem:[%s216 + $0x10] sm:%s208] %v225
                %v227 = vld [vmem:[%s215 + $0x28] sm:%s208]
                %228 = vst [vmem:[%s216 + $0x14] sm:%s208] %v227
                %v229 = vld [vmem:[%s215 + $0x30] sm:%s208]
                %230 = vst [vmem:[%s216 + $0x18] sm:%s208] %v229
                %v231 = vld [vmem:[%s215 + $0x38] sm:%s208]
                %232 = vst [vmem:[%s216 + $0x1c] sm:%s208] %v231
                %v233 = vld [vmem:[%s215 + $0x40] sm:%s208]
                %234 = vst [vmem:[%s216 + $0x20] sm:%s208] %v233
                %v235 = vld [vmem:[%s215 + $0x48] sm:%s208]
                %236 = vst [vmem:[%s216 + $0x24] sm:%s208] %v235
                %v237 = vld [vmem:[%s215 + $0x50] sm:%s208]
                %238 = vst [vmem:[%s216 + $0x28] sm:%s208] %v237
                %v239 = vld [vmem:[%s215 + $0x58] sm:%s208]
                %240 = vst [vmem:[%s216 + $0x2c] sm:%s208] %v239
                %v241 = vld [vmem:[%s215 + $0x60] sm:%s208]
                %242 = vst [vmem:[%s216 + $0x30] sm:%s208] %v241
                %v243 = vld [vmem:[%s215 + $0x68] sm:%s208]
                %244 = vst [vmem:[%s216 + $0x34] sm:%s208] %v243
                %v245 = vld [vmem:[%s215 + $0x70] sm:%s208]
                %246 = vst [vmem:[%s216 + $0x38] sm:%s208] %v245
                %v247 = vld [vmem:[%s215 + $0x78] sm:%s208]
                %248 = vst [vmem:[%s216 + $0x3c] sm:%s208] %v247
                %v249 = vld [vmem:[%s215 + $0x80] sm:%s208]
                %250 = vst [vmem:[%s216 + $0x40] sm:%s208] %v249
                %v251 = vld [vmem:[%s215 + $0x88] sm:%s208]
                %252 = vst [vmem:[%s216 + $0x44] sm:%s208] %v251
                %v253 = vld [vmem:[%s215 + $0x90] sm:%s208]
                %254 = vst [vmem:[%s216 + $0x48] sm:%s208] %v253
                %v255 = vld [vmem:[%s215 + $0x98] sm:%s208]
                %256 = vst [vmem:[%s216 + $0x4c] sm:%s208] %v255
                %v257 = vld [vmem:[%s215 + $0xa0] sm:%s208]
                %258 = vst [vmem:[%s216 + $0x50] sm:%s208] %v257
                %v259 = vld [vmem:[%s215 + $0xa8] sm:%s208]
                %260 = vst [vmem:[%s216 + $0x54] sm:%s208] %v259
                %v261 = vld [vmem:[%s215 + $0xb0] sm:%s208]
                %262 = vst [vmem:[%s216 + $0x58] sm:%s208] %v261
                %v263 = vld [vmem:[%s215 + $0xb8] sm:%s208]
                %264 = vst [vmem:[%s216 + $0x5c] sm:%s208] %v263
                %v265 = vld [vmem:[%s215 + $0xc0] sm:%s208]
                %266 = vst [vmem:[%s216 + $0x60] sm:%s208] %v265
                %v267 = vld [vmem:[%s215 + $0xc8] sm:%s208]
                %268 = vst [vmem:[%s216 + $0x64] sm:%s208] %v267
                %v269 = vld [vmem:[%s215 + $0xd0] sm:%s208]
                %270 = vst [vmem:[%s216 + $0x68] sm:%s208] %v269
                %v271 = vld [vmem:[%s215 + $0xd8] sm:%s208]
                %272 = vst [vmem:[%s216 + $0x6c] sm:%s208] %v271
                %v273 = vld [vmem:[%s215 + $0xe0] sm:%s208]
                %274 = vst [vmem:[%s216 + $0x70] sm:%s208] %v273
                %v275 = vld [vmem:[%s215 + $0xe8] sm:%s208]
                %276 = vst [vmem:[%s216 + $0x74] sm:%s208] %v275
                %v277 = vld [vmem:[%s215 + $0xf0] sm:%s208]
                %278 = vst [vmem:[%s216 + $0x78] sm:%s208] %v277
                %v279 = vld [vmem:[%s215 + $0xf8] sm:%s208]
                %280 = vst [vmem:[%s216 + $0x7c] sm:%s208] %v279
              $region53: #{c3_forward_nchw.7} parent=47 // loop_footer
                %s214 = sadd.s32 1, %s210
              $region54: #{c3_forward_nchw.7} parent=47 // loop_footer_branch
                %209 = sbr.rel target = $region50
              $region55: #{c3_forward_nchw.7} parent=47 // loop_exit
                _
            $region48: #{c3_forward_nchw.7} parent=39 // pred_fallthru
              _
          $region40: #{c3_forward_nchw.7} parent=35 // pred_fallthru
            _
          %365 = vnop
        $region36: #{c3_forward_nchw.7} parent=27 // pred_fallthru
          _
      $region28: #{c3_forward_nchw.7} parent=5 // pred_fallthru
        _
      %p366 = scmp.le.s32.totalorder 1, %s11
      %p367 = scmp.lt.s32.totalorder %s11, 3
      %p368 = pnand %p366, %p367
      %p369 = pneg %p368
      // Predicated region
      $region74: #{c3_forward_nchw.7} parent=5 // pred_check
        _
      $region75: #{c3_forward_nchw.7} parent=5 // pred_check_branch
        %371 = sbr.rel (%p368) target = $region77
      $region76: #{c3_forward_nchw.7} parent=5 // pred_region
        %s372 = ssub.s32 %s11, 1
        %s373 = sand.u32 %s50, 1
        %s374 = sand.u32 %s50, 1
        %s375 = smul.addr %s374, 128
        %s376 = scalar_lea.vmem [#allocation2], %s375
        // Predicated region
        $region78: #{c3_forward_nchw.7} parent=76 // pred_check
          %p377 = pneg %p63
        $region79: #{c3_forward_nchw.7} parent=76 // pred_check_branch
          %379 = sbr.rel (%p377) target = $region81
        $region80: #{c3_forward_nchw.7} parent=76 // pred_region
          _
        $region81: #{c3_forward_nchw.7} parent=76 // pred_fallthru
          _
        %s380 = smul.u32 32, %s16
        %p381 = scmp.lt.s32.totalorder %s380, 63
        %s382 = scalar_select %p381, %s380, 63
        %s383 = smul.addr %s382, 4
        %s384 = scalar_lea.vmem %s0, %s383
        %p385 = pneg %p37
        %p386 = pneg %p34
        %s387 = sand.u32 %s50, 1
        %s388 = sand.u32 %s50, 1
        %s389 = smul.addr %s388, 128
        %s390 = scalar_lea.vmem [#allocation2], %s389
        %p391 = pneg %p63
        %p392 = pneg %p60
        %p393 = pneg %p84
        %p394 = pneg %p81
        %p395 = pneg %p105
        %p396 = pneg %p102
        %p397 = pneg %p126
        %p398 = pneg %p123
        %p399 = pneg %p152
        %p400 = pneg %p149
        %s401 = smul.u32 32, %s16
        %p402 = scmp.lt.s32.totalorder %s401, 63
        %s403 = scalar_select %p402, %s401, 63
        %s404 = smul.addr %s403, 8
        %s405 = scalar_lea.vmem %s5, %s404
        %s406 = smul.u32 32, %s16
        %p407 = scmp.lt.s32.totalorder %s406, 63
        %s408 = scalar_select %p407, %s406, 63
        %s409 = smul.addr %s408, 4
        %s410 = scalar_lea.vmem %s0, %s409
        %s411 = smul.u32 32, %s16
        %s412 = smul.u32 32, %s16
        %s413 = smul.u32 32, %s16
        %p414 = scmp.lt.s32.totalorder %s413, 63
        %s415 = scalar_select %p414, %s413, 63
        %s416 = smul.addr %s415, 8
        %s417 = scalar_lea.vmem %s5, %s416
        %s418 = smul.u32 32, %s16
        %v420 = vld [vmem:[%s410] sm:$0xf]
        %v421 = vld [vmem:[%s410 + $0x4] sm:$0xf]
        %v422 = vld [vmem:[%s410 + $0x8] sm:$0xf]
        %v423 = vld [vmem:[%s410 + $0xc] sm:$0xf]
        %v424 = vld [vmem:[%s410 + $0x10] sm:$0xf]
        %v425 = vld [vmem:[%s410 + $0x14] sm:$0xf]
        %v426 = vld [vmem:[%s410 + $0x18] sm:$0xf]
        %v427 = vld [vmem:[%s410 + $0x1c] sm:$0xf]
        %v428 = vld [vmem:[%s410 + $0x20] sm:$0xf]
        %v429 = vld [vmem:[%s410 + $0x24] sm:$0xf]
        %v430 = vld [vmem:[%s410 + $0x28] sm:$0xf]
        %v431 = vld [vmem:[%s410 + $0x2c] sm:$0xf]
        %v432 = vld [vmem:[%s410 + $0x30] sm:$0xf]
        %v433 = vld [vmem:[%s410 + $0x34] sm:$0xf]
        %v434 = vld [vmem:[%s410 + $0x38] sm:$0xf]
        %v435 = vld [vmem:[%s410 + $0x3c] sm:$0xf]
        %v436 = vld [vmem:[%s410 + $0x40] sm:$0xf]
        %v437 = vld [vmem:[%s410 + $0x44] sm:$0xf]
        %v438 = vld [vmem:[%s410 + $0x48] sm:$0xf]
        %v439 = vld [vmem:[%s410 + $0x4c] sm:$0xf]
        %v440 = vld [vmem:[%s410 + $0x50] sm:$0xf]
        %v441 = vld [vmem:[%s410 + $0x54] sm:$0xf]
        %v442 = vld [vmem:[%s410 + $0x58] sm:$0xf]
        %v443 = vld [vmem:[%s410 + $0x5c] sm:$0xf]
        %v444 = vld [vmem:[%s410 + $0x60] sm:$0xf]
        %v445 = vld [vmem:[%s410 + $0x64] sm:$0xf]
        %v446 = vld [vmem:[%s410 + $0x68] sm:$0xf]
        %v447 = vld [vmem:[%s410 + $0x6c] sm:$0xf]
        %v448 = vld [vmem:[%s410 + $0x70] sm:$0xf]
        %v449 = vld [vmem:[%s410 + $0x74] sm:$0xf]
        %v450 = vld [vmem:[%s410 + $0x78] sm:$0xf]
        %v451 = vld [vmem:[%s410 + $0x7c] sm:$0xf]
        %v452 = vld [vmem:[%s2] sm:$0xf]
        %v453 = vld [vmem:[%s2 + $0x4] sm:$0xf]
        %v454 = vld [vmem:[%s2 + $0x8] sm:$0xf]
        %v455 = vld [vmem:[%s2 + $0xc] sm:$0xf]
        %v456 = vld [vmem:[%s2 + $0x10] sm:$0xf]
        %v457 = vld [vmem:[%s2 + $0x14] sm:$0xf]
        %v458 = vld [vmem:[%s2 + $0x18] sm:$0xf]
        %v459 = vld [vmem:[%s2 + $0x1c] sm:$0xf]
        %v460 = vld [vmem:[%s2 + $0x20] sm:$0xf]
        %v461 = vld [vmem:[%s2 + $0x24] sm:$0xf]
        %v462 = vld [vmem:[%s2 + $0x28] sm:$0xf]
        %v463 = vld [vmem:[%s2 + $0x2c] sm:$0xf]
        %v464 = vld [vmem:[%s2 + $0x30] sm:$0xf]
        %v465 = vld [vmem:[%s2 + $0x34] sm:$0xf]
        %v466 = vld [vmem:[%s2 + $0x38] sm:$0xf]
        %v467 = vld [vmem:[%s2 + $0x3c] sm:$0xf]
        %v468 = vld [vmem:[%s376] sm:$0xf]
        %v469 = vld [vmem:[%s376 + $0x4] sm:$0xf]
        %v470 = vld [vmem:[%s376 + $0x8] sm:$0xf]
        %v471 = vld [vmem:[%s376 + $0xc] sm:$0xf]
        %v472 = vld [vmem:[%s376 + $0x10] sm:$0xf]
        %v473 = vld [vmem:[%s376 + $0x14] sm:$0xf]
        %v474 = vld [vmem:[%s376 + $0x18] sm:$0xf]
        %v475 = vld [vmem:[%s376 + $0x1c] sm:$0xf]
        %v476 = vld [vmem:[%s376 + $0x20] sm:$0xf]
        %v477 = vld [vmem:[%s376 + $0x24] sm:$0xf]
        %v478 = vld [vmem:[%s376 + $0x28] sm:$0xf]
        %v479 = vld [vmem:[%s376 + $0x2c] sm:$0xf]
        %v480 = vld [vmem:[%s376 + $0x30] sm:$0xf]
        %v481 = vld [vmem:[%s376 + $0x34] sm:$0xf]
        %v482 = vld [vmem:[%s376 + $0x38] sm:$0xf]
        %v483 = vld [vmem:[%s376 + $0x3c] sm:$0xf]
        %v484 = vld [vmem:[%s376 + $0x40] sm:$0xf]
        %v485 = vld [vmem:[%s376 + $0x44] sm:$0xf]
        %v486 = vld [vmem:[%s376 + $0x48] sm:$0xf]
        %v487 = vld [vmem:[%s376 + $0x4c] sm:$0xf]
        %v488 = vld [vmem:[%s376 + $0x50] sm:$0xf]
        %v489 = vld [vmem:[%s376 + $0x54] sm:$0xf]
        %v490 = vld [vmem:[%s376 + $0x58] sm:$0xf]
        %v491 = vld [vmem:[%s376 + $0x5c] sm:$0xf]
        %v492 = vld [vmem:[%s376 + $0x60] sm:$0xf]
        %v493 = vld [vmem:[%s376 + $0x64] sm:$0xf]
        %v494 = vld [vmem:[%s376 + $0x68] sm:$0xf]
        %v495 = vld [vmem:[%s376 + $0x6c] sm:$0xf]
        %v496 = vld [vmem:[%s376 + $0x70] sm:$0xf]
        %v497 = vld [vmem:[%s376 + $0x74] sm:$0xf]
        %v498 = vld [vmem:[%s376 + $0x78] sm:$0xf]
        %v499 = vld [vmem:[%s376 + $0x7c] sm:$0xf]
        %v500 = vld [vmem:[%s3] sm:$0xf]
        %v501 = vld [vmem:[%s3 + $0x4] sm:$0xf]
        %v502 = vld [vmem:[%s3 + $0x8] sm:$0xf]
        %v503 = vld [vmem:[%s3 + $0xc] sm:$0xf]
        %v504 = vld [vmem:[%s3 + $0x10] sm:$0xf]
        %v505 = vld [vmem:[%s3 + $0x14] sm:$0xf]
        %v506 = vld [vmem:[%s3 + $0x18] sm:$0xf]
        %v507 = vld [vmem:[%s3 + $0x1c] sm:$0xf]
        %v508 = vld [vmem:[%s3 + $0x20] sm:$0xf]
        %v509 = vld [vmem:[%s3 + $0x24] sm:$0xf]
        %v510 = vld [vmem:[%s3 + $0x28] sm:$0xf]
        %v511 = vld [vmem:[%s3 + $0x2c] sm:$0xf]
        %v512 = vld [vmem:[%s3 + $0x30] sm:$0xf]
        %v513 = vld [vmem:[%s3 + $0x34] sm:$0xf]
        %v514 = vld [vmem:[%s3 + $0x38] sm:$0xf]
        %v515 = vld [vmem:[%s3 + $0x3c] sm:$0xf]
        %v548 = vunpack.c.l.b16 %v468
        %v549 = vunpack.c.l.b16 %v469
        %v550 = vunpack.c.l.b16 %v470
        %v551 = vunpack.c.l.b16 %v471
        %v552 = vunpack.c.l.b16 %v472
        %v553 = vunpack.c.l.b16 %v473
        %v554 = vunpack.c.l.b16 %v474
        %v555 = vunpack.c.l.b16 %v475
        %v556 = vunpack.c.l.b16 %v476
        %v557 = vunpack.c.l.b16 %v477
        %v558 = vunpack.c.l.b16 %v478
        %v559 = vunpack.c.l.b16 %v479
        %v560 = vunpack.c.l.b16 %v480
        %v561 = vunpack.c.l.b16 %v481
        %v562 = vunpack.c.l.b16 %v482
        %v563 = vunpack.c.l.b16 %v483
        %v564 = vunpack.c.l.b16 %v484
        %v565 = vunpack.c.l.b16 %v485
        %v566 = vunpack.c.l.b16 %v486
        %v567 = vunpack.c.l.b16 %v487
        %v568 = vunpack.c.l.b16 %v488
        %v569 = vunpack.c.l.b16 %v489
        %v570 = vunpack.c.l.b16 %v490
        %v571 = vunpack.c.l.b16 %v491
        %v572 = vunpack.c.l.b16 %v492
        %v573 = vunpack.c.l.b16 %v493
        %v574 = vunpack.c.l.b16 %v494
        %v575 = vunpack.c.l.b16 %v495
        %v576 = vunpack.c.l.b16 %v496
        %v577 = vunpack.c.l.b16 %v497
        %v578 = vunpack.c.l.b16 %v498
        %v579 = vunpack.c.l.b16 %v499
        %v580 = vpack.c.b16 %v549, %v548
        %v581 = vpack.c.b16 %v551, %v550
        %v582 = vpack.c.b16 %v553, %v552
        %v583 = vpack.c.b16 %v555, %v554
        %v584 = vpack.c.b16 %v557, %v556
        %v585 = vpack.c.b16 %v559, %v558
        %v586 = vpack.c.b16 %v561, %v560
        %v587 = vpack.c.b16 %v563, %v562
        %v588 = vpack.c.b16 %v565, %v564
        %v589 = vpack.c.b16 %v567, %v566
        %v590 = vpack.c.b16 %v569, %v568
        %v591 = vpack.c.b16 %v571, %v570
        %v592 = vpack.c.b16 %v573, %v572
        %v593 = vpack.c.b16 %v575, %v574
        %v594 = vpack.c.b16 %v577, %v576
        %v595 = vpack.c.b16 %v579, %v578
        %v628 = vunpack.c.l.b16 %v500
        %v629 = vunpack.c.l.b16 %v501
        %v630 = vunpack.c.l.b16 %v502
        %v631 = vunpack.c.l.b16 %v503
        %v632 = vunpack.c.l.b16 %v504
        %v633 = vunpack.c.l.b16 %v505
        %v634 = vunpack.c.l.b16 %v506
        %v635 = vunpack.c.l.b16 %v507
        %v636 = vunpack.c.l.b16 %v508
        %v637 = vunpack.c.l.b16 %v509
        %v638 = vunpack.c.l.b16 %v510
        %v639 = vunpack.c.l.b16 %v511
        %v640 = vunpack.c.l.b16 %v512
        %v641 = vunpack.c.l.b16 %v513
        %v642 = vunpack.c.l.b16 %v514
        %v643 = vunpack.c.l.b16 %v515
        %v644 = vpack.c.b16 %v629, %v628
        %v645 = vpack.c.b16 %v631, %v630
        %v646 = vpack.c.b16 %v633, %v632
        %v647 = vpack.c.b16 %v635, %v634
        %v648 = vpack.c.b16 %v637, %v636
        %v649 = vpack.c.b16 %v639, %v638
        %v650 = vpack.c.b16 %v641, %v640
        %v651 = vpack.c.b16 %v643, %v642
        %660 = vmatprep.subr.bf16.mxu0 0
        %661 = vmatpush1.bf16.msra.mxu0 %v651
        %662 = vmatprep.subr.bf16.mxu0 0
        %663 = vmatpush1.bf16.msra.mxu0 %v650
        %664 = vmatprep.subr.bf16.mxu0 0
        %665 = vmatpush1.bf16.msra.mxu0 %v649
        %666 = vmatprep.subr.bf16.mxu0 0
        %667 = vmatpush1.bf16.msra.mxu0 %v648
        %668 = vmatprep.subr.bf16.mxu0 0
        %669 = vmatpush1.bf16.msra.mxu0 %v647
        %670 = vmatprep.subr.bf16.mxu0 0
        %671 = vmatpush1.bf16.msra.mxu0 %v646
        %672 = vmatprep.subr.bf16.mxu0 0
        %673 = vmatpush1.bf16.msra.mxu0 %v645
        %674 = vmatprep.subr.bf16.mxu0 0
        %675 = vmatpush1.bf16.msra.mxu0 %v644
        %676 = vmatprep.subr.bf16.mxu0 0
        %677 = vmatpush2.bf16.msra.mxu0 0
        %678 = vmatprep.subr.bf16.mxu0 0
        %679 = vmatpush2.bf16.msra.mxu0 0
        %680 = vmatprep.subr.bf16.mxu0 0
        %681 = vmatpush2.bf16.msra.mxu0 0
        %682 = vmatprep.subr.bf16.mxu0 0
        %683 = vmatpush2.bf16.msra.mxu0 0
        %684 = vmatprep.subr.bf16.mxu0 0
        %685 = vmatpush2.bf16.msra.mxu0 0
        %686 = vmatprep.subr.bf16.mxu0 0
        %687 = vmatpush2.bf16.msra.mxu0 0
        %688 = vmatprep.subr.bf16.mxu0 0
        %689 = vmatpush2.bf16.msra.mxu0 0
        %690 = vmatprep.subr.bf16.mxu0 0
        %691 = vmatpush2.bf16.msra.mxu0 0
        %692 = vmatprep.mubr.bf16.mxu0 0
        %693 = vmatmul.mubr.bf16.gmra.mxu0 %v580
        %v694 = vpop.f32.mrf.mxu0
        %v695 = vadd.f32 0.0, %v694
        %v696 = vpop.f32.mrf.mxu0
        %v697 = vpop.f32.mrf.mxu0
        %v698 = vadd.f32 0.0, %v697
        %v699 = vpop.f32.mrf.mxu0
        %700 = vmatprep.mubr.bf16.mxu0 0
        %701 = vmatmul.mubr.bf16.gmra.mxu0 %v581
        %v702 = vpop.f32.mrf.mxu0
        %v703 = vadd.f32 0.0, %v702
        %v704 = vpop.f32.mrf.mxu0
        %v705 = vpop.f32.mrf.mxu0
        %v706 = vadd.f32 0.0, %v705
        %v707 = vpop.f32.mrf.mxu0
        %708 = vmatprep.mubr.bf16.mxu0 0
        %709 = vmatmul.mubr.bf16.gmra.mxu0 %v582
        %v710 = vpop.f32.mrf.mxu0
        %v711 = vadd.f32 0.0, %v710
        %v712 = vpop.f32.mrf.mxu0
        %v713 = vpop.f32.mrf.mxu0
        %v714 = vadd.f32 0.0, %v713
        %v715 = vpop.f32.mrf.mxu0
        %716 = vmatprep.mubr.bf16.mxu0 0
        %717 = vmatmul.mubr.bf16.gmra.mxu0 %v583
        %v718 = vpop.f32.mrf.mxu0
        %v719 = vadd.f32 0.0, %v718
        %v720 = vpop.f32.mrf.mxu0
        %v721 = vpop.f32.mrf.mxu0
        %v722 = vadd.f32 0.0, %v721
        %v723 = vpop.f32.mrf.mxu0
        %724 = vmatprep.mubr.bf16.mxu0 0
        %725 = vmatmul.mubr.bf16.gmra.mxu0 %v584
        %v726 = vpop.f32.mrf.mxu0
        %v727 = vadd.f32 0.0, %v726
        %v728 = vpop.f32.mrf.mxu0
        %v729 = vpop.f32.mrf.mxu0
        %v730 = vadd.f32 0.0, %v729
        %v731 = vpop.f32.mrf.mxu0
        %732 = vmatprep.mubr.bf16.mxu0 0
        %733 = vmatmul.mubr.bf16.gmra.mxu0 %v585
        %v734 = vpop.f32.mrf.mxu0
        %v735 = vadd.f32 0.0, %v734
        %v736 = vpop.f32.mrf.mxu0
        %v737 = vpop.f32.mrf.mxu0
        %v738 = vadd.f32 0.0, %v737
        %v739 = vpop.f32.mrf.mxu0
        %740 = vmatprep.mubr.bf16.mxu0 0
        %741 = vmatmul.mubr.bf16.gmra.mxu0 %v586
        %v742 = vpop.f32.mrf.mxu0
        %v743 = vadd.f32 0.0, %v742
        %v744 = vpop.f32.mrf.mxu0
        %v745 = vpop.f32.mrf.mxu0
        %v746 = vadd.f32 0.0, %v745
        %v747 = vpop.f32.mrf.mxu0
        %748 = vmatprep.mubr.bf16.mxu0 0
        %749 = vmatmul.mubr.bf16.gmra.mxu0 %v587
        %v750 = vpop.f32.mrf.mxu0
        %v751 = vadd.f32 0.0, %v750
        %v752 = vpop.f32.mrf.mxu0
        %v753 = vpop.f32.mrf.mxu0
        %v754 = vadd.f32 0.0, %v753
        %v755 = vpop.f32.mrf.mxu0
        %756 = vmatprep.mubr.bf16.mxu0 0
        %757 = vmatmul.mubr.bf16.gmra.mxu0 %v588
        %v758 = vpop.f32.mrf.mxu0
        %v759 = vadd.f32 0.0, %v758
        %v760 = vpop.f32.mrf.mxu0
        %v761 = vpop.f32.mrf.mxu0
        %v762 = vadd.f32 0.0, %v761
        %v763 = vpop.f32.mrf.mxu0
        %764 = vmatprep.mubr.bf16.mxu0 0
        %765 = vmatmul.mubr.bf16.gmra.mxu0 %v589
        %v766 = vpop.f32.mrf.mxu0
        %v767 = vadd.f32 0.0, %v766
        %v768 = vpop.f32.mrf.mxu0
        %v769 = vpop.f32.mrf.mxu0
        %v770 = vadd.f32 0.0, %v769
        %v771 = vpop.f32.mrf.mxu0
        %772 = vmatprep.mubr.bf16.mxu0 0
        %773 = vmatmul.mubr.bf16.gmra.mxu0 %v590
        %v774 = vpop.f32.mrf.mxu0
        %v775 = vadd.f32 0.0, %v774
        %v776 = vpop.f32.mrf.mxu0
        %v777 = vpop.f32.mrf.mxu0
        %v778 = vadd.f32 0.0, %v777
        %v779 = vpop.f32.mrf.mxu0
        %780 = vmatprep.mubr.bf16.mxu0 0
        %781 = vmatmul.mubr.bf16.gmra.mxu0 %v591
        %v782 = vpop.f32.mrf.mxu0
        %v783 = vadd.f32 0.0, %v782
        %v784 = vpop.f32.mrf.mxu0
        %v785 = vpop.f32.mrf.mxu0
        %v786 = vadd.f32 0.0, %v785
        %v787 = vpop.f32.mrf.mxu0
        %788 = vmatprep.mubr.bf16.mxu0 0
        %789 = vmatmul.mubr.bf16.gmra.mxu0 %v592
        %v790 = vpop.f32.mrf.mxu0
        %v791 = vadd.f32 0.0, %v790
        %v792 = vpop.f32.mrf.mxu0
        %v793 = vpop.f32.mrf.mxu0
        %v794 = vadd.f32 0.0, %v793
        %v795 = vpop.f32.mrf.mxu0
        %796 = vmatprep.mubr.bf16.mxu0 0
        %797 = vmatmul.mubr.bf16.gmra.mxu0 %v593
        %v798 = vpop.f32.mrf.mxu0
        %v799 = vadd.f32 0.0, %v798
        %v800 = vpop.f32.mrf.mxu0
        %v801 = vpop.f32.mrf.mxu0
        %v802 = vadd.f32 0.0, %v801
        %v803 = vpop.f32.mrf.mxu0
        %804 = vmatprep.mubr.bf16.mxu0 0
        %805 = vmatmul.mubr.bf16.gmra.mxu0 %v594
        %v806 = vpop.f32.mrf.mxu0
        %v807 = vadd.f32 0.0, %v806
        %v808 = vpop.f32.mrf.mxu0
        %v809 = vpop.f32.mrf.mxu0
        %v810 = vadd.f32 0.0, %v809
        %v811 = vpop.f32.mrf.mxu0
        %812 = vmatprep.mubr.bf16.mxu0 0
        %813 = vmatmul.mubr.bf16.gmra.mxu0 %v595
        %v814 = vpop.f32.mrf.mxu0
        %v815 = vadd.f32 0.0, %v814
        %v816 = vpop.f32.mrf.mxu0
        %v817 = vpop.f32.mrf.mxu0
        %v818 = vadd.f32 0.0, %v817
        %v819 = vpop.f32.mrf.mxu0
        %820 = vdwg.mxu0
        %v853 = vunpack.c.l.b16 %v420
        %v854 = vunpack.c.l.b16 %v421
        %v855 = vunpack.c.l.b16 %v422
        %v856 = vunpack.c.l.b16 %v423
        %v857 = vunpack.c.l.b16 %v424
        %v858 = vunpack.c.l.b16 %v425
        %v859 = vunpack.c.l.b16 %v426
        %v860 = vunpack.c.l.b16 %v427
        %v861 = vunpack.c.l.b16 %v428
        %v862 = vunpack.c.l.b16 %v429
        %v863 = vunpack.c.l.b16 %v430
        %v864 = vunpack.c.l.b16 %v431
        %v865 = vunpack.c.l.b16 %v432
        %v866 = vunpack.c.l.b16 %v433
        %v867 = vunpack.c.l.b16 %v434
        %v868 = vunpack.c.l.b16 %v435
        %v869 = vunpack.c.l.b16 %v436
        %v870 = vunpack.c.l.b16 %v437
        %v871 = vunpack.c.l.b16 %v438
        %v872 = vunpack.c.l.b16 %v439
        %v873 = vunpack.c.l.b16 %v440
        %v874 = vunpack.c.l.b16 %v441
        %v875 = vunpack.c.l.b16 %v442
        %v876 = vunpack.c.l.b16 %v443
        %v877 = vunpack.c.l.b16 %v444
        %v878 = vunpack.c.l.b16 %v445
        %v879 = vunpack.c.l.b16 %v446
        %v880 = vunpack.c.l.b16 %v447
        %v881 = vunpack.c.l.b16 %v448
        %v882 = vunpack.c.l.b16 %v449
        %v883 = vunpack.c.l.b16 %v450
        %v884 = vunpack.c.l.b16 %v451
        %v885 = vpack.c.b16 %v854, %v853
        %v886 = vpack.c.b16 %v856, %v855
        %v887 = vpack.c.b16 %v858, %v857
        %v888 = vpack.c.b16 %v860, %v859
        %v889 = vpack.c.b16 %v862, %v861
        %v890 = vpack.c.b16 %v864, %v863
        %v891 = vpack.c.b16 %v866, %v865
        %v892 = vpack.c.b16 %v868, %v867
        %v893 = vpack.c.b16 %v870, %v869
        %v894 = vpack.c.b16 %v872, %v871
        %v895 = vpack.c.b16 %v874, %v873
        %v896 = vpack.c.b16 %v876, %v875
        %v897 = vpack.c.b16 %v878, %v877
        %v898 = vpack.c.b16 %v880, %v879
        %v899 = vpack.c.b16 %v882, %v881
        %v900 = vpack.c.b16 %v884, %v883
        %v933 = vunpack.c.l.b16 %v452
        %v934 = vunpack.c.l.b16 %v453
        %v935 = vunpack.c.l.b16 %v454
        %v936 = vunpack.c.l.b16 %v455
        %v937 = vunpack.c.l.b16 %v456
        %v938 = vunpack.c.l.b16 %v457
        %v939 = vunpack.c.l.b16 %v458
        %v940 = vunpack.c.l.b16 %v459
        %v941 = vunpack.c.l.b16 %v460
        %v942 = vunpack.c.l.b16 %v461
        %v943 = vunpack.c.l.b16 %v462
        %v944 = vunpack.c.l.b16 %v463
        %v945 = vunpack.c.l.b16 %v464
        %v946 = vunpack.c.l.b16 %v465
        %v947 = vunpack.c.l.b16 %v466
        %v948 = vunpack.c.l.b16 %v467
        %v949 = vpack.c.b16 %v934, %v933
        %v950 = vpack.c.b16 %v936, %v935
        %v951 = vpack.c.b16 %v938, %v937
        %v952 = vpack.c.b16 %v940, %v939
        %v953 = vpack.c.b16 %v942, %v941
        %v954 = vpack.c.b16 %v944, %v943
        %v955 = vpack.c.b16 %v946, %v945
        %v956 = vpack.c.b16 %v948, %v947
        %965 = vmatprep.subr.bf16.mxu0 0
        %966 = vmatpush1.bf16.msra.mxu0 %v956
        %967 = vmatprep.subr.bf16.mxu0 0
        %968 = vmatpush1.bf16.msra.mxu0 %v955
        %969 = vmatprep.subr.bf16.mxu0 0
        %970 = vmatpush1.bf16.msra.mxu0 %v954
        %971 = vmatprep.subr.bf16.mxu0 0
        %972 = vmatpush1.bf16.msra.mxu0 %v953
        %973 = vmatprep.subr.bf16.mxu0 0
        %974 = vmatpush1.bf16.msra.mxu0 %v952
        %975 = vmatprep.subr.bf16.mxu0 0
        %976 = vmatpush1.bf16.msra.mxu0 %v951
        %977 = vmatprep.subr.bf16.mxu0 0
        %978 = vmatpush1.bf16.msra.mxu0 %v950
        %979 = vmatprep.subr.bf16.mxu0 0
        %980 = vmatpush1.bf16.msra.mxu0 %v949
        %981 = vmatprep.subr.bf16.mxu0 0
        %982 = vmatpush2.bf16.msra.mxu0 0
        %983 = vmatprep.subr.bf16.mxu0 0
        %984 = vmatpush2.bf16.msra.mxu0 0
        %985 = vmatprep.subr.bf16.mxu0 0
        %986 = vmatpush2.bf16.msra.mxu0 0
        %987 = vmatprep.subr.bf16.mxu0 0
        %988 = vmatpush2.bf16.msra.mxu0 0
        %989 = vmatprep.subr.bf16.mxu0 0
        %990 = vmatpush2.bf16.msra.mxu0 0
        %991 = vmatprep.subr.bf16.mxu0 0
        %992 = vmatpush2.bf16.msra.mxu0 0
        %993 = vmatprep.subr.bf16.mxu0 0
        %994 = vmatpush2.bf16.msra.mxu0 0
        %995 = vmatprep.subr.bf16.mxu0 0
        %996 = vmatpush2.bf16.msra.mxu0 0
        %997 = vmatprep.mubr.bf16.mxu0 0
        %998 = vmatmul.mubr.bf16.gmra.mxu0 %v885
        %v999 = vpop.f32.mrf.mxu0
        %v1000 = vadd.f32 %v695, %v999
        %v1001 = vpop.f32.mrf.mxu0
        %v1002 = vpop.f32.mrf.mxu0
        %v1003 = vadd.f32 %v698, %v1002
        %v1004 = vpop.f32.mrf.mxu0
        %1005 = vmatprep.mubr.bf16.mxu0 0
        %1006 = vmatmul.mubr.bf16.gmra.mxu0 %v886
        %v1007 = vpop.f32.mrf.mxu0
        %v1008 = vadd.f32 %v703, %v1007
        %v1009 = vpop.f32.mrf.mxu0
        %v1010 = vpop.f32.mrf.mxu0
        %v1011 = vadd.f32 %v706, %v1010
        %v1012 = vpop.f32.mrf.mxu0
        %1013 = vmatprep.mubr.bf16.mxu0 0
        %1014 = vmatmul.mubr.bf16.gmra.mxu0 %v887
        %v1015 = vpop.f32.mrf.mxu0
        %v1016 = vadd.f32 %v711, %v1015
        %v1017 = vpop.f32.mrf.mxu0
        %v1018 = vpop.f32.mrf.mxu0
        %v1019 = vadd.f32 %v714, %v1018
        %v1020 = vpop.f32.mrf.mxu0
        %1021 = vmatprep.mubr.bf16.mxu0 0
        %1022 = vmatmul.mubr.bf16.gmra.mxu0 %v888
        %v1023 = vpop.f32.mrf.mxu0
        %v1024 = vadd.f32 %v719, %v1023
        %v1025 = vpop.f32.mrf.mxu0
        %v1026 = vpop.f32.mrf.mxu0
        %v1027 = vadd.f32 %v722, %v1026
        %v1028 = vpop.f32.mrf.mxu0
        %1029 = vmatprep.mubr.bf16.mxu0 0
        %1030 = vmatmul.mubr.bf16.gmra.mxu0 %v889
        %v1031 = vpop.f32.mrf.mxu0
        %v1032 = vadd.f32 %v727, %v1031
        %v1033 = vpop.f32.mrf.mxu0
        %v1034 = vpop.f32.mrf.mxu0
        %v1035 = vadd.f32 %v730, %v1034
        %v1036 = vpop.f32.mrf.mxu0
        %1037 = vmatprep.mubr.bf16.mxu0 0
        %1038 = vmatmul.mubr.bf16.gmra.mxu0 %v890
        %v1039 = vpop.f32.mrf.mxu0
        %v1040 = vadd.f32 %v735, %v1039
        %v1041 = vpop.f32.mrf.mxu0
        %v1042 = vpop.f32.mrf.mxu0
        %v1043 = vadd.f32 %v738, %v1042
        %v1044 = vpop.f32.mrf.mxu0
        %1045 = vmatprep.mubr.bf16.mxu0 0
        %1046 = vmatmul.mubr.bf16.gmra.mxu0 %v891
        %v1047 = vpop.f32.mrf.mxu0
        %v1048 = vadd.f32 %v743, %v1047
        %v1049 = vpop.f32.mrf.mxu0
        %v1050 = vpop.f32.mrf.mxu0
        %v1051 = vadd.f32 %v746, %v1050
        %v1052 = vpop.f32.mrf.mxu0
        %1053 = vmatprep.mubr.bf16.mxu0 0
        %1054 = vmatmul.mubr.bf16.gmra.mxu0 %v892
        %v1055 = vpop.f32.mrf.mxu0
        %v1056 = vadd.f32 %v751, %v1055
        %v1057 = vpop.f32.mrf.mxu0
        %v1058 = vpop.f32.mrf.mxu0
        %v1059 = vadd.f32 %v754, %v1058
        %v1060 = vpop.f32.mrf.mxu0
        %1061 = vmatprep.mubr.bf16.mxu0 0
        %1062 = vmatmul.mubr.bf16.gmra.mxu0 %v893
        %v1063 = vpop.f32.mrf.mxu0
        %v1064 = vadd.f32 %v759, %v1063
        %v1065 = vpop.f32.mrf.mxu0
        %v1066 = vpop.f32.mrf.mxu0
        %v1067 = vadd.f32 %v762, %v1066
        %v1068 = vpop.f32.mrf.mxu0
        %1069 = vmatprep.mubr.bf16.mxu0 0
        %1070 = vmatmul.mubr.bf16.gmra.mxu0 %v894
        %v1071 = vpop.f32.mrf.mxu0
        %v1072 = vadd.f32 %v767, %v1071
        %v1073 = vpop.f32.mrf.mxu0
        %v1074 = vpop.f32.mrf.mxu0
        %v1075 = vadd.f32 %v770, %v1074
        %v1076 = vpop.f32.mrf.mxu0
        %1077 = vmatprep.mubr.bf16.mxu0 0
        %1078 = vmatmul.mubr.bf16.gmra.mxu0 %v895
        %v1079 = vpop.f32.mrf.mxu0
        %v1080 = vadd.f32 %v775, %v1079
        %v1081 = vpop.f32.mrf.mxu0
        %v1082 = vpop.f32.mrf.mxu0
        %v1083 = vadd.f32 %v778, %v1082
        %v1084 = vpop.f32.mrf.mxu0
        %1085 = vmatprep.mubr.bf16.mxu0 0
        %1086 = vmatmul.mubr.bf16.gmra.mxu0 %v896
        %v1087 = vpop.f32.mrf.mxu0
        %v1088 = vadd.f32 %v783, %v1087
        %v1089 = vpop.f32.mrf.mxu0
        %v1090 = vpop.f32.mrf.mxu0
        %v1091 = vadd.f32 %v786, %v1090
        %v1092 = vpop.f32.mrf.mxu0
        %1093 = vmatprep.mubr.bf16.mxu0 0
        %1094 = vmatmul.mubr.bf16.gmra.mxu0 %v897
        %v1095 = vpop.f32.mrf.mxu0
        %v1096 = vadd.f32 %v791, %v1095
        %v1097 = vpop.f32.mrf.mxu0
        %v1098 = vpop.f32.mrf.mxu0
        %v1099 = vadd.f32 %v794, %v1098
        %v1100 = vpop.f32.mrf.mxu0
        %1101 = vmatprep.mubr.bf16.mxu0 0
        %1102 = vmatmul.mubr.bf16.gmra.mxu0 %v898
        %v1103 = vpop.f32.mrf.mxu0
        %v1104 = vadd.f32 %v799, %v1103
        %v1105 = vpop.f32.mrf.mxu0
        %v1106 = vpop.f32.mrf.mxu0
        %v1107 = vadd.f32 %v802, %v1106
        %v1108 = vpop.f32.mrf.mxu0
        %1109 = vmatprep.mubr.bf16.mxu0 0
        %1110 = vmatmul.mubr.bf16.gmra.mxu0 %v899
        %v1111 = vpop.f32.mrf.mxu0
        %v1112 = vadd.f32 %v807, %v1111
        %v1113 = vpop.f32.mrf.mxu0
        %v1114 = vpop.f32.mrf.mxu0
        %v1115 = vadd.f32 %v810, %v1114
        %v1116 = vpop.f32.mrf.mxu0
        %1117 = vmatprep.mubr.bf16.mxu0 0
        %1118 = vmatmul.mubr.bf16.gmra.mxu0 %v900
        %v1119 = vpop.f32.mrf.mxu0
        %v1120 = vadd.f32 %v815, %v1119
        %v1121 = vpop.f32.mrf.mxu0
        %v1122 = vpop.f32.mrf.mxu0
        %v1123 = vadd.f32 %v818, %v1122
        %v1124 = vpop.f32.mrf.mxu0
        %1125 = vdwg.mxu0
        %v1126 = vld [vmem:[%s4] sm:$0x1]
        %v1127 = vlaneseq
        %v1128 = vshrl.u32 %v1127, 7
        %v1129 = vsub.s32 0, %v1128
        %v1130 = vrot.slane %v1126, %v1129
        %v1131 = vmul.f32 %v1000, %v1130
        %v1132 = vmul.f32 %v1003, %v1130
        %v1133 = vmul.f32 %v1008, %v1130
        %v1134 = vmul.f32 %v1011, %v1130
        %v1135 = vmul.f32 %v1016, %v1130
        %v1136 = vmul.f32 %v1019, %v1130
        %v1137 = vmul.f32 %v1024, %v1130
        %v1138 = vmul.f32 %v1027, %v1130
        %v1139 = vmul.f32 %v1032, %v1130
        %v1140 = vmul.f32 %v1035, %v1130
        %v1141 = vmul.f32 %v1040, %v1130
        %v1142 = vmul.f32 %v1043, %v1130
        %v1143 = vmul.f32 %v1048, %v1130
        %v1144 = vmul.f32 %v1051, %v1130
        %v1145 = vmul.f32 %v1056, %v1130
        %v1146 = vmul.f32 %v1059, %v1130
        %v1147 = vmul.f32 %v1064, %v1130
        %v1148 = vmul.f32 %v1067, %v1130
        %v1149 = vmul.f32 %v1072, %v1130
        %v1150 = vmul.f32 %v1075, %v1130
        %v1151 = vmul.f32 %v1080, %v1130
        %v1152 = vmul.f32 %v1083, %v1130
        %v1153 = vmul.f32 %v1088, %v1130
        %v1154 = vmul.f32 %v1091, %v1130
        %v1155 = vmul.f32 %v1096, %v1130
        %v1156 = vmul.f32 %v1099, %v1130
        %v1157 = vmul.f32 %v1104, %v1130
        %v1158 = vmul.f32 %v1107, %v1130
        %v1159 = vmul.f32 %v1112, %v1130
        %v1160 = vmul.f32 %v1115, %v1130
        %v1161 = vmul.f32 %v1120, %v1130
        %v1162 = vmul.f32 %v1123, %v1130
        %v1163 = vld [vmem:[%s4 + $0x1] sm:$0x1]
        %v1164 = vlaneseq
        %v1165 = vshrl.u32 %v1164, 7
        %v1166 = vsub.s32 0, %v1165
        %v1167 = vrot.slane %v1163, %v1166
        %v1168 = vadd.f32 %v1131, %v1167
        %v1169 = vadd.f32 %v1132, %v1167
        %v1170 = vadd.f32 %v1133, %v1167
        %v1171 = vadd.f32 %v1134, %v1167
        %v1172 = vadd.f32 %v1135, %v1167
        %v1173 = vadd.f32 %v1136, %v1167
        %v1174 = vadd.f32 %v1137, %v1167
        %v1175 = vadd.f32 %v1138, %v1167
        %v1176 = vadd.f32 %v1139, %v1167
        %v1177 = vadd.f32 %v1140, %v1167
        %v1178 = vadd.f32 %v1141, %v1167
        %v1179 = vadd.f32 %v1142, %v1167
        %v1180 = vadd.f32 %v1143, %v1167
        %v1181 = vadd.f32 %v1144, %v1167
        %v1182 = vadd.f32 %v1145, %v1167
        %v1183 = vadd.f32 %v1146, %v1167
        %v1184 = vadd.f32 %v1147, %v1167
        %v1185 = vadd.f32 %v1148, %v1167
        %v1186 = vadd.f32 %v1149, %v1167
        %v1187 = vadd.f32 %v1150, %v1167
        %v1188 = vadd.f32 %v1151, %v1167
        %v1189 = vadd.f32 %v1152, %v1167
        %v1190 = vadd.f32 %v1153, %v1167
        %v1191 = vadd.f32 %v1154, %v1167
        %v1192 = vadd.f32 %v1155, %v1167
        %v1193 = vadd.f32 %v1156, %v1167
        %v1194 = vadd.f32 %v1157, %v1167
        %v1195 = vadd.f32 %v1158, %v1167
        %v1196 = vadd.f32 %v1159, %v1167
        %v1197 = vadd.f32 %v1160, %v1167
        %v1198 = vadd.f32 %v1161, %v1167
        %v1199 = vadd.f32 %v1162, %v1167
        %v1200 = vsub.f32 0.0, %v1168
        %v1201 = vsub.f32 0.0, %v1169
        %v1202 = vsub.f32 0.0, %v1170
        %v1203 = vsub.f32 0.0, %v1171
        %v1204 = vsub.f32 0.0, %v1172
        %v1205 = vsub.f32 0.0, %v1173
        %v1206 = vsub.f32 0.0, %v1174
        %v1207 = vsub.f32 0.0, %v1175
        %v1208 = vsub.f32 0.0, %v1176
        %v1209 = vsub.f32 0.0, %v1177
        %v1210 = vsub.f32 0.0, %v1178
        %v1211 = vsub.f32 0.0, %v1179
        %v1212 = vsub.f32 0.0, %v1180
        %v1213 = vsub.f32 0.0, %v1181
        %v1214 = vsub.f32 0.0, %v1182
        %v1215 = vsub.f32 0.0, %v1183
        %v1216 = vsub.f32 0.0, %v1184
        %v1217 = vsub.f32 0.0, %v1185
        %v1218 = vsub.f32 0.0, %v1186
        %v1219 = vsub.f32 0.0, %v1187
        %v1220 = vsub.f32 0.0, %v1188
        %v1221 = vsub.f32 0.0, %v1189
        %v1222 = vsub.f32 0.0, %v1190
        %v1223 = vsub.f32 0.0, %v1191
        %v1224 = vsub.f32 0.0, %v1192
        %v1225 = vsub.f32 0.0, %v1193
        %v1226 = vsub.f32 0.0, %v1194
        %v1227 = vsub.f32 0.0, %v1195
        %v1228 = vsub.f32 0.0, %v1196
        %v1229 = vsub.f32 0.0, %v1197
        %v1230 = vsub.f32 0.0, %v1198
        %v1231 = vsub.f32 0.0, %v1199
        %v1232 = vmul.f32 %v1200, 1.442695
        %v1233 = vpow.pop %v1232
        %v1234 = vmul.f32 %v1201, 1.442695
        %v1235 = vpow.pop %v1234
        %v1236 = vmul.f32 %v1202, 1.442695
        %v1237 = vpow.pop %v1236
        %v1238 = vmul.f32 %v1203, 1.442695
        %v1239 = vpow.pop %v1238
        %v1240 = vmul.f32 %v1204, 1.442695
        %v1241 = vpow.pop %v1240
        %v1242 = vmul.f32 %v1205, 1.442695
        %v1243 = vpow.pop %v1242
        %v1244 = vmul.f32 %v1206, 1.442695
        %v1245 = vpow.pop %v1244
        %v1246 = vmul.f32 %v1207, 1.442695
        %v1247 = vpow.pop %v1246
        %v1248 = vmul.f32 %v1208, 1.442695
        %v1249 = vpow.pop %v1248
        %v1250 = vmul.f32 %v1209, 1.442695
        %v1251 = vpow.pop %v1250
        %v1252 = vmul.f32 %v1210, 1.442695
        %v1253 = vpow.pop %v1252
        %v1254 = vmul.f32 %v1211, 1.442695
        %v1255 = vpow.pop %v1254
        %v1256 = vmul.f32 %v1212, 1.442695
        %v1257 = vpow.pop %v1256
        %v1258 = vmul.f32 %v1213, 1.442695
        %v1259 = vpow.pop %v1258
        %v1260 = vmul.f32 %v1214, 1.442695
        %v1261 = vpow.pop %v1260
        %v1262 = vmul.f32 %v1215, 1.442695
        %v1263 = vpow.pop %v1262
        %v1264 = vmul.f32 %v1216, 1.442695
        %v1265 = vpow.pop %v1264
        %v1266 = vmul.f32 %v1217, 1.442695
        %v1267 = vpow.pop %v1266
        %v1268 = vmul.f32 %v1218, 1.442695
        %v1269 = vpow.pop %v1268
        %v1270 = vmul.f32 %v1219, 1.442695
        %v1271 = vpow.pop %v1270
        %v1272 = vmul.f32 %v1220, 1.442695
        %v1273 = vpow.pop %v1272
        %v1274 = vmul.f32 %v1221, 1.442695
        %v1275 = vpow.pop %v1274
        %v1276 = vmul.f32 %v1222, 1.442695
        %v1277 = vpow.pop %v1276
        %v1278 = vmul.f32 %v1223, 1.442695
        %v1279 = vpow.pop %v1278
        %v1280 = vmul.f32 %v1224, 1.442695
        %v1281 = vpow.pop %v1280
        %v1282 = vmul.f32 %v1225, 1.442695
        %v1283 = vpow.pop %v1282
        %v1284 = vmul.f32 %v1226, 1.442695
        %v1285 = vpow.pop %v1284
        %v1286 = vmul.f32 %v1227, 1.442695
        %v1287 = vpow.pop %v1286
        %v1288 = vmul.f32 %v1228, 1.442695
        %v1289 = vpow.pop %v1288
        %v1290 = vmul.f32 %v1229, 1.442695
        %v1291 = vpow.pop %v1290
        %v1292 = vmul.f32 %v1230, 1.442695
        %v1293 = vpow.pop %v1292
        %v1294 = vmul.f32 %v1231, 1.442695
        %v1295 = vpow.pop %v1294
        %v1296 = vadd.f32 %v1233, 1.0
        %v1297 = vadd.f32 %v1235, 1.0
        %v1298 = vadd.f32 %v1237, 1.0
        %v1299 = vadd.f32 %v1239, 1.0
        %v1300 = vadd.f32 %v1241, 1.0
        %v1301 = vadd.f32 %v1243, 1.0
        %v1302 = vadd.f32 %v1245, 1.0
        %v1303 = vadd.f32 %v1247, 1.0
        %v1304 = vadd.f32 %v1249, 1.0
        %v1305 = vadd.f32 %v1251, 1.0
        %v1306 = vadd.f32 %v1253, 1.0
        %v1307 = vadd.f32 %v1255, 1.0
        %v1308 = vadd.f32 %v1257, 1.0
        %v1309 = vadd.f32 %v1259, 1.0
        %v1310 = vadd.f32 %v1261, 1.0
        %v1311 = vadd.f32 %v1263, 1.0
        %v1312 = vadd.f32 %v1265, 1.0
        %v1313 = vadd.f32 %v1267, 1.0
        %v1314 = vadd.f32 %v1269, 1.0
        %v1315 = vadd.f32 %v1271, 1.0
        %v1316 = vadd.f32 %v1273, 1.0
        %v1317 = vadd.f32 %v1275, 1.0
        %v1318 = vadd.f32 %v1277, 1.0
        %v1319 = vadd.f32 %v1279, 1.0
        %v1320 = vadd.f32 %v1281, 1.0
        %v1321 = vadd.f32 %v1283, 1.0
        %v1322 = vadd.f32 %v1285, 1.0
        %v1323 = vadd.f32 %v1287, 1.0
        %v1324 = vadd.f32 %v1289, 1.0
        %v1325 = vadd.f32 %v1291, 1.0
        %v1326 = vadd.f32 %v1293, 1.0
        %v1327 = vadd.f32 %v1295, 1.0
        %v1328 = vrcp.pop %v1296
        %v1329 = vrcp.pop %v1297
        %v1330 = vrcp.pop %v1298
        %v1331 = vrcp.pop %v1299
        %v1332 = vrcp.pop %v1300
        %v1333 = vrcp.pop %v1301
        %v1334 = vrcp.pop %v1302
        %v1335 = vrcp.pop %v1303
        %v1336 = vrcp.pop %v1304
        %v1337 = vrcp.pop %v1305
        %v1338 = vrcp.pop %v1306
        %v1339 = vrcp.pop %v1307
        %v1340 = vrcp.pop %v1308
        %v1341 = vrcp.pop %v1309
        %v1342 = vrcp.pop %v1310
        %v1343 = vrcp.pop %v1311
        %v1344 = vrcp.pop %v1312
        %v1345 = vrcp.pop %v1313
        %v1346 = vrcp.pop %v1314
        %v1347 = vrcp.pop %v1315
        %v1348 = vrcp.pop %v1316
        %v1349 = vrcp.pop %v1317
        %v1350 = vrcp.pop %v1318
        %v1351 = vrcp.pop %v1319
        %v1352 = vrcp.pop %v1320
        %v1353 = vrcp.pop %v1321
        %v1354 = vrcp.pop %v1322
        %v1355 = vrcp.pop %v1323
        %v1356 = vrcp.pop %v1324
        %v1357 = vrcp.pop %v1325
        %v1358 = vrcp.pop %v1326
        %v1359 = vrcp.pop %v1327
        %v1360 = vmul.f32 %v1168, %v1328
        %v1361 = vmul.f32 %v1169, %v1329
        %v1362 = vmul.f32 %v1170, %v1330
        %v1363 = vmul.f32 %v1171, %v1331
        %v1364 = vmul.f32 %v1172, %v1332
        %v1365 = vmul.f32 %v1173, %v1333
        %v1366 = vmul.f32 %v1174, %v1334
        %v1367 = vmul.f32 %v1175, %v1335
        %v1368 = vmul.f32 %v1176, %v1336
        %v1369 = vmul.f32 %v1177, %v1337
        %v1370 = vmul.f32 %v1178, %v1338
        %v1371 = vmul.f32 %v1179, %v1339
        %v1372 = vmul.f32 %v1180, %v1340
        %v1373 = vmul.f32 %v1181, %v1341
        %v1374 = vmul.f32 %v1182, %v1342
        %v1375 = vmul.f32 %v1183, %v1343
        %v1376 = vmul.f32 %v1184, %v1344
        %v1377 = vmul.f32 %v1185, %v1345
        %v1378 = vmul.f32 %v1186, %v1346
        %v1379 = vmul.f32 %v1187, %v1347
        %v1380 = vmul.f32 %v1188, %v1348
        %v1381 = vmul.f32 %v1189, %v1349
        %v1382 = vmul.f32 %v1190, %v1350
        %v1383 = vmul.f32 %v1191, %v1351
        %v1384 = vmul.f32 %v1192, %v1352
        %v1385 = vmul.f32 %v1193, %v1353
        %v1386 = vmul.f32 %v1194, %v1354
        %v1387 = vmul.f32 %v1195, %v1355
        %v1388 = vmul.f32 %v1196, %v1356
        %v1389 = vmul.f32 %v1197, %v1357
        %v1390 = vmul.f32 %v1198, %v1358
        %v1391 = vmul.f32 %v1199, %v1359
        %1392 = vst [vmem:[%s417] sm:$0xff] %v1360
        %1393 = vst [vmem:[%s417 + $0x8] sm:$0xff] %v1361
        %1394 = vst [vmem:[%s417 + $0x10] sm:$0xff] %v1362
        %1395 = vst [vmem:[%s417 + $0x18] sm:$0xff] %v1363
        %1396 = vst [vmem:[%s417 + $0x20] sm:$0xff] %v1364
        %1397 = vst [vmem:[%s417 + $0x28] sm:$0xff] %v1365
        %1398 = vst [vmem:[%s417 + $0x30] sm:$0xff] %v1366
        %1399 = vst [vmem:[%s417 + $0x38] sm:$0xff] %v1367
        %1400 = vst [vmem:[%s417 + $0x40] sm:$0xff] %v1368
        %1401 = vst [vmem:[%s417 + $0x48] sm:$0xff] %v1369
        %1402 = vst [vmem:[%s417 + $0x50] sm:$0xff] %v1370
        %1403 = vst [vmem:[%s417 + $0x58] sm:$0xff] %v1371
        %1404 = vst [vmem:[%s417 + $0x60] sm:$0xff] %v1372
        %1405 = vst [vmem:[%s417 + $0x68] sm:$0xff] %v1373
        %1406 = vst [vmem:[%s417 + $0x70] sm:$0xff] %v1374
        %1407 = vst [vmem:[%s417 + $0x78] sm:$0xff] %v1375
        %1408 = vst [vmem:[%s417 + $0x80] sm:$0xff] %v1376
        %1409 = vst [vmem:[%s417 + $0x88] sm:$0xff] %v1377
        %1410 = vst [vmem:[%s417 + $0x90] sm:$0xff] %v1378
        %1411 = vst [vmem:[%s417 + $0x98] sm:$0xff] %v1379
        %1412 = vst [vmem:[%s417 + $0xa0] sm:$0xff] %v1380
        %1413 = vst [vmem:[%s417 + $0xa8] sm:$0xff] %v1381
        %1414 = vst [vmem:[%s417 + $0xb0] sm:$0xff] %v1382
        %1415 = vst [vmem:[%s417 + $0xb8] sm:$0xff] %v1383
        %1416 = vst [vmem:[%s417 + $0xc0] sm:$0xff] %v1384
        %1417 = vst [vmem:[%s417 + $0xc8] sm:$0xff] %v1385
        %1418 = vst [vmem:[%s417 + $0xd0] sm:$0xff] %v1386
        %1419 = vst [vmem:[%s417 + $0xd8] sm:$0xff] %v1387
        %1420 = vst [vmem:[%s417 + $0xe0] sm:$0xff] %v1388
        %1421 = vst [vmem:[%s417 + $0xe8] sm:$0xff] %v1389
        %1422 = vst [vmem:[%s417 + $0xf0] sm:$0xff] %v1390
        %1423 = vst [vmem:[%s417 + $0xf8] sm:$0xff] %v1391
        %s1424 = smul.u32 32, %s16
        %p1425 = scmp.lt.s32.totalorder %s1424, 63
        %s1426 = scalar_select %p1425, %s1424, 63
        %s1427 = smul.addr %s1426, 8
        %s1428 = scalar_lea.vmem %s5, %s1427
        // Predicated region
        $region82: #{c3_forward_nchw.7} parent=76 // pred_check
          %p1429 = pneg %p149
        $region83: #{c3_forward_nchw.7} parent=76 // pred_check_branch
          %1431 = sbr.rel (%p1429) target = $region85
        $region84: #{c3_forward_nchw.7} parent=76 // pred_region
          %s1432 = smul.u32 32, %s16
        $region85: #{c3_forward_nchw.7} parent=76 // pred_fallthru
          _
      $region77: #{c3_forward_nchw.7} parent=5 // pred_fallthru
        _
      %p1433 = scmp.le.s32.totalorder 2, %s11
      // Predicated region
      $region86: #{c3_forward_nchw.7} parent=5 // pred_check
        %p1434 = pneg %p1433
      $region87: #{c3_forward_nchw.7} parent=5 // pred_check_branch
        %1436 = sbr.rel (%p1434) target = $region89
      $region88: #{c3_forward_nchw.7} parent=5 // pred_region
        %s1437 = ssub.s32 %s11, 2
        // Predicated region
        $region90: #{c3_forward_nchw.7} parent=88 // pred_check
          %p1438 = pneg %p155
        $region91: #{c3_forward_nchw.7} parent=88 // pred_check_branch
          %1440 = sbr.rel (%p1438) target = $region93
        $region92: #{c3_forward_nchw.7} parent=88 // pred_region
          %s1441 = smul.u32 32, %s17
          %p1442 = scmp.lt.s32.totalorder %s1441, 63
          %s1443 = scalar_select %p1442, %s1441, 63
          %s1444 = smul.addr %s1443, 8
          %s1445 = scalar_lea.vmem %s5, %s1444
        $region93: #{c3_forward_nchw.7} parent=88 // pred_fallthru
          _
      $region89: #{c3_forward_nchw.7} parent=5 // pred_fallthru
        _
    $region6: #{c3_forward_nchw.7} parent=1 // loop_footer
      %s15 = sadd.s32 1, %s11
    $region7: #{c3_forward_nchw.7} parent=1 // loop_footer_branch
      %10 = sbr.rel target = $region3
    $region8: #{c3_forward_nchw.7} parent=1 // loop_exit
      _

// kernel: c3_forward_nchw.6
$region0: #{c3_forward_nchw.6}
  #allocation0 [shape = 'u32[]', space=smem, size = 0x4, offset = 0x4, fixed_abs, tag = 'smem constant byte address 0x4 - core index']
  #allocation1 [shape = 'u32[144,128]{1,0:T(1,128)}', space=vmem, size = 0x12000, scoped, tag = 'internal scratch']
  %s0 = inlined_call_operand.vmem [shape: bf16[2,18,18,128], index: 0, kind: input, shape index: {}]
  %s1 = inlined_call_operand.vmem [shape: bf16[9,128,128], index: 1, kind: input, shape index: {}]
  %s2 = inlined_call_operand.vmem [shape: f32[2,128], index: 2, kind: input, shape index: {}]
  %s3 = inlined_call_operand.vmem [shape: bf16[2,16,16,256], index: 3, kind: input, shape index: {}]
  %s4 = inlined_call_operand.vmem [shape: bf16[2,16,16,128], index: 4, kind: output, shape index: {}]
  %s5 = sld [smem:[#allocation0]]
  $region90: #{c3_forward_nchw.6} parent=0
    _
  %s7 = ssub.s32 1, %s5
  %s8 = scalar_select 0, %s7, %s5
  $region1: #{c3_forward_nchw.6} parent=0
    #allocation2 [shape = 'u8[131072]{0}', space=vmem, size = 0x20000, scoped, tag = 'input window, operand 3']
    loop: start=0, step=1, limit=4
    $region2: #{c3_forward_nchw.6} parent=1 // loop_pre_header
      _
    $region3: #{c3_forward_nchw.6} parent=1 // loop_header
      %s10 = sphi 0, %s14
      %p11 = scmp.ge.s32.totalorder %s10, 4
      %s20 = sphi 0, %s22
      %s23 = sphi 0, %s20
      %s24 = sphi 0, %s23
      %s40 = sphi 0, %s24
      %s44 = sphi 0, %s44
      %s46 = sphi 0, %s44
      %s47 = sphi 0, %s46
      %s61 = sphi 0, %s47
      %s65 = sphi 0, %s65
      %s67 = sphi 0, %s65
      %s68 = sphi 0, %s67
      %s82 = sphi 0, %s68
      %s88 = sphi 0, %s90
      %s91 = sphi 0, %s88
      %s92 = sphi 0, %s91
      %s108 = sphi 0, %s92
      %s114 = sphi 0, %s116
      %s117 = sphi 0, %s114
      %s118 = sphi 0, %s117
      %s134 = sphi 0, %s118
    $region4: #{c3_forward_nchw.6} parent=1 // loop_header_branch
      %13 = sbr.rel (%p11) target = $region8
    $region5: #{c3_forward_nchw.6} parent=1 // loop_body
      %s15 = ssub.s32 %s10, 1
      %s16 = ssub.s32 %s10, 2
      %s17 = sadd.s32 %s10, 1
      %s18 = ssub.s32 %s10, %s17
      %p19 = scmp.eq.s32.totalorder %s18, 0
      %s21 = sadd.s32 %s20, 1
      %s22 = scalar_select %p19, %s20, %s21
      %p25 = pneg %p19
      %p26 = scmp.eq.s32.totalorder %s10, 1
      %p27 = por %p25, %p26
      %p28 = scmp.ne.s32.totalorder %s20, %s23
      %p29 = scmp.eq.s32.totalorder %s10, 0
      %p30 = por %p28, %p29
      %p31 = scmp.ne.s32.totalorder %s20, %s23
      %p32 = scmp.eq.s32.totalorder %s15, 1
      %p33 = por %p31, %p32
      %p34 = scmp.ne.s32.totalorder %s23, %s24
      %p35 = scmp.eq.s32.totalorder %s15, 0
      %p36 = por %p34, %p35
      %p37 = scmp.ne.s32.totalorder %s23, %s24
      %p38 = scmp.eq.s32.totalorder %s16, 1
      %p39 = por %p37, %p38
      %p41 = scmp.ne.s32.totalorder %s24, %s40
      %p42 = scmp.eq.s32.totalorder %s16, 0
      %p43 = por %p41, %p42
      %s45 = sadd.s32 %s44, 1
      %p48 = scmp.eq.s32.totalorder %s10, 1
      %p49 = scmp.ne.s32.totalorder %s44, %s46
      %p50 = scmp.eq.s32.totalorder %s10, 0
      %p51 = por %p49, %p50
      %p52 = scmp.ne.s32.totalorder %s44, %s46
      %p53 = scmp.eq.s32.totalorder %s15, 1
      %p54 = por %p52, %p53
      %p55 = scmp.ne.s32.totalorder %s46, %s47
      %p56 = scmp.eq.s32.totalorder %s15, 0
      %p57 = por %p55, %p56
      %p58 = scmp.ne.s32.totalorder %s46, %s47
      %p59 = scmp.eq.s32.totalorder %s16, 1
      %p60 = por %p58, %p59
      %p62 = scmp.ne.s32.totalorder %s47, %s61
      %p63 = scmp.eq.s32.totalorder %s16, 0
      %p64 = por %p62, %p63
      %s66 = sadd.s32 %s65, 1
      %p69 = scmp.eq.s32.totalorder %s10, 1
      %p70 = scmp.ne.s32.totalorder %s65, %s67
      %p71 = scmp.eq.s32.totalorder %s10, 0
      %p72 = por %p70, %p71
      %p73 = scmp.ne.s32.totalorder %s65, %s67
      %p74 = scmp.eq.s32.totalorder %s15, 1
      %p75 = por %p73, %p74
      %p76 = scmp.ne.s32.totalorder %s67, %s68
      %p77 = scmp.eq.s32.totalorder %s15, 0
      %p78 = por %p76, %p77
      %p79 = scmp.ne.s32.totalorder %s67, %s68
      %p80 = scmp.eq.s32.totalorder %s16, 1
      %p81 = por %p79, %p80
      %p83 = scmp.ne.s32.totalorder %s68, %s82
      %p84 = scmp.eq.s32.totalorder %s16, 0
      %p85 = por %p83, %p84
      %s86 = ssub.s32 %s10, %s17
      %p87 = scmp.eq.s32.totalorder %s86, 0
      %s89 = sadd.s32 %s88, 1
      %s90 = scalar_select %p87, %s88, %s89
      %p93 = pneg %p87
      %p94 = scmp.eq.s32.totalorder %s10, 1
      %p95 = por %p93, %p94
      %p96 = scmp.ne.s32.totalorder %s88, %s91
      %p97 = scmp.eq.s32.totalorder %s10, 0
      %p98 = por %p96, %p97
      %p99 = scmp.ne.s32.totalorder %s88, %s91
      %p100 = scmp.eq.s32.totalorder %s15, 1
      %p101 = por %p99, %p100
      %p102 = scmp.ne.s32.totalorder %s91, %s92
      %p103 = scmp.eq.s32.totalorder %s15, 0
      %p104 = por %p102, %p103
      %p105 = scmp.ne.s32.totalorder %s91, %s92
      %p106 = scmp.eq.s32.totalorder %s16, 1
      %p107 = por %p105, %p106
      %p109 = scmp.ne.s32.totalorder %s92, %s108
      %p110 = scmp.eq.s32.totalorder %s16, 0
      %p111 = por %p109, %p110
      %s112 = ssub.s32 %s10, %s17
      %p113 = scmp.eq.s32.totalorder %s112, 0
      %s115 = sadd.s32 %s114, 1
      %s116 = scalar_select %p113, %s114, %s115
      %p119 = pneg %p113
      %p120 = scmp.eq.s32.totalorder %s10, 1
      %p121 = por %p119, %p120
      %p122 = scmp.ne.s32.totalorder %s114, %s117
      %p123 = scmp.eq.s32.totalorder %s10, 0
      %p124 = por %p122, %p123
      %p125 = scmp.ne.s32.totalorder %s114, %s117
      %p126 = scmp.eq.s32.totalorder %s15, 1
      %p127 = por %p125, %p126
      %p128 = scmp.ne.s32.totalorder %s117, %s118
      %p129 = scmp.eq.s32.totalorder %s15, 0
      %p130 = por %p128, %p129
      %p131 = scmp.ne.s32.totalorder %s117, %s118
      %p132 = scmp.eq.s32.totalorder %s16, 1
      %p133 = por %p131, %p132
      %p135 = scmp.ne.s32.totalorder %s118, %s134
      %p136 = scmp.eq.s32.totalorder %s16, 0
      %p137 = por %p135, %p136
      %p138 = scmp.le.s32.totalorder 1, %s10
      %p139 = scmp.lt.s32.totalorder %s10, 3
      %p140 = pnand %p138, %p139
      %p141 = pneg %p140
      // Predicated region
      $region9: #{c3_forward_nchw.6} parent=5 // pred_check
        _
      $region10: #{c3_forward_nchw.6} parent=5 // pred_check_branch
        %143 = sbr.rel (%p140) target = $region12
      $region11: #{c3_forward_nchw.6} parent=5 // pred_region
        %s144 = ssub.s32 %s10, 1
        // Predicated region
        $region13: #{c3_forward_nchw.6} parent=11 // pred_check
          %p145 = pneg %p57
        $region14: #{c3_forward_nchw.6} parent=11 // pred_check_branch
          %147 = sbr.rel (%p145) target = $region16
        $region15: #{c3_forward_nchw.6} parent=11 // pred_region
          _
        $region16: #{c3_forward_nchw.6} parent=11 // pred_fallthru
          _
        // Predicated region
        $region17: #{c3_forward_nchw.6} parent=11 // pred_check
          %p148 = pneg %p78
        $region18: #{c3_forward_nchw.6} parent=11 // pred_check_branch
          %150 = sbr.rel (%p148) target = $region20
        $region19: #{c3_forward_nchw.6} parent=11 // pred_region
          _
        $region20: #{c3_forward_nchw.6} parent=11 // pred_fallthru
          _
      $region12: #{c3_forward_nchw.6} parent=5 // pred_fallthru
        _
      %p151 = scmp.lt.s32.totalorder %s10, 2
      // Predicated region
      $region21: #{c3_forward_nchw.6} parent=5 // pred_check
        %p152 = pneg %p151
      $region22: #{c3_forward_nchw.6} parent=5 // pred_check_branch
        %154 = sbr.rel (%p152) target = $region24
      $region23: #{c3_forward_nchw.6} parent=5 // pred_region
        // Predicated region
        $region25: #{c3_forward_nchw.6} parent=23 // pred_check
          %p155 = pneg %p30
        $region26: #{c3_forward_nchw.6} parent=23 // pred_check_branch
          %157 = sbr.rel (%p155) target = $region28
        $region27: #{c3_forward_nchw.6} parent=23 // pred_region
          %p158 = scmp.lt.s32.totalorder %s10, 1
          %s159 = scalar_select %p158, %s10, 1
          %s160 = smul.addr %s159, 54
          %s161 = smul.addr %s160, 4
          %s162 = scalar_lea.vmem %s0, %s161
        $region28: #{c3_forward_nchw.6} parent=23 // pred_fallthru
          _
        // Predicated region
        $region29: #{c3_forward_nchw.6} parent=23 // pred_check
          %p163 = pneg %p98
        $region30: #{c3_forward_nchw.6} parent=23 // pred_check_branch
          %165 = sbr.rel (%p163) target = $region32
        $region31: #{c3_forward_nchw.6} parent=23 // pred_region
          %s166 = sand.u32 %s88, 1
          %s167 = sand.u32 %s88, 1
          %s168 = smul.addr %s167, 128
          %s169 = scalar_lea.vmem [#allocation2], %s168
          %s170 = smul.addr %s10, 64
          %s171 = smul.addr %s170, 4
          %s172 = scalar_lea.vmem %s3, %s171
          // Predicated region
          $region33: #{c3_forward_nchw.6} parent=31 // pred_check
            _
          $region34: #{c3_forward_nchw.6} parent=31 // pred_check_branch
            %174 = sbr.rel (0) target = $region36
          $region35: #{c3_forward_nchw.6} parent=31 // pred_region
            // Predicated region
            $region37: #{c3_forward_nchw.6} parent=35 // pred_check
              _
            $region38: #{c3_forward_nchw.6} parent=35 // pred_check_branch
              %176 = sbr.rel target = $region40
            $region39: #{c3_forward_nchw.6} parent=35 // pred_region
              // Predicated region
              $region52: #{c3_forward_nchw.6} parent=39 // pred_check
                _
              $region53: #{c3_forward_nchw.6} parent=39 // pred_check_branch
                %254 = sbr.rel (0) target = $region55
              $region54: #{c3_forward_nchw.6} parent=39 // pred_region
                loop: start=0, step=1, limit=1
                $region56: #{c3_forward_nchw.6} parent=54 // loop_pre_header
                  _
                $region57: #{c3_forward_nchw.6} parent=54 // loop_header
                  %s256 = sphi 0, %s260
                  %p257 = scmp.ge.s32.totalorder %s256, 1
                  %s261 = sphi %s172, %s172
                  %s262 = sphi %s169, %s169
                $region58: #{c3_forward_nchw.6} parent=54 // loop_header_branch
                  %259 = sbr.rel (%p257) target = $region62
                $region59: #{c3_forward_nchw.6} parent=54 // loop_body
                  _
                $region60: #{c3_forward_nchw.6} parent=54 // loop_footer
                  %s260 = sadd.s32 1, %s256
                $region61: #{c3_forward_nchw.6} parent=54 // loop_footer_branch
                  %255 = sbr.rel target = $region57
                $region62: #{c3_forward_nchw.6} parent=54 // loop_exit
                  _
                %s264 = ssub.s32 16, 1
                loop: start=0, step=1, limit=1
                $region63: #{c3_forward_nchw.6} parent=54 // loop_pre_header
                  _
                $region64: #{c3_forward_nchw.6} parent=54 // loop_header
                  %s266 = sphi 0, %s270
                  %p267 = scmp.ge.s32.totalorder %s266, 1
                  %s271 = sphi %s172, %s172
                  %s272 = sphi %s169, %s169
                $region65: #{c3_forward_nchw.6} parent=54 // loop_header_branch
                  %269 = sbr.rel (%p267) target = $region69
                $region66: #{c3_forward_nchw.6} parent=54 // loop_body
                  %v273 = vld [vmem:[%s271] sm:%s264]
                  %274 = vst [vmem:[%s272] sm:%s264] %v273
                  %v275 = vld [vmem:[%s271 + $0x8] sm:%s264]
                  %276 = vst [vmem:[%s272 + $0x4] sm:%s264] %v275
                  %v277 = vld [vmem:[%s271 + $0x10] sm:%s264]
                  %278 = vst [vmem:[%s272 + $0x8] sm:%s264] %v277
                  %v279 = vld [vmem:[%s271 + $0x18] sm:%s264]
                  %280 = vst [vmem:[%s272 + $0xc] sm:%s264] %v279
                  %v281 = vld [vmem:[%s271 + $0x20] sm:%s264]
                  %282 = vst [vmem:[%s272 + $0x10] sm:%s264] %v281
                  %v283 = vld [vmem:[%s271 + $0x28] sm:%s264]
                  %284 = vst [vmem:[%s272 + $0x14] sm:%s264] %v283
                  %v285 = vld [vmem:[%s271 + $0x30] sm:%s264]
                  %286 = vst [vmem:[%s272 + $0x18] sm:%s264] %v285
                  %v287 = vld [vmem:[%s271 + $0x38] sm:%s264]
                  %288 = vst [vmem:[%s272 + $0x1c] sm:%s264] %v287
                  %v289 = vld [vmem:[%s271 + $0x40] sm:%s264]
                  %290 = vst [vmem:[%s272 + $0x20] sm:%s264] %v289
                  %v291 = vld [vmem:[%s271 + $0x48] sm:%s264]
                  %292 = vst [vmem:[%s272 + $0x24] sm:%s264] %v291
                  %v293 = vld [vmem:[%s271 + $0x50] sm:%s264]
                  %294 = vst [vmem:[%s272 + $0x28] sm:%s264] %v293
                  %v295 = vld [vmem:[%s271 + $0x58] sm:%s264]
                  %296 = vst [vmem:[%s272 + $0x2c] sm:%s264] %v295
                  %v297 = vld [vmem:[%s271 + $0x60] sm:%s264]
                  %298 = vst [vmem:[%s272 + $0x30] sm:%s264] %v297
                  %v299 = vld [vmem:[%s271 + $0x68] sm:%s264]
                  %300 = vst [vmem:[%s272 + $0x34] sm:%s264] %v299
                  %v301 = vld [vmem:[%s271 + $0x70] sm:%s264]
                  %302 = vst [vmem:[%s272 + $0x38] sm:%s264] %v301
                  %v303 = vld [vmem:[%s271 + $0x78] sm:%s264]
                  %304 = vst [vmem:[%s272 + $0x3c] sm:%s264] %v303
                  %v305 = vld [vmem:[%s271 + $0x80] sm:%s264]
                  %306 = vst [vmem:[%s272 + $0x40] sm:%s264] %v305
                  %v307 = vld [vmem:[%s271 + $0x88] sm:%s264]
                  %308 = vst [vmem:[%s272 + $0x44] sm:%s264] %v307
                  %v309 = vld [vmem:[%s271 + $0x90] sm:%s264]
                  %310 = vst [vmem:[%s272 + $0x48] sm:%s264] %v309
                  %v311 = vld [vmem:[%s271 + $0x98] sm:%s264]
                  %312 = vst [vmem:[%s272 + $0x4c] sm:%s264] %v311
                  %v313 = vld [vmem:[%s271 + $0xa0] sm:%s264]
                  %314 = vst [vmem:[%s272 + $0x50] sm:%s264] %v313
                  %v315 = vld [vmem:[%s271 + $0xa8] sm:%s264]
                  %316 = vst [vmem:[%s272 + $0x54] sm:%s264] %v315
                  %v317 = vld [vmem:[%s271 + $0xb0] sm:%s264]
                  %318 = vst [vmem:[%s272 + $0x58] sm:%s264] %v317
                  %v319 = vld [vmem:[%s271 + $0xb8] sm:%s264]
                  %320 = vst [vmem:[%s272 + $0x5c] sm:%s264] %v319
                  %v321 = vld [vmem:[%s271 + $0xc0] sm:%s264]
                  %322 = vst [vmem:[%s272 + $0x60] sm:%s264] %v321
                  %v323 = vld [vmem:[%s271 + $0xc8] sm:%s264]
                  %324 = vst [vmem:[%s272 + $0x64] sm:%s264] %v323
                  %v325 = vld [vmem:[%s271 + $0xd0] sm:%s264]
                  %326 = vst [vmem:[%s272 + $0x68] sm:%s264] %v325
                  %v327 = vld [vmem:[%s271 + $0xd8] sm:%s264]
                  %328 = vst [vmem:[%s272 + $0x6c] sm:%s264] %v327
                  %v329 = vld [vmem:[%s271 + $0xe0] sm:%s264]
                  %330 = vst [vmem:[%s272 + $0x70] sm:%s264] %v329
                  %v331 = vld [vmem:[%s271 + $0xe8] sm:%s264]
                  %332 = vst [vmem:[%s272 + $0x74] sm:%s264] %v331
                  %v333 = vld [vmem:[%s271 + $0xf0] sm:%s264]
                  %334 = vst [vmem:[%s272 + $0x78] sm:%s264] %v333
                  %v335 = vld [vmem:[%s271 + $0xf8] sm:%s264]
                  %336 = vst [vmem:[%s272 + $0x7c] sm:%s264] %v335
                $region67: #{c3_forward_nchw.6} parent=54 // loop_footer
                  %s270 = sadd.s32 1, %s266
                $region68: #{c3_forward_nchw.6} parent=54 // loop_footer_branch
                  %265 = sbr.rel target = $region64
                $region69: #{c3_forward_nchw.6} parent=54 // loop_exit
                  _
              $region55: #{c3_forward_nchw.6} parent=39 // pred_fallthru
                _
            $region40: #{c3_forward_nchw.6} parent=35 // pred_fallthru
              _
            // Predicated region
            $region41: #{c3_forward_nchw.6} parent=35 // pred_check
              _
            $region42: #{c3_forward_nchw.6} parent=35 // pred_check_branch
              %178 = sbr.rel (0) target = $region44
            $region43: #{c3_forward_nchw.6} parent=35 // pred_region
              %s180 = ssub.s32 16, 1
              loop: start=0, step=1, limit=1
              $region45: #{c3_forward_nchw.6} parent=43 // loop_pre_header
                _
              $region46: #{c3_forward_nchw.6} parent=43 // loop_header
                %s182 = sphi 0, %s186
                %p183 = scmp.ge.s32.totalorder %s182, 1
                %s187 = sphi %s172, %s172
                %s188 = sphi %s169, %s169
              $region47: #{c3_forward_nchw.6} parent=43 // loop_header_branch
                %185 = sbr.rel (%p183) target = $region51
              $region48: #{c3_forward_nchw.6} parent=43 // loop_body
                %v189 = vld [vmem:[%s187] sm:%s180]
                %190 = vst [vmem:[%s188] sm:%s180] %v189
                %v191 = vld [vmem:[%s187 + $0x8] sm:%s180]
                %192 = vst [vmem:[%s188 + $0x4] sm:%s180] %v191
                %v193 = vld [vmem:[%s187 + $0x10] sm:%s180]
                %194 = vst [vmem:[%s188 + $0x8] sm:%s180] %v193
                %v195 = vld [vmem:[%s187 + $0x18] sm:%s180]
                %196 = vst [vmem:[%s188 + $0xc] sm:%s180] %v195
                %v197 = vld [vmem:[%s187 + $0x20] sm:%s180]
                %198 = vst [vmem:[%s188 + $0x10] sm:%s180] %v197
                %v199 = vld [vmem:[%s187 + $0x28] sm:%s180]
                %200 = vst [vmem:[%s188 + $0x14] sm:%s180] %v199
                %v201 = vld [vmem:[%s187 + $0x30] sm:%s180]
                %202 = vst [vmem:[%s188 + $0x18] sm:%s180] %v201
                %v203 = vld [vmem:[%s187 + $0x38] sm:%s180]
                %204 = vst [vmem:[%s188 + $0x1c] sm:%s180] %v203
                %v205 = vld [vmem:[%s187 + $0x40] sm:%s180]
                %206 = vst [vmem:[%s188 + $0x20] sm:%s180] %v205
                %v207 = vld [vmem:[%s187 + $0x48] sm:%s180]
                %208 = vst [vmem:[%s188 + $0x24] sm:%s180] %v207
                %v209 = vld [vmem:[%s187 + $0x50] sm:%s180]
                %210 = vst [vmem:[%s188 + $0x28] sm:%s180] %v209
                %v211 = vld [vmem:[%s187 + $0x58] sm:%s180]
                %212 = vst [vmem:[%s188 + $0x2c] sm:%s180] %v211
                %v213 = vld [vmem:[%s187 + $0x60] sm:%s180]
                %214 = vst [vmem:[%s188 + $0x30] sm:%s180] %v213
                %v215 = vld [vmem:[%s187 + $0x68] sm:%s180]
                %216 = vst [vmem:[%s188 + $0x34] sm:%s180] %v215
                %v217 = vld [vmem:[%s187 + $0x70] sm:%s180]
                %218 = vst [vmem:[%s188 + $0x38] sm:%s180] %v217
                %v219 = vld [vmem:[%s187 + $0x78] sm:%s180]
                %220 = vst [vmem:[%s188 + $0x3c] sm:%s180] %v219
                %v221 = vld [vmem:[%s187 + $0x80] sm:%s180]
                %222 = vst [vmem:[%s188 + $0x40] sm:%s180] %v221
                %v223 = vld [vmem:[%s187 + $0x88] sm:%s180]
                %224 = vst [vmem:[%s188 + $0x44] sm:%s180] %v223
                %v225 = vld [vmem:[%s187 + $0x90] sm:%s180]
                %226 = vst [vmem:[%s188 + $0x48] sm:%s180] %v225
                %v227 = vld [vmem:[%s187 + $0x98] sm:%s180]
                %228 = vst [vmem:[%s188 + $0x4c] sm:%s180] %v227
                %v229 = vld [vmem:[%s187 + $0xa0] sm:%s180]
                %230 = vst [vmem:[%s188 + $0x50] sm:%s180] %v229
                %v231 = vld [vmem:[%s187 + $0xa8] sm:%s180]
                %232 = vst [vmem:[%s188 + $0x54] sm:%s180] %v231
                %v233 = vld [vmem:[%s187 + $0xb0] sm:%s180]
                %234 = vst [vmem:[%s188 + $0x58] sm:%s180] %v233
                %v235 = vld [vmem:[%s187 + $0xb8] sm:%s180]
                %236 = vst [vmem:[%s188 + $0x5c] sm:%s180] %v235
                %v237 = vld [vmem:[%s187 + $0xc0] sm:%s180]
                %238 = vst [vmem:[%s188 + $0x60] sm:%s180] %v237
                %v239 = vld [vmem:[%s187 + $0xc8] sm:%s180]
                %240 = vst [vmem:[%s188 + $0x64] sm:%s180] %v239
                %v241 = vld [vmem:[%s187 + $0xd0] sm:%s180]
                %242 = vst [vmem:[%s188 + $0x68] sm:%s180] %v241
                %v243 = vld [vmem:[%s187 + $0xd8] sm:%s180]
                %244 = vst [vmem:[%s188 + $0x6c] sm:%s180] %v243
                %v245 = vld [vmem:[%s187 + $0xe0] sm:%s180]
                %246 = vst [vmem:[%s188 + $0x70] sm:%s180] %v245
                %v247 = vld [vmem:[%s187 + $0xe8] sm:%s180]
                %248 = vst [vmem:[%s188 + $0x74] sm:%s180] %v247
                %v249 = vld [vmem:[%s187 + $0xf0] sm:%s180]
                %250 = vst [vmem:[%s188 + $0x78] sm:%s180] %v249
                %v251 = vld [vmem:[%s187 + $0xf8] sm:%s180]
                %252 = vst [vmem:[%s188 + $0x7c] sm:%s180] %v251
              $region49: #{c3_forward_nchw.6} parent=43 // loop_footer
                %s186 = sadd.s32 1, %s182
              $region50: #{c3_forward_nchw.6} parent=43 // loop_footer_branch
                %181 = sbr.rel target = $region46
              $region51: #{c3_forward_nchw.6} parent=43 // loop_exit
                _
            $region44: #{c3_forward_nchw.6} parent=35 // pred_fallthru
              _
          $region36: #{c3_forward_nchw.6} parent=31 // pred_fallthru
            _
          %337 = vnop
        $region32: #{c3_forward_nchw.6} parent=23 // pred_fallthru
          _
      $region24: #{c3_forward_nchw.6} parent=5 // pred_fallthru
        _
      %p338 = scmp.le.s32.totalorder 1, %s10
      %p339 = scmp.lt.s32.totalorder %s10, 3
      %p340 = pnand %p338, %p339
      %p341 = pneg %p340
      // Predicated region
      $region70: #{c3_forward_nchw.6} parent=5 // pred_check
        _
      $region71: #{c3_forward_nchw.6} parent=5 // pred_check_branch
        %343 = sbr.rel (%p340) target = $region73
      $region72: #{c3_forward_nchw.6} parent=5 // pred_region
        %s344 = ssub.s32 %s10, 1
        %s345 = sand.u32 %s91, 1
        %s346 = sand.u32 %s91, 1
        %s347 = smul.addr %s346, 128
        %s348 = scalar_lea.vmem [#allocation2], %s347
        // Predicated region
        $region74: #{c3_forward_nchw.6} parent=72 // pred_check
          %p349 = pneg %p104
        $region75: #{c3_forward_nchw.6} parent=72 // pred_check_branch
          %351 = sbr.rel (%p349) target = $region77
        $region76: #{c3_forward_nchw.6} parent=72 // pred_region
          _
        $region77: #{c3_forward_nchw.6} parent=72 // pred_fallthru
          _
        %p352 = scmp.lt.s32.totalorder %s15, 1
        %s353 = scalar_select %p352, %s15, 1
        %s354 = smul.addr %s353, 54
        %s355 = smul.addr %s354, 4
        %s356 = scalar_lea.vmem %s0, %s355
        %p357 = pneg %p36
        %p358 = pneg %p33
        %p359 = pneg %p57
        %p360 = pneg %p54
        %p361 = pneg %p78
        %p362 = pneg %p75
        %s363 = sand.u32 %s91, 1
        %s364 = sand.u32 %s91, 1
        %s365 = smul.addr %s364, 128
        %s366 = scalar_lea.vmem [#allocation2], %s365
        %p367 = pneg %p104
        %p368 = pneg %p101
        %p369 = pneg %p130
        %p370 = pneg %p127
        %p371 = scmp.lt.s32.totalorder %s15, 1
        %s372 = scalar_select %p371, %s15, 1
        %s373 = smul.addr %s372, 32
        %s374 = smul.addr %s373, 4
        %s375 = scalar_lea.vmem %s4, %s374
        %p376 = scmp.lt.s32.totalorder %s15, 1
        %s377 = scalar_select %p376, %s15, 1
        %s378 = smul.addr %s377, 54
        %s379 = smul.addr %s378, 4
        %s380 = scalar_lea.vmem %s0, %s379
        %p381 = scmp.lt.s32.totalorder %s15, 1
        %s382 = scalar_select %p381, %s15, 1
        %s383 = smul.addr %s382, 32
        %s384 = smul.addr %s383, 4
        %s385 = scalar_lea.vmem %s4, %s384
        %v387 = vld [vmem:[%s380] sm:$0xf]
        %v388 = vld [vmem:[%s380 + $0x4] sm:$0xf]
        %v389 = vld [vmem:[%s380 + $0xc] sm:$0xf]
        %v390 = vld [vmem:[%s380 + $0x10] sm:$0xf]
        %v391 = vld [vmem:[%s380 + $0x18] sm:$0xf]
        %v392 = vld [vmem:[%s380 + $0x1c] sm:$0xf]
        %v393 = vld [vmem:[%s380 + $0x24] sm:$0xf]
        %v394 = vld [vmem:[%s380 + $0x28] sm:$0xf]
        %v395 = vld [vmem:[%s380 + $0x30] sm:$0xf]
        %v396 = vld [vmem:[%s380 + $0x34] sm:$0xf]
        %v397 = vld [vmem:[%s380 + $0x3c] sm:$0xf]
        %v398 = vld [vmem:[%s380 + $0x40] sm:$0xf]
        %v399 = vld [vmem:[%s380 + $0x48] sm:$0xf]
        %v400 = vld [vmem:[%s380 + $0x4c] sm:$0xf]
        %v401 = vld [vmem:[%s380 + $0x54] sm:$0xf]
        %v402 = vld [vmem:[%s380 + $0x58] sm:$0xf]
        %v403 = vld [vmem:[%s380 + $0x60] sm:$0xf]
        %v404 = vld [vmem:[%s380 + $0x64] sm:$0xf]
        %v405 = vld [vmem:[%s380 + $0x6c] sm:$0xf]
        %v406 = vld [vmem:[%s380 + $0x70] sm:$0xf]
        %v407 = vld [vmem:[%s380 + $0x78] sm:$0xf]
        %v408 = vld [vmem:[%s380 + $0x7c] sm:$0xf]
        %v409 = vld [vmem:[%s380 + $0x84] sm:$0xf]
        %v410 = vld [vmem:[%s380 + $0x88] sm:$0xf]
        %v411 = vld [vmem:[%s380 + $0x90] sm:$0xf]
        %v412 = vld [vmem:[%s380 + $0x94] sm:$0xf]
        %v413 = vld [vmem:[%s380 + $0x9c] sm:$0xf]
        %v414 = vld [vmem:[%s380 + $0xa0] sm:$0xf]
        %v415 = vld [vmem:[%s380 + $0xa8] sm:$0xf]
        %v416 = vld [vmem:[%s380 + $0xac] sm:$0xf]
        %v417 = vld [vmem:[%s380 + $0xb4] sm:$0xf]
        %v418 = vld [vmem:[%s380 + $0xb8] sm:$0xf]
        %v419 = vld [vmem:[%s1] sm:$0xf]
        %v420 = vld [vmem:[%s1 + $0x4] sm:$0xf]
        %v421 = vld [vmem:[%s1 + $0x8] sm:$0xf]
        %v422 = vld [vmem:[%s1 + $0xc] sm:$0xf]
        %v423 = vld [vmem:[%s1 + $0x10] sm:$0xf]
        %v424 = vld [vmem:[%s1 + $0x14] sm:$0xf]
        %v425 = vld [vmem:[%s1 + $0x18] sm:$0xf]
        %v426 = vld [vmem:[%s1 + $0x1c] sm:$0xf]
        %v427 = vld [vmem:[%s1 + $0x20] sm:$0xf]
        %v428 = vld [vmem:[%s1 + $0x24] sm:$0xf]
        %v429 = vld [vmem:[%s1 + $0x28] sm:$0xf]
        %v430 = vld [vmem:[%s1 + $0x2c] sm:$0xf]
        %v431 = vld [vmem:[%s1 + $0x30] sm:$0xf]
        %v432 = vld [vmem:[%s1 + $0x34] sm:$0xf]
        %v433 = vld [vmem:[%s1 + $0x38] sm:$0xf]
        %v434 = vld [vmem:[%s1 + $0x3c] sm:$0xf]
        %v435 = vld [vmem:[%s380 + $0x8] sm:$0x1]
        %v436 = vld [vmem:[%s380 + $0x14] sm:$0x1]
        %v437 = vld [vmem:[%s380 + $0x20] sm:$0x1]
        %v438 = vld [vmem:[%s380 + $0x2c] sm:$0x1]
        %v439 = vld [vmem:[%s380 + $0x38] sm:$0x1]
        %v440 = vld [vmem:[%s380 + $0x44] sm:$0x1]
        %v441 = vld [vmem:[%s380 + $0x50] sm:$0x1]
        %v442 = vld [vmem:[%s380 + $0x5c] sm:$0x1]
        %v443 = vld [vmem:[%s380 + $0x68] sm:$0x1]
        %v444 = vld [vmem:[%s380 + $0x74] sm:$0x1]
        %v445 = vld [vmem:[%s380 + $0x80] sm:$0x1]
        %v446 = vld [vmem:[%s380 + $0x8c] sm:$0x1]
        %v447 = vld [vmem:[%s380 + $0x98] sm:$0x1]
        %v448 = vld [vmem:[%s380 + $0xa4] sm:$0x1]
        %v449 = vld [vmem:[%s380 + $0xb0] sm:$0x1]
        %v450 = vld [vmem:[%s380 + $0xbc] sm:$0x1]
        %vm451 = vsmask.f32 3328
        %vm452 = vsmask.f32 7440
        %vm453 = vmor %vm451, %vm452
        %v455 = vshrl.u32 %v387, 16
        %v457 = vrot.slane %v455, 4
        %v458 = vshll.u32 %v387, 16
        %v460 = vrot.slane %v458, 5
        %v461 = vor.u32 %v457, %v460
        %v462 = vrot.slane %v461, 4
        %v464 = vshll.u32 %v388, 16
        %v466 = vrot.slane %v464, 5
        %v467 = vsel %vm453, %v462, %v466
        %v468 = vshrl.u32 %v388, 16
        %v470 = vrot.slane %v468, 4
        %v471 = vor.u32 %v470, %v466
        %v472 = vrot.slane %v471, 4
        %v474 = vshll.u32 %v435, 16
        %v476 = vrot.slane %v474, 5
        %v477 = vsel %vm453, %v472, %v476
        %v479 = vshrl.u32 %v389, 16
        %v481 = vrot.slane %v479, 4
        %v482 = vshll.u32 %v389, 16
        %v484 = vrot.slane %v482, 5
        %v485 = vor.u32 %v481, %v484
        %v486 = vrot.slane %v485, 4
        %v488 = vshll.u32 %v390, 16
        %v490 = vrot.slane %v488, 5
        %v491 = vsel %vm453, %v486, %v490
        %v492 = vshrl.u32 %v390, 16
        %v494 = vrot.slane %v492, 4
        %v495 = vor.u32 %v494, %v490
        %v496 = vrot.slane %v495, 4
        %v498 = vshll.u32 %v436, 16
        %v500 = vrot.slane %v498, 5
        %v501 = vsel %vm453, %v496, %v500
        %v503 = vshrl.u32 %v391, 16
        %v505 = vrot.slane %v503, 4
        %v506 = vshll.u32 %v391, 16
        %v508 = vrot.slane %v506, 5
        %v509 = vor.u32 %v505, %v508
        %v510 = vrot.slane %v509, 4
        %v512 = vshll.u32 %v392, 16
        %v514 = vrot.slane %v512, 5
        %v515 = vsel %vm453, %v510, %v514
        %v516 = vshrl.u32 %v392, 16
        %v518 = vrot.slane %v516, 4
        %v519 = vor.u32 %v518, %v514
        %v520 = vrot.slane %v519, 4
        %v522 = vshll.u32 %v437, 16
        %v524 = vrot.slane %v522, 5
        %v525 = vsel %vm453, %v520, %v524
        %v527 = vshrl.u32 %v393, 16
        %v529 = vrot.slane %v527, 4
        %v530 = vshll.u32 %v393, 16
        %v532 = vrot.slane %v530, 5
        %v533 = vor.u32 %v529, %v532
        %v534 = vrot.slane %v533, 4
        %v536 = vshll.u32 %v394, 16
        %v538 = vrot.slane %v536, 5
        %v539 = vsel %vm453, %v534, %v538
        %v540 = vshrl.u32 %v394, 16
        %v542 = vrot.slane %v540, 4
        %v543 = vor.u32 %v542, %v538
        %v544 = vrot.slane %v543, 4
        %v546 = vshll.u32 %v438, 16
        %v548 = vrot.slane %v546, 5
        %v549 = vsel %vm453, %v544, %v548
        %v551 = vshrl.u32 %v395, 16
        %v553 = vrot.slane %v551, 4
        %v554 = vshll.u32 %v395, 16
        %v556 = vrot.slane %v554, 5
        %v557 = vor.u32 %v553, %v556
        %v558 = vrot.slane %v557, 4
        %v560 = vshll.u32 %v396, 16
        %v562 = vrot.slane %v560, 5
        %v563 = vsel %vm453, %v558, %v562
        %v564 = vshrl.u32 %v396, 16
        %v566 = vrot.slane %v564, 4
        %v567 = vor.u32 %v566, %v562
        %v568 = vrot.slane %v567, 4
        %v570 = vshll.u32 %v439, 16
        %v572 = vrot.slane %v570, 5
        %v573 = vsel %vm453, %v568, %v572
        %v575 = vshrl.u32 %v397, 16
        %v577 = vrot.slane %v575, 4
        %v578 = vshll.u32 %v397, 16
        %v580 = vrot.slane %v578, 5
        %v581 = vor.u32 %v577, %v580
        %v582 = vrot.slane %v581, 4
        %v584 = vshll.u32 %v398, 16
        %v586 = vrot.slane %v584, 5
        %v587 = vsel %vm453, %v582, %v586
        %v588 = vshrl.u32 %v398, 16
        %v590 = vrot.slane %v588, 4
        %v591 = vor.u32 %v590, %v586
        %v592 = vrot.slane %v591, 4
        %v594 = vshll.u32 %v440, 16
        %v596 = vrot.slane %v594, 5
        %v597 = vsel %vm453, %v592, %v596
        %v599 = vshrl.u32 %v399, 16
        %v601 = vrot.slane %v599, 4
        %v602 = vshll.u32 %v399, 16
        %v604 = vrot.slane %v602, 5
        %v605 = vor.u32 %v601, %v604
        %v606 = vrot.slane %v605, 4
        %v608 = vshll.u32 %v400, 16
        %v610 = vrot.slane %v608, 5
        %v611 = vsel %vm453, %v606, %v610
        %v612 = vshrl.u32 %v400, 16
        %v614 = vrot.slane %v612, 4
        %v615 = vor.u32 %v614, %v610
        %v616 = vrot.slane %v615, 4
        %v618 = vshll.u32 %v441, 16
        %v620 = vrot.slane %v618, 5
        %v621 = vsel %vm453, %v616, %v620
        %v623 = vshrl.u32 %v401, 16
        %v625 = vrot.slane %v623, 4
        %v626 = vshll.u32 %v401, 16
        %v628 = vrot.slane %v626, 5
        %v629 = vor.u32 %v625, %v628
        %v630 = vrot.slane %v629, 4
        %v632 = vshll.u32 %v402, 16
        %v634 = vrot.slane %v632, 5
        %v635 = vsel %vm453, %v630, %v634
        %v636 = vshrl.u32 %v402, 16
        %v638 = vrot.slane %v636, 4
        %v639 = vor.u32 %v638, %v634
        %v640 = vrot.slane %v639, 4
        %v642 = vshll.u32 %v442, 16
        %v644 = vrot.slane %v642, 5
        %v645 = vsel %vm453, %v640, %v644
        %v647 = vshrl.u32 %v403, 16
        %v649 = vrot.slane %v647, 4
        %v650 = vshll.u32 %v403, 16
        %v652 = vrot.slane %v650, 5
        %v653 = vor.u32 %v649, %v652
        %v654 = vrot.slane %v653, 4
        %v656 = vshll.u32 %v404, 16
        %v658 = vrot.slane %v656, 5
        %v659 = vsel %vm453, %v654, %v658
        %v660 = vshrl.u32 %v404, 16
        %v662 = vrot.slane %v660, 4
        %v663 = vor.u32 %v662, %v658
        %v664 = vrot.slane %v663, 4
        %v666 = vshll.u32 %v443, 16
        %v668 = vrot.slane %v666, 5
        %v669 = vsel %vm453, %v664, %v668
        %v671 = vshrl.u32 %v405, 16
        %v673 = vrot.slane %v671, 4
        %v674 = vshll.u32 %v405, 16
        %v676 = vrot.slane %v674, 5
        %v677 = vor.u32 %v673, %v676
        %v678 = vrot.slane %v677, 4
        %v680 = vshll.u32 %v406, 16
        %v682 = vrot.slane %v680, 5
        %v683 = vsel %vm453, %v678, %v682
        %v684 = vshrl.u32 %v406, 16
        %v686 = vrot.slane %v684, 4
        %v687 = vor.u32 %v686, %v682
        %v688 = vrot.slane %v687, 4
        %v690 = vshll.u32 %v444, 16
        %v692 = vrot.slane %v690, 5
        %v693 = vsel %vm453, %v688, %v692
        %v695 = vshrl.u32 %v407, 16
        %v697 = vrot.slane %v695, 4
        %v698 = vshll.u32 %v407, 16
        %v700 = vrot.slane %v698, 5
        %v701 = vor.u32 %v697, %v700
        %v702 = vrot.slane %v701, 4
        %v704 = vshll.u32 %v408, 16
        %v706 = vrot.slane %v704, 5
        %v707 = vsel %vm453, %v702, %v706
        %v708 = vshrl.u32 %v408, 16
        %v710 = vrot.slane %v708, 4
        %v711 = vor.u32 %v710, %v706
        %v712 = vrot.slane %v711, 4
        %v714 = vshll.u32 %v445, 16
        %v716 = vrot.slane %v714, 5
        %v717 = vsel %vm453, %v712, %v716
        %v719 = vshrl.u32 %v409, 16
        %v721 = vrot.slane %v719, 4
        %v722 = vshll.u32 %v409, 16
        %v724 = vrot.slane %v722, 5
        %v725 = vor.u32 %v721, %v724
        %v726 = vrot.slane %v725, 4
        %v728 = vshll.u32 %v410, 16
        %v730 = vrot.slane %v728, 5
        %v731 = vsel %vm453, %v726, %v730
        %v732 = vshrl.u32 %v410, 16
        %v734 = vrot.slane %v732, 4
        %v735 = vor.u32 %v734, %v730
        %v736 = vrot.slane %v735, 4
        %v738 = vshll.u32 %v446, 16
        %v740 = vrot.slane %v738, 5
        %v741 = vsel %vm453, %v736, %v740
        %v743 = vshrl.u32 %v411, 16
        %v745 = vrot.slane %v743, 4
        %v746 = vshll.u32 %v411, 16
        %v748 = vrot.slane %v746, 5
        %v749 = vor.u32 %v745, %v748
        %v750 = vrot.slane %v749, 4
        %v752 = vshll.u32 %v412, 16
        %v754 = vrot.slane %v752, 5
        %v755 = vsel %vm453, %v750, %v754
        %v756 = vshrl.u32 %v412, 16
        %v758 = vrot.slane %v756, 4
        %v759 = vor.u32 %v758, %v754
        %v760 = vrot.slane %v759, 4
        %v762 = vshll.u32 %v447, 16
        %v764 = vrot.slane %v762, 5
        %v765 = vsel %vm453, %v760, %v764
        %v767 = vshrl.u32 %v413, 16
        %v769 = vrot.slane %v767, 4
        %v770 = vshll.u32 %v413, 16
        %v772 = vrot.slane %v770, 5
        %v773 = vor.u32 %v769, %v772
        %v774 = vrot.slane %v773, 4
        %v776 = vshll.u32 %v414, 16
        %v778 = vrot.slane %v776, 5
        %v779 = vsel %vm453, %v774, %v778
        %v780 = vshrl.u32 %v414, 16
        %v782 = vrot.slane %v780, 4
        %v783 = vor.u32 %v782, %v778
        %v784 = vrot.slane %v783, 4
        %v786 = vshll.u32 %v448, 16
        %v788 = vrot.slane %v786, 5
        %v789 = vsel %vm453, %v784, %v788
        %v791 = vshrl.u32 %v415, 16
        %v793 = vrot.slane %v791, 4
        %v794 = vshll.u32 %v415, 16
        %v796 = vrot.slane %v794, 5
        %v797 = vor.u32 %v793, %v796
        %v798 = vrot.slane %v797, 4
        %v800 = vshll.u32 %v416, 16
        %v802 = vrot.slane %v800, 5
        %v803 = vsel %vm453, %v798, %v802
        %v804 = vshrl.u32 %v416, 16
        %v806 = vrot.slane %v804, 4
        %v807 = vor.u32 %v806, %v802
        %v808 = vrot.slane %v807, 4
        %v810 = vshll.u32 %v449, 16
        %v812 = vrot.slane %v810, 5
        %v813 = vsel %vm453, %v808, %v812
        %v815 = vshrl.u32 %v417, 16
        %v817 = vrot.slane %v815, 4
        %v818 = vshll.u32 %v417, 16
        %v820 = vrot.slane %v818, 5
        %v821 = vor.u32 %v817, %v820
        %v822 = vrot.slane %v821, 4
        %v824 = vshll.u32 %v418, 16
        %v826 = vrot.slane %v824, 5
        %v827 = vsel %vm453, %v822, %v826
        %v828 = vshrl.u32 %v418, 16
        %v830 = vrot.slane %v828, 4
        %v831 = vor.u32 %v830, %v826
        %v832 = vrot.slane %v831, 4
        %v834 = vshll.u32 %v450, 16
        %v836 = vrot.slane %v834, 5
        %v837 = vsel %vm453, %v832, %v836
        %s838 = scalar_lea.vmem %s1, 64
        %v839 = vld [vmem:[%s838] sm:$0xf]
        %v840 = vld [vmem:[%s838 + $0x4] sm:$0xf]
        %v841 = vld [vmem:[%s838 + $0x8] sm:$0xf]
        %v842 = vld [vmem:[%s838 + $0xc] sm:$0xf]
        %v843 = vld [vmem:[%s838 + $0x10] sm:$0xf]
        %v844 = vld [vmem:[%s838 + $0x14] sm:$0xf]
        %v845 = vld [vmem:[%s838 + $0x18] sm:$0xf]
        %v846 = vld [vmem:[%s838 + $0x1c] sm:$0xf]
        %v847 = vld [vmem:[%s838 + $0x20] sm:$0xf]
        %v848 = vld [vmem:[%s838 + $0x24] sm:$0xf]
        %v849 = vld [vmem:[%s838 + $0x28] sm:$0xf]
        %v850 = vld [vmem:[%s838 + $0x2c] sm:$0xf]
        %v851 = vld [vmem:[%s838 + $0x30] sm:$0xf]
        %v852 = vld [vmem:[%s838 + $0x34] sm:$0xf]
        %v853 = vld [vmem:[%s838 + $0x38] sm:$0xf]
        %v854 = vld [vmem:[%s838 + $0x3c] sm:$0xf]
        %v855 = vunpack.c.l.b16 %v467
        %v856 = vunpack.c.l.b16 %v477
        %v857 = vunpack.c.l.b16 %v491
        %v858 = vunpack.c.l.b16 %v501
        %v859 = vunpack.c.l.b16 %v515
        %v860 = vunpack.c.l.b16 %v525
        %v861 = vunpack.c.l.b16 %v539
        %v862 = vunpack.c.l.b16 %v549
        %v863 = vunpack.c.l.b16 %v563
        %v864 = vunpack.c.l.b16 %v573
        %v865 = vunpack.c.l.b16 %v587
        %v866 = vunpack.c.l.b16 %v597
        %v867 = vunpack.c.l.b16 %v611
        %v868 = vunpack.c.l.b16 %v621
        %v869 = vunpack.c.l.b16 %v635
        %v870 = vunpack.c.l.b16 %v645
        %v871 = vunpack.c.l.b16 %v659
        %v872 = vunpack.c.l.b16 %v669
        %v873 = vunpack.c.l.b16 %v683
        %v874 = vunpack.c.l.b16 %v693
        %v875 = vunpack.c.l.b16 %v707
        %v876 = vunpack.c.l.b16 %v717
        %v877 = vunpack.c.l.b16 %v731
        %v878 = vunpack.c.l.b16 %v741
        %v879 = vunpack.c.l.b16 %v755
        %v880 = vunpack.c.l.b16 %v765
        %v881 = vunpack.c.l.b16 %v779
        %v882 = vunpack.c.l.b16 %v789
        %v883 = vunpack.c.l.b16 %v803
        %v884 = vunpack.c.l.b16 %v813
        %v885 = vunpack.c.l.b16 %v827
        %v886 = vunpack.c.l.b16 %v837
        %v887 = vpack.c.b16 %v856, %v855
        %v888 = vpack.c.b16 %v858, %v857
        %v889 = vpack.c.b16 %v860, %v859
        %v890 = vpack.c.b16 %v862, %v861
        %v891 = vpack.c.b16 %v864, %v863
        %v892 = vpack.c.b16 %v866, %v865
        %v893 = vpack.c.b16 %v868, %v867
        %v894 = vpack.c.b16 %v870, %v869
        %v895 = vpack.c.b16 %v872, %v871
        %v896 = vpack.c.b16 %v874, %v873
        %v897 = vpack.c.b16 %v876, %v875
        %v898 = vpack.c.b16 %v878, %v877
        %v899 = vpack.c.b16 %v880, %v879
        %v900 = vpack.c.b16 %v882, %v881
        %v901 = vpack.c.b16 %v884, %v883
        %v902 = vpack.c.b16 %v886, %v885
        %v935 = vunpack.c.l.b16 %v839
        %v936 = vunpack.c.l.b16 %v840
        %v937 = vunpack.c.l.b16 %v841
        %v938 = vunpack.c.l.b16 %v842
        %v939 = vunpack.c.l.b16 %v843
        %v940 = vunpack.c.l.b16 %v844
        %v941 = vunpack.c.l.b16 %v845
        %v942 = vunpack.c.l.b16 %v846
        %v943 = vunpack.c.l.b16 %v847
        %v944 = vunpack.c.l.b16 %v848
        %v945 = vunpack.c.l.b16 %v849
        %v946 = vunpack.c.l.b16 %v850
        %v947 = vunpack.c.l.b16 %v851
        %v948 = vunpack.c.l.b16 %v852
        %v949 = vunpack.c.l.b16 %v853
        %v950 = vunpack.c.l.b16 %v854
        %v951 = vpack.c.b16 %v936, %v935
        %v952 = vpack.c.b16 %v938, %v937
        %v953 = vpack.c.b16 %v940, %v939
        %v954 = vpack.c.b16 %v942, %v941
        %v955 = vpack.c.b16 %v944, %v943
        %v956 = vpack.c.b16 %v946, %v945
        %v957 = vpack.c.b16 %v948, %v947
        %v958 = vpack.c.b16 %v950, %v949
        %967 = vmatprep.subr.bf16.mxu0 0
        %968 = vmatpush1.bf16.msra.mxu0 %v958
        %969 = vmatprep.subr.bf16.mxu0 0
        %970 = vmatpush1.bf16.msra.mxu0 %v957
        %971 = vmatprep.subr.bf16.mxu0 0
        %972 = vmatpush1.bf16.msra.mxu0 %v956
        %973 = vmatprep.subr.bf16.mxu0 0
        %974 = vmatpush1.bf16.msra.mxu0 %v955
        %975 = vmatprep.subr.bf16.mxu0 0
        %976 = vmatpush1.bf16.msra.mxu0 %v954
        %977 = vmatprep.subr.bf16.mxu0 0
        %978 = vmatpush1.bf16.msra.mxu0 %v953
        %979 = vmatprep.subr.bf16.mxu0 0
        %980 = vmatpush1.bf16.msra.mxu0 %v952
        %981 = vmatprep.subr.bf16.mxu0 0
        %982 = vmatpush1.bf16.msra.mxu0 %v951
        %983 = vmatprep.subr.bf16.mxu0 0
        %984 = vmatpush2.bf16.msra.mxu0 0
        %985 = vmatprep.subr.bf16.mxu0 0
        %986 = vmatpush2.bf16.msra.mxu0 0
        %987 = vmatprep.subr.bf16.mxu0 0
        %988 = vmatpush2.bf16.msra.mxu0 0
        %989 = vmatprep.subr.bf16.mxu0 0
        %990 = vmatpush2.bf16.msra.mxu0 0
        %991 = vmatprep.subr.bf16.mxu0 0
        %992 = vmatpush2.bf16.msra.mxu0 0
        %993 = vmatprep.subr.bf16.mxu0 0
        %994 = vmatpush2.bf16.msra.mxu0 0
        %995 = vmatprep.subr.bf16.mxu0 0
        %996 = vmatpush2.bf16.msra.mxu0 0
        %997 = vmatprep.subr.bf16.mxu0 0
        %998 = vmatpush2.bf16.msra.mxu0 0
        %999 = vmatprep.mubr.bf16.mxu0 0
        %1000 = vmatmul.mubr.bf16.gmra.mxu0 %v887
        %v1001 = vpop.f32.mrf.mxu0
        %v1002 = vadd.f32 0.0, %v1001
        %v1003 = vpop.f32.mrf.mxu0
        %v1004 = vpop.f32.mrf.mxu0
        %v1005 = vadd.f32 0.0, %v1004
        %v1006 = vpop.f32.mrf.mxu0
        %1007 = vmatprep.mubr.bf16.mxu0 0
        %1008 = vmatmul.mubr.bf16.gmra.mxu0 %v888
        %v1009 = vpop.f32.mrf.mxu0
        %v1010 = vadd.f32 0.0, %v1009
        %v1011 = vpop.f32.mrf.mxu0
        %v1012 = vpop.f32.mrf.mxu0
        %v1013 = vadd.f32 0.0, %v1012
        %v1014 = vpop.f32.mrf.mxu0
        %1015 = vmatprep.mubr.bf16.mxu0 0
        %1016 = vmatmul.mubr.bf16.gmra.mxu0 %v889
        %v1017 = vpop.f32.mrf.mxu0
        %v1018 = vadd.f32 0.0, %v1017
        %v1019 = vpop.f32.mrf.mxu0
        %v1020 = vpop.f32.mrf.mxu0
        %v1021 = vadd.f32 0.0, %v1020
        %v1022 = vpop.f32.mrf.mxu0
        %1023 = vmatprep.mubr.bf16.mxu0 0
        %1024 = vmatmul.mubr.bf16.gmra.mxu0 %v890
        %v1025 = vpop.f32.mrf.mxu0
        %v1026 = vadd.f32 0.0, %v1025
        %v1027 = vpop.f32.mrf.mxu0
        %v1028 = vpop.f32.mrf.mxu0
        %v1029 = vadd.f32 0.0, %v1028
        %v1030 = vpop.f32.mrf.mxu0
        %1031 = vmatprep.mubr.bf16.mxu0 0
        %1032 = vmatmul.mubr.bf16.gmra.mxu0 %v891
        %v1033 = vpop.f32.mrf.mxu0
        %v1034 = vadd.f32 0.0, %v1033
        %v1035 = vpop.f32.mrf.mxu0
        %v1036 = vpop.f32.mrf.mxu0
        %v1037 = vadd.f32 0.0, %v1036
        %v1038 = vpop.f32.mrf.mxu0
        %1039 = vmatprep.mubr.bf16.mxu0 0
        %1040 = vmatmul.mubr.bf16.gmra.mxu0 %v892
        %v1041 = vpop.f32.mrf.mxu0
        %v1042 = vadd.f32 0.0, %v1041
        %v1043 = vpop.f32.mrf.mxu0
        %v1044 = vpop.f32.mrf.mxu0
        %v1045 = vadd.f32 0.0, %v1044
        %v1046 = vpop.f32.mrf.mxu0
        %1047 = vmatprep.mubr.bf16.mxu0 0
        %1048 = vmatmul.mubr.bf16.gmra.mxu0 %v893
        %v1049 = vpop.f32.mrf.mxu0
        %v1050 = vadd.f32 0.0, %v1049
        %v1051 = vpop.f32.mrf.mxu0
        %v1052 = vpop.f32.mrf.mxu0
        %v1053 = vadd.f32 0.0, %v1052
        %v1054 = vpop.f32.mrf.mxu0
        %1055 = vmatprep.mubr.bf16.mxu0 0
        %1056 = vmatmul.mubr.bf16.gmra.mxu0 %v894
        %v1057 = vpop.f32.mrf.mxu0
        %v1058 = vadd.f32 0.0, %v1057
        %v1059 = vpop.f32.mrf.mxu0
        %v1060 = vpop.f32.mrf.mxu0
        %v1061 = vadd.f32 0.0, %v1060
        %v1062 = vpop.f32.mrf.mxu0
        %1063 = vmatprep.mubr.bf16.mxu0 0
        %1064 = vmatmul.mubr.bf16.gmra.mxu0 %v895
        %v1065 = vpop.f32.mrf.mxu0
        %v1066 = vadd.f32 0.0, %v1065
        %v1067 = vpop.f32.mrf.mxu0
        %v1068 = vpop.f32.mrf.mxu0
        %v1069 = vadd.f32 0.0, %v1068
        %v1070 = vpop.f32.mrf.mxu0
        %1071 = vmatprep.mubr.bf16.mxu0 0
        %1072 = vmatmul.mubr.bf16.gmra.mxu0 %v896
        %v1073 = vpop.f32.mrf.mxu0
        %v1074 = vadd.f32 0.0, %v1073
        %v1075 = vpop.f32.mrf.mxu0
        %v1076 = vpop.f32.mrf.mxu0
        %v1077 = vadd.f32 0.0, %v1076
        %v1078 = vpop.f32.mrf.mxu0
        %1079 = vmatprep.mubr.bf16.mxu0 0
        %1080 = vmatmul.mubr.bf16.gmra.mxu0 %v897
        %v1081 = vpop.f32.mrf.mxu0
        %v1082 = vadd.f32 0.0, %v1081
        %v1083 = vpop.f32.mrf.mxu0
        %v1084 = vpop.f32.mrf.mxu0
        %v1085 = vadd.f32 0.0, %v1084
        %v1086 = vpop.f32.mrf.mxu0
        %1087 = vmatprep.mubr.bf16.mxu0 0
        %1088 = vmatmul.mubr.bf16.gmra.mxu0 %v898
        %v1089 = vpop.f32.mrf.mxu0
        %v1090 = vadd.f32 0.0, %v1089
        %v1091 = vpop.f32.mrf.mxu0
        %v1092 = vpop.f32.mrf.mxu0
        %v1093 = vadd.f32 0.0, %v1092
        %v1094 = vpop.f32.mrf.mxu0
        %1095 = vmatprep.mubr.bf16.mxu0 0
        %1096 = vmatmul.mubr.bf16.gmra.mxu0 %v899
        %v1097 = vpop.f32.mrf.mxu0
        %v1098 = vadd.f32 0.0, %v1097
        %v1099 = vpop.f32.mrf.mxu0
        %v1100 = vpop.f32.mrf.mxu0
        %v1101 = vadd.f32 0.0, %v1100
        %v1102 = vpop.f32.mrf.mxu0
        %1103 = vmatprep.mubr.bf16.mxu0 0
        %1104 = vmatmul.mubr.bf16.gmra.mxu0 %v900
        %v1105 = vpop.f32.mrf.mxu0
        %v1106 = vadd.f32 0.0, %v1105
        %v1107 = vpop.f32.mrf.mxu0
        %v1108 = vpop.f32.mrf.mxu0
        %v1109 = vadd.f32 0.0, %v1108
        %v1110 = vpop.f32.mrf.mxu0
        %1111 = vmatprep.mubr.bf16.mxu0 0
        %1112 = vmatmul.mubr.bf16.gmra.mxu0 %v901
        %v1113 = vpop.f32.mrf.mxu0
        %v1114 = vadd.f32 0.0, %v1113
        %v1115 = vpop.f32.mrf.mxu0
        %v1116 = vpop.f32.mrf.mxu0
        %v1117 = vadd.f32 0.0, %v1116
        %v1118 = vpop.f32.mrf.mxu0
        %1119 = vmatprep.mubr.bf16.mxu0 0
        %1120 = vmatmul.mubr.bf16.gmra.mxu0 %v902
        %v1121 = vpop.f32.mrf.mxu0
        %v1122 = vadd.f32 0.0, %v1121
        %v1123 = vpop.f32.mrf.mxu0
        %v1124 = vpop.f32.mrf.mxu0
        %v1125 = vadd.f32 0.0, %v1124
        %v1126 = vpop.f32.mrf.mxu0
        %1127 = vdwg.mxu0
        %v1160 = vunpack.c.l.b16 %v387
        %v1161 = vunpack.c.l.b16 %v388
        %v1162 = vunpack.c.l.b16 %v389
        %v1163 = vunpack.c.l.b16 %v390
        %v1164 = vunpack.c.l.b16 %v391
        %v1165 = vunpack.c.l.b16 %v392
        %v1166 = vunpack.c.l.b16 %v393
        %v1167 = vunpack.c.l.b16 %v394
        %v1168 = vunpack.c.l.b16 %v395
        %v1169 = vunpack.c.l.b16 %v396
        %v1170 = vunpack.c.l.b16 %v397
        %v1171 = vunpack.c.l.b16 %v398
        %v1172 = vunpack.c.l.b16 %v399
        %v1173 = vunpack.c.l.b16 %v400
        %v1174 = vunpack.c.l.b16 %v401
        %v1175 = vunpack.c.l.b16 %v402
        %v1176 = vunpack.c.l.b16 %v403
        %v1177 = vunpack.c.l.b16 %v404
        %v1178 = vunpack.c.l.b16 %v405
        %v1179 = vunpack.c.l.b16 %v406
        %v1180 = vunpack.c.l.b16 %v407
        %v1181 = vunpack.c.l.b16 %v408
        %v1182 = vunpack.c.l.b16 %v409
        %v1183 = vunpack.c.l.b16 %v410
        %v1184 = vunpack.c.l.b16 %v411
        %v1185 = vunpack.c.l.b16 %v412
        %v1186 = vunpack.c.l.b16 %v413
        %v1187 = vunpack.c.l.b16 %v414
        %v1188 = vunpack.c.l.b16 %v415
        %v1189 = vunpack.c.l.b16 %v416
        %v1190 = vunpack.c.l.b16 %v417
        %v1191 = vunpack.c.l.b16 %v418
        %v1192 = vpack.c.b16 %v1161, %v1160
        %v1193 = vpack.c.b16 %v1163, %v1162
        %v1194 = vpack.c.b16 %v1165, %v1164
        %v1195 = vpack.c.b16 %v1167, %v1166
        %v1196 = vpack.c.b16 %v1169, %v1168
        %v1197 = vpack.c.b16 %v1171, %v1170
        %v1198 = vpack.c.b16 %v1173, %v1172
        %v1199 = vpack.c.b16 %v1175, %v1174
        %v1200 = vpack.c.b16 %v1177, %v1176
        %v1201 = vpack.c.b16 %v1179, %v1178
        %v1202 = vpack.c.b16 %v1181, %v1180
        %v1203 = vpack.c.b16 %v1183, %v1182
        %v1204 = vpack.c.b16 %v1185, %v1184
        %v1205 = vpack.c.b16 %v1187, %v1186
        %v1206 = vpack.c.b16 %v1189, %v1188
        %v1207 = vpack.c.b16 %v1191, %v1190
        %v1240 = vunpack.c.l.b16 %v419
        %v1241 = vunpack.c.l.b16 %v420
        %v1242 = vunpack.c.l.b16 %v421
        %v1243 = vunpack.c.l.b16 %v422
        %v1244 = vunpack.c.l.b16 %v423
        %v1245 = vunpack.c.l.b16 %v424
        %v1246 = vunpack.c.l.b16 %v425
        %v1247 = vunpack.c.l.b16 %v426
        %v1248 = vunpack.c.l.b16 %v427
        %v1249 = vunpack.c.l.b16 %v428
        %v1250 = vunpack.c.l.b16 %v429
        %v1251 = vunpack.c.l.b16 %v430
        %v1252 = vunpack.c.l.b16 %v431
        %v1253 = vunpack.c.l.b16 %v432
        %v1254 = vunpack.c.l.b16 %v433
        %v1255 = vunpack.c.l.b16 %v434
        %v1256 = vpack.c.b16 %v1241, %v1240
        %v1257 = vpack.c.b16 %v1243, %v1242
        %v1258 = vpack.c.b16 %v1245, %v1244
        %v1259 = vpack.c.b16 %v1247, %v1246
        %v1260 = vpack.c.b16 %v1249, %v1248
        %v1261 = vpack.c.b16 %v1251, %v1250
        %v1262 = vpack.c.b16 %v1253, %v1252
        %v1263 = vpack.c.b16 %v1255, %v1254
        %1272 = vmatprep.subr.bf16.mxu0 0
        %1273 = vmatpush1.bf16.msra.mxu0 %v1263
        %1274 = vmatprep.subr.bf16.mxu0 0
        %1275 = vmatpush1.bf16.msra.mxu0 %v1262
        %1276 = vmatprep.subr.bf16.mxu0 0
        %1277 = vmatpush1.bf16.msra.mxu0 %v1261
        %1278 = vmatprep.subr.bf16.mxu0 0
        %1279 = vmatpush1.bf16.msra.mxu0 %v1260
        %1280 = vmatprep.subr.bf16.mxu0 0
        %1281 = vmatpush1.bf16.msra.mxu0 %v1259
        %1282 = vmatprep.subr.bf16.mxu0 0
        %1283 = vmatpush1.bf16.msra.mxu0 %v1258
        %1284 = vmatprep.subr.bf16.mxu0 0
        %1285 = vmatpush1.bf16.msra.mxu0 %v1257
        %1286 = vmatprep.subr.bf16.mxu0 0
        %1287 = vmatpush1.bf16.msra.mxu0 %v1256
        %1288 = vmatprep.subr.bf16.mxu0 0
        %1289 = vmatpush2.bf16.msra.mxu0 0
        %1290 = vmatprep.subr.bf16.mxu0 0
        %1291 = vmatpush2.bf16.msra.mxu0 0
        %1292 = vmatprep.subr.bf16.mxu0 0
        %1293 = vmatpush2.bf16.msra.mxu0 0
        %1294 = vmatprep.subr.bf16.mxu0 0
        %1295 = vmatpush2.bf16.msra.mxu0 0
        %1296 = vmatprep.subr.bf16.mxu0 0
        %1297 = vmatpush2.bf16.msra.mxu0 0
        %1298 = vmatprep.subr.bf16.mxu0 0
        %1299 = vmatpush2.bf16.msra.mxu0 0
        %1300 = vmatprep.subr.bf16.mxu0 0
        %1301 = vmatpush2.bf16.msra.mxu0 0
        %1302 = vmatprep.subr.bf16.mxu0 0
        %1303 = vmatpush2.bf16.msra.mxu0 0
        %1304 = vmatprep.mubr.bf16.mxu0 0
        %1305 = vmatmul.mubr.bf16.gmra.mxu0 %v1192
        %v1306 = vpop.f32.mrf.mxu0
        %v1307 = vadd.f32 %v1002, %v1306
        %v1308 = vpop.f32.mrf.mxu0
        %v1309 = vpop.f32.mrf.mxu0
        %v1310 = vadd.f32 %v1005, %v1309
        %v1311 = vpop.f32.mrf.mxu0
        %1312 = vmatprep.mubr.bf16.mxu0 0
        %1313 = vmatmul.mubr.bf16.gmra.mxu0 %v1193
        %v1314 = vpop.f32.mrf.mxu0
        %v1315 = vadd.f32 %v1010, %v1314
        %v1316 = vpop.f32.mrf.mxu0
        %v1317 = vpop.f32.mrf.mxu0
        %v1318 = vadd.f32 %v1013, %v1317
        %v1319 = vpop.f32.mrf.mxu0
        %1320 = vmatprep.mubr.bf16.mxu0 0
        %1321 = vmatmul.mubr.bf16.gmra.mxu0 %v1194
        %v1322 = vpop.f32.mrf.mxu0
        %v1323 = vadd.f32 %v1018, %v1322
        %v1324 = vpop.f32.mrf.mxu0
        %v1325 = vpop.f32.mrf.mxu0
        %v1326 = vadd.f32 %v1021, %v1325
        %v1327 = vpop.f32.mrf.mxu0
        %1328 = vmatprep.mubr.bf16.mxu0 0
        %1329 = vmatmul.mubr.bf16.gmra.mxu0 %v1195
        %v1330 = vpop.f32.mrf.mxu0
        %v1331 = vadd.f32 %v1026, %v1330
        %v1332 = vpop.f32.mrf.mxu0
        %v1333 = vpop.f32.mrf.mxu0
        %v1334 = vadd.f32 %v1029, %v1333
        %v1335 = vpop.f32.mrf.mxu0
        %1336 = vmatprep.mubr.bf16.mxu0 0
        %1337 = vmatmul.mubr.bf16.gmra.mxu0 %v1196
        %v1338 = vpop.f32.mrf.mxu0
        %v1339 = vadd.f32 %v1034, %v1338
        %v1340 = vpop.f32.mrf.mxu0
        %v1341 = vpop.f32.mrf.mxu0
        %v1342 = vadd.f32 %v1037, %v1341
        %v1343 = vpop.f32.mrf.mxu0
        %1344 = vmatprep.mubr.bf16.mxu0 0
        %1345 = vmatmul.mubr.bf16.gmra.mxu0 %v1197
        %v1346 = vpop.f32.mrf.mxu0
        %v1347 = vadd.f32 %v1042, %v1346
        %v1348 = vpop.f32.mrf.mxu0
        %v1349 = vpop.f32.mrf.mxu0
        %v1350 = vadd.f32 %v1045, %v1349
        %v1351 = vpop.f32.mrf.mxu0
        %1352 = vmatprep.mubr.bf16.mxu0 0
        %1353 = vmatmul.mubr.bf16.gmra.mxu0 %v1198
        %v1354 = vpop.f32.mrf.mxu0
        %v1355 = vadd.f32 %v1050, %v1354
        %v1356 = vpop.f32.mrf.mxu0
        %v1357 = vpop.f32.mrf.mxu0
        %v1358 = vadd.f32 %v1053, %v1357
        %v1359 = vpop.f32.mrf.mxu0
        %1360 = vmatprep.mubr.bf16.mxu0 0
        %1361 = vmatmul.mubr.bf16.gmra.mxu0 %v1199
        %v1362 = vpop.f32.mrf.mxu0
        %v1363 = vadd.f32 %v1058, %v1362
        %v1364 = vpop.f32.mrf.mxu0
        %v1365 = vpop.f32.mrf.mxu0
        %v1366 = vadd.f32 %v1061, %v1365
        %v1367 = vpop.f32.mrf.mxu0
        %1368 = vmatprep.mubr.bf16.mxu0 0
        %1369 = vmatmul.mubr.bf16.gmra.mxu0 %v1200
        %v1370 = vpop.f32.mrf.mxu0
        %v1371 = vadd.f32 %v1066, %v1370
        %v1372 = vpop.f32.mrf.mxu0
        %v1373 = vpop.f32.mrf.mxu0
        %v1374 = vadd.f32 %v1069, %v1373
        %v1375 = vpop.f32.mrf.mxu0
        %1376 = vmatprep.mubr.bf16.mxu0 0
        %1377 = vmatmul.mubr.bf16.gmra.mxu0 %v1201
        %v1378 = vpop.f32.mrf.mxu0
        %v1379 = vadd.f32 %v1074, %v1378
        %v1380 = vpop.f32.mrf.mxu0
        %v1381 = vpop.f32.mrf.mxu0
        %v1382 = vadd.f32 %v1077, %v1381
        %v1383 = vpop.f32.mrf.mxu0
        %1384 = vmatprep.mubr.bf16.mxu0 0
        %1385 = vmatmul.mubr.bf16.gmra.mxu0 %v1202
        %v1386 = vpop.f32.mrf.mxu0
        %v1387 = vadd.f32 %v1082, %v1386
        %v1388 = vpop.f32.mrf.mxu0
        %v1389 = vpop.f32.mrf.mxu0
        %v1390 = vadd.f32 %v1085, %v1389
        %v1391 = vpop.f32.mrf.mxu0
        %1392 = vmatprep.mubr.bf16.mxu0 0
        %1393 = vmatmul.mubr.bf16.gmra.mxu0 %v1203
        %v1394 = vpop.f32.mrf.mxu0
        %v1395 = vadd.f32 %v1090, %v1394
        %v1396 = vpop.f32.mrf.mxu0
        %v1397 = vpop.f32.mrf.mxu0
        %v1398 = vadd.f32 %v1093, %v1397
        %v1399 = vpop.f32.mrf.mxu0
        %1400 = vmatprep.mubr.bf16.mxu0 0
        %1401 = vmatmul.mubr.bf16.gmra.mxu0 %v1204
        %v1402 = vpop.f32.mrf.mxu0
        %v1403 = vadd.f32 %v1098, %v1402
        %v1404 = vpop.f32.mrf.mxu0
        %v1405 = vpop.f32.mrf.mxu0
        %v1406 = vadd.f32 %v1101, %v1405
        %v1407 = vpop.f32.mrf.mxu0
        %1408 = vmatprep.mubr.bf16.mxu0 0
        %1409 = vmatmul.mubr.bf16.gmra.mxu0 %v1205
        %v1410 = vpop.f32.mrf.mxu0
        %v1411 = vadd.f32 %v1106, %v1410
        %v1412 = vpop.f32.mrf.mxu0
        %v1413 = vpop.f32.mrf.mxu0
        %v1414 = vadd.f32 %v1109, %v1413
        %v1415 = vpop.f32.mrf.mxu0
        %1416 = vmatprep.mubr.bf16.mxu0 0
        %1417 = vmatmul.mubr.bf16.gmra.mxu0 %v1206
        %v1418 = vpop.f32.mrf.mxu0
        %v1419 = vadd.f32 %v1114, %v1418
        %v1420 = vpop.f32.mrf.mxu0
        %v1421 = vpop.f32.mrf.mxu0
        %v1422 = vadd.f32 %v1117, %v1421
        %v1423 = vpop.f32.mrf.mxu0
        %1424 = vmatprep.mubr.bf16.mxu0 0
        %1425 = vmatmul.mubr.bf16.gmra.mxu0 %v1207
        %v1426 = vpop.f32.mrf.mxu0
        %v1427 = vadd.f32 %v1122, %v1426
        %v1428 = vpop.f32.mrf.mxu0
        %v1429 = vpop.f32.mrf.mxu0
        %v1430 = vadd.f32 %v1125, %v1429
        %v1431 = vpop.f32.mrf.mxu0
        %1432 = vdwg.mxu0
        %v1433 = vld [vmem:[%s380] sm:$0xe]
        %v1434 = vld [vmem:[%s380 + $0xc] sm:$0xe]
        %v1435 = vld [vmem:[%s380 + $0x18] sm:$0xe]
        %v1436 = vld [vmem:[%s380 + $0x24] sm:$0xe]
        %v1437 = vld [vmem:[%s380 + $0x30] sm:$0xe]
        %v1438 = vld [vmem:[%s380 + $0x3c] sm:$0xe]
        %v1439 = vld [vmem:[%s380 + $0x48] sm:$0xe]
        %v1440 = vld [vmem:[%s380 + $0x54] sm:$0xe]
        %v1441 = vld [vmem:[%s380 + $0x60] sm:$0xe]
        %v1442 = vld [vmem:[%s380 + $0x6c] sm:$0xe]
        %v1443 = vld [vmem:[%s380 + $0x78] sm:$0xe]
        %v1444 = vld [vmem:[%s380 + $0x84] sm:$0xe]
        %v1445 = vld [vmem:[%s380 + $0x90] sm:$0xe]
        %v1446 = vld [vmem:[%s380 + $0x9c] sm:$0xe]
        %v1447 = vld [vmem:[%s380 + $0xa8] sm:$0xe]
        %v1448 = vld [vmem:[%s380 + $0xb4] sm:$0xe]
        %vm1481 = vcmask 1042432
        %vm1482 = vcmask 1046532
        %vm1483 = vmor %vm1481, %vm1482
        %v1484 = vrot.slane %v1433, 5
        %v1485 = vrot.slane %v1484, 4
        %v1486 = vrot.slane %v388, 5
        %v1487 = vsel %vm1483, %v1485, %v1486
        %v1488 = vrot.slane %v1486, 4
        %v1489 = vrot.slane %v435, 5
        %v1490 = vsel %vm1483, %v1488, %v1489
        %v1491 = vrot.slane %v1434, 5
        %v1492 = vrot.slane %v1491, 4
        %v1493 = vrot.slane %v390, 5
        %v1494 = vsel %vm1483, %v1492, %v1493
        %v1495 = vrot.slane %v1493, 4
        %v1496 = vrot.slane %v436, 5
        %v1497 = vsel %vm1483, %v1495, %v1496
        %v1498 = vrot.slane %v1435, 5
        %v1499 = vrot.slane %v1498, 4
        %v1500 = vrot.slane %v392, 5
        %v1501 = vsel %vm1483, %v1499, %v1500
        %v1502 = vrot.slane %v1500, 4
        %v1503 = vrot.slane %v437, 5
        %v1504 = vsel %vm1483, %v1502, %v1503
        %v1505 = vrot.slane %v1436, 5
        %v1506 = vrot.slane %v1505, 4
        %v1507 = vrot.slane %v394, 5
        %v1508 = vsel %vm1483, %v1506, %v1507
        %v1509 = vrot.slane %v1507, 4
        %v1510 = vrot.slane %v438, 5
        %v1511 = vsel %vm1483, %v1509, %v1510
        %v1512 = vrot.slane %v1437, 5
        %v1513 = vrot.slane %v1512, 4
        %v1514 = vrot.slane %v396, 5
        %v1515 = vsel %vm1483, %v1513, %v1514
        %v1516 = vrot.slane %v1514, 4
        %v1517 = vrot.slane %v439, 5
        %v1518 = vsel %vm1483, %v1516, %v1517
        %v1519 = vrot.slane %v1438, 5
        %v1520 = vrot.slane %v1519, 4
        %v1521 = vrot.slane %v398, 5
        %v1522 = vsel %vm1483, %v1520, %v1521
        %v1523 = vrot.slane %v1521, 4
        %v1524 = vrot.slane %v440, 5
        %v1525 = vsel %vm1483, %v1523, %v1524
        %v1526 = vrot.slane %v1439, 5
        %v1527 = vrot.slane %v1526, 4
        %v1528 = vrot.slane %v400, 5
        %v1529 = vsel %vm1483, %v1527, %v1528
        %v1530 = vrot.slane %v1528, 4
        %v1531 = vrot.slane %v441, 5
        %v1532 = vsel %vm1483, %v1530, %v1531
        %v1533 = vrot.slane %v1440, 5
        %v1534 = vrot.slane %v1533, 4
        %v1535 = vrot.slane %v402, 5
        %v1536 = vsel %vm1483, %v1534, %v1535
        %v1537 = vrot.slane %v1535, 4
        %v1538 = vrot.slane %v442, 5
        %v1539 = vsel %vm1483, %v1537, %v1538
        %v1540 = vrot.slane %v1441, 5
        %v1541 = vrot.slane %v1540, 4
        %v1542 = vrot.slane %v404, 5
        %v1543 = vsel %vm1483, %v1541, %v1542
        %v1544 = vrot.slane %v1542, 4
        %v1545 = vrot.slane %v443, 5
        %v1546 = vsel %vm1483, %v1544, %v1545
        %v1547 = vrot.slane %v1442, 5
        %v1548 = vrot.slane %v1547, 4
        %v1549 = vrot.slane %v406, 5
        %v1550 = vsel %vm1483, %v1548, %v1549
        %v1551 = vrot.slane %v1549, 4
        %v1552 = vrot.slane %v444, 5
        %v1553 = vsel %vm1483, %v1551, %v1552
        %v1554 = vrot.slane %v1443, 5
        %v1555 = vrot.slane %v1554, 4
        %v1556 = vrot.slane %v408, 5
        %v1557 = vsel %vm1483, %v1555, %v1556
        %v1558 = vrot.slane %v1556, 4
        %v1559 = vrot.slane %v445, 5
        %v1560 = vsel %vm1483, %v1558, %v1559
        %v1561 = vrot.slane %v1444, 5
        %v1562 = vrot.slane %v1561, 4
        %v1563 = vrot.slane %v410, 5
        %v1564 = vsel %vm1483, %v1562, %v1563
        %v1565 = vrot.slane %v1563, 4
        %v1566 = vrot.slane %v446, 5
        %v1567 = vsel %vm1483, %v1565, %v1566
        %v1568 = vrot.slane %v1445, 5
        %v1569 = vrot.slane %v1568, 4
        %v1570 = vrot.slane %v412, 5
        %v1571 = vsel %vm1483, %v1569, %v1570
        %v1572 = vrot.slane %v1570, 4
        %v1573 = vrot.slane %v447, 5
        %v1574 = vsel %vm1483, %v1572, %v1573
        %v1575 = vrot.slane %v1446, 5
        %v1576 = vrot.slane %v1575, 4
        %v1577 = vrot.slane %v414, 5
        %v1578 = vsel %vm1483, %v1576, %v1577
        %v1579 = vrot.slane %v1577, 4
        %v1580 = vrot.slane %v448, 5
        %v1581 = vsel %vm1483, %v1579, %v1580
        %v1582 = vrot.slane %v1447, 5
        %v1583 = vrot.slane %v1582, 4
        %v1584 = vrot.slane %v416, 5
        %v1585 = vsel %vm1483, %v1583, %v1584
        %v1586 = vrot.slane %v1584, 4
        %v1587 = vrot.slane %v449, 5
        %v1588 = vsel %vm1483, %v1586, %v1587
        %v1589 = vrot.slane %v1448, 5
        %v1590 = vrot.slane %v1589, 4
        %v1591 = vrot.slane %v418, 5
        %v1592 = vsel %vm1483, %v1590, %v1591
        %v1593 = vrot.slane %v1591, 4
        %v1594 = vrot.slane %v450, 5
        %v1595 = vsel %vm1483, %v1593, %v1594
        %s1596 = scalar_lea.vmem %s1, 128
        %v1597 = vld [vmem:[%s1596] sm:$0xf]
        %v1598 = vld [vmem:[%s1596 + $0x4] sm:$0xf]
        %v1599 = vld [vmem:[%s1596 + $0x8] sm:$0xf]
        %v1600 = vld [vmem:[%s1596 + $0xc] sm:$0xf]
        %v1601 = vld [vmem:[%s1596 + $0x10] sm:$0xf]
        %v1602 = vld [vmem:[%s1596 + $0x14] sm:$0xf]
        %v1603 = vld [vmem:[%s1596 + $0x18] sm:$0xf]
        %v1604 = vld [vmem:[%s1596 + $0x1c] sm:$0xf]
        %v1605 = vld [vmem:[%s1596 + $0x20] sm:$0xf]
        %v1606 = vld [vmem:[%s1596 + $0x24] sm:$0xf]
        %v1607 = vld [vmem:[%s1596 + $0x28] sm:$0xf]
        %v1608 = vld [vmem:[%s1596 + $0x2c] sm:$0xf]
        %v1609 = vld [vmem:[%s1596 + $0x30] sm:$0xf]
        %v1610 = vld [vmem:[%s1596 + $0x34] sm:$0xf]
        %v1611 = vld [vmem:[%s1596 + $0x38] sm:$0xf]
        %v1612 = vld [vmem:[%s1596 + $0x3c] sm:$0xf]
        %v1613 = vunpack.c.l.b16 %v1487
        %v1614 = vunpack.c.l.b16 %v1490
        %v1615 = vunpack.c.l.b16 %v1494
        %v1616 = vunpack.c.l.b16 %v1497
        %v1617 = vunpack.c.l.b16 %v1501
        %v1618 = vunpack.c.l.b16 %v1504
        %v1619 = vunpack.c.l.b16 %v1508
        %v1620 = vunpack.c.l.b16 %v1511
        %v1621 = vunpack.c.l.b16 %v1515
        %v1622 = vunpack.c.l.b16 %v1518
        %v1623 = vunpack.c.l.b16 %v1522
        %v1624 = vunpack.c.l.b16 %v1525
        %v1625 = vunpack.c.l.b16 %v1529
        %v1626 = vunpack.c.l.b16 %v1532
        %v1627 = vunpack.c.l.b16 %v1536
        %v1628 = vunpack.c.l.b16 %v1539
        %v1629 = vunpack.c.l.b16 %v1543
        %v1630 = vunpack.c.l.b16 %v1546
        %v1631 = vunpack.c.l.b16 %v1550
        %v1632 = vunpack.c.l.b16 %v1553
        %v1633 = vunpack.c.l.b16 %v1557
        %v1634 = vunpack.c.l.b16 %v1560
        %v1635 = vunpack.c.l.b16 %v1564
        %v1636 = vunpack.c.l.b16 %v1567
        %v1637 = vunpack.c.l.b16 %v1571
        %v1638 = vunpack.c.l.b16 %v1574
        %v1639 = vunpack.c.l.b16 %v1578
        %v1640 = vunpack.c.l.b16 %v1581
        %v1641 = vunpack.c.l.b16 %v1585
        %v1642 = vunpack.c.l.b16 %v1588
        %v1643 = vunpack.c.l.b16 %v1592
        %v1644 = vunpack.c.l.b16 %v1595
        %v1645 = vpack.c.b16 %v1614, %v1613
        %v1646 = vpack.c.b16 %v1616, %v1615
        %v1647 = vpack.c.b16 %v1618, %v1617
        %v1648 = vpack.c.b16 %v1620, %v1619
        %v1649 = vpack.c.b16 %v1622, %v1621
        %v1650 = vpack.c.b16 %v1624, %v1623
        %v1651 = vpack.c.b16 %v1626, %v1625
        %v1652 = vpack.c.b16 %v1628, %v1627
        %v1653 = vpack.c.b16 %v1630, %v1629
        %v1654 = vpack.c.b16 %v1632, %v1631
        %v1655 = vpack.c.b16 %v1634, %v1633
        %v1656 = vpack.c.b16 %v1636, %v1635
        %v1657 = vpack.c.b16 %v1638, %v1637
        %v1658 = vpack.c.b16 %v1640, %v1639
        %v1659 = vpack.c.b16 %v1642, %v1641
        %v1660 = vpack.c.b16 %v1644, %v1643
        %v1693 = vunpack.c.l.b16 %v1597
        %v1694 = vunpack.c.l.b16 %v1598
        %v1695 = vunpack.c.l.b16 %v1599
        %v1696 = vunpack.c.l.b16 %v1600
        %v1697 = vunpack.c.l.b16 %v1601
        %v1698 = vunpack.c.l.b16 %v1602
        %v1699 = vunpack.c.l.b16 %v1603
        %v1700 = vunpack.c.l.b16 %v1604
        %v1701 = vunpack.c.l.b16 %v1605
        %v1702 = vunpack.c.l.b16 %v1606
        %v1703 = vunpack.c.l.b16 %v1607
        %v1704 = vunpack.c.l.b16 %v1608
        %v1705 = vunpack.c.l.b16 %v1609
        %v1706 = vunpack.c.l.b16 %v1610
        %v1707 = vunpack.c.l.b16 %v1611
        %v1708 = vunpack.c.l.b16 %v1612
        %v1709 = vpack.c.b16 %v1694, %v1693
        %v1710 = vpack.c.b16 %v1696, %v1695
        %v1711 = vpack.c.b16 %v1698, %v1697
        %v1712 = vpack.c.b16 %v1700, %v1699
        %v1713 = vpack.c.b16 %v1702, %v1701
        %v1714 = vpack.c.b16 %v1704, %v1703
        %v1715 = vpack.c.b16 %v1706, %v1705
        %v1716 = vpack.c.b16 %v1708, %v1707
        %1725 = vmatprep.subr.bf16.mxu0 0
        %1726 = vmatpush1.bf16.msra.mxu0 %v1716
        %1727 = vmatprep.subr.bf16.mxu0 0
        %1728 = vmatpush1.bf16.msra.mxu0 %v1715
        %1729 = vmatprep.subr.bf16.mxu0 0
        %1730 = vmatpush1.bf16.msra.mxu0 %v1714
        %1731 = vmatprep.subr.bf16.mxu0 0
        %1732 = vmatpush1.bf16.msra.mxu0 %v1713
        %1733 = vmatprep.subr.bf16.mxu0 0
        %1734 = vmatpush1.bf16.msra.mxu0 %v1712
        %1735 = vmatprep.subr.bf16.mxu0 0
        %1736 = vmatpush1.bf16.msra.mxu0 %v1711
        %1737 = vmatprep.subr.bf16.mxu0 0
        %1738 = vmatpush1.bf16.msra.mxu0 %v1710
        %1739 = vmatprep.subr.bf16.mxu0 0
        %1740 = vmatpush1.bf16.msra.mxu0 %v1709
        %1741 = vmatprep.subr.bf16.mxu0 0
        %1742 = vmatpush2.bf16.msra.mxu0 0
        %1743 = vmatprep.subr.bf16.mxu0 0
        %1744 = vmatpush2.bf16.msra.mxu0 0
        %1745 = vmatprep.subr.bf16.mxu0 0
        %1746 = vmatpush2.bf16.msra.mxu0 0
        %1747 = vmatprep.subr.bf16.mxu0 0
        %1748 = vmatpush2.bf16.msra.mxu0 0
        %1749 = vmatprep.subr.bf16.mxu0 0
        %1750 = vmatpush2.bf16.msra.mxu0 0
        %1751 = vmatprep.subr.bf16.mxu0 0
        %1752 = vmatpush2.bf16.msra.mxu0 0
        %1753 = vmatprep.subr.bf16.mxu0 0
        %1754 = vmatpush2.bf16.msra.mxu0 0
        %1755 = vmatprep.subr.bf16.mxu0 0
        %1756 = vmatpush2.bf16.msra.mxu0 0
        %1757 = vmatprep.mubr.bf16.mxu0 0
        %1758 = vmatmul.mubr.bf16.gmra.mxu0 %v1645
        %v1759 = vpop.f32.mrf.mxu0
        %v1760 = vadd.f32 0.0, %v1759
        %v1761 = vpop.f32.mrf.mxu0
        %v1762 = vpop.f32.mrf.mxu0
        %v1763 = vadd.f32 0.0, %v1762
        %v1764 = vpop.f32.mrf.mxu0
        %1765 = vmatprep.mubr.bf16.mxu0 0
        %1766 = vmatmul.mubr.bf16.gmra.mxu0 %v1646
        %v1767 = vpop.f32.mrf.mxu0
        %v1768 = vadd.f32 0.0, %v1767
        %v1769 = vpop.f32.mrf.mxu0
        %v1770 = vpop.f32.mrf.mxu0
        %v1771 = vadd.f32 0.0, %v1770
        %v1772 = vpop.f32.mrf.mxu0
        %1773 = vmatprep.mubr.bf16.mxu0 0
        %1774 = vmatmul.mubr.bf16.gmra.mxu0 %v1647
        %v1775 = vpop.f32.mrf.mxu0
        %v1776 = vadd.f32 0.0, %v1775
        %v1777 = vpop.f32.mrf.mxu0
        %v1778 = vpop.f32.mrf.mxu0
        %v1779 = vadd.f32 0.0, %v1778
        %v1780 = vpop.f32.mrf.mxu0
        %1781 = vmatprep.mubr.bf16.mxu0 0
        %1782 = vmatmul.mubr.bf16.gmra.mxu0 %v1648
        %v1783 = vpop.f32.mrf.mxu0
        %v1784 = vadd.f32 0.0, %v1783
        %v1785 = vpop.f32.mrf.mxu0
        %v1786 = vpop.f32.mrf.mxu0
        %v1787 = vadd.f32 0.0, %v1786
        %v1788 = vpop.f32.mrf.mxu0
        %1789 = vmatprep.mubr.bf16.mxu0 0
        %1790 = vmatmul.mubr.bf16.gmra.mxu0 %v1649
        %v1791 = vpop.f32.mrf.mxu0
        %v1792 = vadd.f32 0.0, %v1791
        %v1793 = vpop.f32.mrf.mxu0
        %v1794 = vpop.f32.mrf.mxu0
        %v1795 = vadd.f32 0.0, %v1794
        %v1796 = vpop.f32.mrf.mxu0
        %1797 = vmatprep.mubr.bf16.mxu0 0
        %1798 = vmatmul.mubr.bf16.gmra.mxu0 %v1650
        %v1799 = vpop.f32.mrf.mxu0
        %v1800 = vadd.f32 0.0, %v1799
        %v1801 = vpop.f32.mrf.mxu0
        %v1802 = vpop.f32.mrf.mxu0
        %v1803 = vadd.f32 0.0, %v1802
        %v1804 = vpop.f32.mrf.mxu0
        %1805 = vmatprep.mubr.bf16.mxu0 0
        %1806 = vmatmul.mubr.bf16.gmra.mxu0 %v1651
        %v1807 = vpop.f32.mrf.mxu0
        %v1808 = vadd.f32 0.0, %v1807
        %v1809 = vpop.f32.mrf.mxu0
        %v1810 = vpop.f32.mrf.mxu0
        %v1811 = vadd.f32 0.0, %v1810
        %v1812 = vpop.f32.mrf.mxu0
        %1813 = vmatprep.mubr.bf16.mxu0 0
        %1814 = vmatmul.mubr.bf16.gmra.mxu0 %v1652
        %v1815 = vpop.f32.mrf.mxu0
        %v1816 = vadd.f32 0.0, %v1815
        %v1817 = vpop.f32.mrf.mxu0
        %v1818 = vpop.f32.mrf.mxu0
        %v1819 = vadd.f32 0.0, %v1818
        %v1820 = vpop.f32.mrf.mxu0
        %1821 = vmatprep.mubr.bf16.mxu0 0
        %1822 = vmatmul.mubr.bf16.gmra.mxu0 %v1653
        %v1823 = vpop.f32.mrf.mxu0
        %v1824 = vadd.f32 0.0, %v1823
        %v1825 = vpop.f32.mrf.mxu0
        %v1826 = vpop.f32.mrf.mxu0
        %v1827 = vadd.f32 0.0, %v1826
        %v1828 = vpop.f32.mrf.mxu0
        %1829 = vmatprep.mubr.bf16.mxu0 0
        %1830 = vmatmul.mubr.bf16.gmra.mxu0 %v1654
        %v1831 = vpop.f32.mrf.mxu0
        %v1832 = vadd.f32 0.0, %v1831
        %v1833 = vpop.f32.mrf.mxu0
        %v1834 = vpop.f32.mrf.mxu0
        %v1835 = vadd.f32 0.0, %v1834
        %v1836 = vpop.f32.mrf.mxu0
        %1837 = vmatprep.mubr.bf16.mxu0 0
        %1838 = vmatmul.mubr.bf16.gmra.mxu0 %v1655
        %v1839 = vpop.f32.mrf.mxu0
        %v1840 = vadd.f32 0.0, %v1839
        %v1841 = vpop.f32.mrf.mxu0
        %v1842 = vpop.f32.mrf.mxu0
        %v1843 = vadd.f32 0.0, %v1842
        %v1844 = vpop.f32.mrf.mxu0
        %1845 = vmatprep.mubr.bf16.mxu0 0
        %1846 = vmatmul.mubr.bf16.gmra.mxu0 %v1656
        %v1847 = vpop.f32.mrf.mxu0
        %v1848 = vadd.f32 0.0, %v1847
        %v1849 = vpop.f32.mrf.mxu0
        %v1850 = vpop.f32.mrf.mxu0
        %v1851 = vadd.f32 0.0, %v1850
        %v1852 = vpop.f32.mrf.mxu0
        %1853 = vmatprep.mubr.bf16.mxu0 0
        %1854 = vmatmul.mubr.bf16.gmra.mxu0 %v1657
        %v1855 = vpop.f32.mrf.mxu0
        %v1856 = vadd.f32 0.0, %v1855
        %v1857 = vpop.f32.mrf.mxu0
        %v1858 = vpop.f32.mrf.mxu0
        %v1859 = vadd.f32 0.0, %v1858
        %v1860 = vpop.f32.mrf.mxu0
        %1861 = vmatprep.mubr.bf16.mxu0 0
        %1862 = vmatmul.mubr.bf16.gmra.mxu0 %v1658
        %v1863 = vpop.f32.mrf.mxu0
        %v1864 = vadd.f32 0.0, %v1863
        %v1865 = vpop.f32.mrf.mxu0
        %v1866 = vpop.f32.mrf.mxu0
        %v1867 = vadd.f32 0.0, %v1866
        %v1868 = vpop.f32.mrf.mxu0
        %1869 = vmatprep.mubr.bf16.mxu0 0
        %1870 = vmatmul.mubr.bf16.gmra.mxu0 %v1659
        %v1871 = vpop.f32.mrf.mxu0
        %v1872 = vadd.f32 0.0, %v1871
        %v1873 = vpop.f32.mrf.mxu0
        %v1874 = vpop.f32.mrf.mxu0
        %v1875 = vadd.f32 0.0, %v1874
        %v1876 = vpop.f32.mrf.mxu0
        %1877 = vmatprep.mubr.bf16.mxu0 0
        %1878 = vmatmul.mubr.bf16.gmra.mxu0 %v1660
        %v1879 = vpop.f32.mrf.mxu0
        %v1880 = vadd.f32 0.0, %v1879
        %v1881 = vpop.f32.mrf.mxu0
        %v1882 = vpop.f32.mrf.mxu0
        %v1883 = vadd.f32 0.0, %v1882
        %v1884 = vpop.f32.mrf.mxu0
        %1885 = vdwg.mxu0
        %v1886 = vadd.f32 %v1307, %v1760
        %v1887 = vadd.f32 %v1310, %v1763
        %v1888 = vadd.f32 %v1315, %v1768
        %v1889 = vadd.f32 %v1318, %v1771
        %v1890 = vadd.f32 %v1323, %v1776
        %v1891 = vadd.f32 %v1326, %v1779
        %v1892 = vadd.f32 %v1331, %v1784
        %v1893 = vadd.f32 %v1334, %v1787
        %v1894 = vadd.f32 %v1339, %v1792
        %v1895 = vadd.f32 %v1342, %v1795
        %v1896 = vadd.f32 %v1347, %v1800
        %v1897 = vadd.f32 %v1350, %v1803
        %v1898 = vadd.f32 %v1355, %v1808
        %v1899 = vadd.f32 %v1358, %v1811
        %v1900 = vadd.f32 %v1363, %v1816
        %v1901 = vadd.f32 %v1366, %v1819
        %v1902 = vadd.f32 %v1371, %v1824
        %v1903 = vadd.f32 %v1374, %v1827
        %v1904 = vadd.f32 %v1379, %v1832
        %v1905 = vadd.f32 %v1382, %v1835
        %v1906 = vadd.f32 %v1387, %v1840
        %v1907 = vadd.f32 %v1390, %v1843
        %v1908 = vadd.f32 %v1395, %v1848
        %v1909 = vadd.f32 %v1398, %v1851
        %v1910 = vadd.f32 %v1403, %v1856
        %v1911 = vadd.f32 %v1406, %v1859
        %v1912 = vadd.f32 %v1411, %v1864
        %v1913 = vadd.f32 %v1414, %v1867
        %v1914 = vadd.f32 %v1419, %v1872
        %v1915 = vadd.f32 %v1422, %v1875
        %v1916 = vadd.f32 %v1427, %v1880
        %v1917 = vadd.f32 %v1430, %v1883
        %s1918 = scalar_lea.vmem %s380, 12
        %v1919 = vld [vmem:[%s1918] sm:$0xf]
        %v1920 = vld [vmem:[%s1918 + $0x4] sm:$0xf]
        %v1921 = vld [vmem:[%s1918 + $0xc] sm:$0xf]
        %v1922 = vld [vmem:[%s1918 + $0x10] sm:$0xf]
        %v1923 = vld [vmem:[%s1918 + $0x18] sm:$0xf]
        %v1924 = vld [vmem:[%s1918 + $0x1c] sm:$0xf]
        %v1925 = vld [vmem:[%s1918 + $0x24] sm:$0xf]
        %v1926 = vld [vmem:[%s1918 + $0x28] sm:$0xf]
        %v1927 = vld [vmem:[%s1918 + $0x30] sm:$0xf]
        %v1928 = vld [vmem:[%s1918 + $0x34] sm:$0xf]
        %v1929 = vld [vmem:[%s1918 + $0x3c] sm:$0xf]
        %v1930 = vld [vmem:[%s1918 + $0x40] sm:$0xf]
        %v1931 = vld [vmem:[%s1918 + $0x48] sm:$0xf]
        %v1932 = vld [vmem:[%s1918 + $0x4c] sm:$0xf]
        %v1933 = vld [vmem:[%s1918 + $0x54] sm:$0xf]
        %v1934 = vld [vmem:[%s1918 + $0x58] sm:$0xf]
        %v1935 = vld [vmem:[%s1918 + $0x60] sm:$0xf]
        %v1936 = vld [vmem:[%s1918 + $0x64] sm:$0xf]
        %v1937 = vld [vmem:[%s1918 + $0x6c] sm:$0xf]
        %v1938 = vld [vmem:[%s1918 + $0x70] sm:$0xf]
        %v1939 = vld [vmem:[%s1918 + $0x78] sm:$0xf]
        %v1940 = vld [vmem:[%s1918 + $0x7c] sm:$0xf]
        %v1941 = vld [vmem:[%s1918 + $0x84] sm:$0xf]
        %v1942 = vld [vmem:[%s1918 + $0x88] sm:$0xf]
        %v1943 = vld [vmem:[%s1918 + $0x90] sm:$0xf]
        %v1944 = vld [vmem:[%s1918 + $0x94] sm:$0xf]
        %v1945 = vld [vmem:[%s1918 + $0x9c] sm:$0xf]
        %v1946 = vld [vmem:[%s1918 + $0xa0] sm:$0xf]
        %v1947 = vld [vmem:[%s1918 + $0xa8] sm:$0xf]
        %v1948 = vld [vmem:[%s1918 + $0xac] sm:$0xf]
        %v1949 = vld [vmem:[%s1918 + $0xb4] sm:$0xf]
        %v1950 = vld [vmem:[%s1918 + $0xb8] sm:$0xf]
        %s1951 = scalar_lea.vmem %s1, 192
        %v1952 = vld [vmem:[%s1951] sm:$0xf]
        %v1953 = vld [vmem:[%s1951 + $0x4] sm:$0xf]
        %v1954 = vld [vmem:[%s1951 + $0x8] sm:$0xf]
        %v1955 = vld [vmem:[%s1951 + $0xc] sm:$0xf]
        %v1956 = vld [vmem:[%s1951 + $0x10] sm:$0xf]
        %v1957 = vld [vmem:[%s1951 + $0x14] sm:$0xf]
        %v1958 = vld [vmem:[%s1951 + $0x18] sm:$0xf]
        %v1959 = vld [vmem:[%s1951 + $0x1c] sm:$0xf]
        %v1960 = vld [vmem:[%s1951 + $0x20] sm:$0xf]
        %v1961 = vld [vmem:[%s1951 + $0x24] sm:$0xf]
        %v1962 = vld [vmem:[%s1951 + $0x28] sm:$0xf]
        %v1963 = vld [vmem:[%s1951 + $0x2c] sm:$0xf]
        %v1964 = vld [vmem:[%s1951 + $0x30] sm:$0xf]
        %v1965 = vld [vmem:[%s1951 + $0x34] sm:$0xf]
        %v1966 = vld [vmem:[%s1951 + $0x38] sm:$0xf]
        %v1967 = vld [vmem:[%s1951 + $0x3c] sm:$0xf]
        %v2000 = vunpack.c.l.b16 %v1919
        %v2001 = vunpack.c.l.b16 %v1920
        %v2002 = vunpack.c.l.b16 %v1921
        %v2003 = vunpack.c.l.b16 %v1922
        %v2004 = vunpack.c.l.b16 %v1923
        %v2005 = vunpack.c.l.b16 %v1924
        %v2006 = vunpack.c.l.b16 %v1925
        %v2007 = vunpack.c.l.b16 %v1926
        %v2008 = vunpack.c.l.b16 %v1927
        %v2009 = vunpack.c.l.b16 %v1928
        %v2010 = vunpack.c.l.b16 %v1929
        %v2011 = vunpack.c.l.b16 %v1930
        %v2012 = vunpack.c.l.b16 %v1931
        %v2013 = vunpack.c.l.b16 %v1932
        %v2014 = vunpack.c.l.b16 %v1933
        %v2015 = vunpack.c.l.b16 %v1934
        %v2016 = vunpack.c.l.b16 %v1935
        %v2017 = vunpack.c.l.b16 %v1936
        %v2018 = vunpack.c.l.b16 %v1937
        %v2019 = vunpack.c.l.b16 %v1938
        %v2020 = vunpack.c.l.b16 %v1939
        %v2021 = vunpack.c.l.b16 %v1940
        %v2022 = vunpack.c.l.b16 %v1941
        %v2023 = vunpack.c.l.b16 %v1942
        %v2024 = vunpack.c.l.b16 %v1943
        %v2025 = vunpack.c.l.b16 %v1944
        %v2026 = vunpack.c.l.b16 %v1945
        %v2027 = vunpack.c.l.b16 %v1946
        %v2028 = vunpack.c.l.b16 %v1947
        %v2029 = vunpack.c.l.b16 %v1948
        %v2030 = vunpack.c.l.b16 %v1949
        %v2031 = vunpack.c.l.b16 %v1950
        %v2032 = vpack.c.b16 %v2001, %v2000
        %v2033 = vpack.c.b16 %v2003, %v2002
        %v2034 = vpack.c.b16 %v2005, %v2004
        %v2035 = vpack.c.b16 %v2007, %v2006
        %v2036 = vpack.c.b16 %v2009, %v2008
        %v2037 = vpack.c.b16 %v2011, %v2010
        %v2038 = vpack.c.b16 %v2013, %v2012
        %v2039 = vpack.c.b16 %v2015, %v2014
        %v2040 = vpack.c.b16 %v2017, %v2016
        %v2041 = vpack.c.b16 %v2019, %v2018
        %v2042 = vpack.c.b16 %v2021, %v2020
        %v2043 = vpack.c.b16 %v2023, %v2022
        %v2044 = vpack.c.b16 %v2025, %v2024
        %v2045 = vpack.c.b16 %v2027, %v2026
        %v2046 = vpack.c.b16 %v2029, %v2028
        %v2047 = vpack.c.b16 %v2031, %v2030
        %v2080 = vunpack.c.l.b16 %v1952
        %v2081 = vunpack.c.l.b16 %v1953
        %v2082 = vunpack.c.l.b16 %v1954
        %v2083 = vunpack.c.l.b16 %v1955
        %v2084 = vunpack.c.l.b16 %v1956
        %v2085 = vunpack.c.l.b16 %v1957
        %v2086 = vunpack.c.l.b16 %v1958
        %v2087 = vunpack.c.l.b16 %v1959
        %v2088 = vunpack.c.l.b16 %v1960
        %v2089 = vunpack.c.l.b16 %v1961
        %v2090 = vunpack.c.l.b16 %v1962
        %v2091 = vunpack.c.l.b16 %v1963
        %v2092 = vunpack.c.l.b16 %v1964
        %v2093 = vunpack.c.l.b16 %v1965
        %v2094 = vunpack.c.l.b16 %v1966
        %v2095 = vunpack.c.l.b16 %v1967
        %v2096 = vpack.c.b16 %v2081, %v2080
        %v2097 = vpack.c.b16 %v2083, %v2082
        %v2098 = vpack.c.b16 %v2085, %v2084
        %v2099 = vpack.c.b16 %v2087, %v2086
        %v2100 = vpack.c.b16 %v2089, %v2088
        %v2101 = vpack.c.b16 %v2091, %v2090
        %v2102 = vpack.c.b16 %v2093, %v2092
        %v2103 = vpack.c.b16 %v2095, %v2094
        %2112 = vmatprep.subr.bf16.mxu0 0
        %2113 = vmatpush1.bf16.msra.mxu0 %v2103
        %2114 = vmatprep.subr.bf16.mxu0 0
        %2115 = vmatpush1.bf16.msra.mxu0 %v2102
        %2116 = vmatprep.subr.bf16.mxu0 0
        %2117 = vmatpush1.bf16.msra.mxu0 %v2101
        %2118 = vmatprep.subr.bf16.mxu0 0
        %2119 = vmatpush1.bf16.msra.mxu0 %v2100
        %2120 = vmatprep.subr.bf16.mxu0 0
        %2121 = vmatpush1.bf16.msra.mxu0 %v2099
        %2122 = vmatprep.subr.bf16.mxu0 0
        %2123 = vmatpush1.bf16.msra.mxu0 %v2098
        %2124 = vmatprep.subr.bf16.mxu0 0
        %2125 = vmatpush1.bf16.msra.mxu0 %v2097
        %2126 = vmatprep.subr.bf16.mxu0 0
        %2127 = vmatpush1.bf16.msra.mxu0 %v2096
        %2128 = vmatprep.subr.bf16.mxu0 0
        %2129 = vmatpush2.bf16.msra.mxu0 0
        %2130 = vmatprep.subr.bf16.mxu0 0
        %2131 = vmatpush2.bf16.msra.mxu0 0
        %2132 = vmatprep.subr.bf16.mxu0 0
        %2133 = vmatpush2.bf16.msra.mxu0 0
        %2134 = vmatprep.subr.bf16.mxu0 0
        %2135 = vmatpush2.bf16.msra.mxu0 0
        %2136 = vmatprep.subr.bf16.mxu0 0
        %2137 = vmatpush2.bf16.msra.mxu0 0
        %2138 = vmatprep.subr.bf16.mxu0 0
        %2139 = vmatpush2.bf16.msra.mxu0 0
        %2140 = vmatprep.subr.bf16.mxu0 0
        %2141 = vmatpush2.bf16.msra.mxu0 0
        %2142 = vmatprep.subr.bf16.mxu0 0
        %2143 = vmatpush2.bf16.msra.mxu0 0
        %2144 = vmatprep.mubr.bf16.mxu0 0
        %2145 = vmatmul.mubr.bf16.gmra.mxu0 %v2032
        %v2146 = vpop.f32.mrf.mxu0
        %v2147 = vadd.f32 0.0, %v2146
        %v2148 = vpop.f32.mrf.mxu0
        %v2149 = vpop.f32.mrf.mxu0
        %v2150 = vadd.f32 0.0, %v2149
        %v2151 = vpop.f32.mrf.mxu0
        %2152 = vmatprep.mubr.bf16.mxu0 0
        %2153 = vmatmul.mubr.bf16.gmra.mxu0 %v2033
        %v2154 = vpop.f32.mrf.mxu0
        %v2155 = vadd.f32 0.0, %v2154
        %v2156 = vpop.f32.mrf.mxu0
        %v2157 = vpop.f32.mrf.mxu0
        %v2158 = vadd.f32 0.0, %v2157
        %v2159 = vpop.f32.mrf.mxu0
        %2160 = vmatprep.mubr.bf16.mxu0 0
        %2161 = vmatmul.mubr.bf16.gmra.mxu0 %v2034
        %v2162 = vpop.f32.mrf.mxu0
        %v2163 = vadd.f32 0.0, %v2162
        %v2164 = vpop.f32.mrf.mxu0
        %v2165 = vpop.f32.mrf.mxu0
        %v2166 = vadd.f32 0.0, %v2165
        %v2167 = vpop.f32.mrf.mxu0
        %2168 = vmatprep.mubr.bf16.mxu0 0
        %2169 = vmatmul.mubr.bf16.gmra.mxu0 %v2035
        %v2170 = vpop.f32.mrf.mxu0
        %v2171 = vadd.f32 0.0, %v2170
        %v2172 = vpop.f32.mrf.mxu0
        %v2173 = vpop.f32.mrf.mxu0
        %v2174 = vadd.f32 0.0, %v2173
        %v2175 = vpop.f32.mrf.mxu0
        %2176 = vmatprep.mubr.bf16.mxu0 0
        %2177 = vmatmul.mubr.bf16.gmra.mxu0 %v2036
        %v2178 = vpop.f32.mrf.mxu0
        %v2179 = vadd.f32 0.0, %v2178
        %v2180 = vpop.f32.mrf.mxu0
        %v2181 = vpop.f32.mrf.mxu0
        %v2182 = vadd.f32 0.0, %v2181
        %v2183 = vpop.f32.mrf.mxu0
        %2184 = vmatprep.mubr.bf16.mxu0 0
        %2185 = vmatmul.mubr.bf16.gmra.mxu0 %v2037
        %v2186 = vpop.f32.mrf.mxu0
        %v2187 = vadd.f32 0.0, %v2186
        %v2188 = vpop.f32.mrf.mxu0
        %v2189 = vpop.f32.mrf.mxu0
        %v2190 = vadd.f32 0.0, %v2189
        %v2191 = vpop.f32.mrf.mxu0
        %2192 = vmatprep.mubr.bf16.mxu0 0
        %2193 = vmatmul.mubr.bf16.gmra.mxu0 %v2038
        %v2194 = vpop.f32.mrf.mxu0
        %v2195 = vadd.f32 0.0, %v2194
        %v2196 = vpop.f32.mrf.mxu0
        %v2197 = vpop.f32.mrf.mxu0
        %v2198 = vadd.f32 0.0, %v2197
        %v2199 = vpop.f32.mrf.mxu0
        %2200 = vmatprep.mubr.bf16.mxu0 0
        %2201 = vmatmul.mubr.bf16.gmra.mxu0 %v2039
        %v2202 = vpop.f32.mrf.mxu0
        %v2203 = vadd.f32 0.0, %v2202
        %v2204 = vpop.f32.mrf.mxu0
        %v2205 = vpop.f32.mrf.mxu0
        %v2206 = vadd.f32 0.0, %v2205
        %v2207 = vpop.f32.mrf.mxu0
        %2208 = vmatprep.mubr.bf16.mxu0 0
        %2209 = vmatmul.mubr.bf16.gmra.mxu0 %v2040
        %v2210 = vpop.f32.mrf.mxu0
        %v2211 = vadd.f32 0.0, %v2210
        %v2212 = vpop.f32.mrf.mxu0
        %v2213 = vpop.f32.mrf.mxu0
        %v2214 = vadd.f32 0.0, %v2213
        %v2215 = vpop.f32.mrf.mxu0
        %2216 = vmatprep.mubr.bf16.mxu0 0
        %2217 = vmatmul.mubr.bf16.gmra.mxu0 %v2041
        %v2218 = vpop.f32.mrf.mxu0
        %v2219 = vadd.f32 0.0, %v2218
        %v2220 = vpop.f32.mrf.mxu0
        %v2221 = vpop.f32.mrf.mxu0
        %v2222 = vadd.f32 0.0, %v2221
        %v2223 = vpop.f32.mrf.mxu0
        %2224 = vmatprep.mubr.bf16.mxu0 0
        %2225 = vmatmul.mubr.bf16.gmra.mxu0 %v2042
        %v2226 = vpop.f32.mrf.mxu0
        %v2227 = vadd.f32 0.0, %v2226
        %v2228 = vpop.f32.mrf.mxu0
        %v2229 = vpop.f32.mrf.mxu0
        %v2230 = vadd.f32 0.0, %v2229
        %v2231 = vpop.f32.mrf.mxu0
        %2232 = vmatprep.mubr.bf16.mxu0 0
        %2233 = vmatmul.mubr.bf16.gmra.mxu0 %v2043
        %v2234 = vpop.f32.mrf.mxu0
        %v2235 = vadd.f32 0.0, %v2234
        %v2236 = vpop.f32.mrf.mxu0
        %v2237 = vpop.f32.mrf.mxu0
        %v2238 = vadd.f32 0.0, %v2237
        %v2239 = vpop.f32.mrf.mxu0
        %2240 = vmatprep.mubr.bf16.mxu0 0
        %2241 = vmatmul.mubr.bf16.gmra.mxu0 %v2044
        %v2242 = vpop.f32.mrf.mxu0
        %v2243 = vadd.f32 0.0, %v2242
        %v2244 = vpop.f32.mrf.mxu0
        %v2245 = vpop.f32.mrf.mxu0
        %v2246 = vadd.f32 0.0, %v2245
        %v2247 = vpop.f32.mrf.mxu0
        %2248 = vmatprep.mubr.bf16.mxu0 0
        %2249 = vmatmul.mubr.bf16.gmra.mxu0 %v2045
        %v2250 = vpop.f32.mrf.mxu0
        %v2251 = vadd.f32 0.0, %v2250
        %v2252 = vpop.f32.mrf.mxu0
        %v2253 = vpop.f32.mrf.mxu0
        %v2254 = vadd.f32 0.0, %v2253
        %v2255 = vpop.f32.mrf.mxu0
        %2256 = vmatprep.mubr.bf16.mxu0 0
        %2257 = vmatmul.mubr.bf16.gmra.mxu0 %v2046
        %v2258 = vpop.f32.mrf.mxu0
        %v2259 = vadd.f32 0.0, %v2258
        %v2260 = vpop.f32.mrf.mxu0
        %v2261 = vpop.f32.mrf.mxu0
        %v2262 = vadd.f32 0.0, %v2261
        %v2263 = vpop.f32.mrf.mxu0
        %2264 = vmatprep.mubr.bf16.mxu0 0
        %2265 = vmatmul.mubr.bf16.gmra.mxu0 %v2047
        %v2266 = vpop.f32.mrf.mxu0
        %v2267 = vadd.f32 0.0, %v2266
        %v2268 = vpop.f32.mrf.mxu0
        %v2269 = vpop.f32.mrf.mxu0
        %v2270 = vadd.f32 0.0, %v2269
        %v2271 = vpop.f32.mrf.mxu0
        %2272 = vdwg.mxu0
        %v2273 = vadd.f32 %v1886, %v2147
        %v2274 = vadd.f32 %v1887, %v2150
        %v2275 = vadd.f32 %v1888, %v2155
        %v2276 = vadd.f32 %v1889, %v2158
        %v2277 = vadd.f32 %v1890, %v2163
        %v2278 = vadd.f32 %v1891, %v2166
        %v2279 = vadd.f32 %v1892, %v2171
        %v2280 = vadd.f32 %v1893, %v2174
        %v2281 = vadd.f32 %v1894, %v2179
        %v2282 = vadd.f32 %v1895, %v2182
        %v2283 = vadd.f32 %v1896, %v2187
        %v2284 = vadd.f32 %v1897, %v2190
        %v2285 = vadd.f32 %v1898, %v2195
        %v2286 = vadd.f32 %v1899, %v2198
        %v2287 = vadd.f32 %v1900, %v2203
        %v2288 = vadd.f32 %v1901, %v2206
        %v2289 = vadd.f32 %v1902, %v2211
        %v2290 = vadd.f32 %v1903, %v2214
        %v2291 = vadd.f32 %v1904, %v2219
        %v2292 = vadd.f32 %v1905, %v2222
        %v2293 = vadd.f32 %v1906, %v2227
        %v2294 = vadd.f32 %v1907, %v2230
        %v2295 = vadd.f32 %v1908, %v2235
        %v2296 = vadd.f32 %v1909, %v2238
        %v2297 = vadd.f32 %v1910, %v2243
        %v2298 = vadd.f32 %v1911, %v2246
        %v2299 = vadd.f32 %v1912, %v2251
        %v2300 = vadd.f32 %v1913, %v2254
        %v2301 = vadd.f32 %v1914, %v2259
        %v2302 = vadd.f32 %v1915, %v2262
        %v2303 = vadd.f32 %v1916, %v2267
        %v2304 = vadd.f32 %v1917, %v2270
        %v2305 = vld [vmem:[%s1918] sm:$0xf]
        %v2306 = vld [vmem:[%s1918 + $0x4] sm:$0xf]
        %v2307 = vld [vmem:[%s1918 + $0x8] sm:$0x1]
        %v2308 = vld [vmem:[%s1918 + $0xc] sm:$0xf]
        %v2309 = vld [vmem:[%s1918 + $0x10] sm:$0xf]
        %v2310 = vld [vmem:[%s1918 + $0x14] sm:$0x1]
        %v2311 = vld [vmem:[%s1918 + $0x18] sm:$0xf]
        %v2312 = vld [vmem:[%s1918 + $0x1c] sm:$0xf]
        %v2313 = vld [vmem:[%s1918 + $0x20] sm:$0x1]
        %v2314 = vld [vmem:[%s1918 + $0x24] sm:$0xf]
        %v2315 = vld [vmem:[%s1918 + $0x28] sm:$0xf]
        %v2316 = vld [vmem:[%s1918 + $0x2c] sm:$0x1]
        %v2317 = vld [vmem:[%s1918 + $0x30] sm:$0xf]
        %v2318 = vld [vmem:[%s1918 + $0x34] sm:$0xf]
        %v2319 = vld [vmem:[%s1918 + $0x38] sm:$0x1]
        %v2320 = vld [vmem:[%s1918 + $0x3c] sm:$0xf]
        %v2321 = vld [vmem:[%s1918 + $0x40] sm:$0xf]
        %v2322 = vld [vmem:[%s1918 + $0x44] sm:$0x1]
        %v2323 = vld [vmem:[%s1918 + $0x48] sm:$0xf]
        %v2324 = vld [vmem:[%s1918 + $0x4c] sm:$0xf]
        %v2325 = vld [vmem:[%s1918 + $0x50] sm:$0x1]
        %v2326 = vld [vmem:[%s1918 + $0x54] sm:$0xf]
        %v2327 = vld [vmem:[%s1918 + $0x58] sm:$0xf]
        %v2328 = vld [vmem:[%s1918 + $0x5c] sm:$0x1]
        %v2329 = vld [vmem:[%s1918 + $0x60] sm:$0xf]
        %v2330 = vld [vmem:[%s1918 + $0x64] sm:$0xf]
        %v2331 = vld [vmem:[%s1918 + $0x68] sm:$0x1]
        %v2332 = vld [vmem:[%s1918 + $0x6c] sm:$0xf]
        %v2333 = vld [vmem:[%s1918 + $0x70] sm:$0xf]
        %v2334 = vld [vmem:[%s1918 + $0x74] sm:$0x1]
        %v2335 = vld [vmem:[%s1918 + $0x78] sm:$0xf]
        %v2336 = vld [vmem:[%s1918 + $0x7c] sm:$0xf]
        %v2337 = vld [vmem:[%s1918 + $0x80] sm:$0x1]
        %v2338 = vld [vmem:[%s1918 + $0x84] sm:$0xf]
        %v2339 = vld [vmem:[%s1918 + $0x88] sm:$0xf]
        %v2340 = vld [vmem:[%s1918 + $0x8c] sm:$0x1]
        %v2341 = vld [vmem:[%s1918 + $0x90] sm:$0xf]
        %v2342 = vld [vmem:[%s1918 + $0x94] sm:$0xf]
        %v2343 = vld [vmem:[%s1918 + $0x98] sm:$0x1]
        %v2344 = vld [vmem:[%s1918 + $0x9c] sm:$0xf]
        %v2345 = vld [vmem:[%s1918 + $0xa0] sm:$0xf]
        %v2346 = vld [vmem:[%s1918 + $0xa4] sm:$0x1]
        %v2347 = vld [vmem:[%s1918 + $0xa8] sm:$0xf]
        %v2348 = vld [vmem:[%s1918 + $0xac] sm:$0xf]
        %v2349 = vld [vmem:[%s1918 + $0xb0] sm:$0x1]
        %v2350 = vld [vmem:[%s1918 + $0xb4] sm:$0xf]
        %v2351 = vld [vmem:[%s1918 + $0xb8] sm:$0xf]
        %v2352 = vld [vmem:[%s1918 + $0xbc] sm:$0x1]
        %v2354 = vshrl.u32 %v2305, 16
        %v2356 = vrot.slane %v2354, 4
        %v2357 = vshll.u32 %v2305, 16
        %v2359 = vrot.slane %v2357, 5
        %v2360 = vor.u32 %v2356, %v2359
        %v2361 = vrot.slane %v2360, 4
        %v2363 = vshll.u32 %v2306, 16
        %v2365 = vrot.slane %v2363, 5
        %v2366 = vsel %vm453, %v2361, %v2365
        %v2367 = vshrl.u32 %v2306, 16
        %v2369 = vrot.slane %v2367, 4
        %v2370 = vor.u32 %v2369, %v2365
        %v2371 = vrot.slane %v2370, 4
        %v2373 = vshll.u32 %v2307, 16
        %v2375 = vrot.slane %v2373, 5
        %v2376 = vsel %vm453, %v2371, %v2375
        %v2378 = vshrl.u32 %v2308, 16
        %v2380 = vrot.slane %v2378, 4
        %v2381 = vshll.u32 %v2308, 16
        %v2383 = vrot.slane %v2381, 5
        %v2384 = vor.u32 %v2380, %v2383
        %v2385 = vrot.slane %v2384, 4
        %v2387 = vshll.u32 %v2309, 16
        %v2389 = vrot.slane %v2387, 5
        %v2390 = vsel %vm453, %v2385, %v2389
        %v2391 = vshrl.u32 %v2309, 16
        %v2393 = vrot.slane %v2391, 4
        %v2394 = vor.u32 %v2393, %v2389
        %v2395 = vrot.slane %v2394, 4
        %v2397 = vshll.u32 %v2310, 16
        %v2399 = vrot.slane %v2397, 5
        %v2400 = vsel %vm453, %v2395, %v2399
        %v2402 = vshrl.u32 %v2311, 16
        %v2404 = vrot.slane %v2402, 4
        %v2405 = vshll.u32 %v2311, 16
        %v2407 = vrot.slane %v2405, 5
        %v2408 = vor.u32 %v2404, %v2407
        %v2409 = vrot.slane %v2408, 4
        %v2411 = vshll.u32 %v2312, 16
        %v2413 = vrot.slane %v2411, 5
        %v2414 = vsel %vm453, %v2409, %v2413
        %v2415 = vshrl.u32 %v2312, 16
        %v2417 = vrot.slane %v2415, 4
        %v2418 = vor.u32 %v2417, %v2413
        %v2419 = vrot.slane %v2418, 4
        %v2421 = vshll.u32 %v2313, 16
        %v2423 = vrot.slane %v2421, 5
        %v2424 = vsel %vm453, %v2419, %v2423
        %v2426 = vshrl.u32 %v2314, 16
        %v2428 = vrot.slane %v2426, 4
        %v2429 = vshll.u32 %v2314, 16
        %v2431 = vrot.slane %v2429, 5
        %v2432 = vor.u32 %v2428, %v2431
        %v2433 = vrot.slane %v2432, 4
        %v2435 = vshll.u32 %v2315, 16
        %v2437 = vrot.slane %v2435, 5
        %v2438 = vsel %vm453, %v2433, %v2437
        %v2439 = vshrl.u32 %v2315, 16
        %v2441 = vrot.slane %v2439, 4
        %v2442 = vor.u32 %v2441, %v2437
        %v2443 = vrot.slane %v2442, 4
        %v2445 = vshll.u32 %v2316, 16
        %v2447 = vrot.slane %v2445, 5
        %v2448 = vsel %vm453, %v2443, %v2447
        %v2450 = vshrl.u32 %v2317, 16
        %v2452 = vrot.slane %v2450, 4
        %v2453 = vshll.u32 %v2317, 16
        %v2455 = vrot.slane %v2453, 5
        %v2456 = vor.u32 %v2452, %v2455
        %v2457 = vrot.slane %v2456, 4
        %v2459 = vshll.u32 %v2318, 16
        %v2461 = vrot.slane %v2459, 5
        %v2462 = vsel %vm453, %v2457, %v2461
        %v2463 = vshrl.u32 %v2318, 16
        %v2465 = vrot.slane %v2463, 4
        %v2466 = vor.u32 %v2465, %v2461
        %v2467 = vrot.slane %v2466, 4
        %v2469 = vshll.u32 %v2319, 16
        %v2471 = vrot.slane %v2469, 5
        %v2472 = vsel %vm453, %v2467, %v2471
        %v2474 = vshrl.u32 %v2320, 16
        %v2476 = vrot.slane %v2474, 4
        %v2477 = vshll.u32 %v2320, 16
        %v2479 = vrot.slane %v2477, 5
        %v2480 = vor.u32 %v2476, %v2479
        %v2481 = vrot.slane %v2480, 4
        %v2483 = vshll.u32 %v2321, 16
        %v2485 = vrot.slane %v2483, 5
        %v2486 = vsel %vm453, %v2481, %v2485
        %v2487 = vshrl.u32 %v2321, 16
        %v2489 = vrot.slane %v2487, 4
        %v2490 = vor.u32 %v2489, %v2485
        %v2491 = vrot.slane %v2490, 4
        %v2493 = vshll.u32 %v2322, 16
        %v2495 = vrot.slane %v2493, 5
        %v2496 = vsel %vm453, %v2491, %v2495
        %v2498 = vshrl.u32 %v2323, 16
        %v2500 = vrot.slane %v2498, 4
        %v2501 = vshll.u32 %v2323, 16
        %v2503 = vrot.slane %v2501, 5
        %v2504 = vor.u32 %v2500, %v2503
        %v2505 = vrot.slane %v2504, 4
        %v2507 = vshll.u32 %v2324, 16
        %v2509 = vrot.slane %v2507, 5
        %v2510 = vsel %vm453, %v2505, %v2509
        %v2511 = vshrl.u32 %v2324, 16
        %v2513 = vrot.slane %v2511, 4
        %v2514 = vor.u32 %v2513, %v2509
        %v2515 = vrot.slane %v2514, 4
        %v2517 = vshll.u32 %v2325, 16
        %v2519 = vrot.slane %v2517, 5
        %v2520 = vsel %vm453, %v2515, %v2519
        %v2522 = vshrl.u32 %v2326, 16
        %v2524 = vrot.slane %v2522, 4
        %v2525 = vshll.u32 %v2326, 16
        %v2527 = vrot.slane %v2525, 5
        %v2528 = vor.u32 %v2524, %v2527
        %v2529 = vrot.slane %v2528, 4
        %v2531 = vshll.u32 %v2327, 16
        %v2533 = vrot.slane %v2531, 5
        %v2534 = vsel %vm453, %v2529, %v2533
        %v2535 = vshrl.u32 %v2327, 16
        %v2537 = vrot.slane %v2535, 4
        %v2538 = vor.u32 %v2537, %v2533
        %v2539 = vrot.slane %v2538, 4
        %v2541 = vshll.u32 %v2328, 16
        %v2543 = vrot.slane %v2541, 5
        %v2544 = vsel %vm453, %v2539, %v2543
        %v2546 = vshrl.u32 %v2329, 16
        %v2548 = vrot.slane %v2546, 4
        %v2549 = vshll.u32 %v2329, 16
        %v2551 = vrot.slane %v2549, 5
        %v2552 = vor.u32 %v2548, %v2551
        %v2553 = vrot.slane %v2552, 4
        %v2555 = vshll.u32 %v2330, 16
        %v2557 = vrot.slane %v2555, 5
        %v2558 = vsel %vm453, %v2553, %v2557
        %v2559 = vshrl.u32 %v2330, 16
        %v2561 = vrot.slane %v2559, 4
        %v2562 = vor.u32 %v2561, %v2557
        %v2563 = vrot.slane %v2562, 4
        %v2565 = vshll.u32 %v2331, 16
        %v2567 = vrot.slane %v2565, 5
        %v2568 = vsel %vm453, %v2563, %v2567
        %v2570 = vshrl.u32 %v2332, 16
        %v2572 = vrot.slane %v2570, 4
        %v2573 = vshll.u32 %v2332, 16
        %v2575 = vrot.slane %v2573, 5
        %v2576 = vor.u32 %v2572, %v2575
        %v2577 = vrot.slane %v2576, 4
        %v2579 = vshll.u32 %v2333, 16
        %v2581 = vrot.slane %v2579, 5
        %v2582 = vsel %vm453, %v2577, %v2581
        %v2583 = vshrl.u32 %v2333, 16
        %v2585 = vrot.slane %v2583, 4
        %v2586 = vor.u32 %v2585, %v2581
        %v2587 = vrot.slane %v2586, 4
        %v2589 = vshll.u32 %v2334, 16
        %v2591 = vrot.slane %v2589, 5
        %v2592 = vsel %vm453, %v2587, %v2591
        %v2594 = vshrl.u32 %v2335, 16
        %v2596 = vrot.slane %v2594, 4
        %v2597 = vshll.u32 %v2335, 16
        %v2599 = vrot.slane %v2597, 5
        %v2600 = vor.u32 %v2596, %v2599
        %v2601 = vrot.slane %v2600, 4
        %v2603 = vshll.u32 %v2336, 16
        %v2605 = vrot.slane %v2603, 5
        %v2606 = vsel %vm453, %v2601, %v2605
        %v2607 = vshrl.u32 %v2336, 16
        %v2609 = vrot.slane %v2607, 4
        %v2610 = vor.u32 %v2609, %v2605
        %v2611 = vrot.slane %v2610, 4
        %v2613 = vshll.u32 %v2337, 16
        %v2615 = vrot.slane %v2613, 5
        %v2616 = vsel %vm453, %v2611, %v2615
        %v2618 = vshrl.u32 %v2338, 16
        %v2620 = vrot.slane %v2618, 4
        %v2621 = vshll.u32 %v2338, 16
        %v2623 = vrot.slane %v2621, 5
        %v2624 = vor.u32 %v2620, %v2623
        %v2625 = vrot.slane %v2624, 4
        %v2627 = vshll.u32 %v2339, 16
        %v2629 = vrot.slane %v2627, 5
        %v2630 = vsel %vm453, %v2625, %v2629
        %v2631 = vshrl.u32 %v2339, 16
        %v2633 = vrot.slane %v2631, 4
        %v2634 = vor.u32 %v2633, %v2629
        %v2635 = vrot.slane %v2634, 4
        %v2637 = vshll.u32 %v2340, 16
        %v2639 = vrot.slane %v2637, 5
        %v2640 = vsel %vm453, %v2635, %v2639
        %v2642 = vshrl.u32 %v2341, 16
        %v2644 = vrot.slane %v2642, 4
        %v2645 = vshll.u32 %v2341, 16
        %v2647 = vrot.slane %v2645, 5
        %v2648 = vor.u32 %v2644, %v2647
        %v2649 = vrot.slane %v2648, 4
        %v2651 = vshll.u32 %v2342, 16
        %v2653 = vrot.slane %v2651, 5
        %v2654 = vsel %vm453, %v2649, %v2653
        %v2655 = vshrl.u32 %v2342, 16
        %v2657 = vrot.slane %v2655, 4
        %v2658 = vor.u32 %v2657, %v2653
        %v2659 = vrot.slane %v2658, 4
        %v2661 = vshll.u32 %v2343, 16
        %v2663 = vrot.slane %v2661, 5
        %v2664 = vsel %vm453, %v2659, %v2663
        %v2666 = vshrl.u32 %v2344, 16
        %v2668 = vrot.slane %v2666, 4
        %v2669 = vshll.u32 %v2344, 16
        %v2671 = vrot.slane %v2669, 5
        %v2672 = vor.u32 %v2668, %v2671
        %v2673 = vrot.slane %v2672, 4
        %v2675 = vshll.u32 %v2345, 16
        %v2677 = vrot.slane %v2675, 5
        %v2678 = vsel %vm453, %v2673, %v2677
        %v2679 = vshrl.u32 %v2345, 16
        %v2681 = vrot.slane %v2679, 4
        %v2682 = vor.u32 %v2681, %v2677
        %v2683 = vrot.slane %v2682, 4
        %v2685 = vshll.u32 %v2346, 16
        %v2687 = vrot.slane %v2685, 5
        %v2688 = vsel %vm453, %v2683, %v2687
        %v2690 = vshrl.u32 %v2347, 16
        %v2692 = vrot.slane %v2690, 4
        %v2693 = vshll.u32 %v2347, 16
        %v2695 = vrot.slane %v2693, 5
        %v2696 = vor.u32 %v2692, %v2695
        %v2697 = vrot.slane %v2696, 4
        %v2699 = vshll.u32 %v2348, 16
        %v2701 = vrot.slane %v2699, 5
        %v2702 = vsel %vm453, %v2697, %v2701
        %v2703 = vshrl.u32 %v2348, 16
        %v2705 = vrot.slane %v2703, 4
        %v2706 = vor.u32 %v2705, %v2701
        %v2707 = vrot.slane %v2706, 4
        %v2709 = vshll.u32 %v2349, 16
        %v2711 = vrot.slane %v2709, 5
        %v2712 = vsel %vm453, %v2707, %v2711
        %v2714 = vshrl.u32 %v2350, 16
        %v2716 = vrot.slane %v2714, 4
        %v2717 = vshll.u32 %v2350, 16
        %v2719 = vrot.slane %v2717, 5
        %v2720 = vor.u32 %v2716, %v2719
        %v2721 = vrot.slane %v2720, 4
        %v2723 = vshll.u32 %v2351, 16
        %v2725 = vrot.slane %v2723, 5
        %v2726 = vsel %vm453, %v2721, %v2725
        %v2727 = vshrl.u32 %v2351, 16
        %v2729 = vrot.slane %v2727, 4
        %v2730 = vor.u32 %v2729, %v2725
        %v2731 = vrot.slane %v2730, 4
        %v2733 = vshll.u32 %v2352, 16
        %v2735 = vrot.slane %v2733, 5
        %v2736 = vsel %vm453, %v2731, %v2735
        %s2737 = scalar_lea.vmem %s1, 256
        %v2738 = vld [vmem:[%s2737] sm:$0xf]
        %v2739 = vld [vmem:[%s2737 + $0x4] sm:$0xf]
        %v2740 = vld [vmem:[%s2737 + $0x8] sm:$0xf]
        %v2741 = vld [vmem:[%s2737 + $0xc] sm:$0xf]
        %v2742 = vld [vmem:[%s2737 + $0x10] sm:$0xf]
        %v2743 = vld [vmem:[%s2737 + $0x14] sm:$0xf]
        %v2744 = vld [vmem:[%s2737 + $0x18] sm:$0xf]
        %v2745 = vld [vmem:[%s2737 + $0x1c] sm:$0xf]
        %v2746 = vld [vmem:[%s2737 + $0x20] sm:$0xf]
        %v2747 = vld [vmem:[%s2737 + $0x24] sm:$0xf]
        %v2748 = vld [vmem:[%s2737 + $0x28] sm:$0xf]
        %v2749 = vld [vmem:[%s2737 + $0x2c] sm:$0xf]
        %v2750 = vld [vmem:[%s2737 + $0x30] sm:$0xf]
        %v2751 = vld [vmem:[%s2737 + $0x34] sm:$0xf]
        %v2752 = vld [vmem:[%s2737 + $0x38] sm:$0xf]
        %v2753 = vld [vmem:[%s2737 + $0x3c] sm:$0xf]
        %v2754 = vunpack.c.l.b16 %v2366
        %v2755 = vunpack.c.l.b16 %v2376
        %v2756 = vunpack.c.l.b16 %v2390
        %v2757 = vunpack.c.l.b16 %v2400
        %v2758 = vunpack.c.l.b16 %v2414
        %v2759 = vunpack.c.l.b16 %v2424
        %v2760 = vunpack.c.l.b16 %v2438
        %v2761 = vunpack.c.l.b16 %v2448
        %v2762 = vunpack.c.l.b16 %v2462
        %v2763 = vunpack.c.l.b16 %v2472
        %v2764 = vunpack.c.l.b16 %v2486
        %v2765 = vunpack.c.l.b16 %v2496
        %v2766 = vunpack.c.l.b16 %v2510
        %v2767 = vunpack.c.l.b16 %v2520
        %v2768 = vunpack.c.l.b16 %v2534
        %v2769 = vunpack.c.l.b16 %v2544
        %v2770 = vunpack.c.l.b16 %v2558
        %v2771 = vunpack.c.l.b16 %v2568
        %v2772 = vunpack.c.l.b16 %v2582
        %v2773 = vunpack.c.l.b16 %v2592
        %v2774 = vunpack.c.l.b16 %v2606
        %v2775 = vunpack.c.l.b16 %v2616
        %v2776 = vunpack.c.l.b16 %v2630
        %v2777 = vunpack.c.l.b16 %v2640
        %v2778 = vunpack.c.l.b16 %v2654
        %v2779 = vunpack.c.l.b16 %v2664
        %v2780 = vunpack.c.l.b16 %v2678
        %v2781 = vunpack.c.l.b16 %v2688
        %v2782 = vunpack.c.l.b16 %v2702
        %v2783 = vunpack.c.l.b16 %v2712
        %v2784 = vunpack.c.l.b16 %v2726
        %v2785 = vunpack.c.l.b16 %v2736
        %v2786 = vpack.c.b16 %v2755, %v2754
        %v2787 = vpack.c.b16 %v2757, %v2756
        %v2788 = vpack.c.b16 %v2759, %v2758
        %v2789 = vpack.c.b16 %v2761, %v2760
        %v2790 = vpack.c.b16 %v2763, %v2762
        %v2791 = vpack.c.b16 %v2765, %v2764
        %v2792 = vpack.c.b16 %v2767, %v2766
        %v2793 = vpack.c.b16 %v2769, %v2768
        %v2794 = vpack.c.b16 %v2771, %v2770
        %v2795 = vpack.c.b16 %v2773, %v2772
        %v2796 = vpack.c.b16 %v2775, %v2774
        %v2797 = vpack.c.b16 %v2777, %v2776
        %v2798 = vpack.c.b16 %v2779, %v2778
        %v2799 = vpack.c.b16 %v2781, %v2780
        %v2800 = vpack.c.b16 %v2783, %v2782
        %v2801 = vpack.c.b16 %v2785, %v2784
        %v2834 = vunpack.c.l.b16 %v2738
        %v2835 = vunpack.c.l.b16 %v2739
        %v2836 = vunpack.c.l.b16 %v2740
        %v2837 = vunpack.c.l.b16 %v2741
        %v2838 = vunpack.c.l.b16 %v2742
        %v2839 = vunpack.c.l.b16 %v2743
        %v2840 = vunpack.c.l.b16 %v2744
        %v2841 = vunpack.c.l.b16 %v2745
        %v2842 = vunpack.c.l.b16 %v2746
        %v2843 = vunpack.c.l.b16 %v2747
        %v2844 = vunpack.c.l.b16 %v2748
        %v2845 = vunpack.c.l.b16 %v2749
        %v2846 = vunpack.c.l.b16 %v2750
        %v2847 = vunpack.c.l.b16 %v2751
        %v2848 = vunpack.c.l.b16 %v2752
        %v2849 = vunpack.c.l.b16 %v2753
        %v2850 = vpack.c.b16 %v2835, %v2834
        %v2851 = vpack.c.b16 %v2837, %v2836
        %v2852 = vpack.c.b16 %v2839, %v2838
        %v2853 = vpack.c.b16 %v2841, %v2840
        %v2854 = vpack.c.b16 %v2843, %v2842
        %v2855 = vpack.c.b16 %v2845, %v2844
        %v2856 = vpack.c.b16 %v2847, %v2846
        %v2857 = vpack.c.b16 %v2849, %v2848
        %2866 = vmatprep.subr.bf16.mxu0 0
        %2867 = vmatpush1.bf16.msra.mxu0 %v2857
        %2868 = vmatprep.subr.bf16.mxu0 0
        %2869 = vmatpush1.bf16.msra.mxu0 %v2856
        %2870 = vmatprep.subr.bf16.mxu0 0
        %2871 = vmatpush1.bf16.msra.mxu0 %v2855
        %2872 = vmatprep.subr.bf16.mxu0 0
        %2873 = vmatpush1.bf16.msra.mxu0 %v2854
        %2874 = vmatprep.subr.bf16.mxu0 0
        %2875 = vmatpush1.bf16.msra.mxu0 %v2853
        %2876 = vmatprep.subr.bf16.mxu0 0
        %2877 = vmatpush1.bf16.msra.mxu0 %v2852
        %2878 = vmatprep.subr.bf16.mxu0 0
        %2879 = vmatpush1.bf16.msra.mxu0 %v2851
        %2880 = vmatprep.subr.bf16.mxu0 0
        %2881 = vmatpush1.bf16.msra.mxu0 %v2850
        %2882 = vmatprep.subr.bf16.mxu0 0
        %2883 = vmatpush2.bf16.msra.mxu0 0
        %2884 = vmatprep.subr.bf16.mxu0 0
        %2885 = vmatpush2.bf16.msra.mxu0 0
        %2886 = vmatprep.subr.bf16.mxu0 0
        %2887 = vmatpush2.bf16.msra.mxu0 0
        %2888 = vmatprep.subr.bf16.mxu0 0
        %2889 = vmatpush2.bf16.msra.mxu0 0
        %2890 = vmatprep.subr.bf16.mxu0 0
        %2891 = vmatpush2.bf16.msra.mxu0 0
        %2892 = vmatprep.subr.bf16.mxu0 0
        %2893 = vmatpush2.bf16.msra.mxu0 0
        %2894 = vmatprep.subr.bf16.mxu0 0
        %2895 = vmatpush2.bf16.msra.mxu0 0
        %2896 = vmatprep.subr.bf16.mxu0 0
        %2897 = vmatpush2.bf16.msra.mxu0 0
        %2898 = vmatprep.mubr.bf16.mxu0 0
        %2899 = vmatmul.mubr.bf16.gmra.mxu0 %v2786
        %v2900 = vpop.f32.mrf.mxu0
        %v2901 = vadd.f32 0.0, %v2900
        %v2902 = vpop.f32.mrf.mxu0
        %v2903 = vpop.f32.mrf.mxu0
        %v2904 = vadd.f32 0.0, %v2903
        %v2905 = vpop.f32.mrf.mxu0
        %2906 = vmatprep.mubr.bf16.mxu0 0
        %2907 = vmatmul.mubr.bf16.gmra.mxu0 %v2787
        %v2908 = vpop.f32.mrf.mxu0
        %v2909 = vadd.f32 0.0, %v2908
        %v2910 = vpop.f32.mrf.mxu0
        %v2911 = vpop.f32.mrf.mxu0
        %v2912 = vadd.f32 0.0, %v2911
        %v2913 = vpop.f32.mrf.mxu0
        %2914 = vmatprep.mubr.bf16.mxu0 0
        %2915 = vmatmul.mubr.bf16.gmra.mxu0 %v2788
        %v2916 = vpop.f32.mrf.mxu0
        %v2917 = vadd.f32 0.0, %v2916
        %v2918 = vpop.f32.mrf.mxu0
        %v2919 = vpop.f32.mrf.mxu0
        %v2920 = vadd.f32 0.0, %v2919
        %v2921 = vpop.f32.mrf.mxu0
        %2922 = vmatprep.mubr.bf16.mxu0 0
        %2923 = vmatmul.mubr.bf16.gmra.mxu0 %v2789
        %v2924 = vpop.f32.mrf.mxu0
        %v2925 = vadd.f32 0.0, %v2924
        %v2926 = vpop.f32.mrf.mxu0
        %v2927 = vpop.f32.mrf.mxu0
        %v2928 = vadd.f32 0.0, %v2927
        %v2929 = vpop.f32.mrf.mxu0
        %2930 = vmatprep.mubr.bf16.mxu0 0
        %2931 = vmatmul.mubr.bf16.gmra.mxu0 %v2790
        %v2932 = vpop.f32.mrf.mxu0
        %v2933 = vadd.f32 0.0, %v2932
        %v2934 = vpop.f32.mrf.mxu0
        %v2935 = vpop.f32.mrf.mxu0
        %v2936 = vadd.f32 0.0, %v2935
        %v2937 = vpop.f32.mrf.mxu0
        %2938 = vmatprep.mubr.bf16.mxu0 0
        %2939 = vmatmul.mubr.bf16.gmra.mxu0 %v2791
        %v2940 = vpop.f32.mrf.mxu0
        %v2941 = vadd.f32 0.0, %v2940
        %v2942 = vpop.f32.mrf.mxu0
        %v2943 = vpop.f32.mrf.mxu0
        %v2944 = vadd.f32 0.0, %v2943
        %v2945 = vpop.f32.mrf.mxu0
        %2946 = vmatprep.mubr.bf16.mxu0 0
        %2947 = vmatmul.mubr.bf16.gmra.mxu0 %v2792
        %v2948 = vpop.f32.mrf.mxu0
        %v2949 = vadd.f32 0.0, %v2948
        %v2950 = vpop.f32.mrf.mxu0
        %v2951 = vpop.f32.mrf.mxu0
        %v2952 = vadd.f32 0.0, %v2951
        %v2953 = vpop.f32.mrf.mxu0
        %2954 = vmatprep.mubr.bf16.mxu0 0
        %2955 = vmatmul.mubr.bf16.gmra.mxu0 %v2793
        %v2956 = vpop.f32.mrf.mxu0
        %v2957 = vadd.f32 0.0, %v2956
        %v2958 = vpop.f32.mrf.mxu0
        %v2959 = vpop.f32.mrf.mxu0
        %v2960 = vadd.f32 0.0, %v2959
        %v2961 = vpop.f32.mrf.mxu0
        %2962 = vmatprep.mubr.bf16.mxu0 0
        %2963 = vmatmul.mubr.bf16.gmra.mxu0 %v2794
        %v2964 = vpop.f32.mrf.mxu0
        %v2965 = vadd.f32 0.0, %v2964
        %v2966 = vpop.f32.mrf.mxu0
        %v2967 = vpop.f32.mrf.mxu0
        %v2968 = vadd.f32 0.0, %v2967
        %v2969 = vpop.f32.mrf.mxu0
        %2970 = vmatprep.mubr.bf16.mxu0 0
        %2971 = vmatmul.mubr.bf16.gmra.mxu0 %v2795
        %v2972 = vpop.f32.mrf.mxu0
        %v2973 = vadd.f32 0.0, %v2972
        %v2974 = vpop.f32.mrf.mxu0
        %v2975 = vpop.f32.mrf.mxu0
        %v2976 = vadd.f32 0.0, %v2975
        %v2977 = vpop.f32.mrf.mxu0
        %2978 = vmatprep.mubr.bf16.mxu0 0
        %2979 = vmatmul.mubr.bf16.gmra.mxu0 %v2796
        %v2980 = vpop.f32.mrf.mxu0
        %v2981 = vadd.f32 0.0, %v2980
        %v2982 = vpop.f32.mrf.mxu0
        %v2983 = vpop.f32.mrf.mxu0
        %v2984 = vadd.f32 0.0, %v2983
        %v2985 = vpop.f32.mrf.mxu0
        %2986 = vmatprep.mubr.bf16.mxu0 0
        %2987 = vmatmul.mubr.bf16.gmra.mxu0 %v2797
        %v2988 = vpop.f32.mrf.mxu0
        %v2989 = vadd.f32 0.0, %v2988
        %v2990 = vpop.f32.mrf.mxu0
        %v2991 = vpop.f32.mrf.mxu0
        %v2992 = vadd.f32 0.0, %v2991
        %v2993 = vpop.f32.mrf.mxu0
        %2994 = vmatprep.mubr.bf16.mxu0 0
        %2995 = vmatmul.mubr.bf16.gmra.mxu0 %v2798
        %v2996 = vpop.f32.mrf.mxu0
        %v2997 = vadd.f32 0.0, %v2996
        %v2998 = vpop.f32.mrf.mxu0
        %v2999 = vpop.f32.mrf.mxu0
        %v3000 = vadd.f32 0.0, %v2999
        %v3001 = vpop.f32.mrf.mxu0
        %3002 = vmatprep.mubr.bf16.mxu0 0
        %3003 = vmatmul.mubr.bf16.gmra.mxu0 %v2799
        %v3004 = vpop.f32.mrf.mxu0
        %v3005 = vadd.f32 0.0, %v3004
        %v3006 = vpop.f32.mrf.mxu0
        %v3007 = vpop.f32.mrf.mxu0
        %v3008 = vadd.f32 0.0, %v3007
        %v3009 = vpop.f32.mrf.mxu0
        %3010 = vmatprep.mubr.bf16.mxu0 0
        %3011 = vmatmul.mubr.bf16.gmra.mxu0 %v2800
        %v3012 = vpop.f32.mrf.mxu0
        %v3013 = vadd.f32 0.0, %v3012
        %v3014 = vpop.f32.mrf.mxu0
        %v3015 = vpop.f32.mrf.mxu0
        %v3016 = vadd.f32 0.0, %v3015
        %v3017 = vpop.f32.mrf.mxu0
        %3018 = vmatprep.mubr.bf16.mxu0 0
        %3019 = vmatmul.mubr.bf16.gmra.mxu0 %v2801
        %v3020 = vpop.f32.mrf.mxu0
        %v3021 = vadd.f32 0.0, %v3020
        %v3022 = vpop.f32.mrf.mxu0
        %v3023 = vpop.f32.mrf.mxu0
        %v3024 = vadd.f32 0.0, %v3023
        %v3025 = vpop.f32.mrf.mxu0
        %3026 = vdwg.mxu0
        %v3027 = vadd.f32 %v2273, %v2901
        %v3028 = vadd.f32 %v2274, %v2904
        %v3029 = vadd.f32 %v2275, %v2909
        %v3030 = vadd.f32 %v2276, %v2912
        %v3031 = vadd.f32 %v2277, %v2917
        %v3032 = vadd.f32 %v2278, %v2920
        %v3033 = vadd.f32 %v2279, %v2925
        %v3034 = vadd.f32 %v2280, %v2928
        %v3035 = vadd.f32 %v2281, %v2933
        %v3036 = vadd.f32 %v2282, %v2936
        %v3037 = vadd.f32 %v2283, %v2941
        %v3038 = vadd.f32 %v2284, %v2944
        %v3039 = vadd.f32 %v2285, %v2949
        %v3040 = vadd.f32 %v2286, %v2952
        %v3041 = vadd.f32 %v2287, %v2957
        %v3042 = vadd.f32 %v2288, %v2960
        %v3043 = vadd.f32 %v2289, %v2965
        %v3044 = vadd.f32 %v2290, %v2968
        %v3045 = vadd.f32 %v2291, %v2973
        %v3046 = vadd.f32 %v2292, %v2976
        %v3047 = vadd.f32 %v2293, %v2981
        %v3048 = vadd.f32 %v2294, %v2984
        %v3049 = vadd.f32 %v2295, %v2989
        %v3050 = vadd.f32 %v2296, %v2992
        %v3051 = vadd.f32 %v2297, %v2997
        %v3052 = vadd.f32 %v2298, %v3000
        %v3053 = vadd.f32 %v2299, %v3005
        %v3054 = vadd.f32 %v2300, %v3008
        %v3055 = vadd.f32 %v2301, %v3013
        %v3056 = vadd.f32 %v2302, %v3016
        %v3057 = vadd.f32 %v2303, %v3021
        %v3058 = vadd.f32 %v2304, %v3024
        %v3059 = vld [vmem:[%s1918] sm:$0xe]
        %v3060 = vld [vmem:[%s1918 + $0xc] sm:$0xe]
        %v3061 = vld [vmem:[%s1918 + $0x18] sm:$0xe]
        %v3062 = vld [vmem:[%s1918 + $0x24] sm:$0xe]
        %v3063 = vld [vmem:[%s1918 + $0x30] sm:$0xe]
        %v3064 = vld [vmem:[%s1918 + $0x3c] sm:$0xe]
        %v3065 = vld [vmem:[%s1918 + $0x48] sm:$0xe]
        %v3066 = vld [vmem:[%s1918 + $0x54] sm:$0xe]
        %v3067 = vld [vmem:[%s1918 + $0x60] sm:$0xe]
        %v3068 = vld [vmem:[%s1918 + $0x6c] sm:$0xe]
        %v3069 = vld [vmem:[%s1918 + $0x78] sm:$0xe]
        %v3070 = vld [vmem:[%s1918 + $0x84] sm:$0xe]
        %v3071 = vld [vmem:[%s1918 + $0x90] sm:$0xe]
        %v3072 = vld [vmem:[%s1918 + $0x9c] sm:$0xe]
        %v3073 = vld [vmem:[%s1918 + $0xa8] sm:$0xe]
        %v3074 = vld [vmem:[%s1918 + $0xb4] sm:$0xe]
        %v3123 = vrot.slane %v3059, 5
        %v3124 = vrot.slane %v3123, 4
        %v3125 = vrot.slane %v2306, 5
        %v3126 = vsel %vm1483, %v3124, %v3125
        %v3127 = vrot.slane %v3125, 4
        %v3128 = vrot.slane %v2307, 5
        %v3129 = vsel %vm1483, %v3127, %v3128
        %v3130 = vrot.slane %v3060, 5
        %v3131 = vrot.slane %v3130, 4
        %v3132 = vrot.slane %v2309, 5
        %v3133 = vsel %vm1483, %v3131, %v3132
        %v3134 = vrot.slane %v3132, 4
        %v3135 = vrot.slane %v2310, 5
        %v3136 = vsel %vm1483, %v3134, %v3135
        %v3137 = vrot.slane %v3061, 5
        %v3138 = vrot.slane %v3137, 4
        %v3139 = vrot.slane %v2312, 5
        %v3140 = vsel %vm1483, %v3138, %v3139
        %v3141 = vrot.slane %v3139, 4
        %v3142 = vrot.slane %v2313, 5
        %v3143 = vsel %vm1483, %v3141, %v3142
        %v3144 = vrot.slane %v3062, 5
        %v3145 = vrot.slane %v3144, 4
        %v3146 = vrot.slane %v2315, 5
        %v3147 = vsel %vm1483, %v3145, %v3146
        %v3148 = vrot.slane %v3146, 4
        %v3149 = vrot.slane %v2316, 5
        %v3150 = vsel %vm1483, %v3148, %v3149
        %v3151 = vrot.slane %v3063, 5
        %v3152 = vrot.slane %v3151, 4
        %v3153 = vrot.slane %v2318, 5
        %v3154 = vsel %vm1483, %v3152, %v3153
        %v3155 = vrot.slane %v3153, 4
        %v3156 = vrot.slane %v2319, 5
        %v3157 = vsel %vm1483, %v3155, %v3156
        %v3158 = vrot.slane %v3064, 5
        %v3159 = vrot.slane %v3158, 4
        %v3160 = vrot.slane %v2321, 5
        %v3161 = vsel %vm1483, %v3159, %v3160
        %v3162 = vrot.slane %v3160, 4
        %v3163 = vrot.slane %v2322, 5
        %v3164 = vsel %vm1483, %v3162, %v3163
        %v3165 = vrot.slane %v3065, 5
        %v3166 = vrot.slane %v3165, 4
        %v3167 = vrot.slane %v2324, 5
        %v3168 = vsel %vm1483, %v3166, %v3167
        %v3169 = vrot.slane %v3167, 4
        %v3170 = vrot.slane %v2325, 5
        %v3171 = vsel %vm1483, %v3169, %v3170
        %v3172 = vrot.slane %v3066, 5
        %v3173 = vrot.slane %v3172, 4
        %v3174 = vrot.slane %v2327, 5
        %v3175 = vsel %vm1483, %v3173, %v3174
        %v3176 = vrot.slane %v3174, 4
        %v3177 = vrot.slane %v2328, 5
        %v3178 = vsel %vm1483, %v3176, %v3177
        %v3179 = vrot.slane %v3067, 5
        %v3180 = vrot.slane %v3179, 4
        %v3181 = vrot.slane %v2330, 5
        %v3182 = vsel %vm1483, %v3180, %v3181
        %v3183 = vrot.slane %v3181, 4
        %v3184 = vrot.slane %v2331, 5
        %v3185 = vsel %vm1483, %v3183, %v3184
        %v3186 = vrot.slane %v3068, 5
        %v3187 = vrot.slane %v3186, 4
        %v3188 = vrot.slane %v2333, 5
        %v3189 = vsel %vm1483, %v3187, %v3188
        %v3190 = vrot.slane %v3188, 4
        %v3191 = vrot.slane %v2334, 5
        %v3192 = vsel %vm1483, %v3190, %v3191
        %v3193 = vrot.slane %v3069, 5
        %v3194 = vrot.slane %v3193, 4
        %v3195 = vrot.slane %v2336, 5
        %v3196 = vsel %vm1483, %v3194, %v3195
        %v3197 = vrot.slane %v3195, 4
        %v3198 = vrot.slane %v2337, 5
        %v3199 = vsel %vm1483, %v3197, %v3198
        %v3200 = vrot.slane %v3070, 5
        %v3201 = vrot.slane %v3200, 4
        %v3202 = vrot.slane %v2339, 5
        %v3203 = vsel %vm1483, %v3201, %v3202
        %v3204 = vrot.slane %v3202, 4
        %v3205 = vrot.slane %v2340, 5
        %v3206 = vsel %vm1483, %v3204, %v3205
        %v3207 = vrot.slane %v3071, 5
        %v3208 = vrot.slane %v3207, 4
        %v3209 = vrot.slane %v2342, 5
        %v3210 = vsel %vm1483, %v3208, %v3209
        %v3211 = vrot.slane %v3209, 4
        %v3212 = vrot.slane %v2343, 5
        %v3213 = vsel %vm1483, %v3211, %v3212
        %v3214 = vrot.slane %v3072, 5
        %v3215 = vrot.slane %v3214, 4
        %v3216 = vrot.slane %v2345, 5
        %v3217 = vsel %vm1483, %v3215, %v3216
        %v3218 = vrot.slane %v3216, 4
        %v3219 = vrot.slane %v2346, 5
        %v3220 = vsel %vm1483, %v3218, %v3219
        %v3221 = vrot.slane %v3073, 5
        %v3222 = vrot.slane %v3221, 4
        %v3223 = vrot.slane %v2348, 5
        %v3224 = vsel %vm1483, %v3222, %v3223
        %v3225 = vrot.slane %v3223, 4
        %v3226 = vrot.slane %v2349, 5
        %v3227 = vsel %vm1483, %v3225, %v3226
        %v3228 = vrot.slane %v3074, 5
        %v3229 = vrot.slane %v3228, 4
        %v3230 = vrot.slane %v2351, 5
        %v3231 = vsel %vm1483, %v3229, %v3230
        %v3232 = vrot.slane %v3230, 4
        %v3233 = vrot.slane %v2352, 5
        %v3234 = vsel %vm1483, %v3232, %v3233
        %s3235 = scalar_lea.vmem %s1, 320
        %v3236 = vld [vmem:[%s3235] sm:$0xf]
        %v3237 = vld [vmem:[%s3235 + $0x4] sm:$0xf]
        %v3238 = vld [vmem:[%s3235 + $0x8] sm:$0xf]
        %v3239 = vld [vmem:[%s3235 + $0xc] sm:$0xf]
        %v3240 = vld [vmem:[%s3235 + $0x10] sm:$0xf]
        %v3241 = vld [vmem:[%s3235 + $0x14] sm:$0xf]
        %v3242 = vld [vmem:[%s3235 + $0x18] sm:$0xf]
        %v3243 = vld [vmem:[%s3235 + $0x1c] sm:$0xf]
        %v3244 = vld [vmem:[%s3235 + $0x20] sm:$0xf]
        %v3245 = vld [vmem:[%s3235 + $0x24] sm:$0xf]
        %v3246 = vld [vmem:[%s3235 + $0x28] sm:$0xf]
        %v3247 = vld [vmem:[%s3235 + $0x2c] sm:$0xf]
        %v3248 = vld [vmem:[%s3235 + $0x30] sm:$0xf]
        %v3249 = vld [vmem:[%s3235 + $0x34] sm:$0xf]
        %v3250 = vld [vmem:[%s3235 + $0x38] sm:$0xf]
        %v3251 = vld [vmem:[%s3235 + $0x3c] sm:$0xf]
        %v3252 = vunpack.c.l.b16 %v3126
        %v3253 = vunpack.c.l.b16 %v3129
        %v3254 = vunpack.c.l.b16 %v3133
        %v3255 = vunpack.c.l.b16 %v3136
        %v3256 = vunpack.c.l.b16 %v3140
        %v3257 = vunpack.c.l.b16 %v3143
        %v3258 = vunpack.c.l.b16 %v3147
        %v3259 = vunpack.c.l.b16 %v3150
        %v3260 = vunpack.c.l.b16 %v3154
        %v3261 = vunpack.c.l.b16 %v3157
        %v3262 = vunpack.c.l.b16 %v3161
        %v3263 = vunpack.c.l.b16 %v3164
        %v3264 = vunpack.c.l.b16 %v3168
        %v3265 = vunpack.c.l.b16 %v3171
        %v3266 = vunpack.c.l.b16 %v3175
        %v3267 = vunpack.c.l.b16 %v3178
        %v3268 = vunpack.c.l.b16 %v3182
        %v3269 = vunpack.c.l.b16 %v3185
        %v3270 = vunpack.c.l.b16 %v3189
        %v3271 = vunpack.c.l.b16 %v3192
        %v3272 = vunpack.c.l.b16 %v3196
        %v3273 = vunpack.c.l.b16 %v3199
        %v3274 = vunpack.c.l.b16 %v3203
        %v3275 = vunpack.c.l.b16 %v3206
        %v3276 = vunpack.c.l.b16 %v3210
        %v3277 = vunpack.c.l.b16 %v3213
        %v3278 = vunpack.c.l.b16 %v3217
        %v3279 = vunpack.c.l.b16 %v3220
        %v3280 = vunpack.c.l.b16 %v3224
        %v3281 = vunpack.c.l.b16 %v3227
        %v3282 = vunpack.c.l.b16 %v3231
        %v3283 = vunpack.c.l.b16 %v3234
        %v3284 = vpack.c.b16 %v3253, %v3252
        %v3285 = vpack.c.b16 %v3255, %v3254
        %v3286 = vpack.c.b16 %v3257, %v3256
        %v3287 = vpack.c.b16 %v3259, %v3258
        %v3288 = vpack.c.b16 %v3261, %v3260
        %v3289 = vpack.c.b16 %v3263, %v3262
        %v3290 = vpack.c.b16 %v3265, %v3264
        %v3291 = vpack.c.b16 %v3267, %v3266
        %v3292 = vpack.c.b16 %v3269, %v3268
        %v3293 = vpack.c.b16 %v3271, %v3270
        %v3294 = vpack.c.b16 %v3273, %v3272
        %v3295 = vpack.c.b16 %v3275, %v3274
        %v3296 = vpack.c.b16 %v3277, %v3276
        %v3297 = vpack.c.b16 %v3279, %v3278
        %v3298 = vpack.c.b16 %v3281, %v3280
        %v3299 = vpack.c.b16 %v3283, %v3282
        %v3332 = vunpack.c.l.b16 %v3236
        %v3333 = vunpack.c.l.b16 %v3237
        %v3334 = vunpack.c.l.b16 %v3238
        %v3335 = vunpack.c.l.b16 %v3239
        %v3336 = vunpack.c.l.b16 %v3240
        %v3337 = vunpack.c.l.b16 %v3241
        %v3338 = vunpack.c.l.b16 %v3242
        %v3339 = vunpack.c.l.b16 %v3243
        %v3340 = vunpack.c.l.b16 %v3244
        %v3341 = vunpack.c.l.b16 %v3245
        %v3342 = vunpack.c.l.b16 %v3246
        %v3343 = vunpack.c.l.b16 %v3247
        %v3344 = vunpack.c.l.b16 %v3248
        %v3345 = vunpack.c.l.b16 %v3249
        %v3346 = vunpack.c.l.b16 %v3250
        %v3347 = vunpack.c.l.b16 %v3251
        %v3348 = vpack.c.b16 %v3333, %v3332
        %v3349 = vpack.c.b16 %v3335, %v3334
        %v3350 = vpack.c.b16 %v3337, %v3336
        %v3351 = vpack.c.b16 %v3339, %v3338
        %v3352 = vpack.c.b16 %v3341, %v3340
        %v3353 = vpack.c.b16 %v3343, %v3342
        %v3354 = vpack.c.b16 %v3345, %v3344
        %v3355 = vpack.c.b16 %v3347, %v3346
        %3364 = vmatprep.subr.bf16.mxu0 0
        %3365 = vmatpush1.bf16.msra.mxu0 %v3355
        %3366 = vmatprep.subr.bf16.mxu0 0
        %3367 = vmatpush1.bf16.msra.mxu0 %v3354
        %3368 = vmatprep.subr.bf16.mxu0 0
        %3369 = vmatpush1.bf16.msra.mxu0 %v3353
        %3370 = vmatprep.subr.bf16.mxu0 0
        %3371 = vmatpush1.bf16.msra.mxu0 %v3352
        %3372 = vmatprep.subr.bf16.mxu0 0
        %3373 = vmatpush1.bf16.msra.mxu0 %v3351
        %3374 = vmatprep.subr.bf16.mxu0 0
        %3375 = vmatpush1.bf16.msra.mxu0 %v3350
        %3376 = vmatprep.subr.bf16.mxu0 0
        %3377 = vmatpush1.bf16.msra.mxu0 %v3349
        %3378 = vmatprep.subr.bf16.mxu0 0
        %3379 = vmatpush1.bf16.msra.mxu0 %v3348
        %3380 = vmatprep.subr.bf16.mxu0 0
        %3381 = vmatpush2.bf16.msra.mxu0 0
        %3382 = vmatprep.subr.bf16.mxu0 0
        %3383 = vmatpush2.bf16.msra.mxu0 0
        %3384 = vmatprep.subr.bf16.mxu0 0
        %3385 = vmatpush2.bf16.msra.mxu0 0
        %3386 = vmatprep.subr.bf16.mxu0 0
        %3387 = vmatpush2.bf16.msra.mxu0 0
        %3388 = vmatprep.subr.bf16.mxu0 0
        %3389 = vmatpush2.bf16.msra.mxu0 0
        %3390 = vmatprep.subr.bf16.mxu0 0
        %3391 = vmatpush2.bf16.msra.mxu0 0
        %3392 = vmatprep.subr.bf16.mxu0 0
        %3393 = vmatpush2.bf16.msra.mxu0 0
        %3394 = vmatprep.subr.bf16.mxu0 0
        %3395 = vmatpush2.bf16.msra.mxu0 0
        %3396 = vmatprep.mubr.bf16.mxu0 0
        %3397 = vmatmul.mubr.bf16.gmra.mxu0 %v3284
        %v3398 = vpop.f32.mrf.mxu0
        %v3399 = vadd.f32 0.0, %v3398
        %v3400 = vpop.f32.mrf.mxu0
        %v3401 = vpop.f32.mrf.mxu0
        %v3402 = vadd.f32 0.0, %v3401
        %v3403 = vpop.f32.mrf.mxu0
        %3404 = vmatprep.mubr.bf16.mxu0 0
        %3405 = vmatmul.mubr.bf16.gmra.mxu0 %v3285
        %v3406 = vpop.f32.mrf.mxu0
        %v3407 = vadd.f32 0.0, %v3406
        %v3408 = vpop.f32.mrf.mxu0
        %v3409 = vpop.f32.mrf.mxu0
        %v3410 = vadd.f32 0.0, %v3409
        %v3411 = vpop.f32.mrf.mxu0
        %3412 = vmatprep.mubr.bf16.mxu0 0
        %3413 = vmatmul.mubr.bf16.gmra.mxu0 %v3286
        %v3414 = vpop.f32.mrf.mxu0
        %v3415 = vadd.f32 0.0, %v3414
        %v3416 = vpop.f32.mrf.mxu0
        %v3417 = vpop.f32.mrf.mxu0
        %v3418 = vadd.f32 0.0, %v3417
        %v3419 = vpop.f32.mrf.mxu0
        %3420 = vmatprep.mubr.bf16.mxu0 0
        %3421 = vmatmul.mubr.bf16.gmra.mxu0 %v3287
        %v3422 = vpop.f32.mrf.mxu0
        %v3423 = vadd.f32 0.0, %v3422
        %v3424 = vpop.f32.mrf.mxu0
        %v3425 = vpop.f32.mrf.mxu0
        %v3426 = vadd.f32 0.0, %v3425
        %v3427 = vpop.f32.mrf.mxu0
        %3428 = vmatprep.mubr.bf16.mxu0 0
        %3429 = vmatmul.mubr.bf16.gmra.mxu0 %v3288
        %v3430 = vpop.f32.mrf.mxu0
        %v3431 = vadd.f32 0.0, %v3430
        %v3432 = vpop.f32.mrf.mxu0
        %v3433 = vpop.f32.mrf.mxu0
        %v3434 = vadd.f32 0.0, %v3433
        %v3435 = vpop.f32.mrf.mxu0
        %3436 = vmatprep.mubr.bf16.mxu0 0
        %3437 = vmatmul.mubr.bf16.gmra.mxu0 %v3289
        %v3438 = vpop.f32.mrf.mxu0
        %v3439 = vadd.f32 0.0, %v3438
        %v3440 = vpop.f32.mrf.mxu0
        %v3441 = vpop.f32.mrf.mxu0
        %v3442 = vadd.f32 0.0, %v3441
        %v3443 = vpop.f32.mrf.mxu0
        %3444 = vmatprep.mubr.bf16.mxu0 0
        %3445 = vmatmul.mubr.bf16.gmra.mxu0 %v3290
        %v3446 = vpop.f32.mrf.mxu0
        %v3447 = vadd.f32 0.0, %v3446
        %v3448 = vpop.f32.mrf.mxu0
        %v3449 = vpop.f32.mrf.mxu0
        %v3450 = vadd.f32 0.0, %v3449
        %v3451 = vpop.f32.mrf.mxu0
        %3452 = vmatprep.mubr.bf16.mxu0 0
        %3453 = vmatmul.mubr.bf16.gmra.mxu0 %v3291
        %v3454 = vpop.f32.mrf.mxu0
        %v3455 = vadd.f32 0.0, %v3454
        %v3456 = vpop.f32.mrf.mxu0
        %v3457 = vpop.f32.mrf.mxu0
        %v3458 = vadd.f32 0.0, %v3457
        %v3459 = vpop.f32.mrf.mxu0
        %3460 = vmatprep.mubr.bf16.mxu0 0
        %3461 = vmatmul.mubr.bf16.gmra.mxu0 %v3292
        %v3462 = vpop.f32.mrf.mxu0
        %v3463 = vadd.f32 0.0, %v3462
        %v3464 = vpop.f32.mrf.mxu0
        %v3465 = vpop.f32.mrf.mxu0
        %v3466 = vadd.f32 0.0, %v3465
        %v3467 = vpop.f32.mrf.mxu0
        %3468 = vmatprep.mubr.bf16.mxu0 0
        %3469 = vmatmul.mubr.bf16.gmra.mxu0 %v3293
        %v3470 = vpop.f32.mrf.mxu0
        %v3471 = vadd.f32 0.0, %v3470
        %v3472 = vpop.f32.mrf.mxu0
        %v3473 = vpop.f32.mrf.mxu0
        %v3474 = vadd.f32 0.0, %v3473
        %v3475 = vpop.f32.mrf.mxu0
        %3476 = vmatprep.mubr.bf16.mxu0 0
        %3477 = vmatmul.mubr.bf16.gmra.mxu0 %v3294
        %v3478 = vpop.f32.mrf.mxu0
        %v3479 = vadd.f32 0.0, %v3478
        %v3480 = vpop.f32.mrf.mxu0
        %v3481 = vpop.f32.mrf.mxu0
        %v3482 = vadd.f32 0.0, %v3481
        %v3483 = vpop.f32.mrf.mxu0
        %3484 = vmatprep.mubr.bf16.mxu0 0
        %3485 = vmatmul.mubr.bf16.gmra.mxu0 %v3295
        %v3486 = vpop.f32.mrf.mxu0
        %v3487 = vadd.f32 0.0, %v3486
        %v3488 = vpop.f32.mrf.mxu0
        %v3489 = vpop.f32.mrf.mxu0
        %v3490 = vadd.f32 0.0, %v3489
        %v3491 = vpop.f32.mrf.mxu0
        %3492 = vmatprep.mubr.bf16.mxu0 0
        %3493 = vmatmul.mubr.bf16.gmra.mxu0 %v3296
        %v3494 = vpop.f32.mrf.mxu0
        %v3495 = vadd.f32 0.0, %v3494
        %v3496 = vpop.f32.mrf.mxu0
        %v3497 = vpop.f32.mrf.mxu0
        %v3498 = vadd.f32 0.0, %v3497
        %v3499 = vpop.f32.mrf.mxu0
        %3500 = vmatprep.mubr.bf16.mxu0 0
        %3501 = vmatmul.mubr.bf16.gmra.mxu0 %v3297
        %v3502 = vpop.f32.mrf.mxu0
        %v3503 = vadd.f32 0.0, %v3502
        %v3504 = vpop.f32.mrf.mxu0
        %v3505 = vpop.f32.mrf.mxu0
        %v3506 = vadd.f32 0.0, %v3505
        %v3507 = vpop.f32.mrf.mxu0
        %3508 = vmatprep.mubr.bf16.mxu0 0
        %3509 = vmatmul.mubr.bf16.gmra.mxu0 %v3298
        %v3510 = vpop.f32.mrf.mxu0
        %v3511 = vadd.f32 0.0, %v3510
        %v3512 = vpop.f32.mrf.mxu0
        %v3513 = vpop.f32.mrf.mxu0
        %v3514 = vadd.f32 0.0, %v3513
        %v3515 = vpop.f32.mrf.mxu0
        %3516 = vmatprep.mubr.bf16.mxu0 0
        %3517 = vmatmul.mubr.bf16.gmra.mxu0 %v3299
        %v3518 = vpop.f32.mrf.mxu0
        %v3519 = vadd.f32 0.0, %v3518
        %v3520 = vpop.f32.mrf.mxu0
        %v3521 = vpop.f32.mrf.mxu0
        %v3522 = vadd.f32 0.0, %v3521
        %v3523 = vpop.f32.mrf.mxu0
        %3524 = vdwg.mxu0
        %v3525 = vadd.f32 %v3027, %v3399
        %v3526 = vadd.f32 %v3028, %v3402
        %v3527 = vadd.f32 %v3029, %v3407
        %v3528 = vadd.f32 %v3030, %v3410
        %v3529 = vadd.f32 %v3031, %v3415
        %v3530 = vadd.f32 %v3032, %v3418
        %v3531 = vadd.f32 %v3033, %v3423
        %v3532 = vadd.f32 %v3034, %v3426
        %v3533 = vadd.f32 %v3035, %v3431
        %v3534 = vadd.f32 %v3036, %v3434
        %v3535 = vadd.f32 %v3037, %v3439
        %v3536 = vadd.f32 %v3038, %v3442
        %v3537 = vadd.f32 %v3039, %v3447
        %v3538 = vadd.f32 %v3040, %v3450
        %v3539 = vadd.f32 %v3041, %v3455
        %v3540 = vadd.f32 %v3042, %v3458
        %v3541 = vadd.f32 %v3043, %v3463
        %v3542 = vadd.f32 %v3044, %v3466
        %v3543 = vadd.f32 %v3045, %v3471
        %v3544 = vadd.f32 %v3046, %v3474
        %v3545 = vadd.f32 %v3047, %v3479
        %v3546 = vadd.f32 %v3048, %v3482
        %v3547 = vadd.f32 %v3049, %v3487
        %v3548 = vadd.f32 %v3050, %v3490
        %v3549 = vadd.f32 %v3051, %v3495
        %v3550 = vadd.f32 %v3052, %v3498
        %v3551 = vadd.f32 %v3053, %v3503
        %v3552 = vadd.f32 %v3054, %v3506
        %v3553 = vadd.f32 %v3055, %v3511
        %v3554 = vadd.f32 %v3056, %v3514
        %v3555 = vadd.f32 %v3057, %v3519
        %v3556 = vadd.f32 %v3058, %v3522
        %s3557 = scalar_lea.vmem %s380, 24
        %v3558 = vld [vmem:[%s3557] sm:$0xf]
        %v3559 = vld [vmem:[%s3557 + $0x4] sm:$0xf]
        %v3560 = vld [vmem:[%s3557 + $0xc] sm:$0xf]
        %v3561 = vld [vmem:[%s3557 + $0x10] sm:$0xf]
        %v3562 = vld [vmem:[%s3557 + $0x18] sm:$0xf]
        %v3563 = vld [vmem:[%s3557 + $0x1c] sm:$0xf]
        %v3564 = vld [vmem:[%s3557 + $0x24] sm:$0xf]
        %v3565 = vld [vmem:[%s3557 + $0x28] sm:$0xf]
        %v3566 = vld [vmem:[%s3557 + $0x30] sm:$0xf]
        %v3567 = vld [vmem:[%s3557 + $0x34] sm:$0xf]
        %v3568 = vld [vmem:[%s3557 + $0x3c] sm:$0xf]
        %v3569 = vld [vmem:[%s3557 + $0x40] sm:$0xf]
        %v3570 = vld [vmem:[%s3557 + $0x48] sm:$0xf]
        %v3571 = vld [vmem:[%s3557 + $0x4c] sm:$0xf]
        %v3572 = vld [vmem:[%s3557 + $0x54] sm:$0xf]
        %v3573 = vld [vmem:[%s3557 + $0x58] sm:$0xf]
        %v3574 = vld [vmem:[%s3557 + $0x60] sm:$0xf]
        %v3575 = vld [vmem:[%s3557 + $0x64] sm:$0xf]
        %v3576 = vld [vmem:[%s3557 + $0x6c] sm:$0xf]
        %v3577 = vld [vmem:[%s3557 + $0x70] sm:$0xf]
        %v3578 = vld [vmem:[%s3557 + $0x78] sm:$0xf]
        %v3579 = vld [vmem:[%s3557 + $0x7c] sm:$0xf]
        %v3580 = vld [vmem:[%s3557 + $0x84] sm:$0xf]
        %v3581 = vld [vmem:[%s3557 + $0x88] sm:$0xf]
        %v3582 = vld [vmem:[%s3557 + $0x90] sm:$0xf]
        %v3583 = vld [vmem:[%s3557 + $0x94] sm:$0xf]
        %v3584 = vld [vmem:[%s3557 + $0x9c] sm:$0xf]
        %v3585 = vld [vmem:[%s3557 + $0xa0] sm:$0xf]
        %v3586 = vld [vmem:[%s3557 + $0xa8] sm:$0xf]
        %v3587 = vld [vmem:[%s3557 + $0xac] sm:$0xf]
        %v3588 = vld [vmem:[%s3557 + $0xb4] sm:$0xf]
        %v3589 = vld [vmem:[%s3557 + $0xb8] sm:$0xf]
        %s3590 = scalar_lea.vmem %s1, 384
        %v3591 = vld [vmem:[%s3590] sm:$0xf]
        %v3592 = vld [vmem:[%s3590 + $0x4] sm:$0xf]
        %v3593 = vld [vmem:[%s3590 + $0x8] sm:$0xf]
        %v3594 = vld [vmem:[%s3590 + $0xc] sm:$0xf]
        %v3595 = vld [vmem:[%s3590 + $0x10] sm:$0xf]
        %v3596 = vld [vmem:[%s3590 + $0x14] sm:$0xf]
        %v3597 = vld [vmem:[%s3590 + $0x18] sm:$0xf]
        %v3598 = vld [vmem:[%s3590 + $0x1c] sm:$0xf]
        %v3599 = vld [vmem:[%s3590 + $0x20] sm:$0xf]
        %v3600 = vld [vmem:[%s3590 + $0x24] sm:$0xf]
        %v3601 = vld [vmem:[%s3590 + $0x28] sm:$0xf]
        %v3602 = vld [vmem:[%s3590 + $0x2c] sm:$0xf]
        %v3603 = vld [vmem:[%s3590 + $0x30] sm:$0xf]
        %v3604 = vld [vmem:[%s3590 + $0x34] sm:$0xf]
        %v3605 = vld [vmem:[%s3590 + $0x38] sm:$0xf]
        %v3606 = vld [vmem:[%s3590 + $0x3c] sm:$0xf]
        %v3639 = vunpack.c.l.b16 %v3558
        %v3640 = vunpack.c.l.b16 %v3559
        %v3641 = vunpack.c.l.b16 %v3560
        %v3642 = vunpack.c.l.b16 %v3561
        %v3643 = vunpack.c.l.b16 %v3562
        %v3644 = vunpack.c.l.b16 %v3563
        %v3645 = vunpack.c.l.b16 %v3564
        %v3646 = vunpack.c.l.b16 %v3565
        %v3647 = vunpack.c.l.b16 %v3566
        %v3648 = vunpack.c.l.b16 %v3567
        %v3649 = vunpack.c.l.b16 %v3568
        %v3650 = vunpack.c.l.b16 %v3569
        %v3651 = vunpack.c.l.b16 %v3570
        %v3652 = vunpack.c.l.b16 %v3571
        %v3653 = vunpack.c.l.b16 %v3572
        %v3654 = vunpack.c.l.b16 %v3573
        %v3655 = vunpack.c.l.b16 %v3574
        %v3656 = vunpack.c.l.b16 %v3575
        %v3657 = vunpack.c.l.b16 %v3576
        %v3658 = vunpack.c.l.b16 %v3577
        %v3659 = vunpack.c.l.b16 %v3578
        %v3660 = vunpack.c.l.b16 %v3579
        %v3661 = vunpack.c.l.b16 %v3580
        %v3662 = vunpack.c.l.b16 %v3581
        %v3663 = vunpack.c.l.b16 %v3582
        %v3664 = vunpack.c.l.b16 %v3583
        %v3665 = vunpack.c.l.b16 %v3584
        %v3666 = vunpack.c.l.b16 %v3585
        %v3667 = vunpack.c.l.b16 %v3586
        %v3668 = vunpack.c.l.b16 %v3587
        %v3669 = vunpack.c.l.b16 %v3588
        %v3670 = vunpack.c.l.b16 %v3589
        %v3671 = vpack.c.b16 %v3640, %v3639
        %v3672 = vpack.c.b16 %v3642, %v3641
        %v3673 = vpack.c.b16 %v3644, %v3643
        %v3674 = vpack.c.b16 %v3646, %v3645
        %v3675 = vpack.c.b16 %v3648, %v3647
        %v3676 = vpack.c.b16 %v3650, %v3649
        %v3677 = vpack.c.b16 %v3652, %v3651
        %v3678 = vpack.c.b16 %v3654, %v3653
        %v3679 = vpack.c.b16 %v3656, %v3655
        %v3680 = vpack.c.b16 %v3658, %v3657
        %v3681 = vpack.c.b16 %v3660, %v3659
        %v3682 = vpack.c.b16 %v3662, %v3661
        %v3683 = vpack.c.b16 %v3664, %v3663
        %v3684 = vpack.c.b16 %v3666, %v3665
        %v3685 = vpack.c.b16 %v3668, %v3667
        %v3686 = vpack.c.b16 %v3670, %v3669
        %v3719 = vunpack.c.l.b16 %v3591
        %v3720 = vunpack.c.l.b16 %v3592
        %v3721 = vunpack.c.l.b16 %v3593
        %v3722 = vunpack.c.l.b16 %v3594
        %v3723 = vunpack.c.l.b16 %v3595
        %v3724 = vunpack.c.l.b16 %v3596
        %v3725 = vunpack.c.l.b16 %v3597
        %v3726 = vunpack.c.l.b16 %v3598
        %v3727 = vunpack.c.l.b16 %v3599
        %v3728 = vunpack.c.l.b16 %v3600
        %v3729 = vunpack.c.l.b16 %v3601
        %v3730 = vunpack.c.l.b16 %v3602
        %v3731 = vunpack.c.l.b16 %v3603
        %v3732 = vunpack.c.l.b16 %v3604
        %v3733 = vunpack.c.l.b16 %v3605
        %v3734 = vunpack.c.l.b16 %v3606
        %v3735 = vpack.c.b16 %v3720, %v3719
        %v3736 = vpack.c.b16 %v3722, %v3721
        %v3737 = vpack.c.b16 %v3724, %v3723
        %v3738 = vpack.c.b16 %v3726, %v3725
        %v3739 = vpack.c.b16 %v3728, %v3727
        %v3740 = vpack.c.b16 %v3730, %v3729
        %v3741 = vpack.c.b16 %v3732, %v3731
        %v3742 = vpack.c.b16 %v3734, %v3733
        %3751 = vmatprep.subr.bf16.mxu0 0
        %3752 = vmatpush1.bf16.msra.mxu0 %v3742
        %3753 = vmatprep.subr.bf16.mxu0 0
        %3754 = vmatpush1.bf16.msra.mxu0 %v3741
        %3755 = vmatprep.subr.bf16.mxu0 0
        %3756 = vmatpush1.bf16.msra.mxu0 %v3740
        %3757 = vmatprep.subr.bf16.mxu0 0
        %3758 = vmatpush1.bf16.msra.mxu0 %v3739
        %3759 = vmatprep.subr.bf16.mxu0 0
        %3760 = vmatpush1.bf16.msra.mxu0 %v3738
        %3761 = vmatprep.subr.bf16.mxu0 0
        %3762 = vmatpush1.bf16.msra.mxu0 %v3737
        %3763 = vmatprep.subr.bf16.mxu0 0
        %3764 = vmatpush1.bf16.msra.mxu0 %v3736
        %3765 = vmatprep.subr.bf16.mxu0 0
        %3766 = vmatpush1.bf16.msra.mxu0 %v3735
        %3767 = vmatprep.subr.bf16.mxu0 0
        %3768 = vmatpush2.bf16.msra.mxu0 0
        %3769 = vmatprep.subr.bf16.mxu0 0
        %3770 = vmatpush2.bf16.msra.mxu0 0
        %3771 = vmatprep.subr.bf16.mxu0 0
        %3772 = vmatpush2.bf16.msra.mxu0 0
        %3773 = vmatprep.subr.bf16.mxu0 0
        %3774 = vmatpush2.bf16.msra.mxu0 0
        %3775 = vmatprep.subr.bf16.mxu0 0
        %3776 = vmatpush2.bf16.msra.mxu0 0
        %3777 = vmatprep.subr.bf16.mxu0 0
        %3778 = vmatpush2.bf16.msra.mxu0 0
        %3779 = vmatprep.subr.bf16.mxu0 0
        %3780 = vmatpush2.bf16.msra.mxu0 0
        %3781 = vmatprep.subr.bf16.mxu0 0
        %3782 = vmatpush2.bf16.msra.mxu0 0
        %3783 = vmatprep.mubr.bf16.mxu0 0
        %3784 = vmatmul.mubr.bf16.gmra.mxu0 %v3671
        %v3785 = vpop.f32.mrf.mxu0
        %v3786 = vadd.f32 0.0, %v3785
        %v3787 = vpop.f32.mrf.mxu0
        %v3788 = vpop.f32.mrf.mxu0
        %v3789 = vadd.f32 0.0, %v3788
        %v3790 = vpop.f32.mrf.mxu0
        %3791 = vmatprep.mubr.bf16.mxu0 0
        %3792 = vmatmul.mubr.bf16.gmra.mxu0 %v3672
        %v3793 = vpop.f32.mrf.mxu0
        %v3794 = vadd.f32 0.0, %v3793
        %v3795 = vpop.f32.mrf.mxu0
        %v3796 = vpop.f32.mrf.mxu0
        %v3797 = vadd.f32 0.0, %v3796
        %v3798 = vpop.f32.mrf.mxu0
        %3799 = vmatprep.mubr.bf16.mxu0 0
        %3800 = vmatmul.mubr.bf16.gmra.mxu0 %v3673
        %v3801 = vpop.f32.mrf.mxu0
        %v3802 = vadd.f32 0.0, %v3801
        %v3803 = vpop.f32.mrf.mxu0
        %v3804 = vpop.f32.mrf.mxu0
        %v3805 = vadd.f32 0.0, %v3804
        %v3806 = vpop.f32.mrf.mxu0
        %3807 = vmatprep.mubr.bf16.mxu0 0
        %3808 = vmatmul.mubr.bf16.gmra.mxu0 %v3674
        %v3809 = vpop.f32.mrf.mxu0
        %v3810 = vadd.f32 0.0, %v3809
        %v3811 = vpop.f32.mrf.mxu0
        %v3812 = vpop.f32.mrf.mxu0
        %v3813 = vadd.f32 0.0, %v3812
        %v3814 = vpop.f32.mrf.mxu0
        %3815 = vmatprep.mubr.bf16.mxu0 0
        %3816 = vmatmul.mubr.bf16.gmra.mxu0 %v3675
        %v3817 = vpop.f32.mrf.mxu0
        %v3818 = vadd.f32 0.0, %v3817
        %v3819 = vpop.f32.mrf.mxu0
        %v3820 = vpop.f32.mrf.mxu0
        %v3821 = vadd.f32 0.0, %v3820
        %v3822 = vpop.f32.mrf.mxu0
        %3823 = vmatprep.mubr.bf16.mxu0 0
        %3824 = vmatmul.mubr.bf16.gmra.mxu0 %v3676
        %v3825 = vpop.f32.mrf.mxu0
        %v3826 = vadd.f32 0.0, %v3825
        %v3827 = vpop.f32.mrf.mxu0
        %v3828 = vpop.f32.mrf.mxu0
        %v3829 = vadd.f32 0.0, %v3828
        %v3830 = vpop.f32.mrf.mxu0
        %3831 = vmatprep.mubr.bf16.mxu0 0
        %3832 = vmatmul.mubr.bf16.gmra.mxu0 %v3677
        %v3833 = vpop.f32.mrf.mxu0
        %v3834 = vadd.f32 0.0, %v3833
        %v3835 = vpop.f32.mrf.mxu0
        %v3836 = vpop.f32.mrf.mxu0
        %v3837 = vadd.f32 0.0, %v3836
        %v3838 = vpop.f32.mrf.mxu0
        %3839 = vmatprep.mubr.bf16.mxu0 0
        %3840 = vmatmul.mubr.bf16.gmra.mxu0 %v3678
        %v3841 = vpop.f32.mrf.mxu0
        %v3842 = vadd.f32 0.0, %v3841
        %v3843 = vpop.f32.mrf.mxu0
        %v3844 = vpop.f32.mrf.mxu0
        %v3845 = vadd.f32 0.0, %v3844
        %v3846 = vpop.f32.mrf.mxu0
        %3847 = vmatprep.mubr.bf16.mxu0 0
        %3848 = vmatmul.mubr.bf16.gmra.mxu0 %v3679
        %v3849 = vpop.f32.mrf.mxu0
        %v3850 = vadd.f32 0.0, %v3849
        %v3851 = vpop.f32.mrf.mxu0
        %v3852 = vpop.f32.mrf.mxu0
        %v3853 = vadd.f32 0.0, %v3852
        %v3854 = vpop.f32.mrf.mxu0
        %3855 = vmatprep.mubr.bf16.mxu0 0
        %3856 = vmatmul.mubr.bf16.gmra.mxu0 %v3680
        %v3857 = vpop.f32.mrf.mxu0
        %v3858 = vadd.f32 0.0, %v3857
        %v3859 = vpop.f32.mrf.mxu0
        %v3860 = vpop.f32.mrf.mxu0
        %v3861 = vadd.f32 0.0, %v3860
        %v3862 = vpop.f32.mrf.mxu0
        %3863 = vmatprep.mubr.bf16.mxu0 0
        %3864 = vmatmul.mubr.bf16.gmra.mxu0 %v3681
        %v3865 = vpop.f32.mrf.mxu0
        %v3866 = vadd.f32 0.0, %v3865
        %v3867 = vpop.f32.mrf.mxu0
        %v3868 = vpop.f32.mrf.mxu0
        %v3869 = vadd.f32 0.0, %v3868
        %v3870 = vpop.f32.mrf.mxu0
        %3871 = vmatprep.mubr.bf16.mxu0 0
        %3872 = vmatmul.mubr.bf16.gmra.mxu0 %v3682
        %v3873 = vpop.f32.mrf.mxu0
        %v3874 = vadd.f32 0.0, %v3873
        %v3875 = vpop.f32.mrf.mxu0
        %v3876 = vpop.f32.mrf.mxu0
        %v3877 = vadd.f32 0.0, %v3876
        %v3878 = vpop.f32.mrf.mxu0
        %3879 = vmatprep.mubr.bf16.mxu0 0
        %3880 = vmatmul.mubr.bf16.gmra.mxu0 %v3683
        %v3881 = vpop.f32.mrf.mxu0
        %v3882 = vadd.f32 0.0, %v3881
        %v3883 = vpop.f32.mrf.mxu0
        %v3884 = vpop.f32.mrf.mxu0
        %v3885 = vadd.f32 0.0, %v3884
        %v3886 = vpop.f32.mrf.mxu0
        %3887 = vmatprep.mubr.bf16.mxu0 0
        %3888 = vmatmul.mubr.bf16.gmra.mxu0 %v3684
        %v3889 = vpop.f32.mrf.mxu0
        %v3890 = vadd.f32 0.0, %v3889
        %v3891 = vpop.f32.mrf.mxu0
        %v3892 = vpop.f32.mrf.mxu0
        %v3893 = vadd.f32 0.0, %v3892
        %v3894 = vpop.f32.mrf.mxu0
        %3895 = vmatprep.mubr.bf16.mxu0 0
        %3896 = vmatmul.mubr.bf16.gmra.mxu0 %v3685
        %v3897 = vpop.f32.mrf.mxu0
        %v3898 = vadd.f32 0.0, %v3897
        %v3899 = vpop.f32.mrf.mxu0
        %v3900 = vpop.f32.mrf.mxu0
        %v3901 = vadd.f32 0.0, %v3900
        %v3902 = vpop.f32.mrf.mxu0
        %3903 = vmatprep.mubr.bf16.mxu0 0
        %3904 = vmatmul.mubr.bf16.gmra.mxu0 %v3686
        %v3905 = vpop.f32.mrf.mxu0
        %v3906 = vadd.f32 0.0, %v3905
        %v3907 = vpop.f32.mrf.mxu0
        %v3908 = vpop.f32.mrf.mxu0
        %v3909 = vadd.f32 0.0, %v3908
        %v3910 = vpop.f32.mrf.mxu0
        %3911 = vdwg.mxu0
        %v3912 = vadd.f32 %v3525, %v3786
        %v3913 = vadd.f32 %v3526, %v3789
        %v3914 = vadd.f32 %v3527, %v3794
        %v3915 = vadd.f32 %v3528, %v3797
        %v3916 = vadd.f32 %v3529, %v3802
        %v3917 = vadd.f32 %v3530, %v3805
        %v3918 = vadd.f32 %v3531, %v3810
        %v3919 = vadd.f32 %v3532, %v3813
        %v3920 = vadd.f32 %v3533, %v3818
        %v3921 = vadd.f32 %v3534, %v3821
        %v3922 = vadd.f32 %v3535, %v3826
        %v3923 = vadd.f32 %v3536, %v3829
        %v3924 = vadd.f32 %v3537, %v3834
        %v3925 = vadd.f32 %v3538, %v3837
        %v3926 = vadd.f32 %v3539, %v3842
        %v3927 = vadd.f32 %v3540, %v3845
        %v3928 = vadd.f32 %v3541, %v3850
        %v3929 = vadd.f32 %v3542, %v3853
        %v3930 = vadd.f32 %v3543, %v3858
        %v3931 = vadd.f32 %v3544, %v3861
        %v3932 = vadd.f32 %v3545, %v3866
        %v3933 = vadd.f32 %v3546, %v3869
        %v3934 = vadd.f32 %v3547, %v3874
        %v3935 = vadd.f32 %v3548, %v3877
        %v3936 = vadd.f32 %v3549, %v3882
        %v3937 = vadd.f32 %v3550, %v3885
        %v3938 = vadd.f32 %v3551, %v3890
        %v3939 = vadd.f32 %v3552, %v3893
        %v3940 = vadd.f32 %v3553, %v3898
        %v3941 = vadd.f32 %v3554, %v3901
        %v3942 = vadd.f32 %v3555, %v3906
        %v3943 = vadd.f32 %v3556, %v3909
        %v3944 = vld [vmem:[%s3557] sm:$0xf]
        %v3945 = vld [vmem:[%s3557 + $0x4] sm:$0xf]
        %v3946 = vld [vmem:[%s3557 + $0x8] sm:$0x1]
        %v3947 = vld [vmem:[%s3557 + $0xc] sm:$0xf]
        %v3948 = vld [vmem:[%s3557 + $0x10] sm:$0xf]
        %v3949 = vld [vmem:[%s3557 + $0x14] sm:$0x1]
        %v3950 = vld [vmem:[%s3557 + $0x18] sm:$0xf]
        %v3951 = vld [vmem:[%s3557 + $0x1c] sm:$0xf]
        %v3952 = vld [vmem:[%s3557 + $0x20] sm:$0x1]
        %v3953 = vld [vmem:[%s3557 + $0x24] sm:$0xf]
        %v3954 = vld [vmem:[%s3557 + $0x28] sm:$0xf]
        %v3955 = vld [vmem:[%s3557 + $0x2c] sm:$0x1]
        %v3956 = vld [vmem:[%s3557 + $0x30] sm:$0xf]
        %v3957 = vld [vmem:[%s3557 + $0x34] sm:$0xf]
        %v3958 = vld [vmem:[%s3557 + $0x38] sm:$0x1]
        %v3959 = vld [vmem:[%s3557 + $0x3c] sm:$0xf]
        %v3960 = vld [vmem:[%s3557 + $0x40] sm:$0xf]
        %v3961 = vld [vmem:[%s3557 + $0x44] sm:$0x1]
        %v3962 = vld [vmem:[%s3557 + $0x48] sm:$0xf]
        %v3963 = vld [vmem:[%s3557 + $0x4c] sm:$0xf]
        %v3964 = vld [vmem:[%s3557 + $0x50] sm:$0x1]
        %v3965 = vld [vmem:[%s3557 + $0x54] sm:$0xf]
        %v3966 = vld [vmem:[%s3557 + $0x58] sm:$0xf]
        %v3967 = vld [vmem:[%s3557 + $0x5c] sm:$0x1]
        %v3968 = vld [vmem:[%s3557 + $0x60] sm:$0xf]
        %v3969 = vld [vmem:[%s3557 + $0x64] sm:$0xf]
        %v3970 = vld [vmem:[%s3557 + $0x68] sm:$0x1]
        %v3971 = vld [vmem:[%s3557 + $0x6c] sm:$0xf]
        %v3972 = vld [vmem:[%s3557 + $0x70] sm:$0xf]
        %v3973 = vld [vmem:[%s3557 + $0x74] sm:$0x1]
        %v3974 = vld [vmem:[%s3557 + $0x78] sm:$0xf]
        %v3975 = vld [vmem:[%s3557 + $0x7c] sm:$0xf]
        %v3976 = vld [vmem:[%s3557 + $0x80] sm:$0x1]
        %v3977 = vld [vmem:[%s3557 + $0x84] sm:$0xf]
        %v3978 = vld [vmem:[%s3557 + $0x88] sm:$0xf]
        %v3979 = vld [vmem:[%s3557 + $0x8c] sm:$0x1]
        %v3980 = vld [vmem:[%s3557 + $0x90] sm:$0xf]
        %v3981 = vld [vmem:[%s3557 + $0x94] sm:$0xf]
        %v3982 = vld [vmem:[%s3557 + $0x98] sm:$0x1]
        %v3983 = vld [vmem:[%s3557 + $0x9c] sm:$0xf]
        %v3984 = vld [vmem:[%s3557 + $0xa0] sm:$0xf]
        %v3985 = vld [vmem:[%s3557 + $0xa4] sm:$0x1]
        %v3986 = vld [vmem:[%s3557 + $0xa8] sm:$0xf]
        %v3987 = vld [vmem:[%s3557 + $0xac] sm:$0xf]
        %v3988 = vld [vmem:[%s3557 + $0xb0] sm:$0x1]
        %v3989 = vld [vmem:[%s3557 + $0xb4] sm:$0xf]
        %v3990 = vld [vmem:[%s3557 + $0xb8] sm:$0xf]
        %v3991 = vld [vmem:[%s3557 + $0xbc] sm:$0x1]
        %v3993 = vshrl.u32 %v3944, 16
        %v3995 = vrot.slane %v3993, 4
        %v3996 = vshll.u32 %v3944, 16
        %v3998 = vrot.slane %v3996, 5
        %v3999 = vor.u32 %v3995, %v3998
        %v4000 = vrot.slane %v3999, 4
        %v4002 = vshll.u32 %v3945, 16
        %v4004 = vrot.slane %v4002, 5
        %v4005 = vsel %vm453, %v4000, %v4004
        %v4006 = vshrl.u32 %v3945, 16
        %v4008 = vrot.slane %v4006, 4
        %v4009 = vor.u32 %v4008, %v4004
        %v4010 = vrot.slane %v4009, 4
        %v4012 = vshll.u32 %v3946, 16
        %v4014 = vrot.slane %v4012, 5
        %v4015 = vsel %vm453, %v4010, %v4014
        %v4017 = vshrl.u32 %v3947, 16
        %v4019 = vrot.slane %v4017, 4
        %v4020 = vshll.u32 %v3947, 16
        %v4022 = vrot.slane %v4020, 5
        %v4023 = vor.u32 %v4019, %v4022
        %v4024 = vrot.slane %v4023, 4
        %v4026 = vshll.u32 %v3948, 16
        %v4028 = vrot.slane %v4026, 5
        %v4029 = vsel %vm453, %v4024, %v4028
        %v4030 = vshrl.u32 %v3948, 16
        %v4032 = vrot.slane %v4030, 4
        %v4033 = vor.u32 %v4032, %v4028
        %v4034 = vrot.slane %v4033, 4
        %v4036 = vshll.u32 %v3949, 16
        %v4038 = vrot.slane %v4036, 5
        %v4039 = vsel %vm453, %v4034, %v4038
        %v4041 = vshrl.u32 %v3950, 16
        %v4043 = vrot.slane %v4041, 4
        %v4044 = vshll.u32 %v3950, 16
        %v4046 = vrot.slane %v4044, 5
        %v4047 = vor.u32 %v4043, %v4046
        %v4048 = vrot.slane %v4047, 4
        %v4050 = vshll.u32 %v3951, 16
        %v4052 = vrot.slane %v4050, 5
        %v4053 = vsel %vm453, %v4048, %v4052
        %v4054 = vshrl.u32 %v3951, 16
        %v4056 = vrot.slane %v4054, 4
        %v4057 = vor.u32 %v4056, %v4052
        %v4058 = vrot.slane %v4057, 4
        %v4060 = vshll.u32 %v3952, 16
        %v4062 = vrot.slane %v4060, 5
        %v4063 = vsel %vm453, %v4058, %v4062
        %v4065 = vshrl.u32 %v3953, 16
        %v4067 = vrot.slane %v4065, 4
        %v4068 = vshll.u32 %v3953, 16
        %v4070 = vrot.slane %v4068, 5
        %v4071 = vor.u32 %v4067, %v4070
        %v4072 = vrot.slane %v4071, 4
        %v4074 = vshll.u32 %v3954, 16
        %v4076 = vrot.slane %v4074, 5
        %v4077 = vsel %vm453, %v4072, %v4076
        %v4078 = vshrl.u32 %v3954, 16
        %v4080 = vrot.slane %v4078, 4
        %v4081 = vor.u32 %v4080, %v4076
        %v4082 = vrot.slane %v4081, 4
        %v4084 = vshll.u32 %v3955, 16
        %v4086 = vrot.slane %v4084, 5
        %v4087 = vsel %vm453, %v4082, %v4086
        %v4089 = vshrl.u32 %v3956, 16
        %v4091 = vrot.slane %v4089, 4
        %v4092 = vshll.u32 %v3956, 16
        %v4094 = vrot.slane %v4092, 5
        %v4095 = vor.u32 %v4091, %v4094
        %v4096 = vrot.slane %v4095, 4
        %v4098 = vshll.u32 %v3957, 16
        %v4100 = vrot.slane %v4098, 5
        %v4101 = vsel %vm453, %v4096, %v4100
        %v4102 = vshrl.u32 %v3957, 16
        %v4104 = vrot.slane %v4102, 4
        %v4105 = vor.u32 %v4104, %v4100
        %v4106 = vrot.slane %v4105, 4
        %v4108 = vshll.u32 %v3958, 16
        %v4110 = vrot.slane %v4108, 5
        %v4111 = vsel %vm453, %v4106, %v4110
        %v4113 = vshrl.u32 %v3959, 16
        %v4115 = vrot.slane %v4113, 4
        %v4116 = vshll.u32 %v3959, 16
        %v4118 = vrot.slane %v4116, 5
        %v4119 = vor.u32 %v4115, %v4118
        %v4120 = vrot.slane %v4119, 4
        %v4122 = vshll.u32 %v3960, 16
        %v4124 = vrot.slane %v4122, 5
        %v4125 = vsel %vm453, %v4120, %v4124
        %v4126 = vshrl.u32 %v3960, 16
        %v4128 = vrot.slane %v4126, 4
        %v4129 = vor.u32 %v4128, %v4124
        %v4130 = vrot.slane %v4129, 4
        %v4132 = vshll.u32 %v3961, 16
        %v4134 = vrot.slane %v4132, 5
        %v4135 = vsel %vm453, %v4130, %v4134
        %v4137 = vshrl.u32 %v3962, 16
        %v4139 = vrot.slane %v4137, 4
        %v4140 = vshll.u32 %v3962, 16
        %v4142 = vrot.slane %v4140, 5
        %v4143 = vor.u32 %v4139, %v4142
        %v4144 = vrot.slane %v4143, 4
        %v4146 = vshll.u32 %v3963, 16
        %v4148 = vrot.slane %v4146, 5
        %v4149 = vsel %vm453, %v4144, %v4148
        %v4150 = vshrl.u32 %v3963, 16
        %v4152 = vrot.slane %v4150, 4
        %v4153 = vor.u32 %v4152, %v4148
        %v4154 = vrot.slane %v4153, 4
        %v4156 = vshll.u32 %v3964, 16
        %v4158 = vrot.slane %v4156, 5
        %v4159 = vsel %vm453, %v4154, %v4158
        %v4161 = vshrl.u32 %v3965, 16
        %v4163 = vrot.slane %v4161, 4
        %v4164 = vshll.u32 %v3965, 16
        %v4166 = vrot.slane %v4164, 5
        %v4167 = vor.u32 %v4163, %v4166
        %v4168 = vrot.slane %v4167, 4
        %v4170 = vshll.u32 %v3966, 16
        %v4172 = vrot.slane %v4170, 5
        %v4173 = vsel %vm453, %v4168, %v4172
        %v4174 = vshrl.u32 %v3966, 16
        %v4176 = vrot.slane %v4174, 4
        %v4177 = vor.u32 %v4176, %v4172
        %v4178 = vrot.slane %v4177, 4
        %v4180 = vshll.u32 %v3967, 16
        %v4182 = vrot.slane %v4180, 5
        %v4183 = vsel %vm453, %v4178, %v4182
        %v4185 = vshrl.u32 %v3968, 16
        %v4187 = vrot.slane %v4185, 4
        %v4188 = vshll.u32 %v3968, 16
        %v4190 = vrot.slane %v4188, 5
        %v4191 = vor.u32 %v4187, %v4190
        %v4192 = vrot.slane %v4191, 4
        %v4194 = vshll.u32 %v3969, 16
        %v4196 = vrot.slane %v4194, 5
        %v4197 = vsel %vm453, %v4192, %v4196
        %v4198 = vshrl.u32 %v3969, 16
        %v4200 = vrot.slane %v4198, 4
        %v4201 = vor.u32 %v4200, %v4196
        %v4202 = vrot.slane %v4201, 4
        %v4204 = vshll.u32 %v3970, 16
        %v4206 = vrot.slane %v4204, 5
        %v4207 = vsel %vm453, %v4202, %v4206
        %v4209 = vshrl.u32 %v3971, 16
        %v4211 = vrot.slane %v4209, 4
        %v4212 = vshll.u32 %v3971, 16
        %v4214 = vrot.slane %v4212, 5
        %v4215 = vor.u32 %v4211, %v4214
        %v4216 = vrot.slane %v4215, 4
        %v4218 = vshll.u32 %v3972, 16
        %v4220 = vrot.slane %v4218, 5
        %v4221 = vsel %vm453, %v4216, %v4220
        %v4222 = vshrl.u32 %v3972, 16
        %v4224 = vrot.slane %v4222, 4
        %v4225 = vor.u32 %v4224, %v4220
        %v4226 = vrot.slane %v4225, 4
        %v4228 = vshll.u32 %v3973, 16
        %v4230 = vrot.slane %v4228, 5
        %v4231 = vsel %vm453, %v4226, %v4230
        %v4233 = vshrl.u32 %v3974, 16
        %v4235 = vrot.slane %v4233, 4
        %v4236 = vshll.u32 %v3974, 16
        %v4238 = vrot.slane %v4236, 5
        %v4239 = vor.u32 %v4235, %v4238
        %v4240 = vrot.slane %v4239, 4
        %v4242 = vshll.u32 %v3975, 16
        %v4244 = vrot.slane %v4242, 5
        %v4245 = vsel %vm453, %v4240, %v4244
        %v4246 = vshrl.u32 %v3975, 16
        %v4248 = vrot.slane %v4246, 4
        %v4249 = vor.u32 %v4248, %v4244
        %v4250 = vrot.slane %v4249, 4
        %v4252 = vshll.u32 %v3976, 16
        %v4254 = vrot.slane %v4252, 5
        %v4255 = vsel %vm453, %v4250, %v4254
        %v4257 = vshrl.u32 %v3977, 16
        %v4259 = vrot.slane %v4257, 4
        %v4260 = vshll.u32 %v3977, 16
        %v4262 = vrot.slane %v4260, 5
        %v4263 = vor.u32 %v4259, %v4262
        %v4264 = vrot.slane %v4263, 4
        %v4266 = vshll.u32 %v3978, 16
        %v4268 = vrot.slane %v4266, 5
        %v4269 = vsel %vm453, %v4264, %v4268
        %v4270 = vshrl.u32 %v3978, 16
        %v4272 = vrot.slane %v4270, 4
        %v4273 = vor.u32 %v4272, %v4268
        %v4274 = vrot.slane %v4273, 4
        %v4276 = vshll.u32 %v3979, 16
        %v4278 = vrot.slane %v4276, 5
        %v4279 = vsel %vm453, %v4274, %v4278
        %v4281 = vshrl.u32 %v3980, 16
        %v4283 = vrot.slane %v4281, 4
        %v4284 = vshll.u32 %v3980, 16
        %v4286 = vrot.slane %v4284, 5
        %v4287 = vor.u32 %v4283, %v4286
        %v4288 = vrot.slane %v4287, 4
        %v4290 = vshll.u32 %v3981, 16
        %v4292 = vrot.slane %v4290, 5
        %v4293 = vsel %vm453, %v4288, %v4292
        %v4294 = vshrl.u32 %v3981, 16
        %v4296 = vrot.slane %v4294, 4
        %v4297 = vor.u32 %v4296, %v4292
        %v4298 = vrot.slane %v4297, 4
        %v4300 = vshll.u32 %v3982, 16
        %v4302 = vrot.slane %v4300, 5
        %v4303 = vsel %vm453, %v4298, %v4302
        %v4305 = vshrl.u32 %v3983, 16
        %v4307 = vrot.slane %v4305, 4
        %v4308 = vshll.u32 %v3983, 16
        %v4310 = vrot.slane %v4308, 5
        %v4311 = vor.u32 %v4307, %v4310
        %v4312 = vrot.slane %v4311, 4
        %v4314 = vshll.u32 %v3984, 16
        %v4316 = vrot.slane %v4314, 5
        %v4317 = vsel %vm453, %v4312, %v4316
        %v4318 = vshrl.u32 %v3984, 16
        %v4320 = vrot.slane %v4318, 4
        %v4321 = vor.u32 %v4320, %v4316
        %v4322 = vrot.slane %v4321, 4
        %v4324 = vshll.u32 %v3985, 16
        %v4326 = vrot.slane %v4324, 5
        %v4327 = vsel %vm453, %v4322, %v4326
        %v4329 = vshrl.u32 %v3986, 16
        %v4331 = vrot.slane %v4329, 4
        %v4332 = vshll.u32 %v3986, 16
        %v4334 = vrot.slane %v4332, 5
        %v4335 = vor.u32 %v4331, %v4334
        %v4336 = vrot.slane %v4335, 4
        %v4338 = vshll.u32 %v3987, 16
        %v4340 = vrot.slane %v4338, 5
        %v4341 = vsel %vm453, %v4336, %v4340
        %v4342 = vshrl.u32 %v3987, 16
        %v4344 = vrot.slane %v4342, 4
        %v4345 = vor.u32 %v4344, %v4340
        %v4346 = vrot.slane %v4345, 4
        %v4348 = vshll.u32 %v3988, 16
        %v4350 = vrot.slane %v4348, 5
        %v4351 = vsel %vm453, %v4346, %v4350
        %v4353 = vshrl.u32 %v3989, 16
        %v4355 = vrot.slane %v4353, 4
        %v4356 = vshll.u32 %v3989, 16
        %v4358 = vrot.slane %v4356, 5
        %v4359 = vor.u32 %v4355, %v4358
        %v4360 = vrot.slane %v4359, 4
        %v4362 = vshll.u32 %v3990, 16
        %v4364 = vrot.slane %v4362, 5
        %v4365 = vsel %vm453, %v4360, %v4364
        %v4366 = vshrl.u32 %v3990, 16
        %v4368 = vrot.slane %v4366, 4
        %v4369 = vor.u32 %v4368, %v4364
        %v4370 = vrot.slane %v4369, 4
        %v4372 = vshll.u32 %v3991, 16
        %v4374 = vrot.slane %v4372, 5
        %v4375 = vsel %vm453, %v4370, %v4374
        %s4376 = scalar_lea.vmem %s1, 448
        %v4377 = vld [vmem:[%s4376] sm:$0xf]
        %v4378 = vld [vmem:[%s4376 + $0x4] sm:$0xf]
        %v4379 = vld [vmem:[%s4376 + $0x8] sm:$0xf]
        %v4380 = vld [vmem:[%s4376 + $0xc] sm:$0xf]
        %v4381 = vld [vmem:[%s4376 + $0x10] sm:$0xf]
        %v4382 = vld [vmem:[%s4376 + $0x14] sm:$0xf]
        %v4383 = vld [vmem:[%s4376 + $0x18] sm:$0xf]
        %v4384 = vld [vmem:[%s4376 + $0x1c] sm:$0xf]
        %v4385 = vld [vmem:[%s4376 + $0x20] sm:$0xf]
        %v4386 = vld [vmem:[%s4376 + $0x24] sm:$0xf]
        %v4387 = vld [vmem:[%s4376 + $0x28] sm:$0xf]
        %v4388 = vld [vmem:[%s4376 + $0x2c] sm:$0xf]
        %v4389 = vld [vmem:[%s4376 + $0x30] sm:$0xf]
        %v4390 = vld [vmem:[%s4376 + $0x34] sm:$0xf]
        %v4391 = vld [vmem:[%s4376 + $0x38] sm:$0xf]
        %v4392 = vld [vmem:[%s4376 + $0x3c] sm:$0xf]
        %v4393 = vunpack.c.l.b16 %v4005
        %v4394 = vunpack.c.l.b16 %v4015
        %v4395 = vunpack.c.l.b16 %v4029
        %v4396 = vunpack.c.l.b16 %v4039
        %v4397 = vunpack.c.l.b16 %v4053
        %v4398 = vunpack.c.l.b16 %v4063
        %v4399 = vunpack.c.l.b16 %v4077
        %v4400 = vunpack.c.l.b16 %v4087
        %v4401 = vunpack.c.l.b16 %v4101
        %v4402 = vunpack.c.l.b16 %v4111
        %v4403 = vunpack.c.l.b16 %v4125
        %v4404 = vunpack.c.l.b16 %v4135
        %v4405 = vunpack.c.l.b16 %v4149
        %v4406 = vunpack.c.l.b16 %v4159
        %v4407 = vunpack.c.l.b16 %v4173
        %v4408 = vunpack.c.l.b16 %v4183
        %v4409 = vunpack.c.l.b16 %v4197
        %v4410 = vunpack.c.l.b16 %v4207
        %v4411 = vunpack.c.l.b16 %v4221
        %v4412 = vunpack.c.l.b16 %v4231
        %v4413 = vunpack.c.l.b16 %v4245
        %v4414 = vunpack.c.l.b16 %v4255
        %v4415 = vunpack.c.l.b16 %v4269
        %v4416 = vunpack.c.l.b16 %v4279
        %v4417 = vunpack.c.l.b16 %v4293
        %v4418 = vunpack.c.l.b16 %v4303
        %v4419 = vunpack.c.l.b16 %v4317
        %v4420 = vunpack.c.l.b16 %v4327
        %v4421 = vunpack.c.l.b16 %v4341
        %v4422 = vunpack.c.l.b16 %v4351
        %v4423 = vunpack.c.l.b16 %v4365
        %v4424 = vunpack.c.l.b16 %v4375
        %v4425 = vpack.c.b16 %v4394, %v4393
        %v4426 = vpack.c.b16 %v4396, %v4395
        %v4427 = vpack.c.b16 %v4398, %v4397
        %v4428 = vpack.c.b16 %v4400, %v4399
        %v4429 = vpack.c.b16 %v4402, %v4401
        %v4430 = vpack.c.b16 %v4404, %v4403
        %v4431 = vpack.c.b16 %v4406, %v4405
        %v4432 = vpack.c.b16 %v4408, %v4407
        %v4433 = vpack.c.b16 %v4410, %v4409
        %v4434 = vpack.c.b16 %v4412, %v4411
        %v4435 = vpack.c.b16 %v4414, %v4413
        %v4436 = vpack.c.b16 %v4416, %v4415
        %v4437 = vpack.c.b16 %v4418, %v4417
        %v4438 = vpack.c.b16 %v4420, %v4419
        %v4439 = vpack.c.b16 %v4422, %v4421
        %v4440 = vpack.c.b16 %v4424, %v4423
        %v4473 = vunpack.c.l.b16 %v4377
        %v4474 = vunpack.c.l.b16 %v4378
        %v4475 = vunpack.c.l.b16 %v4379
        %v4476 = vunpack.c.l.b16 %v4380
        %v4477 = vunpack.c.l.b16 %v4381
        %v4478 = vunpack.c.l.b16 %v4382
        %v4479 = vunpack.c.l.b16 %v4383
        %v4480 = vunpack.c.l.b16 %v4384
        %v4481 = vunpack.c.l.b16 %v4385
        %v4482 = vunpack.c.l.b16 %v4386
        %v4483 = vunpack.c.l.b16 %v4387
        %v4484 = vunpack.c.l.b16 %v4388
        %v4485 = vunpack.c.l.b16 %v4389
        %v4486 = vunpack.c.l.b16 %v4390
        %v4487 = vunpack.c.l.b16 %v4391
        %v4488 = vunpack.c.l.b16 %v4392
        %v4489 = vpack.c.b16 %v4474, %v4473
        %v4490 = vpack.c.b16 %v4476, %v4475
        %v4491 = vpack.c.b16 %v4478, %v4477
        %v4492 = vpack.c.b16 %v4480, %v4479
        %v4493 = vpack.c.b16 %v4482, %v4481
        %v4494 = vpack.c.b16 %v4484, %v4483
        %v4495 = vpack.c.b16 %v4486, %v4485
        %v4496 = vpack.c.b16 %v4488, %v4487
        %4505 = vmatprep.subr.bf16.mxu0 0
        %4506 = vmatpush1.bf16.msra.mxu0 %v4496
        %4507 = vmatprep.subr.bf16.mxu0 0
        %4508 = vmatpush1.bf16.msra.mxu0 %v4495
        %4509 = vmatprep.subr.bf16.mxu0 0
        %4510 = vmatpush1.bf16.msra.mxu0 %v4494
        %4511 = vmatprep.subr.bf16.mxu0 0
        %4512 = vmatpush1.bf16.msra.mxu0 %v4493
        %4513 = vmatprep.subr.bf16.mxu0 0
        %4514 = vmatpush1.bf16.msra.mxu0 %v4492
        %4515 = vmatprep.subr.bf16.mxu0 0
        %4516 = vmatpush1.bf16.msra.mxu0 %v4491
        %4517 = vmatprep.subr.bf16.mxu0 0
        %4518 = vmatpush1.bf16.msra.mxu0 %v4490
        %4519 = vmatprep.subr.bf16.mxu0 0
        %4520 = vmatpush1.bf16.msra.mxu0 %v4489
        %4521 = vmatprep.subr.bf16.mxu0 0
        %4522 = vmatpush2.bf16.msra.mxu0 0
        %4523 = vmatprep.subr.bf16.mxu0 0
        %4524 = vmatpush2.bf16.msra.mxu0 0
        %4525 = vmatprep.subr.bf16.mxu0 0
        %4526 = vmatpush2.bf16.msra.mxu0 0
        %4527 = vmatprep.subr.bf16.mxu0 0
        %4528 = vmatpush2.bf16.msra.mxu0 0
        %4529 = vmatprep.subr.bf16.mxu0 0
        %4530 = vmatpush2.bf16.msra.mxu0 0
        %4531 = vmatprep.subr.bf16.mxu0 0
        %4532 = vmatpush2.bf16.msra.mxu0 0
        %4533 = vmatprep.subr.bf16.mxu0 0
        %4534 = vmatpush2.bf16.msra.mxu0 0
        %4535 = vmatprep.subr.bf16.mxu0 0
        %4536 = vmatpush2.bf16.msra.mxu0 0
        %4537 = vmatprep.mubr.bf16.mxu0 0
        %4538 = vmatmul.mubr.bf16.gmra.mxu0 %v4425
        %v4539 = vpop.f32.mrf.mxu0
        %v4540 = vadd.f32 0.0, %v4539
        %v4541 = vpop.f32.mrf.mxu0
        %v4542 = vpop.f32.mrf.mxu0
        %v4543 = vadd.f32 0.0, %v4542
        %v4544 = vpop.f32.mrf.mxu0
        %4545 = vmatprep.mubr.bf16.mxu0 0
        %4546 = vmatmul.mubr.bf16.gmra.mxu0 %v4426
        %v4547 = vpop.f32.mrf.mxu0
        %v4548 = vadd.f32 0.0, %v4547
        %v4549 = vpop.f32.mrf.mxu0
        %v4550 = vpop.f32.mrf.mxu0
        %v4551 = vadd.f32 0.0, %v4550
        %v4552 = vpop.f32.mrf.mxu0
        %4553 = vmatprep.mubr.bf16.mxu0 0
        %4554 = vmatmul.mubr.bf16.gmra.mxu0 %v4427
        %v4555 = vpop.f32.mrf.mxu0
        %v4556 = vadd.f32 0.0, %v4555
        %v4557 = vpop.f32.mrf.mxu0
        %v4558 = vpop.f32.mrf.mxu0
        %v4559 = vadd.f32 0.0, %v4558
        %v4560 = vpop.f32.mrf.mxu0
        %4561 = vmatprep.mubr.bf16.mxu0 0
        %4562 = vmatmul.mubr.bf16.gmra.mxu0 %v4428
        %v4563 = vpop.f32.mrf.mxu0
        %v4564 = vadd.f32 0.0, %v4563
        %v4565 = vpop.f32.mrf.mxu0
        %v4566 = vpop.f32.mrf.mxu0
        %v4567 = vadd.f32 0.0, %v4566
        %v4568 = vpop.f32.mrf.mxu0
        %4569 = vmatprep.mubr.bf16.mxu0 0
        %4570 = vmatmul.mubr.bf16.gmra.mxu0 %v4429
        %v4571 = vpop.f32.mrf.mxu0
        %v4572 = vadd.f32 0.0, %v4571
        %v4573 = vpop.f32.mrf.mxu0
        %v4574 = vpop.f32.mrf.mxu0
        %v4575 = vadd.f32 0.0, %v4574
        %v4576 = vpop.f32.mrf.mxu0
        %4577 = vmatprep.mubr.bf16.mxu0 0
        %4578 = vmatmul.mubr.bf16.gmra.mxu0 %v4430
        %v4579 = vpop.f32.mrf.mxu0
        %v4580 = vadd.f32 0.0, %v4579
        %v4581 = vpop.f32.mrf.mxu0
        %v4582 = vpop.f32.mrf.mxu0
        %v4583 = vadd.f32 0.0, %v4582
        %v4584 = vpop.f32.mrf.mxu0
        %4585 = vmatprep.mubr.bf16.mxu0 0
        %4586 = vmatmul.mubr.bf16.gmra.mxu0 %v4431
        %v4587 = vpop.f32.mrf.mxu0
        %v4588 = vadd.f32 0.0, %v4587
        %v4589 = vpop.f32.mrf.mxu0
        %v4590 = vpop.f32.mrf.mxu0
        %v4591 = vadd.f32 0.0, %v4590
        %v4592 = vpop.f32.mrf.mxu0
        %4593 = vmatprep.mubr.bf16.mxu0 0
        %4594 = vmatmul.mubr.bf16.gmra.mxu0 %v4432
        %v4595 = vpop.f32.mrf.mxu0
        %v4596 = vadd.f32 0.0, %v4595
        %v4597 = vpop.f32.mrf.mxu0
        %v4598 = vpop.f32.mrf.mxu0
        %v4599 = vadd.f32 0.0, %v4598
        %v4600 = vpop.f32.mrf.mxu0
        %4601 = vmatprep.mubr.bf16.mxu0 0
        %4602 = vmatmul.mubr.bf16.gmra.mxu0 %v4433
        %v4603 = vpop.f32.mrf.mxu0
        %v4604 = vadd.f32 0.0, %v4603
        %v4605 = vpop.f32.mrf.mxu0
        %v4606 = vpop.f32.mrf.mxu0
        %v4607 = vadd.f32 0.0, %v4606
        %v4608 = vpop.f32.mrf.mxu0
        %4609 = vmatprep.mubr.bf16.mxu0 0
        %4610 = vmatmul.mubr.bf16.gmra.mxu0 %v4434
        %v4611 = vpop.f32.mrf.mxu0
        %v4612 = vadd.f32 0.0, %v4611
        %v4613 = vpop.f32.mrf.mxu0
        %v4614 = vpop.f32.mrf.mxu0
        %v4615 = vadd.f32 0.0, %v4614
        %v4616 = vpop.f32.mrf.mxu0
        %4617 = vmatprep.mubr.bf16.mxu0 0
        %4618 = vmatmul.mubr.bf16.gmra.mxu0 %v4435
        %v4619 = vpop.f32.mrf.mxu0
        %v4620 = vadd.f32 0.0, %v4619
        %v4621 = vpop.f32.mrf.mxu0
        %v4622 = vpop.f32.mrf.mxu0
        %v4623 = vadd.f32 0.0, %v4622
        %v4624 = vpop.f32.mrf.mxu0
        %4625 = vmatprep.mubr.bf16.mxu0 0
        %4626 = vmatmul.mubr.bf16.gmra.mxu0 %v4436
        %v4627 = vpop.f32.mrf.mxu0
        %v4628 = vadd.f32 0.0, %v4627
        %v4629 = vpop.f32.mrf.mxu0
        %v4630 = vpop.f32.mrf.mxu0
        %v4631 = vadd.f32 0.0, %v4630
        %v4632 = vpop.f32.mrf.mxu0
        %4633 = vmatprep.mubr.bf16.mxu0 0
        %4634 = vmatmul.mubr.bf16.gmra.mxu0 %v4437
        %v4635 = vpop.f32.mrf.mxu0
        %v4636 = vadd.f32 0.0, %v4635
        %v4637 = vpop.f32.mrf.mxu0
        %v4638 = vpop.f32.mrf.mxu0
        %v4639 = vadd.f32 0.0, %v4638
        %v4640 = vpop.f32.mrf.mxu0
        %4641 = vmatprep.mubr.bf16.mxu0 0
        %4642 = vmatmul.mubr.bf16.gmra.mxu0 %v4438
        %v4643 = vpop.f32.mrf.mxu0
        %v4644 = vadd.f32 0.0, %v4643
        %v4645 = vpop.f32.mrf.mxu0
        %v4646 = vpop.f32.mrf.mxu0
        %v4647 = vadd.f32 0.0, %v4646
        %v4648 = vpop.f32.mrf.mxu0
        %4649 = vmatprep.mubr.bf16.mxu0 0
        %4650 = vmatmul.mubr.bf16.gmra.mxu0 %v4439
        %v4651 = vpop.f32.mrf.mxu0
        %v4652 = vadd.f32 0.0, %v4651
        %v4653 = vpop.f32.mrf.mxu0
        %v4654 = vpop.f32.mrf.mxu0
        %v4655 = vadd.f32 0.0, %v4654
        %v4656 = vpop.f32.mrf.mxu0
        %4657 = vmatprep.mubr.bf16.mxu0 0
        %4658 = vmatmul.mubr.bf16.gmra.mxu0 %v4440
        %v4659 = vpop.f32.mrf.mxu0
        %v4660 = vadd.f32 0.0, %v4659
        %v4661 = vpop.f32.mrf.mxu0
        %v4662 = vpop.f32.mrf.mxu0
        %v4663 = vadd.f32 0.0, %v4662
        %v4664 = vpop.f32.mrf.mxu0
        %4665 = vdwg.mxu0
        %v4666 = vadd.f32 %v3912, %v4540
        %v4667 = vadd.f32 %v3913, %v4543
        %v4668 = vadd.f32 %v3914, %v4548
        %v4669 = vadd.f32 %v3915, %v4551
        %v4670 = vadd.f32 %v3916, %v4556
        %v4671 = vadd.f32 %v3917, %v4559
        %v4672 = vadd.f32 %v3918, %v4564
        %v4673 = vadd.f32 %v3919, %v4567
        %v4674 = vadd.f32 %v3920, %v4572
        %v4675 = vadd.f32 %v3921, %v4575
        %v4676 = vadd.f32 %v3922, %v4580
        %v4677 = vadd.f32 %v3923, %v4583
        %v4678 = vadd.f32 %v3924, %v4588
        %v4679 = vadd.f32 %v3925, %v4591
        %v4680 = vadd.f32 %v3926, %v4596
        %v4681 = vadd.f32 %v3927, %v4599
        %v4682 = vadd.f32 %v3928, %v4604
        %v4683 = vadd.f32 %v3929, %v4607
        %v4684 = vadd.f32 %v3930, %v4612
        %v4685 = vadd.f32 %v3931, %v4615
        %v4686 = vadd.f32 %v3932, %v4620
        %v4687 = vadd.f32 %v3933, %v4623
        %v4688 = vadd.f32 %v3934, %v4628
        %v4689 = vadd.f32 %v3935, %v4631
        %v4690 = vadd.f32 %v3936, %v4636
        %v4691 = vadd.f32 %v3937, %v4639
        %v4692 = vadd.f32 %v3938, %v4644
        %v4693 = vadd.f32 %v3939, %v4647
        %v4694 = vadd.f32 %v3940, %v4652
        %v4695 = vadd.f32 %v3941, %v4655
        %v4696 = vadd.f32 %v3942, %v4660
        %v4697 = vadd.f32 %v3943, %v4663
        %v4698 = vld [vmem:[%s3557] sm:$0xe]
        %v4699 = vld [vmem:[%s3557 + $0xc] sm:$0xe]
        %v4700 = vld [vmem:[%s3557 + $0x18] sm:$0xe]
        %v4701 = vld [vmem:[%s3557 + $0x24] sm:$0xe]
        %v4702 = vld [vmem:[%s3557 + $0x30] sm:$0xe]
        %v4703 = vld [vmem:[%s3557 + $0x3c] sm:$0xe]
        %v4704 = vld [vmem:[%s3557 + $0x48] sm:$0xe]
        %v4705 = vld [vmem:[%s3557 + $0x54] sm:$0xe]
        %v4706 = vld [vmem:[%s3557 + $0x60] sm:$0xe]
        %v4707 = vld [vmem:[%s3557 + $0x6c] sm:$0xe]
        %v4708 = vld [vmem:[%s3557 + $0x78] sm:$0xe]
        %v4709 = vld [vmem:[%s3557 + $0x84] sm:$0xe]
        %v4710 = vld [vmem:[%s3557 + $0x90] sm:$0xe]
        %v4711 = vld [vmem:[%s3557 + $0x9c] sm:$0xe]
        %v4712 = vld [vmem:[%s3557 + $0xa8] sm:$0xe]
        %v4713 = vld [vmem:[%s3557 + $0xb4] sm:$0xe]
        %v4762 = vrot.slane %v4698, 5
        %v4763 = vrot.slane %v4762, 4
        %v4764 = vrot.slane %v3945, 5
        %v4765 = vsel %vm1483, %v4763, %v4764
        %v4766 = vrot.slane %v4764, 4
        %v4767 = vrot.slane %v3946, 5
        %v4768 = vsel %vm1483, %v4766, %v4767
        %v4769 = vrot.slane %v4699, 5
        %v4770 = vrot.slane %v4769, 4
        %v4771 = vrot.slane %v3948, 5
        %v4772 = vsel %vm1483, %v4770, %v4771
        %v4773 = vrot.slane %v4771, 4
        %v4774 = vrot.slane %v3949, 5
        %v4775 = vsel %vm1483, %v4773, %v4774
        %v4776 = vrot.slane %v4700, 5
        %v4777 = vrot.slane %v4776, 4
        %v4778 = vrot.slane %v3951, 5
        %v4779 = vsel %vm1483, %v4777, %v4778
        %v4780 = vrot.slane %v4778, 4
        %v4781 = vrot.slane %v3952, 5
        %v4782 = vsel %vm1483, %v4780, %v4781
        %v4783 = vrot.slane %v4701, 5
        %v4784 = vrot.slane %v4783, 4
        %v4785 = vrot.slane %v3954, 5
        %v4786 = vsel %vm1483, %v4784, %v4785
        %v4787 = vrot.slane %v4785, 4
        %v4788 = vrot.slane %v3955, 5
        %v4789 = vsel %vm1483, %v4787, %v4788
        %v4790 = vrot.slane %v4702, 5
        %v4791 = vrot.slane %v4790, 4
        %v4792 = vrot.slane %v3957, 5
        %v4793 = vsel %vm1483, %v4791, %v4792
        %v4794 = vrot.slane %v4792, 4
        %v4795 = vrot.slane %v3958, 5
        %v4796 = vsel %vm1483, %v4794, %v4795
        %v4797 = vrot.slane %v4703, 5
        %v4798 = vrot.slane %v4797, 4
        %v4799 = vrot.slane %v3960, 5
        %v4800 = vsel %vm1483, %v4798, %v4799
        %v4801 = vrot.slane %v4799, 4
        %v4802 = vrot.slane %v3961, 5
        %v4803 = vsel %vm1483, %v4801, %v4802
        %v4804 = vrot.slane %v4704, 5
        %v4805 = vrot.slane %v4804, 4
        %v4806 = vrot.slane %v3963, 5
        %v4807 = vsel %vm1483, %v4805, %v4806
        %v4808 = vrot.slane %v4806, 4
        %v4809 = vrot.slane %v3964, 5
        %v4810 = vsel %vm1483, %v4808, %v4809
        %v4811 = vrot.slane %v4705, 5
        %v4812 = vrot.slane %v4811, 4
        %v4813 = vrot.slane %v3966, 5
        %v4814 = vsel %vm1483, %v4812, %v4813
        %v4815 = vrot.slane %v4813, 4
        %v4816 = vrot.slane %v3967, 5
        %v4817 = vsel %vm1483, %v4815, %v4816
        %v4818 = vrot.slane %v4706, 5
        %v4819 = vrot.slane %v4818, 4
        %v4820 = vrot.slane %v3969, 5
        %v4821 = vsel %vm1483, %v4819, %v4820
        %v4822 = vrot.slane %v4820, 4
        %v4823 = vrot.slane %v3970, 5
        %v4824 = vsel %vm1483, %v4822, %v4823
        %v4825 = vrot.slane %v4707, 5
        %v4826 = vrot.slane %v4825, 4
        %v4827 = vrot.slane %v3972, 5
        %v4828 = vsel %vm1483, %v4826, %v4827
        %v4829 = vrot.slane %v4827, 4
        %v4830 = vrot.slane %v3973, 5
        %v4831 = vsel %vm1483, %v4829, %v4830
        %v4832 = vrot.slane %v4708, 5
        %v4833 = vrot.slane %v4832, 4
        %v4834 = vrot.slane %v3975, 5
        %v4835 = vsel %vm1483, %v4833, %v4834
        %v4836 = vrot.slane %v4834, 4
        %v4837 = vrot.slane %v3976, 5
        %v4838 = vsel %vm1483, %v4836, %v4837
        %v4839 = vrot.slane %v4709, 5
        %v4840 = vrot.slane %v4839, 4
        %v4841 = vrot.slane %v3978, 5
        %v4842 = vsel %vm1483, %v4840, %v4841
        %v4843 = vrot.slane %v4841, 4
        %v4844 = vrot.slane %v3979, 5
        %v4845 = vsel %vm1483, %v4843, %v4844
        %v4846 = vrot.slane %v4710, 5
        %v4847 = vrot.slane %v4846, 4
        %v4848 = vrot.slane %v3981, 5
        %v4849 = vsel %vm1483, %v4847, %v4848
        %v4850 = vrot.slane %v4848, 4
        %v4851 = vrot.slane %v3982, 5
        %v4852 = vsel %vm1483, %v4850, %v4851
        %v4853 = vrot.slane %v4711, 5
        %v4854 = vrot.slane %v4853, 4
        %v4855 = vrot.slane %v3984, 5
        %v4856 = vsel %vm1483, %v4854, %v4855
        %v4857 = vrot.slane %v4855, 4
        %v4858 = vrot.slane %v3985, 5
        %v4859 = vsel %vm1483, %v4857, %v4858
        %v4860 = vrot.slane %v4712, 5
        %v4861 = vrot.slane %v4860, 4
        %v4862 = vrot.slane %v3987, 5
        %v4863 = vsel %vm1483, %v4861, %v4862
        %v4864 = vrot.slane %v4862, 4
        %v4865 = vrot.slane %v3988, 5
        %v4866 = vsel %vm1483, %v4864, %v4865
        %v4867 = vrot.slane %v4713, 5
        %v4868 = vrot.slane %v4867, 4
        %v4869 = vrot.slane %v3990, 5
        %v4870 = vsel %vm1483, %v4868, %v4869
        %v4871 = vrot.slane %v4869, 4
        %v4872 = vrot.slane %v3991, 5
        %v4873 = vsel %vm1483, %v4871, %v4872
        %s4874 = scalar_lea.vmem %s1, 512
        %v4875 = vld [vmem:[%s4874] sm:$0xf]
        %v4876 = vld [vmem:[%s4874 + $0x4] sm:$0xf]
        %v4877 = vld [vmem:[%s4874 + $0x8] sm:$0xf]
        %v4878 = vld [vmem:[%s4874 + $0xc] sm:$0xf]
        %v4879 = vld [vmem:[%s4874 + $0x10] sm:$0xf]
        %v4880 = vld [vmem:[%s4874 + $0x14] sm:$0xf]
        %v4881 = vld [vmem:[%s4874 + $0x18] sm:$0xf]
        %v4882 = vld [vmem:[%s4874 + $0x1c] sm:$0xf]
        %v4883 = vld [vmem:[%s4874 + $0x20] sm:$0xf]
        %v4884 = vld [vmem:[%s4874 + $0x24] sm:$0xf]
        %v4885 = vld [vmem:[%s4874 + $0x28] sm:$0xf]
        %v4886 = vld [vmem:[%s4874 + $0x2c] sm:$0xf]
        %v4887 = vld [vmem:[%s4874 + $0x30] sm:$0xf]
        %v4888 = vld [vmem:[%s4874 + $0x34] sm:$0xf]
        %v4889 = vld [vmem:[%s4874 + $0x38] sm:$0xf]
        %v4890 = vld [vmem:[%s4874 + $0x3c] sm:$0xf]
        %v4891 = vunpack.c.l.b16 %v4765
        %v4892 = vunpack.c.l.b16 %v4768
        %v4893 = vunpack.c.l.b16 %v4772
        %v4894 = vunpack.c.l.b16 %v4775
        %v4895 = vunpack.c.l.b16 %v4779
        %v4896 = vunpack.c.l.b16 %v4782
        %v4897 = vunpack.c.l.b16 %v4786
        %v4898 = vunpack.c.l.b16 %v4789
        %v4899 = vunpack.c.l.b16 %v4793
        %v4900 = vunpack.c.l.b16 %v4796
        %v4901 = vunpack.c.l.b16 %v4800
        %v4902 = vunpack.c.l.b16 %v4803
        %v4903 = vunpack.c.l.b16 %v4807
        %v4904 = vunpack.c.l.b16 %v4810
        %v4905 = vunpack.c.l.b16 %v4814
        %v4906 = vunpack.c.l.b16 %v4817
        %v4907 = vunpack.c.l.b16 %v4821
        %v4908 = vunpack.c.l.b16 %v4824
        %v4909 = vunpack.c.l.b16 %v4828
        %v4910 = vunpack.c.l.b16 %v4831
        %v4911 = vunpack.c.l.b16 %v4835
        %v4912 = vunpack.c.l.b16 %v4838
        %v4913 = vunpack.c.l.b16 %v4842
        %v4914 = vunpack.c.l.b16 %v4845
        %v4915 = vunpack.c.l.b16 %v4849
        %v4916 = vunpack.c.l.b16 %v4852
        %v4917 = vunpack.c.l.b16 %v4856
        %v4918 = vunpack.c.l.b16 %v4859
        %v4919 = vunpack.c.l.b16 %v4863
        %v4920 = vunpack.c.l.b16 %v4866
        %v4921 = vunpack.c.l.b16 %v4870
        %v4922 = vunpack.c.l.b16 %v4873
        %v4923 = vpack.c.b16 %v4892, %v4891
        %v4924 = vpack.c.b16 %v4894, %v4893
        %v4925 = vpack.c.b16 %v4896, %v4895
        %v4926 = vpack.c.b16 %v4898, %v4897
        %v4927 = vpack.c.b16 %v4900, %v4899
        %v4928 = vpack.c.b16 %v4902, %v4901
        %v4929 = vpack.c.b16 %v4904, %v4903
        %v4930 = vpack.c.b16 %v4906, %v4905
        %v4931 = vpack.c.b16 %v4908, %v4907
        %v4932 = vpack.c.b16 %v4910, %v4909
        %v4933 = vpack.c.b16 %v4912, %v4911
        %v4934 = vpack.c.b16 %v4914, %v4913
        %v4935 = vpack.c.b16 %v4916, %v4915
        %v4936 = vpack.c.b16 %v4918, %v4917
        %v4937 = vpack.c.b16 %v4920, %v4919
        %v4938 = vpack.c.b16 %v4922, %v4921
        %v4971 = vunpack.c.l.b16 %v4875
        %v4972 = vunpack.c.l.b16 %v4876
        %v4973 = vunpack.c.l.b16 %v4877
        %v4974 = vunpack.c.l.b16 %v4878
        %v4975 = vunpack.c.l.b16 %v4879
        %v4976 = vunpack.c.l.b16 %v4880
        %v4977 = vunpack.c.l.b16 %v4881
        %v4978 = vunpack.c.l.b16 %v4882
        %v4979 = vunpack.c.l.b16 %v4883
        %v4980 = vunpack.c.l.b16 %v4884
        %v4981 = vunpack.c.l.b16 %v4885
        %v4982 = vunpack.c.l.b16 %v4886
        %v4983 = vunpack.c.l.b16 %v4887
        %v4984 = vunpack.c.l.b16 %v4888
        %v4985 = vunpack.c.l.b16 %v4889
        %v4986 = vunpack.c.l.b16 %v4890
        %v4987 = vpack.c.b16 %v4972, %v4971
        %v4988 = vpack.c.b16 %v4974, %v4973
        %v4989 = vpack.c.b16 %v4976, %v4975
        %v4990 = vpack.c.b16 %v4978, %v4977
        %v4991 = vpack.c.b16 %v4980, %v4979
        %v4992 = vpack.c.b16 %v4982, %v4981
        %v4993 = vpack.c.b16 %v4984, %v4983
        %v4994 = vpack.c.b16 %v4986, %v4985
        %5003 = vmatprep.subr.bf16.mxu0 0
        %5004 = vmatpush1.bf16.msra.mxu0 %v4994
        %5005 = vmatprep.subr.bf16.mxu0 0
        %5006 = vmatpush1.bf16.msra.mxu0 %v4993
        %5007 = vmatprep.subr.bf16.mxu0 0
        %5008 = vmatpush1.bf16.msra.mxu0 %v4992
        %5009 = vmatprep.subr.bf16.mxu0 0
        %5010 = vmatpush1.bf16.msra.mxu0 %v4991
        %5011 = vmatprep.subr.bf16.mxu0 0
        %5012 = vmatpush1.bf16.msra.mxu0 %v4990
        %5013 = vmatprep.subr.bf16.mxu0 0
        %5014 = vmatpush1.bf16.msra.mxu0 %v4989
        %5015 = vmatprep.subr.bf16.mxu0 0
        %5016 = vmatpush1.bf16.msra.mxu0 %v4988
        %5017 = vmatprep.subr.bf16.mxu0 0
        %5018 = vmatpush1.bf16.msra.mxu0 %v4987
        %5019 = vmatprep.subr.bf16.mxu0 0
        %5020 = vmatpush2.bf16.msra.mxu0 0
        %5021 = vmatprep.subr.bf16.mxu0 0
        %5022 = vmatpush2.bf16.msra.mxu0 0
        %5023 = vmatprep.subr.bf16.mxu0 0
        %5024 = vmatpush2.bf16.msra.mxu0 0
        %5025 = vmatprep.subr.bf16.mxu0 0
        %5026 = vmatpush2.bf16.msra.mxu0 0
        %5027 = vmatprep.subr.bf16.mxu0 0
        %5028 = vmatpush2.bf16.msra.mxu0 0
        %5029 = vmatprep.subr.bf16.mxu0 0
        %5030 = vmatpush2.bf16.msra.mxu0 0
        %5031 = vmatprep.subr.bf16.mxu0 0
        %5032 = vmatpush2.bf16.msra.mxu0 0
        %5033 = vmatprep.subr.bf16.mxu0 0
        %5034 = vmatpush2.bf16.msra.mxu0 0
        %5035 = vmatprep.mubr.bf16.mxu0 0
        %5036 = vmatmul.mubr.bf16.gmra.mxu0 %v4923
        %v5037 = vpop.f32.mrf.mxu0
        %v5038 = vadd.f32 0.0, %v5037
        %v5039 = vpop.f32.mrf.mxu0
        %v5040 = vpop.f32.mrf.mxu0
        %v5041 = vadd.f32 0.0, %v5040
        %v5042 = vpop.f32.mrf.mxu0
        %5043 = vmatprep.mubr.bf16.mxu0 0
        %5044 = vmatmul.mubr.bf16.gmra.mxu0 %v4924
        %v5045 = vpop.f32.mrf.mxu0
        %v5046 = vadd.f32 0.0, %v5045
        %v5047 = vpop.f32.mrf.mxu0
        %v5048 = vpop.f32.mrf.mxu0
        %v5049 = vadd.f32 0.0, %v5048
        %v5050 = vpop.f32.mrf.mxu0
        %5051 = vmatprep.mubr.bf16.mxu0 0
        %5052 = vmatmul.mubr.bf16.gmra.mxu0 %v4925
        %v5053 = vpop.f32.mrf.mxu0
        %v5054 = vadd.f32 0.0, %v5053
        %v5055 = vpop.f32.mrf.mxu0
        %v5056 = vpop.f32.mrf.mxu0
        %v5057 = vadd.f32 0.0, %v5056
        %v5058 = vpop.f32.mrf.mxu0
        %5059 = vmatprep.mubr.bf16.mxu0 0
        %5060 = vmatmul.mubr.bf16.gmra.mxu0 %v4926
        %v5061 = vpop.f32.mrf.mxu0
        %v5062 = vadd.f32 0.0, %v5061
        %v5063 = vpop.f32.mrf.mxu0
        %v5064 = vpop.f32.mrf.mxu0
        %v5065 = vadd.f32 0.0, %v5064
        %v5066 = vpop.f32.mrf.mxu0
        %5067 = vmatprep.mubr.bf16.mxu0 0
        %5068 = vmatmul.mubr.bf16.gmra.mxu0 %v4927
        %v5069 = vpop.f32.mrf.mxu0
        %v5070 = vadd.f32 0.0, %v5069
        %v5071 = vpop.f32.mrf.mxu0
        %v5072 = vpop.f32.mrf.mxu0
        %v5073 = vadd.f32 0.0, %v5072
        %v5074 = vpop.f32.mrf.mxu0
        %5075 = vmatprep.mubr.bf16.mxu0 0
        %5076 = vmatmul.mubr.bf16.gmra.mxu0 %v4928
        %v5077 = vpop.f32.mrf.mxu0
        %v5078 = vadd.f32 0.0, %v5077
        %v5079 = vpop.f32.mrf.mxu0
        %v5080 = vpop.f32.mrf.mxu0
        %v5081 = vadd.f32 0.0, %v5080
        %v5082 = vpop.f32.mrf.mxu0
        %5083 = vmatprep.mubr.bf16.mxu0 0
        %5084 = vmatmul.mubr.bf16.gmra.mxu0 %v4929
        %v5085 = vpop.f32.mrf.mxu0
        %v5086 = vadd.f32 0.0, %v5085
        %v5087 = vpop.f32.mrf.mxu0
        %v5088 = vpop.f32.mrf.mxu0
        %v5089 = vadd.f32 0.0, %v5088
        %v5090 = vpop.f32.mrf.mxu0
        %5091 = vmatprep.mubr.bf16.mxu0 0
        %5092 = vmatmul.mubr.bf16.gmra.mxu0 %v4930
        %v5093 = vpop.f32.mrf.mxu0
        %v5094 = vadd.f32 0.0, %v5093
        %v5095 = vpop.f32.mrf.mxu0
        %v5096 = vpop.f32.mrf.mxu0
        %v5097 = vadd.f32 0.0, %v5096
        %v5098 = vpop.f32.mrf.mxu0
        %5099 = vmatprep.mubr.bf16.mxu0 0
        %5100 = vmatmul.mubr.bf16.gmra.mxu0 %v4931
        %v5101 = vpop.f32.mrf.mxu0
        %v5102 = vadd.f32 0.0, %v5101
        %v5103 = vpop.f32.mrf.mxu0
        %v5104 = vpop.f32.mrf.mxu0
        %v5105 = vadd.f32 0.0, %v5104
        %v5106 = vpop.f32.mrf.mxu0
        %5107 = vmatprep.mubr.bf16.mxu0 0
        %5108 = vmatmul.mubr.bf16.gmra.mxu0 %v4932
        %v5109 = vpop.f32.mrf.mxu0
        %v5110 = vadd.f32 0.0, %v5109
        %v5111 = vpop.f32.mrf.mxu0
        %v5112 = vpop.f32.mrf.mxu0
        %v5113 = vadd.f32 0.0, %v5112
        %v5114 = vpop.f32.mrf.mxu0
        %5115 = vmatprep.mubr.bf16.mxu0 0
        %5116 = vmatmul.mubr.bf16.gmra.mxu0 %v4933
        %v5117 = vpop.f32.mrf.mxu0
        %v5118 = vadd.f32 0.0, %v5117
        %v5119 = vpop.f32.mrf.mxu0
        %v5120 = vpop.f32.mrf.mxu0
        %v5121 = vadd.f32 0.0, %v5120
        %v5122 = vpop.f32.mrf.mxu0
        %5123 = vmatprep.mubr.bf16.mxu0 0
        %5124 = vmatmul.mubr.bf16.gmra.mxu0 %v4934
        %v5125 = vpop.f32.mrf.mxu0
        %v5126 = vadd.f32 0.0, %v5125
        %v5127 = vpop.f32.mrf.mxu0
        %v5128 = vpop.f32.mrf.mxu0
        %v5129 = vadd.f32 0.0, %v5128
        %v5130 = vpop.f32.mrf.mxu0
        %5131 = vmatprep.mubr.bf16.mxu0 0
        %5132 = vmatmul.mubr.bf16.gmra.mxu0 %v4935
        %v5133 = vpop.f32.mrf.mxu0
        %v5134 = vadd.f32 0.0, %v5133
        %v5135 = vpop.f32.mrf.mxu0
        %v5136 = vpop.f32.mrf.mxu0
        %v5137 = vadd.f32 0.0, %v5136
        %v5138 = vpop.f32.mrf.mxu0
        %5139 = vmatprep.mubr.bf16.mxu0 0
        %5140 = vmatmul.mubr.bf16.gmra.mxu0 %v4936
        %v5141 = vpop.f32.mrf.mxu0
        %v5142 = vadd.f32 0.0, %v5141
        %v5143 = vpop.f32.mrf.mxu0
        %v5144 = vpop.f32.mrf.mxu0
        %v5145 = vadd.f32 0.0, %v5144
        %v5146 = vpop.f32.mrf.mxu0
        %5147 = vmatprep.mubr.bf16.mxu0 0
        %5148 = vmatmul.mubr.bf16.gmra.mxu0 %v4937
        %v5149 = vpop.f32.mrf.mxu0
        %v5150 = vadd.f32 0.0, %v5149
        %v5151 = vpop.f32.mrf.mxu0
        %v5152 = vpop.f32.mrf.mxu0
        %v5153 = vadd.f32 0.0, %v5152
        %v5154 = vpop.f32.mrf.mxu0
        %5155 = vmatprep.mubr.bf16.mxu0 0
        %5156 = vmatmul.mubr.bf16.gmra.mxu0 %v4938
        %v5157 = vpop.f32.mrf.mxu0
        %v5158 = vadd.f32 0.0, %v5157
        %v5159 = vpop.f32.mrf.mxu0
        %v5160 = vpop.f32.mrf.mxu0
        %v5161 = vadd.f32 0.0, %v5160
        %v5162 = vpop.f32.mrf.mxu0
        %5163 = vdwg.mxu0
        %v5164 = vadd.f32 %v4666, %v5038
        %v5165 = vadd.f32 %v4667, %v5041
        %v5166 = vadd.f32 %v4668, %v5046
        %v5167 = vadd.f32 %v4669, %v5049
        %v5168 = vadd.f32 %v4670, %v5054
        %v5169 = vadd.f32 %v4671, %v5057
        %v5170 = vadd.f32 %v4672, %v5062
        %v5171 = vadd.f32 %v4673, %v5065
        %v5172 = vadd.f32 %v4674, %v5070
        %v5173 = vadd.f32 %v4675, %v5073
        %v5174 = vadd.f32 %v4676, %v5078
        %v5175 = vadd.f32 %v4677, %v5081
        %v5176 = vadd.f32 %v4678, %v5086
        %v5177 = vadd.f32 %v4679, %v5089
        %v5178 = vadd.f32 %v4680, %v5094
        %v5179 = vadd.f32 %v4681, %v5097
        %v5180 = vadd.f32 %v4682, %v5102
        %v5181 = vadd.f32 %v4683, %v5105
        %v5182 = vadd.f32 %v4684, %v5110
        %v5183 = vadd.f32 %v4685, %v5113
        %v5184 = vadd.f32 %v4686, %v5118
        %v5185 = vadd.f32 %v4687, %v5121
        %v5186 = vadd.f32 %v4688, %v5126
        %v5187 = vadd.f32 %v4689, %v5129
        %v5188 = vadd.f32 %v4690, %v5134
        %v5189 = vadd.f32 %v4691, %v5137
        %v5190 = vadd.f32 %v4692, %v5142
        %v5191 = vadd.f32 %v4693, %v5145
        %v5192 = vadd.f32 %v4694, %v5150
        %v5193 = vadd.f32 %v4695, %v5153
        %v5194 = vadd.f32 %v4696, %v5158
        %v5195 = vadd.f32 %v4697, %v5161
        %v5196 = vld [vmem:[%s2] sm:$0x1]
        %v5197 = vlaneseq
        %v5198 = vshrl.u32 %v5197, 7
        %v5199 = vsub.s32 0, %v5198
        %v5200 = vrot.slane %v5196, %v5199
        %v5201 = vmul.f32 %v5164, %v5200
        %v5202 = vmul.f32 %v5165, %v5200
        %v5203 = vmul.f32 %v5166, %v5200
        %v5204 = vmul.f32 %v5167, %v5200
        %v5205 = vmul.f32 %v5168, %v5200
        %v5206 = vmul.f32 %v5169, %v5200
        %v5207 = vmul.f32 %v5170, %v5200
        %v5208 = vmul.f32 %v5171, %v5200
        %v5209 = vmul.f32 %v5172, %v5200
        %v5210 = vmul.f32 %v5173, %v5200
        %v5211 = vmul.f32 %v5174, %v5200
        %v5212 = vmul.f32 %v5175, %v5200
        %v5213 = vmul.f32 %v5176, %v5200
        %v5214 = vmul.f32 %v5177, %v5200
        %v5215 = vmul.f32 %v5178, %v5200
        %v5216 = vmul.f32 %v5179, %v5200
        %v5217 = vmul.f32 %v5180, %v5200
        %v5218 = vmul.f32 %v5181, %v5200
        %v5219 = vmul.f32 %v5182, %v5200
        %v5220 = vmul.f32 %v5183, %v5200
        %v5221 = vmul.f32 %v5184, %v5200
        %v5222 = vmul.f32 %v5185, %v5200
        %v5223 = vmul.f32 %v5186, %v5200
        %v5224 = vmul.f32 %v5187, %v5200
        %v5225 = vmul.f32 %v5188, %v5200
        %v5226 = vmul.f32 %v5189, %v5200
        %v5227 = vmul.f32 %v5190, %v5200
        %v5228 = vmul.f32 %v5191, %v5200
        %v5229 = vmul.f32 %v5192, %v5200
        %v5230 = vmul.f32 %v5193, %v5200
        %v5231 = vmul.f32 %v5194, %v5200
        %v5232 = vmul.f32 %v5195, %v5200
        %v5233 = vld [vmem:[%s2 + $0x1] sm:$0x1]
        %v5234 = vlaneseq
        %v5235 = vshrl.u32 %v5234, 7
        %v5236 = vsub.s32 0, %v5235
        %v5237 = vrot.slane %v5233, %v5236
        %v5238 = vadd.f32 %v5201, %v5237
        %v5239 = vadd.f32 %v5202, %v5237
        %v5240 = vadd.f32 %v5203, %v5237
        %v5241 = vadd.f32 %v5204, %v5237
        %v5242 = vadd.f32 %v5205, %v5237
        %v5243 = vadd.f32 %v5206, %v5237
        %v5244 = vadd.f32 %v5207, %v5237
        %v5245 = vadd.f32 %v5208, %v5237
        %v5246 = vadd.f32 %v5209, %v5237
        %v5247 = vadd.f32 %v5210, %v5237
        %v5248 = vadd.f32 %v5211, %v5237
        %v5249 = vadd.f32 %v5212, %v5237
        %v5250 = vadd.f32 %v5213, %v5237
        %v5251 = vadd.f32 %v5214, %v5237
        %v5252 = vadd.f32 %v5215, %v5237
        %v5253 = vadd.f32 %v5216, %v5237
        %v5254 = vadd.f32 %v5217, %v5237
        %v5255 = vadd.f32 %v5218, %v5237
        %v5256 = vadd.f32 %v5219, %v5237
        %v5257 = vadd.f32 %v5220, %v5237
        %v5258 = vadd.f32 %v5221, %v5237
        %v5259 = vadd.f32 %v5222, %v5237
        %v5260 = vadd.f32 %v5223, %v5237
        %v5261 = vadd.f32 %v5224, %v5237
        %v5262 = vadd.f32 %v5225, %v5237
        %v5263 = vadd.f32 %v5226, %v5237
        %v5264 = vadd.f32 %v5227, %v5237
        %v5265 = vadd.f32 %v5228, %v5237
        %v5266 = vadd.f32 %v5229, %v5237
        %v5267 = vadd.f32 %v5230, %v5237
        %v5268 = vadd.f32 %v5231, %v5237
        %v5269 = vadd.f32 %v5232, %v5237
        %v5270 = vsub.f32 0.0, %v5238
        %v5271 = vsub.f32 0.0, %v5239
        %v5272 = vsub.f32 0.0, %v5240
        %v5273 = vsub.f32 0.0, %v5241
        %v5274 = vsub.f32 0.0, %v5242
        %v5275 = vsub.f32 0.0, %v5243
        %v5276 = vsub.f32 0.0, %v5244
        %v5277 = vsub.f32 0.0, %v5245
        %v5278 = vsub.f32 0.0, %v5246
        %v5279 = vsub.f32 0.0, %v5247
        %v5280 = vsub.f32 0.0, %v5248
        %v5281 = vsub.f32 0.0, %v5249
        %v5282 = vsub.f32 0.0, %v5250
        %v5283 = vsub.f32 0.0, %v5251
        %v5284 = vsub.f32 0.0, %v5252
        %v5285 = vsub.f32 0.0, %v5253
        %v5286 = vsub.f32 0.0, %v5254
        %v5287 = vsub.f32 0.0, %v5255
        %v5288 = vsub.f32 0.0, %v5256
        %v5289 = vsub.f32 0.0, %v5257
        %v5290 = vsub.f32 0.0, %v5258
        %v5291 = vsub.f32 0.0, %v5259
        %v5292 = vsub.f32 0.0, %v5260
        %v5293 = vsub.f32 0.0, %v5261
        %v5294 = vsub.f32 0.0, %v5262
        %v5295 = vsub.f32 0.0, %v5263
        %v5296 = vsub.f32 0.0, %v5264
        %v5297 = vsub.f32 0.0, %v5265
        %v5298 = vsub.f32 0.0, %v5266
        %v5299 = vsub.f32 0.0, %v5267
        %v5300 = vsub.f32 0.0, %v5268
        %v5301 = vsub.f32 0.0, %v5269
        %v5302 = vmul.f32 %v5270, 1.442695
        %v5303 = vpow.pop %v5302
        %v5304 = vmul.f32 %v5271, 1.442695
        %v5305 = vpow.pop %v5304
        %v5306 = vmul.f32 %v5272, 1.442695
        %v5307 = vpow.pop %v5306
        %v5308 = vmul.f32 %v5273, 1.442695
        %v5309 = vpow.pop %v5308
        %v5310 = vmul.f32 %v5274, 1.442695
        %v5311 = vpow.pop %v5310
        %v5312 = vmul.f32 %v5275, 1.442695
        %v5313 = vpow.pop %v5312
        %v5314 = vmul.f32 %v5276, 1.442695
        %v5315 = vpow.pop %v5314
        %v5316 = vmul.f32 %v5277, 1.442695
        %v5317 = vpow.pop %v5316
        %v5318 = vmul.f32 %v5278, 1.442695
        %v5319 = vpow.pop %v5318
        %v5320 = vmul.f32 %v5279, 1.442695
        %v5321 = vpow.pop %v5320
        %v5322 = vmul.f32 %v5280, 1.442695
        %v5323 = vpow.pop %v5322
        %v5324 = vmul.f32 %v5281, 1.442695
        %v5325 = vpow.pop %v5324
        %v5326 = vmul.f32 %v5282, 1.442695
        %v5327 = vpow.pop %v5326
        %v5328 = vmul.f32 %v5283, 1.442695
        %v5329 = vpow.pop %v5328
        %v5330 = vmul.f32 %v5284, 1.442695
        %v5331 = vpow.pop %v5330
        %v5332 = vmul.f32 %v5285, 1.442695
        %v5333 = vpow.pop %v5332
        %v5334 = vmul.f32 %v5286, 1.442695
        %v5335 = vpow.pop %v5334
        %v5336 = vmul.f32 %v5287, 1.442695
        %v5337 = vpow.pop %v5336
        %v5338 = vmul.f32 %v5288, 1.442695
        %v5339 = vpow.pop %v5338
        %v5340 = vmul.f32 %v5289, 1.442695
        %v5341 = vpow.pop %v5340
        %v5342 = vmul.f32 %v5290, 1.442695
        %v5343 = vpow.pop %v5342
        %v5344 = vmul.f32 %v5291, 1.442695
        %v5345 = vpow.pop %v5344
        %v5346 = vmul.f32 %v5292, 1.442695
        %v5347 = vpow.pop %v5346
        %v5348 = vmul.f32 %v5293, 1.442695
        %v5349 = vpow.pop %v5348
        %v5350 = vmul.f32 %v5294, 1.442695
        %v5351 = vpow.pop %v5350
        %v5352 = vmul.f32 %v5295, 1.442695
        %v5353 = vpow.pop %v5352
        %v5354 = vmul.f32 %v5296, 1.442695
        %v5355 = vpow.pop %v5354
        %v5356 = vmul.f32 %v5297, 1.442695
        %v5357 = vpow.pop %v5356
        %v5358 = vmul.f32 %v5298, 1.442695
        %v5359 = vpow.pop %v5358
        %v5360 = vmul.f32 %v5299, 1.442695
        %v5361 = vpow.pop %v5360
        %v5362 = vmul.f32 %v5300, 1.442695
        %v5363 = vpow.pop %v5362
        %v5364 = vmul.f32 %v5301, 1.442695
        %v5365 = vpow.pop %v5364
        %v5366 = vadd.f32 %v5303, 1.0
        %v5367 = vadd.f32 %v5305, 1.0
        %v5368 = vadd.f32 %v5307, 1.0
        %v5369 = vadd.f32 %v5309, 1.0
        %v5370 = vadd.f32 %v5311, 1.0
        %v5371 = vadd.f32 %v5313, 1.0
        %v5372 = vadd.f32 %v5315, 1.0
        %v5373 = vadd.f32 %v5317, 1.0
        %v5374 = vadd.f32 %v5319, 1.0
        %v5375 = vadd.f32 %v5321, 1.0
        %v5376 = vadd.f32 %v5323, 1.0
        %v5377 = vadd.f32 %v5325, 1.0
        %v5378 = vadd.f32 %v5327, 1.0
        %v5379 = vadd.f32 %v5329, 1.0
        %v5380 = vadd.f32 %v5331, 1.0
        %v5381 = vadd.f32 %v5333, 1.0
        %v5382 = vadd.f32 %v5335, 1.0
        %v5383 = vadd.f32 %v5337, 1.0
        %v5384 = vadd.f32 %v5339, 1.0
        %v5385 = vadd.f32 %v5341, 1.0
        %v5386 = vadd.f32 %v5343, 1.0
        %v5387 = vadd.f32 %v5345, 1.0
        %v5388 = vadd.f32 %v5347, 1.0
        %v5389 = vadd.f32 %v5349, 1.0
        %v5390 = vadd.f32 %v5351, 1.0
        %v5391 = vadd.f32 %v5353, 1.0
        %v5392 = vadd.f32 %v5355, 1.0
        %v5393 = vadd.f32 %v5357, 1.0
        %v5394 = vadd.f32 %v5359, 1.0
        %v5395 = vadd.f32 %v5361, 1.0
        %v5396 = vadd.f32 %v5363, 1.0
        %v5397 = vadd.f32 %v5365, 1.0
        %v5398 = vrcp.pop %v5366
        %v5399 = vrcp.pop %v5367
        %v5400 = vrcp.pop %v5368
        %v5401 = vrcp.pop %v5369
        %v5402 = vrcp.pop %v5370
        %v5403 = vrcp.pop %v5371
        %v5404 = vrcp.pop %v5372
        %v5405 = vrcp.pop %v5373
        %v5406 = vrcp.pop %v5374
        %v5407 = vrcp.pop %v5375
        %v5408 = vrcp.pop %v5376
        %v5409 = vrcp.pop %v5377
        %v5410 = vrcp.pop %v5378
        %v5411 = vrcp.pop %v5379
        %v5412 = vrcp.pop %v5380
        %v5413 = vrcp.pop %v5381
        %v5414 = vrcp.pop %v5382
        %v5415 = vrcp.pop %v5383
        %v5416 = vrcp.pop %v5384
        %v5417 = vrcp.pop %v5385
        %v5418 = vrcp.pop %v5386
        %v5419 = vrcp.pop %v5387
        %v5420 = vrcp.pop %v5388
        %v5421 = vrcp.pop %v5389
        %v5422 = vrcp.pop %v5390
        %v5423 = vrcp.pop %v5391
        %v5424 = vrcp.pop %v5392
        %v5425 = vrcp.pop %v5393
        %v5426 = vrcp.pop %v5394
        %v5427 = vrcp.pop %v5395
        %v5428 = vrcp.pop %v5396
        %v5429 = vrcp.pop %v5397
        %v5430 = vmul.f32 %v5238, %v5398
        %v5431 = vmul.f32 %v5239, %v5399
        %v5432 = vmul.f32 %v5240, %v5400
        %v5433 = vmul.f32 %v5241, %v5401
        %v5434 = vmul.f32 %v5242, %v5402
        %v5435 = vmul.f32 %v5243, %v5403
        %v5436 = vmul.f32 %v5244, %v5404
        %v5437 = vmul.f32 %v5245, %v5405
        %v5438 = vmul.f32 %v5246, %v5406
        %v5439 = vmul.f32 %v5247, %v5407
        %v5440 = vmul.f32 %v5248, %v5408
        %v5441 = vmul.f32 %v5249, %v5409
        %v5442 = vmul.f32 %v5250, %v5410
        %v5443 = vmul.f32 %v5251, %v5411
        %v5444 = vmul.f32 %v5252, %v5412
        %v5445 = vmul.f32 %v5253, %v5413
        %v5446 = vmul.f32 %v5254, %v5414
        %v5447 = vmul.f32 %v5255, %v5415
        %v5448 = vmul.f32 %v5256, %v5416
        %v5449 = vmul.f32 %v5257, %v5417
        %v5450 = vmul.f32 %v5258, %v5418
        %v5451 = vmul.f32 %v5259, %v5419
        %v5452 = vmul.f32 %v5260, %v5420
        %v5453 = vmul.f32 %v5261, %v5421
        %v5454 = vmul.f32 %v5262, %v5422
        %v5455 = vmul.f32 %v5263, %v5423
        %v5456 = vmul.f32 %v5264, %v5424
        %v5457 = vmul.f32 %v5265, %v5425
        %v5458 = vmul.f32 %v5266, %v5426
        %v5459 = vmul.f32 %v5267, %v5427
        %v5460 = vmul.f32 %v5268, %v5428
        %v5461 = vmul.f32 %v5269, %v5429
        %v5462 = vld [vmem:[%s348] sm:$0xf]
        %v5463 = vld [vmem:[%s348 + $0x4] sm:$0xf]
        %v5464 = vld [vmem:[%s348 + $0x8] sm:$0xf]
        %v5465 = vld [vmem:[%s348 + $0xc] sm:$0xf]
        %v5466 = vld [vmem:[%s348 + $0x10] sm:$0xf]
        %v5467 = vld [vmem:[%s348 + $0x14] sm:$0xf]
        %v5468 = vld [vmem:[%s348 + $0x18] sm:$0xf]
        %v5469 = vld [vmem:[%s348 + $0x1c] sm:$0xf]
        %v5470 = vld [vmem:[%s348 + $0x20] sm:$0xf]
        %v5471 = vld [vmem:[%s348 + $0x24] sm:$0xf]
        %v5472 = vld [vmem:[%s348 + $0x28] sm:$0xf]
        %v5473 = vld [vmem:[%s348 + $0x2c] sm:$0xf]
        %v5474 = vld [vmem:[%s348 + $0x30] sm:$0xf]
        %v5475 = vld [vmem:[%s348 + $0x34] sm:$0xf]
        %v5476 = vld [vmem:[%s348 + $0x38] sm:$0xf]
        %v5477 = vld [vmem:[%s348 + $0x3c] sm:$0xf]
        %v5478 = vld [vmem:[%s348 + $0x40] sm:$0xf]
        %v5479 = vld [vmem:[%s348 + $0x44] sm:$0xf]
        %v5480 = vld [vmem:[%s348 + $0x48] sm:$0xf]
        %v5481 = vld [vmem:[%s348 + $0x4c] sm:$0xf]
        %v5482 = vld [vmem:[%s348 + $0x50] sm:$0xf]
        %v5483 = vld [vmem:[%s348 + $0x54] sm:$0xf]
        %v5484 = vld [vmem:[%s348 + $0x58] sm:$0xf]
        %v5485 = vld [vmem:[%s348 + $0x5c] sm:$0xf]
        %v5486 = vld [vmem:[%s348 + $0x60] sm:$0xf]
        %v5487 = vld [vmem:[%s348 + $0x64] sm:$0xf]
        %v5488 = vld [vmem:[%s348 + $0x68] sm:$0xf]
        %v5489 = vld [vmem:[%s348 + $0x6c] sm:$0xf]
        %v5490 = vld [vmem:[%s348 + $0x70] sm:$0xf]
        %v5491 = vld [vmem:[%s348 + $0x74] sm:$0xf]
        %v5492 = vld [vmem:[%s348 + $0x78] sm:$0xf]
        %v5493 = vld [vmem:[%s348 + $0x7c] sm:$0xf]
        %v5494 = vunpack.c.l.bf16 %v5462
        %v5495 = vunpack.c.l.bf16 %v5463
        %v5496 = vunpack.c.l.bf16 %v5464
        %v5497 = vunpack.c.l.bf16 %v5465
        %v5498 = vunpack.c.l.bf16 %v5466
        %v5499 = vunpack.c.l.bf16 %v5467
        %v5500 = vunpack.c.l.bf16 %v5468
        %v5501 = vunpack.c.l.bf16 %v5469
        %v5502 = vunpack.c.l.bf16 %v5470
        %v5503 = vunpack.c.l.bf16 %v5471
        %v5504 = vunpack.c.l.bf16 %v5472
        %v5505 = vunpack.c.l.bf16 %v5473
        %v5506 = vunpack.c.l.bf16 %v5474
        %v5507 = vunpack.c.l.bf16 %v5475
        %v5508 = vunpack.c.l.bf16 %v5476
        %v5509 = vunpack.c.l.bf16 %v5477
        %v5510 = vunpack.c.l.bf16 %v5478
        %v5511 = vunpack.c.l.bf16 %v5479
        %v5512 = vunpack.c.l.bf16 %v5480
        %v5513 = vunpack.c.l.bf16 %v5481
        %v5514 = vunpack.c.l.bf16 %v5482
        %v5515 = vunpack.c.l.bf16 %v5483
        %v5516 = vunpack.c.l.bf16 %v5484
        %v5517 = vunpack.c.l.bf16 %v5485
        %v5518 = vunpack.c.l.bf16 %v5486
        %v5519 = vunpack.c.l.bf16 %v5487
        %v5520 = vunpack.c.l.bf16 %v5488
        %v5521 = vunpack.c.l.bf16 %v5489
        %v5522 = vunpack.c.l.bf16 %v5490
        %v5523 = vunpack.c.l.bf16 %v5491
        %v5524 = vunpack.c.l.bf16 %v5492
        %v5525 = vunpack.c.l.bf16 %v5493
        %v5526 = vadd.f32 %v5430, %v5494
        %v5527 = vadd.f32 %v5431, %v5495
        %v5528 = vadd.f32 %v5432, %v5496
        %v5529 = vadd.f32 %v5433, %v5497
        %v5530 = vadd.f32 %v5434, %v5498
        %v5531 = vadd.f32 %v5435, %v5499
        %v5532 = vadd.f32 %v5436, %v5500
        %v5533 = vadd.f32 %v5437, %v5501
        %v5534 = vadd.f32 %v5438, %v5502
        %v5535 = vadd.f32 %v5439, %v5503
        %v5536 = vadd.f32 %v5440, %v5504
        %v5537 = vadd.f32 %v5441, %v5505
        %v5538 = vadd.f32 %v5442, %v5506
        %v5539 = vadd.f32 %v5443, %v5507
        %v5540 = vadd.f32 %v5444, %v5508
        %v5541 = vadd.f32 %v5445, %v5509
        %v5542 = vadd.f32 %v5446, %v5510
        %v5543 = vadd.f32 %v5447, %v5511
        %v5544 = vadd.f32 %v5448, %v5512
        %v5545 = vadd.f32 %v5449, %v5513
        %v5546 = vadd.f32 %v5450, %v5514
        %v5547 = vadd.f32 %v5451, %v5515
        %v5548 = vadd.f32 %v5452, %v5516
        %v5549 = vadd.f32 %v5453, %v5517
        %v5550 = vadd.f32 %v5454, %v5518
        %v5551 = vadd.f32 %v5455, %v5519
        %v5552 = vadd.f32 %v5456, %v5520
        %v5553 = vadd.f32 %v5457, %v5521
        %v5554 = vadd.f32 %v5458, %v5522
        %v5555 = vadd.f32 %v5459, %v5523
        %v5556 = vadd.f32 %v5460, %v5524
        %v5557 = vadd.f32 %v5461, %v5525
        %v5558 = vpack.c.bf16 %v5527, %v5526
        %v5559 = vpack.c.bf16 %v5529, %v5528
        %v5560 = vpack.c.bf16 %v5531, %v5530
        %v5561 = vpack.c.bf16 %v5533, %v5532
        %v5562 = vpack.c.bf16 %v5535, %v5534
        %v5563 = vpack.c.bf16 %v5537, %v5536
        %v5564 = vpack.c.bf16 %v5539, %v5538
        %v5565 = vpack.c.bf16 %v5541, %v5540
        %v5566 = vpack.c.bf16 %v5543, %v5542
        %v5567 = vpack.c.bf16 %v5545, %v5544
        %v5568 = vpack.c.bf16 %v5547, %v5546
        %v5569 = vpack.c.bf16 %v5549, %v5548
        %v5570 = vpack.c.bf16 %v5551, %v5550
        %v5571 = vpack.c.bf16 %v5553, %v5552
        %v5572 = vpack.c.bf16 %v5555, %v5554
        %v5573 = vpack.c.bf16 %v5557, %v5556
        %v5590 = vunpack.c.l.b16 %v5558
        %v5591 = vunpack.c.h.b16 %v5558
        %v5592 = vunpack.c.l.b16 %v5559
        %v5593 = vunpack.c.h.b16 %v5559
        %v5594 = vunpack.c.l.b16 %v5560
        %v5595 = vunpack.c.h.b16 %v5560
        %v5596 = vunpack.c.l.b16 %v5561
        %v5597 = vunpack.c.h.b16 %v5561
        %v5598 = vunpack.c.l.b16 %v5562
        %v5599 = vunpack.c.h.b16 %v5562
        %v5600 = vunpack.c.l.b16 %v5563
        %v5601 = vunpack.c.h.b16 %v5563
        %v5602 = vunpack.c.l.b16 %v5564
        %v5603 = vunpack.c.h.b16 %v5564
        %v5604 = vunpack.c.l.b16 %v5565
        %v5605 = vunpack.c.h.b16 %v5565
        %v5606 = vunpack.c.l.b16 %v5566
        %v5607 = vunpack.c.h.b16 %v5566
        %v5608 = vunpack.c.l.b16 %v5567
        %v5609 = vunpack.c.h.b16 %v5567
        %v5610 = vunpack.c.l.b16 %v5568
        %v5611 = vunpack.c.h.b16 %v5568
        %v5612 = vunpack.c.l.b16 %v5569
        %v5613 = vunpack.c.h.b16 %v5569
        %v5614 = vunpack.c.l.b16 %v5570
        %v5615 = vunpack.c.h.b16 %v5570
        %v5616 = vunpack.c.l.b16 %v5571
        %v5617 = vunpack.c.h.b16 %v5571
        %v5618 = vunpack.c.l.b16 %v5572
        %v5619 = vunpack.c.h.b16 %v5572
        %v5620 = vunpack.c.l.b16 %v5573
        %v5621 = vunpack.c.h.b16 %v5573
        %v5622 = vpack.c.b16 %v5590, %v5590
        %v5623 = vpack.c.b16 %v5591, %v5591
        %v5624 = vpack.c.b16 %v5592, %v5592
        %v5625 = vpack.c.b16 %v5593, %v5593
        %v5626 = vpack.c.b16 %v5594, %v5594
        %v5627 = vpack.c.b16 %v5595, %v5595
        %v5628 = vpack.c.b16 %v5596, %v5596
        %v5629 = vpack.c.b16 %v5597, %v5597
        %v5630 = vpack.c.b16 %v5598, %v5598
        %v5631 = vpack.c.b16 %v5599, %v5599
        %v5632 = vpack.c.b16 %v5600, %v5600
        %v5633 = vpack.c.b16 %v5601, %v5601
        %v5634 = vpack.c.b16 %v5602, %v5602
        %v5635 = vpack.c.b16 %v5603, %v5603
        %v5636 = vpack.c.b16 %v5604, %v5604
        %v5637 = vpack.c.b16 %v5605, %v5605
        %v5638 = vpack.c.b16 %v5606, %v5606
        %v5639 = vpack.c.b16 %v5607, %v5607
        %v5640 = vpack.c.b16 %v5608, %v5608
        %v5641 = vpack.c.b16 %v5609, %v5609
        %v5642 = vpack.c.b16 %v5610, %v5610
        %v5643 = vpack.c.b16 %v5611, %v5611
        %v5644 = vpack.c.b16 %v5612, %v5612
        %v5645 = vpack.c.b16 %v5613, %v5613
        %v5646 = vpack.c.b16 %v5614, %v5614
        %v5647 = vpack.c.b16 %v5615, %v5615
        %v5648 = vpack.c.b16 %v5616, %v5616
        %v5649 = vpack.c.b16 %v5617, %v5617
        %v5650 = vpack.c.b16 %v5618, %v5618
        %v5651 = vpack.c.b16 %v5619, %v5619
        %v5652 = vpack.c.b16 %v5620, %v5620
        %v5653 = vpack.c.b16 %v5621, %v5621
        %5686 = vst [vmem:[%s385] sm:$0xf] %v5622
        %5687 = vst [vmem:[%s385 + $0x4] sm:$0xf] %v5623
        %5688 = vst [vmem:[%s385 + $0x8] sm:$0xf] %v5624
        %5689 = vst [vmem:[%s385 + $0xc] sm:$0xf] %v5625
        %5690 = vst [vmem:[%s385 + $0x10] sm:$0xf] %v5626
        %5691 = vst [vmem:[%s385 + $0x14] sm:$0xf] %v5627
        %5692 = vst [vmem:[%s385 + $0x18] sm:$0xf] %v5628
        %5693 = vst [vmem:[%s385 + $0x1c] sm:$0xf] %v5629
        %5694 = vst [vmem:[%s385 + $0x20] sm:$0xf] %v5630
        %5695 = vst [vmem:[%s385 + $0x24] sm:$0xf] %v5631
        %5696 = vst [vmem:[%s385 + $0x28] sm:$0xf] %v5632
        %5697 = vst [vmem:[%s385 + $0x2c] sm:$0xf] %v5633
        %5698 = vst [vmem:[%s385 + $0x30] sm:$0xf] %v5634
        %5699 = vst [vmem:[%s385 + $0x34] sm:$0xf] %v5635
        %5700 = vst [vmem:[%s385 + $0x38] sm:$0xf] %v5636
        %5701 = vst [vmem:[%s385 + $0x3c] sm:$0xf] %v5637
        %5702 = vst [vmem:[%s385 + $0x40] sm:$0xf] %v5638
        %5703 = vst [vmem:[%s385 + $0x44] sm:$0xf] %v5639
        %5704 = vst [vmem:[%s385 + $0x48] sm:$0xf] %v5640
        %5705 = vst [vmem:[%s385 + $0x4c] sm:$0xf] %v5641
        %5706 = vst [vmem:[%s385 + $0x50] sm:$0xf] %v5642
        %5707 = vst [vmem:[%s385 + $0x54] sm:$0xf] %v5643
        %5708 = vst [vmem:[%s385 + $0x58] sm:$0xf] %v5644
        %5709 = vst [vmem:[%s385 + $0x5c] sm:$0xf] %v5645
        %5710 = vst [vmem:[%s385 + $0x60] sm:$0xf] %v5646
        %5711 = vst [vmem:[%s385 + $0x64] sm:$0xf] %v5647
        %5712 = vst [vmem:[%s385 + $0x68] sm:$0xf] %v5648
        %5713 = vst [vmem:[%s385 + $0x6c] sm:$0xf] %v5649
        %5714 = vst [vmem:[%s385 + $0x70] sm:$0xf] %v5650
        %5715 = vst [vmem:[%s385 + $0x74] sm:$0xf] %v5651
        %5716 = vst [vmem:[%s385 + $0x78] sm:$0xf] %v5652
        %5717 = vst [vmem:[%s385 + $0x7c] sm:$0xf] %v5653
        %p5718 = scmp.lt.s32.totalorder %s15, 1
        %s5719 = scalar_select %p5718, %s15, 1
        %s5720 = smul.addr %s5719, 32
        %s5721 = smul.addr %s5720, 4
        %s5722 = scalar_lea.vmem %s4, %s5721
        // Predicated region
        $region78: #{c3_forward_nchw.6} parent=72 // pred_check
          %p5723 = pneg %p127
        $region79: #{c3_forward_nchw.6} parent=72 // pred_check_branch
          %5725 = sbr.rel (%p5723) target = $region81
        $region80: #{c3_forward_nchw.6} parent=72 // pred_region
          _
        $region81: #{c3_forward_nchw.6} parent=72 // pred_fallthru
          _
      $region73: #{c3_forward_nchw.6} parent=5 // pred_fallthru
        _
      %p5726 = scmp.le.s32.totalorder 2, %s10
      // Predicated region
      $region82: #{c3_forward_nchw.6} parent=5 // pred_check
        %p5727 = pneg %p5726
      $region83: #{c3_forward_nchw.6} parent=5 // pred_check_branch
        %5729 = sbr.rel (%p5727) target = $region85
      $region84: #{c3_forward_nchw.6} parent=5 // pred_region
        %s5730 = ssub.s32 %s10, 2
        // Predicated region
        $region86: #{c3_forward_nchw.6} parent=84 // pred_check
          %p5731 = pneg %p133
        $region87: #{c3_forward_nchw.6} parent=84 // pred_check_branch
          %5733 = sbr.rel (%p5731) target = $region89
        $region88: #{c3_forward_nchw.6} parent=84 // pred_region
          %p5734 = scmp.lt.s32.totalorder %s16, 1
          %s5735 = scalar_select %p5734, %s16, 1
          %s5736 = smul.addr %s5735, 32
          %s5737 = smul.addr %s5736, 4
          %s5738 = scalar_lea.vmem %s4, %s5737
        $region89: #{c3_forward_nchw.6} parent=84 // pred_fallthru
          _
      $region85: #{c3_forward_nchw.6} parent=5 // pred_fallthru
        _
    $region6: #{c3_forward_nchw.6} parent=1 // loop_footer
      %s14 = sadd.s32 1, %s10
    $region7: #{c3_forward_nchw.6} parent=1 // loop_footer_branch
      %9 = sbr.rel target = $region3
    $region8: #{c3_forward_nchw.6} parent=1 // loop_exit
      _

</llo_original>
